<compile_context>
chip_gen: v6e
topology: v6e:2x2x1
jax: 0.10.0
libtpu: 0.0.40
codegen_flags: <defaults>
</compile_context>

<pallas_src>
import jax
import jax.numpy as jnp
from jax import lax
from jax.experimental import pallas as pl
from jax.experimental.pallas import tpu as pltpu

LATENT = 20


def _round_up(n, m):
    return ((n + m - 1) // m) * m


def _vmem_limit_bytes():
    # 128 MiB VMEM on v5e/v6e -> allow 64 MiB; 64 MiB physical on v7x -> 32 MiB.
    try:
        cap = pltpu.get_tpu_info().vmem_capacity_bytes
        return int(min(64 * 1024 * 1024, max(cap // 2, 16 * 1024 * 1024)))
    except Exception:
        return 32 * 1024 * 1024


_VMEM_LIMIT = _vmem_limit_bytes()


# ---------------------------------------------------------------------------
# Polyphase helpers.  7x7 spatial maps are kept flattened as (49, C) values with
# row index i = 7*p + q.  Shifts move the map by one step in p and/or q with
# zero fill at the boundary (static slices/concats -> plain VMEM copies).
# ---------------------------------------------------------------------------

def _shift_plus(v, row_idx, rows, cols):
    """out[7p+q] = v[7(p+rows) + (q+cols)], zero where p+rows>6 or q+cols>6."""
    c = v.shape[1]
    if rows:
        v = jnp.concatenate([v[7:, :], jnp.zeros((7, c), v.dtype)], axis=0)
    if cols:
        v = jnp.concatenate([v[1:, :], jnp.zeros((1, c), v.dtype)], axis=0)
        v = jnp.where(row_idx % 7 < 6, v, 0.0)
    return v


def _shift_minus(v, row_idx, rows, cols):
    """out[7p+q] = v[7(p-rows) + (q-cols)], zero where p-rows<0 or q-cols<0."""
    c = v.shape[1]
    if rows:
        v = jnp.concatenate([jnp.zeros((7, c), v.dtype), v[:42, :]], axis=0)
    if cols:
        v = jnp.concatenate([jnp.zeros((1, c), v.dtype), v[:48, :]], axis=0)
        v = jnp.where(row_idx % 7 >= 1, v, 0.0)
    return v


# ---------------------------------- kernels ---------------------------------

def _encoder_kernel(xp_ref, w1_ref, b1_ref, w2_ref, b2_ref, o_ref):
    """Per-sample fused encoder.

    xp_ref : (4, 49, 9)  conv1 input patches, grouped by conv1 output parity
             phase (s, t) -> index 2s+t; rows 7a+b; taps 3di+dj.
    o_ref  : (49, 64)    flattened 7x7x64 encoder output (rows 7p+q).
    """
    row_idx = lax.broadcasted_iota(jnp.int32, (49, 1), 0)

    # Conv2d(1, 32, 3, stride=2, padding=1) + ReLU: one tiny GEMM per phase.
    ph = []
    for st in range(4):
        h = jnp.dot(xp_ref[st], w1_ref[...], preferred_element_type=jnp.float32)
        ph.append(jnp.maximum(h + b1_ref[...], 0.0))              # (49, 32)

    # Conv2d(32, 64, 3, stride=2, padding=1) + ReLU as 9 tap matmuls.
    # Output (p, q) reads h1[2p+di-1, 2q+dj-1]:
    #   di=0 -> phase 1 shifted by -1,  di=1 -> phase 0,  di=2 -> phase 1.
    sel = ((1, 1), (0, 0), (1, 0))                 # di/dj -> (parity, shift)
    acc = jnp.zeros((49, 64), jnp.float32)
    for di in range(3):
        s, sa = sel[di]
        for dj in range(3):
            t, sb = sel[dj]
            lhs = _shift_minus(ph[2 * s + t], row_idx, sa, sb)
            acc = acc + jnp.dot(lhs, w2_ref[3 * di + dj],
                                preferred_element_type=jnp.float32)
    o_ref[...] = jnp.maximum(acc + b2_ref[...], 0.0)


def _latent_kernel(h_ref, eps_ref, wml_ref, bml_ref, wd_ref, bd_ref,
                   d_ref, mu_ref, lv_ref):
    """fc_mu + fc_logvar (merged matmul), reparameterize, Linear(20,3136)+ReLU."""
    h = h_ref[...]
    ml = jnp.dot(h, wml_ref[...], preferred_element_type=jnp.float32) + bml_ref[...]
    mu = ml[:, :LATENT]
    lv = ml[:, LATENT:2 * LATENT]
    z = mu + jnp.exp(0.5 * lv) * eps_ref[...]
    d = jnp.dot(z, wd_ref[...], preferred_element_type=jnp.float32) + bd_ref[...]
    d_ref[...] = jnp.maximum(d, 0.0)
    mu_ref[...] = mu
    lv_ref[...] = lv


# Polyphase taps of a k=3, stride=2, pad=1, output_padding=1 transposed conv:
# output parity sigma -> ((input shift da, kernel tap index di), ...).
_T_TAPS = {0: ((0, 1),), 1: ((0, 0), (1, 2))}


def _decoder_kernel(x_ref, wt1_ref, bt1_ref, wt2_ref, bt2_ref, o_ref):
    """Per-sample fused decoder.

    x_ref : (49, 64)     flattened 7x7x64 input (rows 7p+q).
    o_ref : (16, 49, 1)  sigmoid output phases; output pixel (4p+kr, 4q+kc) is
                         stored at o_ref[4*kr + kc, 7p+q, 0].
    """
    row_idx = lax.broadcasted_iota(jnp.int32, (49, 1), 0)
    x = x_ref[...]
    xs = [[_shift_plus(x, row_idx, a, b) for b in range(2)] for a in range(2)]

    # ConvTranspose2d(64, 32) + ReLU -> y stored as 4 parity phases of the
    # 14x14x32 map: y[s][t][7p+q] = y_full(2p+s, 2q+t).
    y = []
    for s in range(2):
        row = []
        for t in range(2):
            acc = jnp.zeros((49, 32), jnp.float32)
            for da, di in _T_TAPS[s]:
                for db, dj in _T_TAPS[t]:
                    acc = acc + jnp.dot(xs[da][db], wt1_ref[3 * di + dj],
                                        preferred_element_type=jnp.float32)
            row.append(jnp.maximum(acc + bt1_ref[...], 0.0))
        y.append(row)

    # Shifted variants of every y phase (for the +1 row/col reads of ConvT2).
    ysh = [[[[_shift_plus(y[s][t], row_idx, a, b) for b in range(2)]
             for a in range(2)] for t in range(2)] for s in range(2)]

    # ConvTranspose2d(32, 1) + Sigmoid.  With a single output channel each tap
    # is a lane-broadcast multiply; one cross-lane reduction per output phase
    # (no N=1 -> 128 padding, no junk rows).
    for s in range(2):
        for s2 in range(2):
            for t in range(2):
                for t2 in range(2):
                    acc = jnp.zeros((49, 32), jnp.float32)
                    for da, di in _T_TAPS[s2]:
                        for db, dj in _T_TAPS[t2]:
                            lhs = ysh[(s + da) % 2][(t + db) % 2][(s + da) // 2][(t + db) // 2]
                            acc = acc + lhs * wt2_ref[3 * di + dj]
                    v = jnp.sum(acc, axis=1, keepdims=True) + bt2_ref[...]
                    # Only 784 sigmoids per sample remain, so an exact divide is noise.
                    v = 1.0 / (1.0 + jnp.exp(-v))
                    o_ref[4 * (2 * s + s2) + (2 * t + t2)] = v


# ------------------------------ pallas wrappers ------------------------------

def _encoder(xp, params):
    bsz = xp.shape[0]
    w1 = params["w1"].reshape(9, 32)
    b1 = params["b1"].reshape(1, 32)
    w2 = params["w2"].reshape(9, 32, 64)
    b2 = params["b2"].reshape(1, 64)
    flops = bsz * 2 * (4 * 49 * 9 * 32 + 9 * 49 * 32 * 64)
    bytes_acc = 4 * (xp.size + w1.size + b1.size + w2.size + b2.size + bsz * 49 * 64)
    return pl.pallas_call(
        _encoder_kernel,
        out_shape=jax.ShapeDtypeStruct((bsz, 49, 64), jnp.float32),
        grid=(bsz,),
        in_specs=[
            pl.BlockSpec((None, 4, 49, 9), lambda b: (b, 0, 0, 0)),
            pl.BlockSpec((9, 32), lambda b: (0, 0)),          # weights resident
            pl.BlockSpec((1, 32), lambda b: (0, 0)),
            pl.BlockSpec((9, 32, 64), lambda b: (0, 0, 0)),
            pl.BlockSpec((1, 64), lambda b: (0, 0)),
        ],
        out_specs=pl.BlockSpec((None, 49, 64), lambda b: (b, 0, 0)),
        compiler_params=pltpu.CompilerParams(
            dimension_semantics=("parallel",), vmem_limit_bytes=_VMEM_LIMIT),
        cost_estimate=pl.CostEstimate(flops=flops, transcendentals=0,
                                      bytes_accessed=bytes_acc),
    )(xp, w1, b1, w2, b2)


def _latent(h_flat, eps, params, *, block_rows=256):
    bsz, kdim = h_flat.shape
    n_dec = params["wd"].shape[1]
    n_pad = _round_up(n_dec, 128)                      # 3136 -> 3200 lane-dense
    wml = jnp.concatenate([params["wmu"], params["wlv"]], axis=1)     # (3136, 40)
    bml = jnp.concatenate([params["bmu"], params["blv"]]).reshape(1, 2 * LATENT)
    wd = jnp.pad(params["wd"], ((0, 0), (0, n_pad - n_dec)))
    bd = jnp.pad(params["bd"], ((0, n_pad - n_dec),)).reshape(1, n_pad)

    b8 = _round_up(max(bsz, 8), 8)
    tb = min(block_rows, b8)
    b_pad = _round_up(b8, tb)
    if b_pad != bsz:
        h_flat = jnp.pad(h_flat, ((0, b_pad - bsz), (0, 0)))
        eps = jnp.pad(eps, ((0, b_pad - bsz), (0, 0)))

    flops = 2 * bsz * (kdim * 2 * LATENT + LATENT * n_dec)
    bytes_acc = 4 * (b_pad * (kdim + LATENT) + wml.size + wd.size
                     + b_pad * (n_pad + 4 * LATENT))
    d, mu, lv = pl.pallas_call(
        _latent_kernel,
        out_shape=(
            jax.ShapeDtypeStruct((b_pad, n_pad), jnp.float32),
            jax.ShapeDtypeStruct((b_pad, LATENT), jnp.float32),
            jax.ShapeDtypeStruct((b_pad, LATENT), jnp.float32),
        ),
        grid=(b_pad // tb,),
        in_specs=[
            pl.BlockSpec((tb, kdim), lambda i: (i, 0)),
            pl.BlockSpec((tb, LATENT), lambda i: (i, 0)),
            pl.BlockSpec((kdim, 2 * LATENT), lambda i: (0, 0)),   # resident
            pl.BlockSpec((1, 2 * LATENT), lambda i: (0, 0)),
            pl.BlockSpec((LATENT, n_pad), lambda i: (0, 0)),
            pl.BlockSpec((1, n_pad), lambda i: (0, 0)),
        ],
        out_specs=(
            pl.BlockSpec((tb, n_pad), lambda i: (i, 0)),
            pl.BlockSpec((tb, LATENT), lambda i: (i, 0)),
            pl.BlockSpec((tb, LATENT), lambda i: (i, 0)),
        ),
        compiler_params=pltpu.CompilerParams(
            dimension_semantics=("parallel",), vmem_limit_bytes=_VMEM_LIMIT),
        cost_estimate=pl.CostEstimate(flops=flops, transcendentals=bsz * LATENT,
                                      bytes_accessed=bytes_acc),
    )(h_flat, eps, wml, bml, wd, bd)
    return d[:bsz, :n_dec], mu[:bsz], lv[:bsz]


def _decoder(d_sp, params):
    bsz = d_sp.shape[0]
    wt1 = params["wt1"].reshape(9, 64, 32)
    bt1 = params["bt1"].reshape(1, 32)
    wt2 = params["wt2"].reshape(9, 1, 32)
    bt2 = params["bt2"].reshape(1, 1)
    flops = bsz * 2 * (9 * 49 * 64 * 32 + 36 * 49 * 32)
    bytes_acc = 4 * (d_sp.size + wt1.size + wt2.size + bsz * 16 * 49)
    return pl.pallas_call(
        _decoder_kernel,
        out_shape=jax.ShapeDtypeStruct((bsz, 16, 49, 1), jnp.float32),
        grid=(bsz,),
        in_specs=[
            pl.BlockSpec((None, 49, 64), lambda b: (b, 0, 0)),
            pl.BlockSpec((9, 64, 32), lambda b: (0, 0, 0)),    # weights resident
            pl.BlockSpec((1, 32), lambda b: (0, 0)),
            pl.BlockSpec((9, 1, 32), lambda b: (0, 0, 0)),
            pl.BlockSpec((1, 1), lambda b: (0, 0)),
        ],
        out_specs=pl.BlockSpec((None, 16, 49, 1), lambda b: (b, 0, 0, 0)),
        compiler_params=pltpu.CompilerParams(
            dimension_semantics=("parallel",), vmem_limit_bytes=_VMEM_LIMIT),
        cost_estimate=pl.CostEstimate(flops=flops, transcendentals=bsz * 784,
                                      bytes_accessed=bytes_acc),
    )(d_sp, wt1, bt1, wt2, bt2)


# --------------------- layout prep (pure data movement) ---------------------

def _conv1_phase_patches(x_nhwc):
    """(B,28,28,1) -> (B,4,49,9): 3x3/stride-2/pad-1 patches of the raw input,
    grouped by conv1 output parity phase (s,t) -> 2s+t; rows 7a+b; taps 3di+dj."""
    bsz = x_nhwc.shape[0]
    xp = jnp.pad(x_nhwc, ((0, 0), (1, 1), (1, 1), (0, 0)))
    taps = [xp[:, di:di + 28:2, dj:dj + 28:2, 0]
            for di in range(3) for dj in range(3)]
    p = jnp.stack(taps, axis=-1)                               # (B, 14, 14, 9)
    p = p.reshape(bsz, 7, 2, 7, 2, 9).transpose(0, 2, 4, 1, 3, 5)
    return p.reshape(bsz, 4, 49, 9)


# ---------------------------------- model -----------------------------------

def init_params(key, dtype=jnp.float32):
    def uni(k, shape, fan_in):
        bound = 1.0 / (fan_in ** 0.5)
        return jax.random.uniform(k, shape, minval=-bound, maxval=bound, dtype=dtype)

    ks = jax.random.split(key, 14)
    p = {}
    p["w1"] = uni(ks[0], (3, 3, 1, 32), 9);        p["b1"] = uni(ks[1], (32,), 9)
    p["w2"] = uni(ks[2], (3, 3, 32, 64), 288);     p["b2"] = uni(ks[3], (64,), 288)
    p["wmu"] = uni(ks[4], (3136, LATENT), 3136);   p["bmu"] = uni(ks[5], (LATENT,), 3136)
    p["wlv"] = uni(ks[6], (3136, LATENT), 3136);   p["blv"] = uni(ks[7], (LATENT,), 3136)
    p["wd"] = uni(ks[8], (LATENT, 3136), LATENT);  p["bd"] = uni(ks[9], (3136,), LATENT)
    p["wt1"] = uni(ks[10], (3, 3, 64, 32), 576);   p["bt1"] = uni(ks[11], (32,), 576)
    p["wt2"] = uni(ks[12], (3, 3, 32, 1), 288);    p["bt2"] = uni(ks[13], (1,), 288)
    return p


def vae_forward(x_nchw, params, eps):
    """x: (B,1,28,28), eps: (B,20) -> (recon (B,1,28,28), mu (B,20), logvar (B,20))."""
    bsz = x_nchw.shape[0]
    x = jnp.transpose(x_nchw, (0, 2, 3, 1))                    # NCHW -> NHWC

    xp = _conv1_phase_patches(x)                               # (B, 4, 49, 9)
    h = _encoder(xp, params)                                   # (B, 49, 64)
    d, mu, logvar = _latent(h.reshape(bsz, 49 * 64), eps, params)
    ph = _decoder(d.reshape(bsz, 49, 64), params)              # (B, 16, 49, 1)

    recon = (ph.reshape(bsz, 4, 4, 7, 7)
               .transpose(0, 3, 1, 4, 2)                       # (B, 7, 4, 7, 4)
               .reshape(bsz, 1, 28, 28))
    return recon, mu, logvar


# ------------------------------ pure-JAX reference ---------------------------

def vae_reference(x_nchw, params, eps):
    dn = ("NHWC", "HWIO", "NHWC")
    x = jnp.transpose(x_nchw, (0, 2, 3, 1))
    h1 = jax.nn.relu(lax.conv_general_dilated(
        x, params["w1"], (2, 2), ((1, 1), (1, 1)), dimension_numbers=dn) + params["b1"])
    h2 = jax.nn.relu(lax.conv_general_dilated(
        h1, params["w2"], (2, 2), ((1, 1), (1, 1)), dimension_numbers=dn) + params["b2"])
    h_flat = h2.reshape(x.shape[0], -1)
    mu = h_flat @ params["wmu"] + params["bmu"]
    logvar = h_flat @ params["wlv"] + params["blv"]
    z = mu + jnp.exp(0.5 * logvar) * eps
    d = jax.nn.relu(z @ params["wd"] + params["bd"]).reshape(x.shape[0], 7, 7, 64)
    u1 = jax.nn.relu(lax.conv_general_dilated(
        d, params["wt1"], (1, 1), ((1, 2), (1, 2)), lhs_dilation=(2, 2),
        dimension_numbers=dn) + params["bt1"])
    u2 = jax.nn.sigmoid(lax.conv_general_dilated(
        u1, params["wt2"], (1, 1), ((1, 2), (1, 2)), lhs_dilation=(2, 2),
        dimension_numbers=dn) + params["bt2"])
    return jnp.transpose(u2, (0, 3, 1, 2)), mu, logvar


if __name__ == "__main__":
    key = jax.random.PRNGKey(0)
    k_x, k_p, k_eps = jax.random.split(key, 3)

    batch = 2
    x = jax.random.normal(k_x, (batch, 1, 28, 28), dtype=jnp.float32)
    params = init_params(k_p)
    eps = jax.random.normal(k_eps, (batch, LATENT), dtype=jnp.float32)

    recon, mu, logvar = jax.block_until_ready(jax.jit(vae_forward)(x, params, eps))

    r_ref, mu_ref, lv_ref = vae_reference(x, params, eps)
    assert recon.shape == (batch, 1, 28, 28)
    assert mu.shape == (batch, LATENT) and logvar.shape == (batch, LATENT)
    assert jnp.allclose(mu, mu_ref, atol=2e-3, rtol=2e-3)
    assert jnp.allclose(logvar, lv_ref, atol=2e-3, rtol=2e-3)
    assert jnp.allclose(recon, r_ref, atol=2e-3, rtol=2e-3)

    print("KERNEL_OK")
</pallas_src>

<mosaic_0001>
module attributes {stable_mosaic.version = 11 : i64} {
  func.func @_encoder_kernel(%arg0: i32, %arg1: memref<1x4x49x9xf32, #tpu.memory_space<vmem>>, %arg2: memref<9x32xf32, #tpu.memory_space<vmem>>, %arg3: memref<1x32xf32, #tpu.memory_space<vmem>>, %arg4: memref<9x32x64xf32, #tpu.memory_space<vmem>>, %arg5: memref<1x64xf32, #tpu.memory_space<vmem>>, %arg6: memref<1x49x64xf32, #tpu.memory_space<vmem>>) attributes {dimension_semantics = [#tpu.dimension_semantics<parallel>], iteration_bounds = array<i64: 2>, scalar_prefetch = 0 : i64, scratch_operands = 0 : i64, tpu.core_type = #tpu.core_type<tc>, window_params = [{transform_indices = @transform_0, window_bounds = array<i64: 1, 4, 49, 9>}, {pipeline_mode = #tpu.pipeline_mode<synchronous>, transform_indices = @transform_1, window_bounds = array<i64: 9, 32>}, {pipeline_mode = #tpu.pipeline_mode<synchronous>, transform_indices = @transform_2, window_bounds = array<i64: 1, 32>}, {pipeline_mode = #tpu.pipeline_mode<synchronous>, transform_indices = @transform_3, window_bounds = array<i64: 9, 32, 64>}, {pipeline_mode = #tpu.pipeline_mode<synchronous>, transform_indices = @transform_4, window_bounds = array<i64: 1, 64>}, {transform_indices = @transform_5, window_bounds = array<i64: 1, 49, 64>}]} {
    %0 = tpu.iota {dimensions = array<i32: 0>} : vector<49x1xi32>
    %c0 = arith.constant 0 : index
    %c0_0 = arith.constant 0 : index
    %c0_1 = arith.constant 0 : index
    %c0_2 = arith.constant 0 : index
    %1 = vector.load %arg1[%c0, %c0_0, %c0_1, %c0_2] : memref<1x4x49x9xf32, #tpu.memory_space<vmem>>, vector<1x1x49x9xf32>
    %2 = vector.shape_cast %1 : vector<1x1x49x9xf32> to vector<49x9xf32>
    %c0_3 = arith.constant 0 : index
    %c0_4 = arith.constant 0 : index
    %3 = vector.load %arg2[%c0_3, %c0_4] : memref<9x32xf32, #tpu.memory_space<vmem>>, vector<9x32xf32>
    %cst = arith.constant dense<0.000000e+00> : vector<49x32xf32>
    %4 = tpu.matmul %2, %3, %cst {dimension_numbers = #tpu.dot_dimension_numbers<[1], [0], [0], [1], [0, 0, 1, 1], [], []>} : vector<49x9xf32>, vector<9x32xf32>, vector<49x32xf32> -> vector<49x32xf32>
    %c0_5 = arith.constant 0 : index
    %c0_6 = arith.constant 0 : index
    %5 = vector.load %arg3[%c0_5, %c0_6] : memref<1x32xf32, #tpu.memory_space<vmem>>, vector<1x32xf32>
    %6 = vector.broadcast %5 : vector<1x32xf32> to vector<49x32xf32>
    %7 = arith.addf %4, %6 : vector<49x32xf32>
    %cst_7 = arith.constant 0.000000e+00 : f32
    %8 = vector.broadcast %cst_7 : f32 to vector<49x32xf32>
    %9 = arith.maximumf %7, %8 : vector<49x32xf32>
    %c0_8 = arith.constant 0 : index
    %c1 = arith.constant 1 : index
    %c0_9 = arith.constant 0 : index
    %c0_10 = arith.constant 0 : index
    %10 = vector.load %arg1[%c0_8, %c1, %c0_9, %c0_10] : memref<1x4x49x9xf32, #tpu.memory_space<vmem>>, vector<1x1x49x9xf32>
    %11 = vector.shape_cast %10 : vector<1x1x49x9xf32> to vector<49x9xf32>
    %c0_11 = arith.constant 0 : index
    %c0_12 = arith.constant 0 : index
    %12 = vector.load %arg2[%c0_11, %c0_12] : memref<9x32xf32, #tpu.memory_space<vmem>>, vector<9x32xf32>
    %cst_13 = arith.constant dense<0.000000e+00> : vector<49x32xf32>
    %13 = tpu.matmul %11, %12, %cst_13 {dimension_numbers = #tpu.dot_dimension_numbers<[1], [0], [0], [1], [0, 0, 1, 1], [], []>} : vector<49x9xf32>, vector<9x32xf32>, vector<49x32xf32> -> vector<49x32xf32>
    %c0_14 = arith.constant 0 : index
    %c0_15 = arith.constant 0 : index
    %14 = vector.load %arg3[%c0_14, %c0_15] : memref<1x32xf32, #tpu.memory_space<vmem>>, vector<1x32xf32>
    %15 = vector.broadcast %14 : vector<1x32xf32> to vector<49x32xf32>
    %16 = arith.addf %13, %15 : vector<49x32xf32>
    %cst_16 = arith.constant 0.000000e+00 : f32
    %17 = vector.broadcast %cst_16 : f32 to vector<49x32xf32>
    %18 = arith.maximumf %16, %17 : vector<49x32xf32>
    %c0_17 = arith.constant 0 : index
    %c2 = arith.constant 2 : index
    %c0_18 = arith.constant 0 : index
    %c0_19 = arith.constant 0 : index
    %19 = vector.load %arg1[%c0_17, %c2, %c0_18, %c0_19] : memref<1x4x49x9xf32, #tpu.memory_space<vmem>>, vector<1x1x49x9xf32>
    %20 = vector.shape_cast %19 : vector<1x1x49x9xf32> to vector<49x9xf32>
    %c0_20 = arith.constant 0 : index
    %c0_21 = arith.constant 0 : index
    %21 = vector.load %arg2[%c0_20, %c0_21] : memref<9x32xf32, #tpu.memory_space<vmem>>, vector<9x32xf32>
    %cst_22 = arith.constant dense<0.000000e+00> : vector<49x32xf32>
    %22 = tpu.matmul %20, %21, %cst_22 {dimension_numbers = #tpu.dot_dimension_numbers<[1], [0], [0], [1], [0, 0, 1, 1], [], []>} : vector<49x9xf32>, vector<9x32xf32>, vector<49x32xf32> -> vector<49x32xf32>
    %c0_23 = arith.constant 0 : index
    %c0_24 = arith.constant 0 : index
    %23 = vector.load %arg3[%c0_23, %c0_24] : memref<1x32xf32, #tpu.memory_space<vmem>>, vector<1x32xf32>
    %24 = vector.broadcast %23 : vector<1x32xf32> to vector<49x32xf32>
    %25 = arith.addf %22, %24 : vector<49x32xf32>
    %cst_25 = arith.constant 0.000000e+00 : f32
    %26 = vector.broadcast %cst_25 : f32 to vector<49x32xf32>
    %27 = arith.maximumf %25, %26 : vector<49x32xf32>
    %c0_26 = arith.constant 0 : index
    %c3 = arith.constant 3 : index
    %c0_27 = arith.constant 0 : index
    %c0_28 = arith.constant 0 : index
    %28 = vector.load %arg1[%c0_26, %c3, %c0_27, %c0_28] : memref<1x4x49x9xf32, #tpu.memory_space<vmem>>, vector<1x1x49x9xf32>
    %29 = vector.shape_cast %28 : vector<1x1x49x9xf32> to vector<49x9xf32>
    %c0_29 = arith.constant 0 : index
    %c0_30 = arith.constant 0 : index
    %30 = vector.load %arg2[%c0_29, %c0_30] : memref<9x32xf32, #tpu.memory_space<vmem>>, vector<9x32xf32>
    %cst_31 = arith.constant dense<0.000000e+00> : vector<49x32xf32>
    %31 = tpu.matmul %29, %30, %cst_31 {dimension_numbers = #tpu.dot_dimension_numbers<[1], [0], [0], [1], [0, 0, 1, 1], [], []>} : vector<49x9xf32>, vector<9x32xf32>, vector<49x32xf32> -> vector<49x32xf32>
    %c0_32 = arith.constant 0 : index
    %c0_33 = arith.constant 0 : index
    %32 = vector.load %arg3[%c0_32, %c0_33] : memref<1x32xf32, #tpu.memory_space<vmem>>, vector<1x32xf32>
    %33 = vector.broadcast %32 : vector<1x32xf32> to vector<49x32xf32>
    %34 = arith.addf %31, %33 : vector<49x32xf32>
    %cst_34 = arith.constant 0.000000e+00 : f32
    %35 = vector.broadcast %cst_34 : f32 to vector<49x32xf32>
    %36 = arith.maximumf %34, %35 : vector<49x32xf32>
    %cst_35 = arith.constant 0.000000e+00 : f32
    %37 = vector.broadcast %cst_35 : f32 to vector<49x64xf32>
    %cst_36 = arith.constant 0.000000e+00 : f32
    %38 = vector.broadcast %cst_36 : f32 to vector<7x32xf32>
    %39 = vector.extract_strided_slice %36 {offsets = [0, 0], sizes = [42, 32], strides = [1, 1]} : vector<49x32xf32> to vector<42x32xf32>
    %40 = tpu.concatenate %38, %39 in 0 : vector<7x32xf32>, vector<42x32xf32> -> vector<49x32xf32>
    %cst_37 = arith.constant 0.000000e+00 : f32
    %41 = vector.broadcast %cst_37 : f32 to vector<1x32xf32>
    %42 = vector.extract_strided_slice %40 {offsets = [0, 0], sizes = [48, 32], strides = [1, 1]} : vector<49x32xf32> to vector<48x32xf32>
    %43 = tpu.concatenate %41, %42 in 0 : vector<1x32xf32>, vector<48x32xf32> -> vector<49x32xf32>
    %c7_i32 = arith.constant 7 : i32
    %c0_i32 = arith.constant 0 : i32
    %44 = arith.cmpi eq, %c7_i32, %c0_i32 : i32
    %c1_i32 = arith.constant 1 : i32
    %45 = arith.select %44, %c1_i32, %c7_i32 : i32
    %46 = vector.broadcast %45 : i32 to vector<49x1xi32>
    %47 = arith.remsi %0, %46 : vector<49x1xi32>
    %c0_i32_38 = arith.constant 0 : i32
    %48 = vector.broadcast %c0_i32_38 : i32 to vector<49x1xi32>
    %49 = arith.cmpi ne, %47, %48 : vector<49x1xi32>
    %c0_i32_39 = arith.constant 0 : i32
    %50 = vector.broadcast %c0_i32_39 : i32 to vector<49x1xi32>
    %51 = arith.cmpi slt, %47, %50 : vector<49x1xi32>
    %c0_i32_40 = arith.constant 0 : i32
    %52 = arith.cmpi slt, %45, %c0_i32_40 : i32
    %53 = vector.broadcast %52 : i1 to vector<49x1xi1>
    %54 = vector.broadcast %53 : vector<49x1xi1> to vector<49x1xi1>
    %55 = arith.xori %51, %54 : vector<49x1xi1>
    %56 = arith.andi %55, %49 : vector<49x1xi1>
    %57 = vector.broadcast %45 : i32 to vector<49x1xi32>
    %58 = arith.addi %47, %57 : vector<49x1xi32>
    %59 = arith.select %56, %58, %47 : vector<49x1xi1>, vector<49x1xi32>
    %c1_i32_41 = arith.constant 1 : i32
    %60 = vector.broadcast %c1_i32_41 : i32 to vector<49x1xi32>
    %61 = arith.cmpi sge, %59, %60 : vector<49x1xi32>
    %cst_42 = arith.constant 0.000000e+00 : f32
    %62 = vector.shape_cast %61 : vector<49x1xi1> to vector<49x1xi1>
    %63 = vector.broadcast %62 : vector<49x1xi1> to vector<49x32xi1>
    %64 = vector.broadcast %cst_42 : f32 to vector<49x32xf32>
    %65 = arith.select %63, %43, %64 : vector<49x32xi1>, vector<49x32xf32>
    %c0_43 = arith.constant 0 : index
    %c0_44 = arith.constant 0 : index
    %c0_45 = arith.constant 0 : index
    %66 = vector.load %arg4[%c0_43, %c0_44, %c0_45] : memref<9x32x64xf32, #tpu.memory_space<vmem>>, vector<1x32x64xf32>
    %67 = vector.shape_cast %66 : vector<1x32x64xf32> to vector<32x64xf32>
    %cst_46 = arith.constant dense<0.000000e+00> : vector<49x64xf32>
    %68 = tpu.matmul %65, %67, %cst_46 {dimension_numbers = #tpu.dot_dimension_numbers<[1], [0], [0], [1], [0, 0, 1, 1], [], []>} : vector<49x32xf32>, vector<32x64xf32>, vector<49x64xf32> -> vector<49x64xf32>
    %69 = arith.addf %37, %68 : vector<49x64xf32>
    %cst_47 = arith.constant 0.000000e+00 : f32
    %70 = vector.broadcast %cst_47 : f32 to vector<7x32xf32>
    %71 = vector.extract_strided_slice %27 {offsets = [0, 0], sizes = [42, 32], strides = [1, 1]} : vector<49x32xf32> to vector<42x32xf32>
    %72 = tpu.concatenate %70, %71 in 0 : vector<7x32xf32>, vector<42x32xf32> -> vector<49x32xf32>
    %c1_48 = arith.constant 1 : index
    %c0_49 = arith.constant 0 : index
    %c0_50 = arith.constant 0 : index
    %73 = vector.load %arg4[%c1_48, %c0_49, %c0_50] : memref<9x32x64xf32, #tpu.memory_space<vmem>>, vector<1x32x64xf32>
    %74 = vector.shape_cast %73 : vector<1x32x64xf32> to vector<32x64xf32>
    %cst_51 = arith.constant dense<0.000000e+00> : vector<49x64xf32>
    %75 = tpu.matmul %72, %74, %cst_51 {dimension_numbers = #tpu.dot_dimension_numbers<[1], [0], [0], [1], [0, 0, 1, 1], [], []>} : vector<49x32xf32>, vector<32x64xf32>, vector<49x64xf32> -> vector<49x64xf32>
    %76 = arith.addf %69, %75 : vector<49x64xf32>
    %cst_52 = arith.constant 0.000000e+00 : f32
    %77 = vector.broadcast %cst_52 : f32 to vector<7x32xf32>
    %78 = vector.extract_strided_slice %36 {offsets = [0, 0], sizes = [42, 32], strides = [1, 1]} : vector<49x32xf32> to vector<42x32xf32>
    %79 = tpu.concatenate %77, %78 in 0 : vector<7x32xf32>, vector<42x32xf32> -> vector<49x32xf32>
    %c2_53 = arith.constant 2 : index
    %c0_54 = arith.constant 0 : index
    %c0_55 = arith.constant 0 : index
    %80 = vector.load %arg4[%c2_53, %c0_54, %c0_55] : memref<9x32x64xf32, #tpu.memory_space<vmem>>, vector<1x32x64xf32>
    %81 = vector.shape_cast %80 : vector<1x32x64xf32> to vector<32x64xf32>
    %cst_56 = arith.constant dense<0.000000e+00> : vector<49x64xf32>
    %82 = tpu.matmul %79, %81, %cst_56 {dimension_numbers = #tpu.dot_dimension_numbers<[1], [0], [0], [1], [0, 0, 1, 1], [], []>} : vector<49x32xf32>, vector<32x64xf32>, vector<49x64xf32> -> vector<49x64xf32>
    %83 = arith.addf %76, %82 : vector<49x64xf32>
    %cst_57 = arith.constant 0.000000e+00 : f32
    %84 = vector.broadcast %cst_57 : f32 to vector<1x32xf32>
    %85 = vector.extract_strided_slice %18 {offsets = [0, 0], sizes = [48, 32], strides = [1, 1]} : vector<49x32xf32> to vector<48x32xf32>
    %86 = tpu.concatenate %84, %85 in 0 : vector<1x32xf32>, vector<48x32xf32> -> vector<49x32xf32>
    %c7_i32_58 = arith.constant 7 : i32
    %c0_i32_59 = arith.constant 0 : i32
    %87 = arith.cmpi eq, %c7_i32_58, %c0_i32_59 : i32
    %c1_i32_60 = arith.constant 1 : i32
    %88 = arith.select %87, %c1_i32_60, %c7_i32_58 : i32
    %89 = vector.broadcast %88 : i32 to vector<49x1xi32>
    %90 = arith.remsi %0, %89 : vector<49x1xi32>
    %c0_i32_61 = arith.constant 0 : i32
    %91 = vector.broadcast %c0_i32_61 : i32 to vector<49x1xi32>
    %92 = arith.cmpi ne, %90, %91 : vector<49x1xi32>
    %c0_i32_62 = arith.constant 0 : i32
    %93 = vector.broadcast %c0_i32_62 : i32 to vector<49x1xi32>
    %94 = arith.cmpi slt, %90, %93 : vector<49x1xi32>
    %c0_i32_63 = arith.constant 0 : i32
    %95 = arith.cmpi slt, %88, %c0_i32_63 : i32
    %96 = vector.broadcast %95 : i1 to vector<49x1xi1>
    %97 = vector.broadcast %96 : vector<49x1xi1> to vector<49x1xi1>
    %98 = arith.xori %94, %97 : vector<49x1xi1>
    %99 = arith.andi %98, %92 : vector<49x1xi1>
    %100 = vector.broadcast %88 : i32 to vector<49x1xi32>
    %101 = arith.addi %90, %100 : vector<49x1xi32>
    %102 = arith.select %99, %101, %90 : vector<49x1xi1>, vector<49x1xi32>
    %c1_i32_64 = arith.constant 1 : i32
    %103 = vector.broadcast %c1_i32_64 : i32 to vector<49x1xi32>
    %104 = arith.cmpi sge, %102, %103 : vector<49x1xi32>
    %cst_65 = arith.constant 0.000000e+00 : f32
    %105 = vector.shape_cast %104 : vector<49x1xi1> to vector<49x1xi1>
    %106 = vector.broadcast %105 : vector<49x1xi1> to vector<49x32xi1>
    %107 = vector.broadcast %cst_65 : f32 to vector<49x32xf32>
    %108 = arith.select %106, %86, %107 : vector<49x32xi1>, vector<49x32xf32>
    %c3_66 = arith.constant 3 : index
    %c0_67 = arith.constant 0 : index
    %c0_68 = arith.constant 0 : index
    %109 = vector.load %arg4[%c3_66, %c0_67, %c0_68] : memref<9x32x64xf32, #tpu.memory_space<vmem>>, vector<1x32x64xf32>
    %110 = vector.shape_cast %109 : vector<1x32x64xf32> to vector<32x64xf32>
    %cst_69 = arith.constant dense<0.000000e+00> : vector<49x64xf32>
    %111 = tpu.matmul %108, %110, %cst_69 {dimension_numbers = #tpu.dot_dimension_numbers<[1], [0], [0], [1], [0, 0, 1, 1], [], []>} : vector<49x32xf32>, vector<32x64xf32>, vector<49x64xf32> -> vector<49x64xf32>
    %112 = arith.addf %83, %111 : vector<49x64xf32>
    %c4 = arith.constant 4 : index
    %c0_70 = arith.constant 0 : index
    %c0_71 = arith.constant 0 : index
    %113 = vector.load %arg4[%c4, %c0_70, %c0_71] : memref<9x32x64xf32, #tpu.memory_space<vmem>>, vector<1x32x64xf32>
    %114 = vector.shape_cast %113 : vector<1x32x64xf32> to vector<32x64xf32>
    %cst_72 = arith.constant dense<0.000000e+00> : vector<49x64xf32>
    %115 = tpu.matmul %9, %114, %cst_72 {dimension_numbers = #tpu.dot_dimension_numbers<[1], [0], [0], [1], [0, 0, 1, 1], [], []>} : vector<49x32xf32>, vector<32x64xf32>, vector<49x64xf32> -> vector<49x64xf32>
    %116 = arith.addf %112, %115 : vector<49x64xf32>
    %c5 = arith.constant 5 : index
    %c0_73 = arith.constant 0 : index
    %c0_74 = arith.constant 0 : index
    %117 = vector.load %arg4[%c5, %c0_73, %c0_74] : memref<9x32x64xf32, #tpu.memory_space<vmem>>, vector<1x32x64xf32>
    %118 = vector.shape_cast %117 : vector<1x32x64xf32> to vector<32x64xf32>
    %cst_75 = arith.constant dense<0.000000e+00> : vector<49x64xf32>
    %119 = tpu.matmul %18, %118, %cst_75 {dimension_numbers = #tpu.dot_dimension_numbers<[1], [0], [0], [1], [0, 0, 1, 1], [], []>} : vector<49x32xf32>, vector<32x64xf32>, vector<49x64xf32> -> vector<49x64xf32>
    %120 = arith.addf %116, %119 : vector<49x64xf32>
    %cst_76 = arith.constant 0.000000e+00 : f32
    %121 = vector.broadcast %cst_76 : f32 to vector<1x32xf32>
    %122 = vector.extract_strided_slice %36 {offsets = [0, 0], sizes = [48, 32], strides = [1, 1]} : vector<49x32xf32> to vector<48x32xf32>
    %123 = tpu.concatenate %121, %122 in 0 : vector<1x32xf32>, vector<48x32xf32> -> vector<49x32xf32>
    %c7_i32_77 = arith.constant 7 : i32
    %c0_i32_78 = arith.constant 0 : i32
    %124 = arith.cmpi eq, %c7_i32_77, %c0_i32_78 : i32
    %c1_i32_79 = arith.constant 1 : i32
    %125 = arith.select %124, %c1_i32_79, %c7_i32_77 : i32
    %126 = vector.broadcast %125 : i32 to vector<49x1xi32>
    %127 = arith.remsi %0, %126 : vector<49x1xi32>
    %c0_i32_80 = arith.constant 0 : i32
    %128 = vector.broadcast %c0_i32_80 : i32 to vector<49x1xi32>
    %129 = arith.cmpi ne, %127, %128 : vector<49x1xi32>
    %c0_i32_81 = arith.constant 0 : i32
    %130 = vector.broadcast %c0_i32_81 : i32 to vector<49x1xi32>
    %131 = arith.cmpi slt, %127, %130 : vector<49x1xi32>
    %c0_i32_82 = arith.constant 0 : i32
    %132 = arith.cmpi slt, %125, %c0_i32_82 : i32
    %133 = vector.broadcast %132 : i1 to vector<49x1xi1>
    %134 = vector.broadcast %133 : vector<49x1xi1> to vector<49x1xi1>
    %135 = arith.xori %131, %134 : vector<49x1xi1>
    %136 = arith.andi %135, %129 : vector<49x1xi1>
    %137 = vector.broadcast %125 : i32 to vector<49x1xi32>
    %138 = arith.addi %127, %137 : vector<49x1xi32>
    %139 = arith.select %136, %138, %127 : vector<49x1xi1>, vector<49x1xi32>
    %c1_i32_83 = arith.constant 1 : i32
    %140 = vector.broadcast %c1_i32_83 : i32 to vector<49x1xi32>
    %141 = arith.cmpi sge, %139, %140 : vector<49x1xi32>
    %cst_84 = arith.constant 0.000000e+00 : f32
    %142 = vector.shape_cast %141 : vector<49x1xi1> to vector<49x1xi1>
    %143 = vector.broadcast %142 : vector<49x1xi1> to vector<49x32xi1>
    %144 = vector.broadcast %cst_84 : f32 to vector<49x32xf32>
    %145 = arith.select %143, %123, %144 : vector<49x32xi1>, vector<49x32xf32>
    %c6 = arith.constant 6 : index
    %c0_85 = arith.constant 0 : index
    %c0_86 = arith.constant 0 : index
    %146 = vector.load %arg4[%c6, %c0_85, %c0_86] : memref<9x32x64xf32, #tpu.memory_space<vmem>>, vector<1x32x64xf32>
    %147 = vector.shape_cast %146 : vector<1x32x64xf32> to vector<32x64xf32>
    %cst_87 = arith.constant dense<0.000000e+00> : vector<49x64xf32>
    %148 = tpu.matmul %145, %147, %cst_87 {dimension_numbers = #tpu.dot_dimension_numbers<[1], [0], [0], [1], [0, 0, 1, 1], [], []>} : vector<49x32xf32>, vector<32x64xf32>, vector<49x64xf32> -> vector<49x64xf32>
    %149 = arith.addf %120, %148 : vector<49x64xf32>
    %c7 = arith.constant 7 : index
    %c0_88 = arith.constant 0 : index
    %c0_89 = arith.constant 0 : index
    %150 = vector.load %arg4[%c7, %c0_88, %c0_89] : memref<9x32x64xf32, #tpu.memory_space<vmem>>, vector<1x32x64xf32>
    %151 = vector.shape_cast %150 : vector<1x32x64xf32> to vector<32x64xf32>
    %cst_90 = arith.constant dense<0.000000e+00> : vector<49x64xf32>
    %152 = tpu.matmul %27, %151, %cst_90 {dimension_numbers = #tpu.dot_dimension_numbers<[1], [0], [0], [1], [0, 0, 1, 1], [], []>} : vector<49x32xf32>, vector<32x64xf32>, vector<49x64xf32> -> vector<49x64xf32>
    %153 = arith.addf %149, %152 : vector<49x64xf32>
    %c8 = arith.constant 8 : index
    %c0_91 = arith.constant 0 : index
    %c0_92 = arith.constant 0 : index
    %154 = vector.load %arg4[%c8, %c0_91, %c0_92] : memref<9x32x64xf32, #tpu.memory_space<vmem>>, vector<1x32x64xf32>
    %155 = vector.shape_cast %154 : vector<1x32x64xf32> to vector<32x64xf32>
    %cst_93 = arith.constant dense<0.000000e+00> : vector<49x64xf32>
    %156 = tpu.matmul %36, %155, %cst_93 {dimension_numbers = #tpu.dot_dimension_numbers<[1], [0], [0], [1], [0, 0, 1, 1], [], []>} : vector<49x32xf32>, vector<32x64xf32>, vector<49x64xf32> -> vector<49x64xf32>
    %157 = arith.addf %153, %156 : vector<49x64xf32>
    %c0_94 = arith.constant 0 : index
    %c0_95 = arith.constant 0 : index
    %158 = vector.load %arg5[%c0_94, %c0_95] : memref<1x64xf32, #tpu.memory_space<vmem>>, vector<1x64xf32>
    %159 = vector.broadcast %158 : vector<1x64xf32> to vector<49x64xf32>
    %160 = arith.addf %157, %159 : vector<49x64xf32>
    %cst_96 = arith.constant 0.000000e+00 : f32
    %161 = vector.broadcast %cst_96 : f32 to vector<49x64xf32>
    %162 = arith.maximumf %160, %161 : vector<49x64xf32>
    %c0_97 = arith.constant 0 : index
    %c0_98 = arith.constant 0 : index
    %c0_99 = arith.constant 0 : index
    %163 = vector.load %arg6[%c0_97, %c0_98, %c0_99] : memref<1x49x64xf32, #tpu.memory_space<vmem>>, vector<1x49x64xf32>
    %164 = vector.shape_cast %163 : vector<1x49x64xf32> to vector<49x64xf32>
    %165 = vector.shape_cast %162 : vector<49x64xf32> to vector<1x49x64xf32>
    tpu.vector_store %arg6[%c0_97, %c0_98, %c0_99], %165 {strides = array<i32>} : memref<1x49x64xf32, #tpu.memory_space<vmem>>, vector<1x49x64xf32>,
    return
  }
  func.func @transform_0(%arg0: i32) -> (i32, i32, i32, i32) {
    %c0_i32 = arith.constant 0 : i32
    %c0_i32_0 = arith.constant 0 : i32
    %c0_i32_1 = arith.constant 0 : i32
    %c0_i32_2 = arith.constant 0 : i32
    return %arg0, %c0_i32, %c0_i32_0, %c0_i32_1 : i32, i32, i32, i32
  }
  func.func @transform_1(%arg0: i32) -> (i32, i32) {
    %c0_i32 = arith.constant 0 : i32
    %c0_i32_0 = arith.constant 0 : i32
    %c0_i32_1 = arith.constant 0 : i32
    return %c0_i32, %c0_i32_0 : i32, i32
  }
  func.func @transform_2(%arg0: i32) -> (i32, i32) {
    %c0_i32 = arith.constant 0 : i32
    %c0_i32_0 = arith.constant 0 : i32
    %c0_i32_1 = arith.constant 0 : i32
    return %c0_i32, %c0_i32_0 : i32, i32
  }
  func.func @transform_3(%arg0: i32) -> (i32, i32, i32) {
    %c0_i32 = arith.constant 0 : i32
    %c0_i32_0 = arith.constant 0 : i32
    %c0_i32_1 = arith.constant 0 : i32
    %c0_i32_2 = arith.constant 0 : i32
    return %c0_i32, %c0_i32_0, %c0_i32_1 : i32, i32, i32
  }
  func.func @transform_4(%arg0: i32) -> (i32, i32) {
    %c0_i32 = arith.constant 0 : i32
    %c0_i32_0 = arith.constant 0 : i32
    %c0_i32_1 = arith.constant 0 : i32
    return %c0_i32, %c0_i32_0 : i32, i32
  }
  func.func @transform_5(%arg0: i32) -> (i32, i32, i32) {
    %c0_i32 = arith.constant 0 : i32
    %c0_i32_0 = arith.constant 0 : i32
    %c0_i32_1 = arith.constant 0 : i32
    return %arg0, %c0_i32, %c0_i32_0 : i32, i32, i32
  }
}

module attributes {stable_mosaic.version = 11 : i64} {
  func.func @_latent_kernel(%arg0: i32, %arg1: memref<8x3136xf32, #tpu.memory_space<vmem>>, %arg2: memref<8x20xf32, #tpu.memory_space<vmem>>, %arg3: memref<3136x40xf32, #tpu.memory_space<vmem>>, %arg4: memref<1x40xf32, #tpu.memory_space<vmem>>, %arg5: memref<20x3200xf32, #tpu.memory_space<vmem>>, %arg6: memref<1x3200xf32, #tpu.memory_space<vmem>>, %arg7: memref<8x3200xf32, #tpu.memory_space<vmem>>, %arg8: memref<8x20xf32, #tpu.memory_space<vmem>>, %arg9: memref<8x20xf32, #tpu.memory_space<vmem>>) attributes {dimension_semantics = [#tpu.dimension_semantics<parallel>], iteration_bounds = array<i64: 1>, scalar_prefetch = 0 : i64, scratch_operands = 0 : i64, tpu.core_type = #tpu.core_type<tc>, window_params = [{transform_indices = @transform_0, window_bounds = array<i64: 8, 3136>}, {transform_indices = @transform_1, window_bounds = array<i64: 8, 20>}, {pipeline_mode = #tpu.pipeline_mode<synchronous>, transform_indices = @transform_2, window_bounds = array<i64: 3136, 40>}, {pipeline_mode = #tpu.pipeline_mode<synchronous>, transform_indices = @transform_3, window_bounds = array<i64: 1, 40>}, {pipeline_mode = #tpu.pipeline_mode<synchronous>, transform_indices = @transform_4, window_bounds = array<i64: 20, 3200>}, {pipeline_mode = #tpu.pipeline_mode<synchronous>, transform_indices = @transform_5, window_bounds = array<i64: 1, 3200>}, {transform_indices = @transform_6, window_bounds = array<i64: 8, 3200>}, {transform_indices = @transform_7, window_bounds = array<i64: 8, 20>}, {transform_indices = @transform_8, window_bounds = array<i64: 8, 20>}]} {
    %c0 = arith.constant 0 : index
    %c0_0 = arith.constant 0 : index
    %0 = vector.load %arg1[%c0, %c0_0] : memref<8x3136xf32, #tpu.memory_space<vmem>>, vector<8x3136xf32>
    %c0_1 = arith.constant 0 : index
    %c0_2 = arith.constant 0 : index
    %1 = vector.load %arg3[%c0_1, %c0_2] : memref<3136x40xf32, #tpu.memory_space<vmem>>, vector<3136x40xf32>
    %cst = arith.constant dense<0.000000e+00> : vector<8x40xf32>
    %2 = tpu.matmul %0, %1, %cst {dimension_numbers = #tpu.dot_dimension_numbers<[1], [0], [0], [1], [0, 0, 1, 1], [], []>} : vector<8x3136xf32>, vector<3136x40xf32>, vector<8x40xf32> -> vector<8x40xf32>
    %c0_3 = arith.constant 0 : index
    %c0_4 = arith.constant 0 : index
    %3 = vector.load %arg4[%c0_3, %c0_4] : memref<1x40xf32, #tpu.memory_space<vmem>>, vector<1x40xf32>
    %4 = vector.broadcast %3 : vector<1x40xf32> to vector<8x40xf32>
    %5 = arith.addf %2, %4 : vector<8x40xf32>
    %6 = vector.extract_strided_slice %5 {offsets = [0, 0], sizes = [8, 20], strides = [1, 1]} : vector<8x40xf32> to vector<8x20xf32>
    %7 = vector.extract_strided_slice %5 {offsets = [0, 20], sizes = [8, 20], strides = [1, 1]} : vector<8x40xf32> to vector<8x20xf32>
    %cst_5 = arith.constant 5.000000e-01 : f32
    %8 = vector.broadcast %cst_5 : f32 to vector<8x20xf32>
    %9 = arith.mulf %8, %7 : vector<8x20xf32>
    %10 = math.exp %9 : vector<8x20xf32>
    %c0_6 = arith.constant 0 : index
    %c0_7 = arith.constant 0 : index
    %11 = vector.load %arg2[%c0_6, %c0_7] : memref<8x20xf32, #tpu.memory_space<vmem>>, vector<8x20xf32>
    %12 = arith.mulf %10, %11 : vector<8x20xf32>
    %13 = arith.addf %6, %12 : vector<8x20xf32>
    %c0_8 = arith.constant 0 : index
    %c0_9 = arith.constant 0 : index
    %14 = vector.load %arg5[%c0_8, %c0_9] : memref<20x3200xf32, #tpu.memory_space<vmem>>, vector<20x3200xf32>
    %cst_10 = arith.constant dense<0.000000e+00> : vector<8x3200xf32>
    %15 = tpu.matmul %13, %14, %cst_10 {dimension_numbers = #tpu.dot_dimension_numbers<[1], [0], [0], [1], [0, 0, 1, 1], [], []>} : vector<8x20xf32>, vector<20x3200xf32>, vector<8x3200xf32> -> vector<8x3200xf32>
    %c0_11 = arith.constant 0 : index
    %c0_12 = arith.constant 0 : index
    %16 = vector.load %arg6[%c0_11, %c0_12] : memref<1x3200xf32, #tpu.memory_space<vmem>>, vector<1x3200xf32>
    %17 = vector.broadcast %16 : vector<1x3200xf32> to vector<8x3200xf32>
    %18 = arith.addf %15, %17 : vector<8x3200xf32>
    %cst_13 = arith.constant 0.000000e+00 : f32
    %19 = vector.broadcast %cst_13 : f32 to vector<8x3200xf32>
    %20 = arith.maximumf %18, %19 : vector<8x3200xf32>
    %c0_14 = arith.constant 0 : index
    %c0_15 = arith.constant 0 : index
    %21 = vector.load %arg7[%c0_14, %c0_15] : memref<8x3200xf32, #tpu.memory_space<vmem>>, vector<8x3200xf32>
    tpu.vector_store %arg7[%c0_14, %c0_15], %20 {strides = array<i32>} : memref<8x3200xf32, #tpu.memory_space<vmem>>, vector<8x3200xf32>,
    %c0_16 = arith.constant 0 : index
    %c0_17 = arith.constant 0 : index
    %22 = vector.load %arg8[%c0_16, %c0_17] : memref<8x20xf32, #tpu.memory_space<vmem>>, vector<8x20xf32>
    tpu.vector_store %arg8[%c0_16, %c0_17], %6 {strides = array<i32>} : memref<8x20xf32, #tpu.memory_space<vmem>>, vector<8x20xf32>,
    %c0_18 = arith.constant 0 : index
    %c0_19 = arith.constant 0 : index
    %23 = vector.load %arg9[%c0_18, %c0_19] : memref<8x20xf32, #tpu.memory_space<vmem>>, vector<8x20xf32>
    tpu.vector_store %arg9[%c0_18, %c0_19], %7 {strides = array<i32>} : memref<8x20xf32, #tpu.memory_space<vmem>>, vector<8x20xf32>,
    return
  }
  func.func @transform_0(%arg0: i32) -> (i32, i32) {
    %c0_i32 = arith.constant 0 : i32
    %c0_i32_0 = arith.constant 0 : i32
    return %arg0, %c0_i32 : i32, i32
  }
  func.func @transform_1(%arg0: i32) -> (i32, i32) {
    %c0_i32 = arith.constant 0 : i32
    %c0_i32_0 = arith.constant 0 : i32
    return %arg0, %c0_i32 : i32, i32
  }
  func.func @transform_2(%arg0: i32) -> (i32, i32) {
    %c0_i32 = arith.constant 0 : i32
    %c0_i32_0 = arith.constant 0 : i32
    %c0_i32_1 = arith.constant 0 : i32
    return %c0_i32, %c0_i32_0 : i32, i32
  }
  func.func @transform_3(%arg0: i32) -> (i32, i32) {
    %c0_i32 = arith.constant 0 : i32
    %c0_i32_0 = arith.constant 0 : i32
    %c0_i32_1 = arith.constant 0 : i32
    return %c0_i32, %c0_i32_0 : i32, i32
  }
  func.func @transform_4(%arg0: i32) -> (i32, i32) {
    %c0_i32 = arith.constant 0 : i32
    %c0_i32_0 = arith.constant 0 : i32
    %c0_i32_1 = arith.constant 0 : i32
    return %c0_i32, %c0_i32_0 : i32, i32
  }
  func.func @transform_5(%arg0: i32) -> (i32, i32) {
    %c0_i32 = arith.constant 0 : i32
    %c0_i32_0 = arith.constant 0 : i32
    %c0_i32_1 = arith.constant 0 : i32
    return %c0_i32, %c0_i32_0 : i32, i32
  }
  func.func @transform_6(%arg0: i32) -> (i32, i32) {
    %c0_i32 = arith.constant 0 : i32
    %c0_i32_0 = arith.constant 0 : i32
    return %arg0, %c0_i32 : i32, i32
  }
  func.func @transform_7(%arg0: i32) -> (i32, i32) {
    %c0_i32 = arith.constant 0 : i32
    %c0_i32_0 = arith.constant 0 : i32
    return %arg0, %c0_i32 : i32, i32
  }
  func.func @transform_8(%arg0: i32) -> (i32, i32) {
    %c0_i32 = arith.constant 0 : i32
    %c0_i32_0 = arith.constant 0 : i32
    return %arg0, %c0_i32 : i32, i32
  }
}

module attributes {stable_mosaic.version = 11 : i64} {
  func.func @_decoder_kernel(%arg0: i32, %arg1: memref<1x49x64xf32, #tpu.memory_space<vmem>>, %arg2: memref<9x64x32xf32, #tpu.memory_space<vmem>>, %arg3: memref<1x32xf32, #tpu.memory_space<vmem>>, %arg4: memref<9x1x32xf32, #tpu.memory_space<vmem>>, %arg5: memref<1x1xf32, #tpu.memory_space<vmem>>, %arg6: memref<1x16x49x1xf32, #tpu.memory_space<vmem>>) attributes {dimension_semantics = [#tpu.dimension_semantics<parallel>], iteration_bounds = array<i64: 2>, scalar_prefetch = 0 : i64, scratch_operands = 0 : i64, tpu.core_type = #tpu.core_type<tc>, window_params = [{transform_indices = @transform_0, window_bounds = array<i64: 1, 49, 64>}, {pipeline_mode = #tpu.pipeline_mode<synchronous>, transform_indices = @transform_1, window_bounds = array<i64: 9, 64, 32>}, {pipeline_mode = #tpu.pipeline_mode<synchronous>, transform_indices = @transform_2, window_bounds = array<i64: 1, 32>}, {pipeline_mode = #tpu.pipeline_mode<synchronous>, transform_indices = @transform_3, window_bounds = array<i64: 9, 1, 32>}, {pipeline_mode = #tpu.pipeline_mode<synchronous>, transform_indices = @transform_4, window_bounds = array<i64: 1, 1>}, {transform_indices = @transform_5, window_bounds = array<i64: 1, 16, 49, 1>}]} {
    %0 = tpu.iota {dimensions = array<i32: 0>} : vector<49x1xi32>
    %c0 = arith.constant 0 : index
    %c0_0 = arith.constant 0 : index
    %c0_1 = arith.constant 0 : index
    %1 = vector.load %arg1[%c0, %c0_0, %c0_1] : memref<1x49x64xf32, #tpu.memory_space<vmem>>, vector<1x49x64xf32>
    %2 = vector.shape_cast %1 : vector<1x49x64xf32> to vector<49x64xf32>
    %3 = vector.extract_strided_slice %2 {offsets = [1, 0], sizes = [48, 64], strides = [1, 1]} : vector<49x64xf32> to vector<48x64xf32>
    %cst = arith.constant 0.000000e+00 : f32
    %4 = vector.broadcast %cst : f32 to vector<1x64xf32>
    %5 = tpu.concatenate %3, %4 in 0 : vector<48x64xf32>, vector<1x64xf32> -> vector<49x64xf32>
    %c7_i32 = arith.constant 7 : i32
    %c0_i32 = arith.constant 0 : i32
    %6 = arith.cmpi eq, %c7_i32, %c0_i32 : i32
    %c1_i32 = arith.constant 1 : i32
    %7 = arith.select %6, %c1_i32, %c7_i32 : i32
    %8 = vector.broadcast %7 : i32 to vector<49x1xi32>
    %9 = arith.remsi %0, %8 : vector<49x1xi32>
    %c0_i32_2 = arith.constant 0 : i32
    %10 = vector.broadcast %c0_i32_2 : i32 to vector<49x1xi32>
    %11 = arith.cmpi ne, %9, %10 : vector<49x1xi32>
    %c0_i32_3 = arith.constant 0 : i32
    %12 = vector.broadcast %c0_i32_3 : i32 to vector<49x1xi32>
    %13 = arith.cmpi slt, %9, %12 : vector<49x1xi32>
    %c0_i32_4 = arith.constant 0 : i32
    %14 = arith.cmpi slt, %7, %c0_i32_4 : i32
    %15 = vector.broadcast %14 : i1 to vector<49x1xi1>
    %16 = vector.broadcast %15 : vector<49x1xi1> to vector<49x1xi1>
    %17 = arith.xori %13, %16 : vector<49x1xi1>
    %18 = arith.andi %17, %11 : vector<49x1xi1>
    %19 = vector.broadcast %7 : i32 to vector<49x1xi32>
    %20 = arith.addi %9, %19 : vector<49x1xi32>
    %21 = arith.select %18, %20, %9 : vector<49x1xi1>, vector<49x1xi32>
    %c6_i32 = arith.constant 6 : i32
    %22 = vector.broadcast %c6_i32 : i32 to vector<49x1xi32>
    %23 = arith.cmpi slt, %21, %22 : vector<49x1xi32>
    %cst_5 = arith.constant 0.000000e+00 : f32
    %24 = vector.shape_cast %23 : vector<49x1xi1> to vector<49x1xi1>
    %25 = vector.broadcast %24 : vector<49x1xi1> to vector<49x64xi1>
    %26 = vector.broadcast %cst_5 : f32 to vector<49x64xf32>
    %27 = arith.select %25, %5, %26 : vector<49x64xi1>, vector<49x64xf32>
    %28 = vector.extract_strided_slice %2 {offsets = [7, 0], sizes = [42, 64], strides = [1, 1]} : vector<49x64xf32> to vector<42x64xf32>
    %cst_6 = arith.constant 0.000000e+00 : f32
    %29 = vector.broadcast %cst_6 : f32 to vector<7x64xf32>
    %30 = tpu.concatenate %28, %29 in 0 : vector<42x64xf32>, vector<7x64xf32> -> vector<49x64xf32>
    %31 = vector.extract_strided_slice %2 {offsets = [7, 0], sizes = [42, 64], strides = [1, 1]} : vector<49x64xf32> to vector<42x64xf32>
    %cst_7 = arith.constant 0.000000e+00 : f32
    %32 = vector.broadcast %cst_7 : f32 to vector<7x64xf32>
    %33 = tpu.concatenate %31, %32 in 0 : vector<42x64xf32>, vector<7x64xf32> -> vector<49x64xf32>
    %34 = vector.extract_strided_slice %33 {offsets = [1, 0], sizes = [48, 64], strides = [1, 1]} : vector<49x64xf32> to vector<48x64xf32>
    %cst_8 = arith.constant 0.000000e+00 : f32
    %35 = vector.broadcast %cst_8 : f32 to vector<1x64xf32>
    %36 = tpu.concatenate %34, %35 in 0 : vector<48x64xf32>, vector<1x64xf32> -> vector<49x64xf32>
    %c7_i32_9 = arith.constant 7 : i32
    %c0_i32_10 = arith.constant 0 : i32
    %37 = arith.cmpi eq, %c7_i32_9, %c0_i32_10 : i32
    %c1_i32_11 = arith.constant 1 : i32
    %38 = arith.select %37, %c1_i32_11, %c7_i32_9 : i32
    %39 = vector.broadcast %38 : i32 to vector<49x1xi32>
    %40 = arith.remsi %0, %39 : vector<49x1xi32>
    %c0_i32_12 = arith.constant 0 : i32
    %41 = vector.broadcast %c0_i32_12 : i32 to vector<49x1xi32>
    %42 = arith.cmpi ne, %40, %41 : vector<49x1xi32>
    %c0_i32_13 = arith.constant 0 : i32
    %43 = vector.broadcast %c0_i32_13 : i32 to vector<49x1xi32>
    %44 = arith.cmpi slt, %40, %43 : vector<49x1xi32>
    %c0_i32_14 = arith.constant 0 : i32
    %45 = arith.cmpi slt, %38, %c0_i32_14 : i32
    %46 = vector.broadcast %45 : i1 to vector<49x1xi1>
    %47 = vector.broadcast %46 : vector<49x1xi1> to vector<49x1xi1>
    %48 = arith.xori %44, %47 : vector<49x1xi1>
    %49 = arith.andi %48, %42 : vector<49x1xi1>
    %50 = vector.broadcast %38 : i32 to vector<49x1xi32>
    %51 = arith.addi %40, %50 : vector<49x1xi32>
    %52 = arith.select %49, %51, %40 : vector<49x1xi1>, vector<49x1xi32>
    %c6_i32_15 = arith.constant 6 : i32
    %53 = vector.broadcast %c6_i32_15 : i32 to vector<49x1xi32>
    %54 = arith.cmpi slt, %52, %53 : vector<49x1xi32>
    %cst_16 = arith.constant 0.000000e+00 : f32
    %55 = vector.shape_cast %54 : vector<49x1xi1> to vector<49x1xi1>
    %56 = vector.broadcast %55 : vector<49x1xi1> to vector<49x64xi1>
    %57 = vector.broadcast %cst_16 : f32 to vector<49x64xf32>
    %58 = arith.select %56, %36, %57 : vector<49x64xi1>, vector<49x64xf32>
    %cst_17 = arith.constant 0.000000e+00 : f32
    %59 = vector.broadcast %cst_17 : f32 to vector<49x32xf32>
    %c4 = arith.constant 4 : index
    %c0_18 = arith.constant 0 : index
    %c0_19 = arith.constant 0 : index
    %60 = vector.load %arg2[%c4, %c0_18, %c0_19] : memref<9x64x32xf32, #tpu.memory_space<vmem>>, vector<1x64x32xf32>
    %61 = vector.shape_cast %60 : vector<1x64x32xf32> to vector<64x32xf32>
    %cst_20 = arith.constant dense<0.000000e+00> : vector<49x32xf32>
    %62 = tpu.matmul %2, %61, %cst_20 {dimension_numbers = #tpu.dot_dimension_numbers<[1], [0], [0], [1], [0, 0, 1, 1], [], []>} : vector<49x64xf32>, vector<64x32xf32>, vector<49x32xf32> -> vector<49x32xf32>
    %63 = arith.addf %59, %62 : vector<49x32xf32>
    %c0_21 = arith.constant 0 : index
    %c0_22 = arith.constant 0 : index
    %64 = vector.load %arg3[%c0_21, %c0_22] : memref<1x32xf32, #tpu.memory_space<vmem>>, vector<1x32xf32>
    %65 = vector.broadcast %64 : vector<1x32xf32> to vector<49x32xf32>
    %66 = arith.addf %63, %65 : vector<49x32xf32>
    %cst_23 = arith.constant 0.000000e+00 : f32
    %67 = vector.broadcast %cst_23 : f32 to vector<49x32xf32>
    %68 = arith.maximumf %66, %67 : vector<49x32xf32>
    %cst_24 = arith.constant 0.000000e+00 : f32
    %69 = vector.broadcast %cst_24 : f32 to vector<49x32xf32>
    %c3 = arith.constant 3 : index
    %c0_25 = arith.constant 0 : index
    %c0_26 = arith.constant 0 : index
    %70 = vector.load %arg2[%c3, %c0_25, %c0_26] : memref<9x64x32xf32, #tpu.memory_space<vmem>>, vector<1x64x32xf32>
    %71 = vector.shape_cast %70 : vector<1x64x32xf32> to vector<64x32xf32>
    %cst_27 = arith.constant dense<0.000000e+00> : vector<49x32xf32>
    %72 = tpu.matmul %2, %71, %cst_27 {dimension_numbers = #tpu.dot_dimension_numbers<[1], [0], [0], [1], [0, 0, 1, 1], [], []>} : vector<49x64xf32>, vector<64x32xf32>, vector<49x32xf32> -> vector<49x32xf32>
    %73 = arith.addf %69, %72 : vector<49x32xf32>
    %c5 = arith.constant 5 : index
    %c0_28 = arith.constant 0 : index
    %c0_29 = arith.constant 0 : index
    %74 = vector.load %arg2[%c5, %c0_28, %c0_29] : memref<9x64x32xf32, #tpu.memory_space<vmem>>, vector<1x64x32xf32>
    %75 = vector.shape_cast %74 : vector<1x64x32xf32> to vector<64x32xf32>
    %cst_30 = arith.constant dense<0.000000e+00> : vector<49x32xf32>
    %76 = tpu.matmul %27, %75, %cst_30 {dimension_numbers = #tpu.dot_dimension_numbers<[1], [0], [0], [1], [0, 0, 1, 1], [], []>} : vector<49x64xf32>, vector<64x32xf32>, vector<49x32xf32> -> vector<49x32xf32>
    %77 = arith.addf %73, %76 : vector<49x32xf32>
    %c0_31 = arith.constant 0 : index
    %c0_32 = arith.constant 0 : index
    %78 = vector.load %arg3[%c0_31, %c0_32] : memref<1x32xf32, #tpu.memory_space<vmem>>, vector<1x32xf32>
    %79 = vector.broadcast %78 : vector<1x32xf32> to vector<49x32xf32>
    %80 = arith.addf %77, %79 : vector<49x32xf32>
    %cst_33 = arith.constant 0.000000e+00 : f32
    %81 = vector.broadcast %cst_33 : f32 to vector<49x32xf32>
    %82 = arith.maximumf %80, %81 : vector<49x32xf32>
    %cst_34 = arith.constant 0.000000e+00 : f32
    %83 = vector.broadcast %cst_34 : f32 to vector<49x32xf32>
    %c1 = arith.constant 1 : index
    %c0_35 = arith.constant 0 : index
    %c0_36 = arith.constant 0 : index
    %84 = vector.load %arg2[%c1, %c0_35, %c0_36] : memref<9x64x32xf32, #tpu.memory_space<vmem>>, vector<1x64x32xf32>
    %85 = vector.shape_cast %84 : vector<1x64x32xf32> to vector<64x32xf32>
    %cst_37 = arith.constant dense<0.000000e+00> : vector<49x32xf32>
    %86 = tpu.matmul %2, %85, %cst_37 {dimension_numbers = #tpu.dot_dimension_numbers<[1], [0], [0], [1], [0, 0, 1, 1], [], []>} : vector<49x64xf32>, vector<64x32xf32>, vector<49x32xf32> -> vector<49x32xf32>
    %87 = arith.addf %83, %86 : vector<49x32xf32>
    %c7 = arith.constant 7 : index
    %c0_38 = arith.constant 0 : index
    %c0_39 = arith.constant 0 : index
    %88 = vector.load %arg2[%c7, %c0_38, %c0_39] : memref<9x64x32xf32, #tpu.memory_space<vmem>>, vector<1x64x32xf32>
    %89 = vector.shape_cast %88 : vector<1x64x32xf32> to vector<64x32xf32>
    %cst_40 = arith.constant dense<0.000000e+00> : vector<49x32xf32>
    %90 = tpu.matmul %30, %89, %cst_40 {dimension_numbers = #tpu.dot_dimension_numbers<[1], [0], [0], [1], [0, 0, 1, 1], [], []>} : vector<49x64xf32>, vector<64x32xf32>, vector<49x32xf32> -> vector<49x32xf32>
    %91 = arith.addf %87, %90 : vector<49x32xf32>
    %c0_41 = arith.constant 0 : index
    %c0_42 = arith.constant 0 : index
    %92 = vector.load %arg3[%c0_41, %c0_42] : memref<1x32xf32, #tpu.memory_space<vmem>>, vector<1x32xf32>
    %93 = vector.broadcast %92 : vector<1x32xf32> to vector<49x32xf32>
    %94 = arith.addf %91, %93 : vector<49x32xf32>
    %cst_43 = arith.constant 0.000000e+00 : f32
    %95 = vector.broadcast %cst_43 : f32 to vector<49x32xf32>
    %96 = arith.maximumf %94, %95 : vector<49x32xf32>
    %cst_44 = arith.constant 0.000000e+00 : f32
    %97 = vector.broadcast %cst_44 : f32 to vector<49x32xf32>
    %c0_45 = arith.constant 0 : index
    %c0_46 = arith.constant 0 : index
    %c0_47 = arith.constant 0 : index
    %98 = vector.load %arg2[%c0_45, %c0_46, %c0_47] : memref<9x64x32xf32, #tpu.memory_space<vmem>>, vector<1x64x32xf32>
    %99 = vector.shape_cast %98 : vector<1x64x32xf32> to vector<64x32xf32>
    %cst_48 = arith.constant dense<0.000000e+00> : vector<49x32xf32>
    %100 = tpu.matmul %2, %99, %cst_48 {dimension_numbers = #tpu.dot_dimension_numbers<[1], [0], [0], [1], [0, 0, 1, 1], [], []>} : vector<49x64xf32>, vector<64x32xf32>, vector<49x32xf32> -> vector<49x32xf32>
    %101 = arith.addf %97, %100 : vector<49x32xf32>
    %c2 = arith.constant 2 : index
    %c0_49 = arith.constant 0 : index
    %c0_50 = arith.constant 0 : index
    %102 = vector.load %arg2[%c2, %c0_49, %c0_50] : memref<9x64x32xf32, #tpu.memory_space<vmem>>, vector<1x64x32xf32>
    %103 = vector.shape_cast %102 : vector<1x64x32xf32> to vector<64x32xf32>
    %cst_51 = arith.constant dense<0.000000e+00> : vector<49x32xf32>
    %104 = tpu.matmul %27, %103, %cst_51 {dimension_numbers = #tpu.dot_dimension_numbers<[1], [0], [0], [1], [0, 0, 1, 1], [], []>} : vector<49x64xf32>, vector<64x32xf32>, vector<49x32xf32> -> vector<49x32xf32>
    %105 = arith.addf %101, %104 : vector<49x32xf32>
    %c6 = arith.constant 6 : index
    %c0_52 = arith.constant 0 : index
    %c0_53 = arith.constant 0 : index
    %106 = vector.load %arg2[%c6, %c0_52, %c0_53] : memref<9x64x32xf32, #tpu.memory_space<vmem>>, vector<1x64x32xf32>
    %107 = vector.shape_cast %106 : vector<1x64x32xf32> to vector<64x32xf32>
    %cst_54 = arith.constant dense<0.000000e+00> : vector<49x32xf32>
    %108 = tpu.matmul %30, %107, %cst_54 {dimension_numbers = #tpu.dot_dimension_numbers<[1], [0], [0], [1], [0, 0, 1, 1], [], []>} : vector<49x64xf32>, vector<64x32xf32>, vector<49x32xf32> -> vector<49x32xf32>
    %109 = arith.addf %105, %108 : vector<49x32xf32>
    %c8 = arith.constant 8 : index
    %c0_55 = arith.constant 0 : index
    %c0_56 = arith.constant 0 : index
    %110 = vector.load %arg2[%c8, %c0_55, %c0_56] : memref<9x64x32xf32, #tpu.memory_space<vmem>>, vector<1x64x32xf32>
    %111 = vector.shape_cast %110 : vector<1x64x32xf32> to vector<64x32xf32>
    %cst_57 = arith.constant dense<0.000000e+00> : vector<49x32xf32>
    %112 = tpu.matmul %58, %111, %cst_57 {dimension_numbers = #tpu.dot_dimension_numbers<[1], [0], [0], [1], [0, 0, 1, 1], [], []>} : vector<49x64xf32>, vector<64x32xf32>, vector<49x32xf32> -> vector<49x32xf32>
    %113 = arith.addf %109, %112 : vector<49x32xf32>
    %c0_58 = arith.constant 0 : index
    %c0_59 = arith.constant 0 : index
    %114 = vector.load %arg3[%c0_58, %c0_59] : memref<1x32xf32, #tpu.memory_space<vmem>>, vector<1x32xf32>
    %115 = vector.broadcast %114 : vector<1x32xf32> to vector<49x32xf32>
    %116 = arith.addf %113, %115 : vector<49x32xf32>
    %cst_60 = arith.constant 0.000000e+00 : f32
    %117 = vector.broadcast %cst_60 : f32 to vector<49x32xf32>
    %118 = arith.maximumf %116, %117 : vector<49x32xf32>
    %119 = vector.extract_strided_slice %68 {offsets = [1, 0], sizes = [48, 32], strides = [1, 1]} : vector<49x32xf32> to vector<48x32xf32>
    %cst_61 = arith.constant 0.000000e+00 : f32
    %120 = vector.broadcast %cst_61 : f32 to vector<1x32xf32>
    %121 = tpu.concatenate %119, %120 in 0 : vector<48x32xf32>, vector<1x32xf32> -> vector<49x32xf32>
    %c7_i32_62 = arith.constant 7 : i32
    %c0_i32_63 = arith.constant 0 : i32
    %122 = arith.cmpi eq, %c7_i32_62, %c0_i32_63 : i32
    %c1_i32_64 = arith.constant 1 : i32
    %123 = arith.select %122, %c1_i32_64, %c7_i32_62 : i32
    %124 = vector.broadcast %123 : i32 to vector<49x1xi32>
    %125 = arith.remsi %0, %124 : vector<49x1xi32>
    %c0_i32_65 = arith.constant 0 : i32
    %126 = vector.broadcast %c0_i32_65 : i32 to vector<49x1xi32>
    %127 = arith.cmpi ne, %125, %126 : vector<49x1xi32>
    %c0_i32_66 = arith.constant 0 : i32
    %128 = vector.broadcast %c0_i32_66 : i32 to vector<49x1xi32>
    %129 = arith.cmpi slt, %125, %128 : vector<49x1xi32>
    %c0_i32_67 = arith.constant 0 : i32
    %130 = arith.cmpi slt, %123, %c0_i32_67 : i32
    %131 = vector.broadcast %130 : i1 to vector<49x1xi1>
    %132 = vector.broadcast %131 : vector<49x1xi1> to vector<49x1xi1>
    %133 = arith.xori %129, %132 : vector<49x1xi1>
    %134 = arith.andi %133, %127 : vector<49x1xi1>
    %135 = vector.broadcast %123 : i32 to vector<49x1xi32>
    %136 = arith.addi %125, %135 : vector<49x1xi32>
    %137 = arith.select %134, %136, %125 : vector<49x1xi1>, vector<49x1xi32>
    %c6_i32_68 = arith.constant 6 : i32
    %138 = vector.broadcast %c6_i32_68 : i32 to vector<49x1xi32>
    %139 = arith.cmpi slt, %137, %138 : vector<49x1xi32>
    %cst_69 = arith.constant 0.000000e+00 : f32
    %140 = vector.shape_cast %139 : vector<49x1xi1> to vector<49x1xi1>
    %141 = vector.broadcast %140 : vector<49x1xi1> to vector<49x32xi1>
    %142 = vector.broadcast %cst_69 : f32 to vector<49x32xf32>
    %143 = arith.select %141, %121, %142 : vector<49x32xi1>, vector<49x32xf32>
    %144 = vector.extract_strided_slice %68 {offsets = [7, 0], sizes = [42, 32], strides = [1, 1]} : vector<49x32xf32> to vector<42x32xf32>
    %cst_70 = arith.constant 0.000000e+00 : f32
    %145 = vector.broadcast %cst_70 : f32 to vector<7x32xf32>
    %146 = tpu.concatenate %144, %145 in 0 : vector<42x32xf32>, vector<7x32xf32> -> vector<49x32xf32>
    %147 = vector.extract_strided_slice %68 {offsets = [7, 0], sizes = [42, 32], strides = [1, 1]} : vector<49x32xf32> to vector<42x32xf32>
    %cst_71 = arith.constant 0.000000e+00 : f32
    %148 = vector.broadcast %cst_71 : f32 to vector<7x32xf32>
    %149 = tpu.concatenate %147, %148 in 0 : vector<42x32xf32>, vector<7x32xf32> -> vector<49x32xf32>
    %150 = vector.extract_strided_slice %149 {offsets = [1, 0], sizes = [48, 32], strides = [1, 1]} : vector<49x32xf32> to vector<48x32xf32>
    %cst_72 = arith.constant 0.000000e+00 : f32
    %151 = vector.broadcast %cst_72 : f32 to vector<1x32xf32>
    %152 = tpu.concatenate %150, %151 in 0 : vector<48x32xf32>, vector<1x32xf32> -> vector<49x32xf32>
    %c7_i32_73 = arith.constant 7 : i32
    %c0_i32_74 = arith.constant 0 : i32
    %153 = arith.cmpi eq, %c7_i32_73, %c0_i32_74 : i32
    %c1_i32_75 = arith.constant 1 : i32
    %154 = arith.select %153, %c1_i32_75, %c7_i32_73 : i32
    %155 = vector.broadcast %154 : i32 to vector<49x1xi32>
    %156 = arith.remsi %0, %155 : vector<49x1xi32>
    %c0_i32_76 = arith.constant 0 : i32
    %157 = vector.broadcast %c0_i32_76 : i32 to vector<49x1xi32>
    %158 = arith.cmpi ne, %156, %157 : vector<49x1xi32>
    %c0_i32_77 = arith.constant 0 : i32
    %159 = vector.broadcast %c0_i32_77 : i32 to vector<49x1xi32>
    %160 = arith.cmpi slt, %156, %159 : vector<49x1xi32>
    %c0_i32_78 = arith.constant 0 : i32
    %161 = arith.cmpi slt, %154, %c0_i32_78 : i32
    %162 = vector.broadcast %161 : i1 to vector<49x1xi1>
    %163 = vector.broadcast %162 : vector<49x1xi1> to vector<49x1xi1>
    %164 = arith.xori %160, %163 : vector<49x1xi1>
    %165 = arith.andi %164, %158 : vector<49x1xi1>
    %166 = vector.broadcast %154 : i32 to vector<49x1xi32>
    %167 = arith.addi %156, %166 : vector<49x1xi32>
    %168 = arith.select %165, %167, %156 : vector<49x1xi1>, vector<49x1xi32>
    %c6_i32_79 = arith.constant 6 : i32
    %169 = vector.broadcast %c6_i32_79 : i32 to vector<49x1xi32>
    %170 = arith.cmpi slt, %168, %169 : vector<49x1xi32>
    %cst_80 = arith.constant 0.000000e+00 : f32
    %171 = vector.shape_cast %170 : vector<49x1xi1> to vector<49x1xi1>
    %172 = vector.broadcast %171 : vector<49x1xi1> to vector<49x32xi1>
    %173 = vector.broadcast %cst_80 : f32 to vector<49x32xf32>
    %174 = arith.select %172, %152, %173 : vector<49x32xi1>, vector<49x32xf32>
    %175 = vector.extract_strided_slice %82 {offsets = [7, 0], sizes = [42, 32], strides = [1, 1]} : vector<49x32xf32> to vector<42x32xf32>
    %cst_81 = arith.constant 0.000000e+00 : f32
    %176 = vector.broadcast %cst_81 : f32 to vector<7x32xf32>
    %177 = tpu.concatenate %175, %176 in 0 : vector<42x32xf32>, vector<7x32xf32> -> vector<49x32xf32>
    %178 = vector.extract_strided_slice %96 {offsets = [1, 0], sizes = [48, 32], strides = [1, 1]} : vector<49x32xf32> to vector<48x32xf32>
    %cst_82 = arith.constant 0.000000e+00 : f32
    %179 = vector.broadcast %cst_82 : f32 to vector<1x32xf32>
    %180 = tpu.concatenate %178, %179 in 0 : vector<48x32xf32>, vector<1x32xf32> -> vector<49x32xf32>
    %c7_i32_83 = arith.constant 7 : i32
    %c0_i32_84 = arith.constant 0 : i32
    %181 = arith.cmpi eq, %c7_i32_83, %c0_i32_84 : i32
    %c1_i32_85 = arith.constant 1 : i32
    %182 = arith.select %181, %c1_i32_85, %c7_i32_83 : i32
    %183 = vector.broadcast %182 : i32 to vector<49x1xi32>
    %184 = arith.remsi %0, %183 : vector<49x1xi32>
    %c0_i32_86 = arith.constant 0 : i32
    %185 = vector.broadcast %c0_i32_86 : i32 to vector<49x1xi32>
    %186 = arith.cmpi ne, %184, %185 : vector<49x1xi32>
    %c0_i32_87 = arith.constant 0 : i32
    %187 = vector.broadcast %c0_i32_87 : i32 to vector<49x1xi32>
    %188 = arith.cmpi slt, %184, %187 : vector<49x1xi32>
    %c0_i32_88 = arith.constant 0 : i32
    %189 = arith.cmpi slt, %182, %c0_i32_88 : i32
    %190 = vector.broadcast %189 : i1 to vector<49x1xi1>
    %191 = vector.broadcast %190 : vector<49x1xi1> to vector<49x1xi1>
    %192 = arith.xori %188, %191 : vector<49x1xi1>
    %193 = arith.andi %192, %186 : vector<49x1xi1>
    %194 = vector.broadcast %182 : i32 to vector<49x1xi32>
    %195 = arith.addi %184, %194 : vector<49x1xi32>
    %196 = arith.select %193, %195, %184 : vector<49x1xi1>, vector<49x1xi32>
    %c6_i32_89 = arith.constant 6 : i32
    %197 = vector.broadcast %c6_i32_89 : i32 to vector<49x1xi32>
    %198 = arith.cmpi slt, %196, %197 : vector<49x1xi32>
    %cst_90 = arith.constant 0.000000e+00 : f32
    %199 = vector.shape_cast %198 : vector<49x1xi1> to vector<49x1xi1>
    %200 = vector.broadcast %199 : vector<49x1xi1> to vector<49x32xi1>
    %201 = vector.broadcast %cst_90 : f32 to vector<49x32xf32>
    %202 = arith.select %200, %180, %201 : vector<49x32xi1>, vector<49x32xf32>
    %cst_91 = arith.constant 0.000000e+00 : f32
    %203 = vector.broadcast %cst_91 : f32 to vector<49x32xf32>
    %c4_92 = arith.constant 4 : index
    %c0_93 = arith.constant 0 : index
    %c0_94 = arith.constant 0 : index
    %204 = vector.load %arg4[%c4_92, %c0_93, %c0_94] : memref<9x1x32xf32, #tpu.memory_space<vmem>>, vector<1x1x32xf32>
    %205 = vector.shape_cast %204 : vector<1x1x32xf32> to vector<1x32xf32>
    %206 = vector.broadcast %205 : vector<1x32xf32> to vector<49x32xf32>
    %207 = arith.mulf %68, %206 : vector<49x32xf32>
    %208 = arith.addf %203, %207 : vector<49x32xf32>
    %cst_95 = arith.constant dense<0.000000e+00> : vector<49xf32>
    %209 = vector.multi_reduction <add>, %208, %cst_95 [1] : vector<49x32xf32> to vector<49xf32>
    %210 = vector.shape_cast %209 : vector<49xf32> to vector<49x1xf32>
    %c0_96 = arith.constant 0 : index
    %c0_97 = arith.constant 0 : index
    %211 = vector.load %arg5[%c0_96, %c0_97] : memref<1x1xf32, #tpu.memory_space<vmem>>, vector<1x1xf32>
    %212 = vector.broadcast %211 : vector<1x1xf32> to vector<49x1xf32>
    %213 = arith.addf %210, %212 : vector<49x1xf32>
    %cst_98 = arith.constant 0.000000e+00 : f32
    %214 = vector.broadcast %cst_98 : f32 to vector<49x1xf32>
    %215 = arith.subf %214, %213 : vector<49x1xf32>
    %216 = math.exp %215 : vector<49x1xf32>
    %cst_99 = arith.constant 1.000000e+00 : f32
    %217 = vector.broadcast %cst_99 : f32 to vector<49x1xf32>
    %218 = arith.addf %217, %216 : vector<49x1xf32>
    %cst_100 = arith.constant 1.000000e+00 : f32
    %219 = vector.broadcast %cst_100 : f32 to vector<49x1xf32>
    %220 = arith.divf %219, %218 : vector<49x1xf32>
    %c0_101 = arith.constant 0 : index
    %c0_102 = arith.constant 0 : index
    %c0_103 = arith.constant 0 : index
    %c0_104 = arith.constant 0 : index
    %221 = vector.load %arg6[%c0_101, %c0_102, %c0_103, %c0_104] : memref<1x16x49x1xf32, #tpu.memory_space<vmem>>, vector<1x1x49x1xf32>
    %222 = vector.shape_cast %221 : vector<1x1x49x1xf32> to vector<49x1xf32>
    %223 = vector.shape_cast %220 : vector<49x1xf32> to vector<1x1x49x1xf32>
    tpu.vector_store %arg6[%c0_101, %c0_102, %c0_103, %c0_104], %223 {strides = array<i32>} : memref<1x16x49x1xf32, #tpu.memory_space<vmem>>, vector<1x1x49x1xf32>,
    %cst_105 = arith.constant 0.000000e+00 : f32
    %224 = vector.broadcast %cst_105 : f32 to vector<49x32xf32>
    %c3_106 = arith.constant 3 : index
    %c0_107 = arith.constant 0 : index
    %c0_108 = arith.constant 0 : index
    %225 = vector.load %arg4[%c3_106, %c0_107, %c0_108] : memref<9x1x32xf32, #tpu.memory_space<vmem>>, vector<1x1x32xf32>
    %226 = vector.shape_cast %225 : vector<1x1x32xf32> to vector<1x32xf32>
    %227 = vector.broadcast %226 : vector<1x32xf32> to vector<49x32xf32>
    %228 = arith.mulf %68, %227 : vector<49x32xf32>
    %229 = arith.addf %224, %228 : vector<49x32xf32>
    %c5_109 = arith.constant 5 : index
    %c0_110 = arith.constant 0 : index
    %c0_111 = arith.constant 0 : index
    %230 = vector.load %arg4[%c5_109, %c0_110, %c0_111] : memref<9x1x32xf32, #tpu.memory_space<vmem>>, vector<1x1x32xf32>
    %231 = vector.shape_cast %230 : vector<1x1x32xf32> to vector<1x32xf32>
    %232 = vector.broadcast %231 : vector<1x32xf32> to vector<49x32xf32>
    %233 = arith.mulf %82, %232 : vector<49x32xf32>
    %234 = arith.addf %229, %233 : vector<49x32xf32>
    %cst_112 = arith.constant dense<0.000000e+00> : vector<49xf32>
    %235 = vector.multi_reduction <add>, %234, %cst_112 [1] : vector<49x32xf32> to vector<49xf32>
    %236 = vector.shape_cast %235 : vector<49xf32> to vector<49x1xf32>
    %c0_113 = arith.constant 0 : index
    %c0_114 = arith.constant 0 : index
    %237 = vector.load %arg5[%c0_113, %c0_114] : memref<1x1xf32, #tpu.memory_space<vmem>>, vector<1x1xf32>
    %238 = vector.broadcast %237 : vector<1x1xf32> to vector<49x1xf32>
    %239 = arith.addf %236, %238 : vector<49x1xf32>
    %cst_115 = arith.constant 0.000000e+00 : f32
    %240 = vector.broadcast %cst_115 : f32 to vector<49x1xf32>
    %241 = arith.subf %240, %239 : vector<49x1xf32>
    %242 = math.exp %241 : vector<49x1xf32>
    %cst_116 = arith.constant 1.000000e+00 : f32
    %243 = vector.broadcast %cst_116 : f32 to vector<49x1xf32>
    %244 = arith.addf %243, %242 : vector<49x1xf32>
    %cst_117 = arith.constant 1.000000e+00 : f32
    %245 = vector.broadcast %cst_117 : f32 to vector<49x1xf32>
    %246 = arith.divf %245, %244 : vector<49x1xf32>
    %c0_118 = arith.constant 0 : index
    %c1_119 = arith.constant 1 : index
    %c0_120 = arith.constant 0 : index
    %c0_121 = arith.constant 0 : index
    %247 = vector.load %arg6[%c0_118, %c1_119, %c0_120, %c0_121] : memref<1x16x49x1xf32, #tpu.memory_space<vmem>>, vector<1x1x49x1xf32>
    %248 = vector.shape_cast %247 : vector<1x1x49x1xf32> to vector<49x1xf32>
    %249 = vector.shape_cast %246 : vector<49x1xf32> to vector<1x1x49x1xf32>
    tpu.vector_store %arg6[%c0_118, %c1_119, %c0_120, %c0_121], %249 {strides = array<i32>} : memref<1x16x49x1xf32, #tpu.memory_space<vmem>>, vector<1x1x49x1xf32>,
    %cst_122 = arith.constant 0.000000e+00 : f32
    %250 = vector.broadcast %cst_122 : f32 to vector<49x32xf32>
    %c4_123 = arith.constant 4 : index
    %c0_124 = arith.constant 0 : index
    %c0_125 = arith.constant 0 : index
    %251 = vector.load %arg4[%c4_123, %c0_124, %c0_125] : memref<9x1x32xf32, #tpu.memory_space<vmem>>, vector<1x1x32xf32>
    %252 = vector.shape_cast %251 : vector<1x1x32xf32> to vector<1x32xf32>
    %253 = vector.broadcast %252 : vector<1x32xf32> to vector<49x32xf32>
    %254 = arith.mulf %82, %253 : vector<49x32xf32>
    %255 = arith.addf %250, %254 : vector<49x32xf32>
    %cst_126 = arith.constant dense<0.000000e+00> : vector<49xf32>
    %256 = vector.multi_reduction <add>, %255, %cst_126 [1] : vector<49x32xf32> to vector<49xf32>
    %257 = vector.shape_cast %256 : vector<49xf32> to vector<49x1xf32>
    %c0_127 = arith.constant 0 : index
    %c0_128 = arith.constant 0 : index
    %258 = vector.load %arg5[%c0_127, %c0_128] : memref<1x1xf32, #tpu.memory_space<vmem>>, vector<1x1xf32>
    %259 = vector.broadcast %258 : vector<1x1xf32> to vector<49x1xf32>
    %260 = arith.addf %257, %259 : vector<49x1xf32>
    %cst_129 = arith.constant 0.000000e+00 : f32
    %261 = vector.broadcast %cst_129 : f32 to vector<49x1xf32>
    %262 = arith.subf %261, %260 : vector<49x1xf32>
    %263 = math.exp %262 : vector<49x1xf32>
    %cst_130 = arith.constant 1.000000e+00 : f32
    %264 = vector.broadcast %cst_130 : f32 to vector<49x1xf32>
    %265 = arith.addf %264, %263 : vector<49x1xf32>
    %cst_131 = arith.constant 1.000000e+00 : f32
    %266 = vector.broadcast %cst_131 : f32 to vector<49x1xf32>
    %267 = arith.divf %266, %265 : vector<49x1xf32>
    %c0_132 = arith.constant 0 : index
    %c2_133 = arith.constant 2 : index
    %c0_134 = arith.constant 0 : index
    %c0_135 = arith.constant 0 : index
    %268 = vector.load %arg6[%c0_132, %c2_133, %c0_134, %c0_135] : memref<1x16x49x1xf32, #tpu.memory_space<vmem>>, vector<1x1x49x1xf32>
    %269 = vector.shape_cast %268 : vector<1x1x49x1xf32> to vector<49x1xf32>
    %270 = vector.shape_cast %267 : vector<49x1xf32> to vector<1x1x49x1xf32>
    tpu.vector_store %arg6[%c0_132, %c2_133, %c0_134, %c0_135], %270 {strides = array<i32>} : memref<1x16x49x1xf32, #tpu.memory_space<vmem>>, vector<1x1x49x1xf32>,
    %cst_136 = arith.constant 0.000000e+00 : f32
    %271 = vector.broadcast %cst_136 : f32 to vector<49x32xf32>
    %c3_137 = arith.constant 3 : index
    %c0_138 = arith.constant 0 : index
    %c0_139 = arith.constant 0 : index
    %272 = vector.load %arg4[%c3_137, %c0_138, %c0_139] : memref<9x1x32xf32, #tpu.memory_space<vmem>>, vector<1x1x32xf32>
    %273 = vector.shape_cast %272 : vector<1x1x32xf32> to vector<1x32xf32>
    %274 = vector.broadcast %273 : vector<1x32xf32> to vector<49x32xf32>
    %275 = arith.mulf %82, %274 : vector<49x32xf32>
    %276 = arith.addf %271, %275 : vector<49x32xf32>
    %c5_140 = arith.constant 5 : index
    %c0_141 = arith.constant 0 : index
    %c0_142 = arith.constant 0 : index
    %277 = vector.load %arg4[%c5_140, %c0_141, %c0_142] : memref<9x1x32xf32, #tpu.memory_space<vmem>>, vector<1x1x32xf32>
    %278 = vector.shape_cast %277 : vector<1x1x32xf32> to vector<1x32xf32>
    %279 = vector.broadcast %278 : vector<1x32xf32> to vector<49x32xf32>
    %280 = arith.mulf %143, %279 : vector<49x32xf32>
    %281 = arith.addf %276, %280 : vector<49x32xf32>
    %cst_143 = arith.constant dense<0.000000e+00> : vector<49xf32>
    %282 = vector.multi_reduction <add>, %281, %cst_143 [1] : vector<49x32xf32> to vector<49xf32>
    %283 = vector.shape_cast %282 : vector<49xf32> to vector<49x1xf32>
    %c0_144 = arith.constant 0 : index
    %c0_145 = arith.constant 0 : index
    %284 = vector.load %arg5[%c0_144, %c0_145] : memref<1x1xf32, #tpu.memory_space<vmem>>, vector<1x1xf32>
    %285 = vector.broadcast %284 : vector<1x1xf32> to vector<49x1xf32>
    %286 = arith.addf %283, %285 : vector<49x1xf32>
    %cst_146 = arith.constant 0.000000e+00 : f32
    %287 = vector.broadcast %cst_146 : f32 to vector<49x1xf32>
    %288 = arith.subf %287, %286 : vector<49x1xf32>
    %289 = math.exp %288 : vector<49x1xf32>
    %cst_147 = arith.constant 1.000000e+00 : f32
    %290 = vector.broadcast %cst_147 : f32 to vector<49x1xf32>
    %291 = arith.addf %290, %289 : vector<49x1xf32>
    %cst_148 = arith.constant 1.000000e+00 : f32
    %292 = vector.broadcast %cst_148 : f32 to vector<49x1xf32>
    %293 = arith.divf %292, %291 : vector<49x1xf32>
    %c0_149 = arith.constant 0 : index
    %c3_150 = arith.constant 3 : index
    %c0_151 = arith.constant 0 : index
    %c0_152 = arith.constant 0 : index
    %294 = vector.load %arg6[%c0_149, %c3_150, %c0_151, %c0_152] : memref<1x16x49x1xf32, #tpu.memory_space<vmem>>, vector<1x1x49x1xf32>
    %295 = vector.shape_cast %294 : vector<1x1x49x1xf32> to vector<49x1xf32>
    %296 = vector.shape_cast %293 : vector<49x1xf32> to vector<1x1x49x1xf32>
    tpu.vector_store %arg6[%c0_149, %c3_150, %c0_151, %c0_152], %296 {strides = array<i32>} : memref<1x16x49x1xf32, #tpu.memory_space<vmem>>, vector<1x1x49x1xf32>,
    %cst_153 = arith.constant 0.000000e+00 : f32
    %297 = vector.broadcast %cst_153 : f32 to vector<49x32xf32>
    %c1_154 = arith.constant 1 : index
    %c0_155 = arith.constant 0 : index
    %c0_156 = arith.constant 0 : index
    %298 = vector.load %arg4[%c1_154, %c0_155, %c0_156] : memref<9x1x32xf32, #tpu.memory_space<vmem>>, vector<1x1x32xf32>
    %299 = vector.shape_cast %298 : vector<1x1x32xf32> to vector<1x32xf32>
    %300 = vector.broadcast %299 : vector<1x32xf32> to vector<49x32xf32>
    %301 = arith.mulf %68, %300 : vector<49x32xf32>
    %302 = arith.addf %297, %301 : vector<49x32xf32>
    %c7_157 = arith.constant 7 : index
    %c0_158 = arith.constant 0 : index
    %c0_159 = arith.constant 0 : index
    %303 = vector.load %arg4[%c7_157, %c0_158, %c0_159] : memref<9x1x32xf32, #tpu.memory_space<vmem>>, vector<1x1x32xf32>
    %304 = vector.shape_cast %303 : vector<1x1x32xf32> to vector<1x32xf32>
    %305 = vector.broadcast %304 : vector<1x32xf32> to vector<49x32xf32>
    %306 = arith.mulf %96, %305 : vector<49x32xf32>
    %307 = arith.addf %302, %306 : vector<49x32xf32>
    %cst_160 = arith.constant dense<0.000000e+00> : vector<49xf32>
    %308 = vector.multi_reduction <add>, %307, %cst_160 [1] : vector<49x32xf32> to vector<49xf32>
    %309 = vector.shape_cast %308 : vector<49xf32> to vector<49x1xf32>
    %c0_161 = arith.constant 0 : index
    %c0_162 = arith.constant 0 : index
    %310 = vector.load %arg5[%c0_161, %c0_162] : memref<1x1xf32, #tpu.memory_space<vmem>>, vector<1x1xf32>
    %311 = vector.broadcast %310 : vector<1x1xf32> to vector<49x1xf32>
    %312 = arith.addf %309, %311 : vector<49x1xf32>
    %cst_163 = arith.constant 0.000000e+00 : f32
    %313 = vector.broadcast %cst_163 : f32 to vector<49x1xf32>
    %314 = arith.subf %313, %312 : vector<49x1xf32>
    %315 = math.exp %314 : vector<49x1xf32>
    %cst_164 = arith.constant 1.000000e+00 : f32
    %316 = vector.broadcast %cst_164 : f32 to vector<49x1xf32>
    %317 = arith.addf %316, %315 : vector<49x1xf32>
    %cst_165 = arith.constant 1.000000e+00 : f32
    %318 = vector.broadcast %cst_165 : f32 to vector<49x1xf32>
    %319 = arith.divf %318, %317 : vector<49x1xf32>
    %c0_166 = arith.constant 0 : index
    %c4_167 = arith.constant 4 : index
    %c0_168 = arith.constant 0 : index
    %c0_169 = arith.constant 0 : index
    %320 = vector.load %arg6[%c0_166, %c4_167, %c0_168, %c0_169] : memref<1x16x49x1xf32, #tpu.memory_space<vmem>>, vector<1x1x49x1xf32>
    %321 = vector.shape_cast %320 : vector<1x1x49x1xf32> to vector<49x1xf32>
    %322 = vector.shape_cast %319 : vector<49x1xf32> to vector<1x1x49x1xf32>
    tpu.vector_store %arg6[%c0_166, %c4_167, %c0_168, %c0_169], %322 {strides = array<i32>} : memref<1x16x49x1xf32, #tpu.memory_space<vmem>>, vector<1x1x49x1xf32>,
    %cst_170 = arith.constant 0.000000e+00 : f32
    %323 = vector.broadcast %cst_170 : f32 to vector<49x32xf32>
    %c0_171 = arith.constant 0 : index
    %c0_172 = arith.constant 0 : index
    %c0_173 = arith.constant 0 : index
    %324 = vector.load %arg4[%c0_171, %c0_172, %c0_173] : memref<9x1x32xf32, #tpu.memory_space<vmem>>, vector<1x1x32xf32>
    %325 = vector.shape_cast %324 : vector<1x1x32xf32> to vector<1x32xf32>
    %326 = vector.broadcast %325 : vector<1x32xf32> to vector<49x32xf32>
    %327 = arith.mulf %68, %326 : vector<49x32xf32>
    %328 = arith.addf %323, %327 : vector<49x32xf32>
    %c2_174 = arith.constant 2 : index
    %c0_175 = arith.constant 0 : index
    %c0_176 = arith.constant 0 : index
    %329 = vector.load %arg4[%c2_174, %c0_175, %c0_176] : memref<9x1x32xf32, #tpu.memory_space<vmem>>, vector<1x1x32xf32>
    %330 = vector.shape_cast %329 : vector<1x1x32xf32> to vector<1x32xf32>
    %331 = vector.broadcast %330 : vector<1x32xf32> to vector<49x32xf32>
    %332 = arith.mulf %82, %331 : vector<49x32xf32>
    %333 = arith.addf %328, %332 : vector<49x32xf32>
    %c6_177 = arith.constant 6 : index
    %c0_178 = arith.constant 0 : index
    %c0_179 = arith.constant 0 : index
    %334 = vector.load %arg4[%c6_177, %c0_178, %c0_179] : memref<9x1x32xf32, #tpu.memory_space<vmem>>, vector<1x1x32xf32>
    %335 = vector.shape_cast %334 : vector<1x1x32xf32> to vector<1x32xf32>
    %336 = vector.broadcast %335 : vector<1x32xf32> to vector<49x32xf32>
    %337 = arith.mulf %96, %336 : vector<49x32xf32>
    %338 = arith.addf %333, %337 : vector<49x32xf32>
    %c8_180 = arith.constant 8 : index
    %c0_181 = arith.constant 0 : index
    %c0_182 = arith.constant 0 : index
    %339 = vector.load %arg4[%c8_180, %c0_181, %c0_182] : memref<9x1x32xf32, #tpu.memory_space<vmem>>, vector<1x1x32xf32>
    %340 = vector.shape_cast %339 : vector<1x1x32xf32> to vector<1x32xf32>
    %341 = vector.broadcast %340 : vector<1x32xf32> to vector<49x32xf32>
    %342 = arith.mulf %118, %341 : vector<49x32xf32>
    %343 = arith.addf %338, %342 : vector<49x32xf32>
    %cst_183 = arith.constant dense<0.000000e+00> : vector<49xf32>
    %344 = vector.multi_reduction <add>, %343, %cst_183 [1] : vector<49x32xf32> to vector<49xf32>
    %345 = vector.shape_cast %344 : vector<49xf32> to vector<49x1xf32>
    %c0_184 = arith.constant 0 : index
    %c0_185 = arith.constant 0 : index
    %346 = vector.load %arg5[%c0_184, %c0_185] : memref<1x1xf32, #tpu.memory_space<vmem>>, vector<1x1xf32>
    %347 = vector.broadcast %346 : vector<1x1xf32> to vector<49x1xf32>
    %348 = arith.addf %345, %347 : vector<49x1xf32>
    %cst_186 = arith.constant 0.000000e+00 : f32
    %349 = vector.broadcast %cst_186 : f32 to vector<49x1xf32>
    %350 = arith.subf %349, %348 : vector<49x1xf32>
    %351 = math.exp %350 : vector<49x1xf32>
    %cst_187 = arith.constant 1.000000e+00 : f32
    %352 = vector.broadcast %cst_187 : f32 to vector<49x1xf32>
    %353 = arith.addf %352, %351 : vector<49x1xf32>
    %cst_188 = arith.constant 1.000000e+00 : f32
    %354 = vector.broadcast %cst_188 : f32 to vector<49x1xf32>
    %355 = arith.divf %354, %353 : vector<49x1xf32>
    %c0_189 = arith.constant 0 : index
    %c5_190 = arith.constant 5 : index
    %c0_191 = arith.constant 0 : index
    %c0_192 = arith.constant 0 : index
    %356 = vector.load %arg6[%c0_189, %c5_190, %c0_191, %c0_192] : memref<1x16x49x1xf32, #tpu.memory_space<vmem>>, vector<1x1x49x1xf32>
    %357 = vector.shape_cast %356 : vector<1x1x49x1xf32> to vector<49x1xf32>
    %358 = vector.shape_cast %355 : vector<49x1xf32> to vector<1x1x49x1xf32>
    tpu.vector_store %arg6[%c0_189, %c5_190, %c0_191, %c0_192], %358 {strides = array<i32>} : memref<1x16x49x1xf32, #tpu.memory_space<vmem>>, vector<1x1x49x1xf32>,
    %cst_193 = arith.constant 0.000000e+00 : f32
    %359 = vector.broadcast %cst_193 : f32 to vector<49x32xf32>
    %c1_194 = arith.constant 1 : index
    %c0_195 = arith.constant 0 : index
    %c0_196 = arith.constant 0 : index
    %360 = vector.load %arg4[%c1_194, %c0_195, %c0_196] : memref<9x1x32xf32, #tpu.memory_space<vmem>>, vector<1x1x32xf32>
    %361 = vector.shape_cast %360 : vector<1x1x32xf32> to vector<1x32xf32>
    %362 = vector.broadcast %361 : vector<1x32xf32> to vector<49x32xf32>
    %363 = arith.mulf %82, %362 : vector<49x32xf32>
    %364 = arith.addf %359, %363 : vector<49x32xf32>
    %c7_197 = arith.constant 7 : index
    %c0_198 = arith.constant 0 : index
    %c0_199 = arith.constant 0 : index
    %365 = vector.load %arg4[%c7_197, %c0_198, %c0_199] : memref<9x1x32xf32, #tpu.memory_space<vmem>>, vector<1x1x32xf32>
    %366 = vector.shape_cast %365 : vector<1x1x32xf32> to vector<1x32xf32>
    %367 = vector.broadcast %366 : vector<1x32xf32> to vector<49x32xf32>
    %368 = arith.mulf %118, %367 : vector<49x32xf32>
    %369 = arith.addf %364, %368 : vector<49x32xf32>
    %cst_200 = arith.constant dense<0.000000e+00> : vector<49xf32>
    %370 = vector.multi_reduction <add>, %369, %cst_200 [1] : vector<49x32xf32> to vector<49xf32>
    %371 = vector.shape_cast %370 : vector<49xf32> to vector<49x1xf32>
    %c0_201 = arith.constant 0 : index
    %c0_202 = arith.constant 0 : index
    %372 = vector.load %arg5[%c0_201, %c0_202] : memref<1x1xf32, #tpu.memory_space<vmem>>, vector<1x1xf32>
    %373 = vector.broadcast %372 : vector<1x1xf32> to vector<49x1xf32>
    %374 = arith.addf %371, %373 : vector<49x1xf32>
    %cst_203 = arith.constant 0.000000e+00 : f32
    %375 = vector.broadcast %cst_203 : f32 to vector<49x1xf32>
    %376 = arith.subf %375, %374 : vector<49x1xf32>
    %377 = math.exp %376 : vector<49x1xf32>
    %cst_204 = arith.constant 1.000000e+00 : f32
    %378 = vector.broadcast %cst_204 : f32 to vector<49x1xf32>
    %379 = arith.addf %378, %377 : vector<49x1xf32>
    %cst_205 = arith.constant 1.000000e+00 : f32
    %380 = vector.broadcast %cst_205 : f32 to vector<49x1xf32>
    %381 = arith.divf %380, %379 : vector<49x1xf32>
    %c0_206 = arith.constant 0 : index
    %c6_207 = arith.constant 6 : index
    %c0_208 = arith.constant 0 : index
    %c0_209 = arith.constant 0 : index
    %382 = vector.load %arg6[%c0_206, %c6_207, %c0_208, %c0_209] : memref<1x16x49x1xf32, #tpu.memory_space<vmem>>, vector<1x1x49x1xf32>
    %383 = vector.shape_cast %382 : vector<1x1x49x1xf32> to vector<49x1xf32>
    %384 = vector.shape_cast %381 : vector<49x1xf32> to vector<1x1x49x1xf32>
    tpu.vector_store %arg6[%c0_206, %c6_207, %c0_208, %c0_209], %384 {strides = array<i32>} : memref<1x16x49x1xf32, #tpu.memory_space<vmem>>, vector<1x1x49x1xf32>,
    %cst_210 = arith.constant 0.000000e+00 : f32
    %385 = vector.broadcast %cst_210 : f32 to vector<49x32xf32>
    %c0_211 = arith.constant 0 : index
    %c0_212 = arith.constant 0 : index
    %c0_213 = arith.constant 0 : index
    %386 = vector.load %arg4[%c0_211, %c0_212, %c0_213] : memref<9x1x32xf32, #tpu.memory_space<vmem>>, vector<1x1x32xf32>
    %387 = vector.shape_cast %386 : vector<1x1x32xf32> to vector<1x32xf32>
    %388 = vector.broadcast %387 : vector<1x32xf32> to vector<49x32xf32>
    %389 = arith.mulf %82, %388 : vector<49x32xf32>
    %390 = arith.addf %385, %389 : vector<49x32xf32>
    %c2_214 = arith.constant 2 : index
    %c0_215 = arith.constant 0 : index
    %c0_216 = arith.constant 0 : index
    %391 = vector.load %arg4[%c2_214, %c0_215, %c0_216] : memref<9x1x32xf32, #tpu.memory_space<vmem>>, vector<1x1x32xf32>
    %392 = vector.shape_cast %391 : vector<1x1x32xf32> to vector<1x32xf32>
    %393 = vector.broadcast %392 : vector<1x32xf32> to vector<49x32xf32>
    %394 = arith.mulf %143, %393 : vector<49x32xf32>
    %395 = arith.addf %390, %394 : vector<49x32xf32>
    %c6_217 = arith.constant 6 : index
    %c0_218 = arith.constant 0 : index
    %c0_219 = arith.constant 0 : index
    %396 = vector.load %arg4[%c6_217, %c0_218, %c0_219] : memref<9x1x32xf32, #tpu.memory_space<vmem>>, vector<1x1x32xf32>
    %397 = vector.shape_cast %396 : vector<1x1x32xf32> to vector<1x32xf32>
    %398 = vector.broadcast %397 : vector<1x32xf32> to vector<49x32xf32>
    %399 = arith.mulf %118, %398 : vector<49x32xf32>
    %400 = arith.addf %395, %399 : vector<49x32xf32>
    %c8_220 = arith.constant 8 : index
    %c0_221 = arith.constant 0 : index
    %c0_222 = arith.constant 0 : index
    %401 = vector.load %arg4[%c8_220, %c0_221, %c0_222] : memref<9x1x32xf32, #tpu.memory_space<vmem>>, vector<1x1x32xf32>
    %402 = vector.shape_cast %401 : vector<1x1x32xf32> to vector<1x32xf32>
    %403 = vector.broadcast %402 : vector<1x32xf32> to vector<49x32xf32>
    %404 = arith.mulf %202, %403 : vector<49x32xf32>
    %405 = arith.addf %400, %404 : vector<49x32xf32>
    %cst_223 = arith.constant dense<0.000000e+00> : vector<49xf32>
    %406 = vector.multi_reduction <add>, %405, %cst_223 [1] : vector<49x32xf32> to vector<49xf32>
    %407 = vector.shape_cast %406 : vector<49xf32> to vector<49x1xf32>
    %c0_224 = arith.constant 0 : index
    %c0_225 = arith.constant 0 : index
    %408 = vector.load %arg5[%c0_224, %c0_225] : memref<1x1xf32, #tpu.memory_space<vmem>>, vector<1x1xf32>
    %409 = vector.broadcast %408 : vector<1x1xf32> to vector<49x1xf32>
    %410 = arith.addf %407, %409 : vector<49x1xf32>
    %cst_226 = arith.constant 0.000000e+00 : f32
    %411 = vector.broadcast %cst_226 : f32 to vector<49x1xf32>
    %412 = arith.subf %411, %410 : vector<49x1xf32>
    %413 = math.exp %412 : vector<49x1xf32>
    %cst_227 = arith.constant 1.000000e+00 : f32
    %414 = vector.broadcast %cst_227 : f32 to vector<49x1xf32>
    %415 = arith.addf %414, %413 : vector<49x1xf32>
    %cst_228 = arith.constant 1.000000e+00 : f32
    %416 = vector.broadcast %cst_228 : f32 to vector<49x1xf32>
    %417 = arith.divf %416, %415 : vector<49x1xf32>
    %c0_229 = arith.constant 0 : index
    %c7_230 = arith.constant 7 : index
    %c0_231 = arith.constant 0 : index
    %c0_232 = arith.constant 0 : index
    %418 = vector.load %arg6[%c0_229, %c7_230, %c0_231, %c0_232] : memref<1x16x49x1xf32, #tpu.memory_space<vmem>>, vector<1x1x49x1xf32>
    %419 = vector.shape_cast %418 : vector<1x1x49x1xf32> to vector<49x1xf32>
    %420 = vector.shape_cast %417 : vector<49x1xf32> to vector<1x1x49x1xf32>
    tpu.vector_store %arg6[%c0_229, %c7_230, %c0_231, %c0_232], %420 {strides = array<i32>} : memref<1x16x49x1xf32, #tpu.memory_space<vmem>>, vector<1x1x49x1xf32>,
    %cst_233 = arith.constant 0.000000e+00 : f32
    %421 = vector.broadcast %cst_233 : f32 to vector<49x32xf32>
    %c4_234 = arith.constant 4 : index
    %c0_235 = arith.constant 0 : index
    %c0_236 = arith.constant 0 : index
    %422 = vector.load %arg4[%c4_234, %c0_235, %c0_236] : memref<9x1x32xf32, #tpu.memory_space<vmem>>, vector<1x1x32xf32>
    %423 = vector.shape_cast %422 : vector<1x1x32xf32> to vector<1x32xf32>
    %424 = vector.broadcast %423 : vector<1x32xf32> to vector<49x32xf32>
    %425 = arith.mulf %96, %424 : vector<49x32xf32>
    %426 = arith.addf %421, %425 : vector<49x32xf32>
    %cst_237 = arith.constant dense<0.000000e+00> : vector<49xf32>
    %427 = vector.multi_reduction <add>, %426, %cst_237 [1] : vector<49x32xf32> to vector<49xf32>
    %428 = vector.shape_cast %427 : vector<49xf32> to vector<49x1xf32>
    %c0_238 = arith.constant 0 : index
    %c0_239 = arith.constant 0 : index
    %429 = vector.load %arg5[%c0_238, %c0_239] : memref<1x1xf32, #tpu.memory_space<vmem>>, vector<1x1xf32>
    %430 = vector.broadcast %429 : vector<1x1xf32> to vector<49x1xf32>
    %431 = arith.addf %428, %430 : vector<49x1xf32>
    %cst_240 = arith.constant 0.000000e+00 : f32
    %432 = vector.broadcast %cst_240 : f32 to vector<49x1xf32>
    %433 = arith.subf %432, %431 : vector<49x1xf32>
    %434 = math.exp %433 : vector<49x1xf32>
    %cst_241 = arith.constant 1.000000e+00 : f32
    %435 = vector.broadcast %cst_241 : f32 to vector<49x1xf32>
    %436 = arith.addf %435, %434 : vector<49x1xf32>
    %cst_242 = arith.constant 1.000000e+00 : f32
    %437 = vector.broadcast %cst_242 : f32 to vector<49x1xf32>
    %438 = arith.divf %437, %436 : vector<49x1xf32>
    %c0_243 = arith.constant 0 : index
    %c8_244 = arith.constant 8 : index
    %c0_245 = arith.constant 0 : index
    %c0_246 = arith.constant 0 : index
    %439 = vector.load %arg6[%c0_243, %c8_244, %c0_245, %c0_246] : memref<1x16x49x1xf32, #tpu.memory_space<vmem>>, vector<1x1x49x1xf32>
    %440 = vector.shape_cast %439 : vector<1x1x49x1xf32> to vector<49x1xf32>
    %441 = vector.shape_cast %438 : vector<49x1xf32> to vector<1x1x49x1xf32>
    tpu.vector_store %arg6[%c0_243, %c8_244, %c0_245, %c0_246], %441 {strides = array<i32>} : memref<1x16x49x1xf32, #tpu.memory_space<vmem>>, vector<1x1x49x1xf32>,
    %cst_247 = arith.constant 0.000000e+00 : f32
    %442 = vector.broadcast %cst_247 : f32 to vector<49x32xf32>
    %c3_248 = arith.constant 3 : index
    %c0_249 = arith.constant 0 : index
    %c0_250 = arith.constant 0 : index
    %443 = vector.load %arg4[%c3_248, %c0_249, %c0_250] : memref<9x1x32xf32, #tpu.memory_space<vmem>>, vector<1x1x32xf32>
    %444 = vector.shape_cast %443 : vector<1x1x32xf32> to vector<1x32xf32>
    %445 = vector.broadcast %444 : vector<1x32xf32> to vector<49x32xf32>
    %446 = arith.mulf %96, %445 : vector<49x32xf32>
    %447 = arith.addf %442, %446 : vector<49x32xf32>
    %c5_251 = arith.constant 5 : index
    %c0_252 = arith.constant 0 : index
    %c0_253 = arith.constant 0 : index
    %448 = vector.load %arg4[%c5_251, %c0_252, %c0_253] : memref<9x1x32xf32, #tpu.memory_space<vmem>>, vector<1x1x32xf32>
    %449 = vector.shape_cast %448 : vector<1x1x32xf32> to vector<1x32xf32>
    %450 = vector.broadcast %449 : vector<1x32xf32> to vector<49x32xf32>
    %451 = arith.mulf %118, %450 : vector<49x32xf32>
    %452 = arith.addf %447, %451 : vector<49x32xf32>
    %cst_254 = arith.constant dense<0.000000e+00> : vector<49xf32>
    %453 = vector.multi_reduction <add>, %452, %cst_254 [1] : vector<49x32xf32> to vector<49xf32>
    %454 = vector.shape_cast %453 : vector<49xf32> to vector<49x1xf32>
    %c0_255 = arith.constant 0 : index
    %c0_256 = arith.constant 0 : index
    %455 = vector.load %arg5[%c0_255, %c0_256] : memref<1x1xf32, #tpu.memory_space<vmem>>, vector<1x1xf32>
    %456 = vector.broadcast %455 : vector<1x1xf32> to vector<49x1xf32>
    %457 = arith.addf %454, %456 : vector<49x1xf32>
    %cst_257 = arith.constant 0.000000e+00 : f32
    %458 = vector.broadcast %cst_257 : f32 to vector<49x1xf32>
    %459 = arith.subf %458, %457 : vector<49x1xf32>
    %460 = math.exp %459 : vector<49x1xf32>
    %cst_258 = arith.constant 1.000000e+00 : f32
    %461 = vector.broadcast %cst_258 : f32 to vector<49x1xf32>
    %462 = arith.addf %461, %460 : vector<49x1xf32>
    %cst_259 = arith.constant 1.000000e+00 : f32
    %463 = vector.broadcast %cst_259 : f32 to vector<49x1xf32>
    %464 = arith.divf %463, %462 : vector<49x1xf32>
    %c0_260 = arith.constant 0 : index
    %c9 = arith.constant 9 : index
    %c0_261 = arith.constant 0 : index
    %c0_262 = arith.constant 0 : index
    %465 = vector.load %arg6[%c0_260, %c9, %c0_261, %c0_262] : memref<1x16x49x1xf32, #tpu.memory_space<vmem>>, vector<1x1x49x1xf32>
    %466 = vector.shape_cast %465 : vector<1x1x49x1xf32> to vector<49x1xf32>
    %467 = vector.shape_cast %464 : vector<49x1xf32> to vector<1x1x49x1xf32>
    tpu.vector_store %arg6[%c0_260, %c9, %c0_261, %c0_262], %467 {strides = array<i32>} : memref<1x16x49x1xf32, #tpu.memory_space<vmem>>, vector<1x1x49x1xf32>,
    %cst_263 = arith.constant 0.000000e+00 : f32
    %468 = vector.broadcast %cst_263 : f32 to vector<49x32xf32>
    %c4_264 = arith.constant 4 : index
    %c0_265 = arith.constant 0 : index
    %c0_266 = arith.constant 0 : index
    %469 = vector.load %arg4[%c4_264, %c0_265, %c0_266] : memref<9x1x32xf32, #tpu.memory_space<vmem>>, vector<1x1x32xf32>
    %470 = vector.shape_cast %469 : vector<1x1x32xf32> to vector<1x32xf32>
    %471 = vector.broadcast %470 : vector<1x32xf32> to vector<49x32xf32>
    %472 = arith.mulf %118, %471 : vector<49x32xf32>
    %473 = arith.addf %468, %472 : vector<49x32xf32>
    %cst_267 = arith.constant dense<0.000000e+00> : vector<49xf32>
    %474 = vector.multi_reduction <add>, %473, %cst_267 [1] : vector<49x32xf32> to vector<49xf32>
    %475 = vector.shape_cast %474 : vector<49xf32> to vector<49x1xf32>
    %c0_268 = arith.constant 0 : index
    %c0_269 = arith.constant 0 : index
    %476 = vector.load %arg5[%c0_268, %c0_269] : memref<1x1xf32, #tpu.memory_space<vmem>>, vector<1x1xf32>
    %477 = vector.broadcast %476 : vector<1x1xf32> to vector<49x1xf32>
    %478 = arith.addf %475, %477 : vector<49x1xf32>
    %cst_270 = arith.constant 0.000000e+00 : f32
    %479 = vector.broadcast %cst_270 : f32 to vector<49x1xf32>
    %480 = arith.subf %479, %478 : vector<49x1xf32>
    %481 = math.exp %480 : vector<49x1xf32>
    %cst_271 = arith.constant 1.000000e+00 : f32
    %482 = vector.broadcast %cst_271 : f32 to vector<49x1xf32>
    %483 = arith.addf %482, %481 : vector<49x1xf32>
    %cst_272 = arith.constant 1.000000e+00 : f32
    %484 = vector.broadcast %cst_272 : f32 to vector<49x1xf32>
    %485 = arith.divf %484, %483 : vector<49x1xf32>
    %c0_273 = arith.constant 0 : index
    %c10 = arith.constant 10 : index
    %c0_274 = arith.constant 0 : index
    %c0_275 = arith.constant 0 : index
    %486 = vector.load %arg6[%c0_273, %c10, %c0_274, %c0_275] : memref<1x16x49x1xf32, #tpu.memory_space<vmem>>, vector<1x1x49x1xf32>
    %487 = vector.shape_cast %486 : vector<1x1x49x1xf32> to vector<49x1xf32>
    %488 = vector.shape_cast %485 : vector<49x1xf32> to vector<1x1x49x1xf32>
    tpu.vector_store %arg6[%c0_273, %c10, %c0_274, %c0_275], %488 {strides = array<i32>} : memref<1x16x49x1xf32, #tpu.memory_space<vmem>>, vector<1x1x49x1xf32>,
    %cst_276 = arith.constant 0.000000e+00 : f32
    %489 = vector.broadcast %cst_276 : f32 to vector<49x32xf32>
    %c3_277 = arith.constant 3 : index
    %c0_278 = arith.constant 0 : index
    %c0_279 = arith.constant 0 : index
    %490 = vector.load %arg4[%c3_277, %c0_278, %c0_279] : memref<9x1x32xf32, #tpu.memory_space<vmem>>, vector<1x1x32xf32>
    %491 = vector.shape_cast %490 : vector<1x1x32xf32> to vector<1x32xf32>
    %492 = vector.broadcast %491 : vector<1x32xf32> to vector<49x32xf32>
    %493 = arith.mulf %118, %492 : vector<49x32xf32>
    %494 = arith.addf %489, %493 : vector<49x32xf32>
    %c5_280 = arith.constant 5 : index
    %c0_281 = arith.constant 0 : index
    %c0_282 = arith.constant 0 : index
    %495 = vector.load %arg4[%c5_280, %c0_281, %c0_282] : memref<9x1x32xf32, #tpu.memory_space<vmem>>, vector<1x1x32xf32>
    %496 = vector.shape_cast %495 : vector<1x1x32xf32> to vector<1x32xf32>
    %497 = vector.broadcast %496 : vector<1x32xf32> to vector<49x32xf32>
    %498 = arith.mulf %202, %497 : vector<49x32xf32>
    %499 = arith.addf %494, %498 : vector<49x32xf32>
    %cst_283 = arith.constant dense<0.000000e+00> : vector<49xf32>
    %500 = vector.multi_reduction <add>, %499, %cst_283 [1] : vector<49x32xf32> to vector<49xf32>
    %501 = vector.shape_cast %500 : vector<49xf32> to vector<49x1xf32>
    %c0_284 = arith.constant 0 : index
    %c0_285 = arith.constant 0 : index
    %502 = vector.load %arg5[%c0_284, %c0_285] : memref<1x1xf32, #tpu.memory_space<vmem>>, vector<1x1xf32>
    %503 = vector.broadcast %502 : vector<1x1xf32> to vector<49x1xf32>
    %504 = arith.addf %501, %503 : vector<49x1xf32>
    %cst_286 = arith.constant 0.000000e+00 : f32
    %505 = vector.broadcast %cst_286 : f32 to vector<49x1xf32>
    %506 = arith.subf %505, %504 : vector<49x1xf32>
    %507 = math.exp %506 : vector<49x1xf32>
    %cst_287 = arith.constant 1.000000e+00 : f32
    %508 = vector.broadcast %cst_287 : f32 to vector<49x1xf32>
    %509 = arith.addf %508, %507 : vector<49x1xf32>
    %cst_288 = arith.constant 1.000000e+00 : f32
    %510 = vector.broadcast %cst_288 : f32 to vector<49x1xf32>
    %511 = arith.divf %510, %509 : vector<49x1xf32>
    %c0_289 = arith.constant 0 : index
    %c11 = arith.constant 11 : index
    %c0_290 = arith.constant 0 : index
    %c0_291 = arith.constant 0 : index
    %512 = vector.load %arg6[%c0_289, %c11, %c0_290, %c0_291] : memref<1x16x49x1xf32, #tpu.memory_space<vmem>>, vector<1x1x49x1xf32>
    %513 = vector.shape_cast %512 : vector<1x1x49x1xf32> to vector<49x1xf32>
    %514 = vector.shape_cast %511 : vector<49x1xf32> to vector<1x1x49x1xf32>
    tpu.vector_store %arg6[%c0_289, %c11, %c0_290, %c0_291], %514 {strides = array<i32>} : memref<1x16x49x1xf32, #tpu.memory_space<vmem>>, vector<1x1x49x1xf32>,
    %cst_292 = arith.constant 0.000000e+00 : f32
    %515 = vector.broadcast %cst_292 : f32 to vector<49x32xf32>
    %c1_293 = arith.constant 1 : index
    %c0_294 = arith.constant 0 : index
    %c0_295 = arith.constant 0 : index
    %516 = vector.load %arg4[%c1_293, %c0_294, %c0_295] : memref<9x1x32xf32, #tpu.memory_space<vmem>>, vector<1x1x32xf32>
    %517 = vector.shape_cast %516 : vector<1x1x32xf32> to vector<1x32xf32>
    %518 = vector.broadcast %517 : vector<1x32xf32> to vector<49x32xf32>
    %519 = arith.mulf %96, %518 : vector<49x32xf32>
    %520 = arith.addf %515, %519 : vector<49x32xf32>
    %c7_296 = arith.constant 7 : index
    %c0_297 = arith.constant 0 : index
    %c0_298 = arith.constant 0 : index
    %521 = vector.load %arg4[%c7_296, %c0_297, %c0_298] : memref<9x1x32xf32, #tpu.memory_space<vmem>>, vector<1x1x32xf32>
    %522 = vector.shape_cast %521 : vector<1x1x32xf32> to vector<1x32xf32>
    %523 = vector.broadcast %522 : vector<1x32xf32> to vector<49x32xf32>
    %524 = arith.mulf %146, %523 : vector<49x32xf32>
    %525 = arith.addf %520, %524 : vector<49x32xf32>
    %cst_299 = arith.constant dense<0.000000e+00> : vector<49xf32>
    %526 = vector.multi_reduction <add>, %525, %cst_299 [1] : vector<49x32xf32> to vector<49xf32>
    %527 = vector.shape_cast %526 : vector<49xf32> to vector<49x1xf32>
    %c0_300 = arith.constant 0 : index
    %c0_301 = arith.constant 0 : index
    %528 = vector.load %arg5[%c0_300, %c0_301] : memref<1x1xf32, #tpu.memory_space<vmem>>, vector<1x1xf32>
    %529 = vector.broadcast %528 : vector<1x1xf32> to vector<49x1xf32>
    %530 = arith.addf %527, %529 : vector<49x1xf32>
    %cst_302 = arith.constant 0.000000e+00 : f32
    %531 = vector.broadcast %cst_302 : f32 to vector<49x1xf32>
    %532 = arith.subf %531, %530 : vector<49x1xf32>
    %533 = math.exp %532 : vector<49x1xf32>
    %cst_303 = arith.constant 1.000000e+00 : f32
    %534 = vector.broadcast %cst_303 : f32 to vector<49x1xf32>
    %535 = arith.addf %534, %533 : vector<49x1xf32>
    %cst_304 = arith.constant 1.000000e+00 : f32
    %536 = vector.broadcast %cst_304 : f32 to vector<49x1xf32>
    %537 = arith.divf %536, %535 : vector<49x1xf32>
    %c0_305 = arith.constant 0 : index
    %c12 = arith.constant 12 : index
    %c0_306 = arith.constant 0 : index
    %c0_307 = arith.constant 0 : index
    %538 = vector.load %arg6[%c0_305, %c12, %c0_306, %c0_307] : memref<1x16x49x1xf32, #tpu.memory_space<vmem>>, vector<1x1x49x1xf32>
    %539 = vector.shape_cast %538 : vector<1x1x49x1xf32> to vector<49x1xf32>
    %540 = vector.shape_cast %537 : vector<49x1xf32> to vector<1x1x49x1xf32>
    tpu.vector_store %arg6[%c0_305, %c12, %c0_306, %c0_307], %540 {strides = array<i32>} : memref<1x16x49x1xf32, #tpu.memory_space<vmem>>, vector<1x1x49x1xf32>,
    %cst_308 = arith.constant 0.000000e+00 : f32
    %541 = vector.broadcast %cst_308 : f32 to vector<49x32xf32>
    %c0_309 = arith.constant 0 : index
    %c0_310 = arith.constant 0 : index
    %c0_311 = arith.constant 0 : index
    %542 = vector.load %arg4[%c0_309, %c0_310, %c0_311] : memref<9x1x32xf32, #tpu.memory_space<vmem>>, vector<1x1x32xf32>
    %543 = vector.shape_cast %542 : vector<1x1x32xf32> to vector<1x32xf32>
    %544 = vector.broadcast %543 : vector<1x32xf32> to vector<49x32xf32>
    %545 = arith.mulf %96, %544 : vector<49x32xf32>
    %546 = arith.addf %541, %545 : vector<49x32xf32>
    %c2_312 = arith.constant 2 : index
    %c0_313 = arith.constant 0 : index
    %c0_314 = arith.constant 0 : index
    %547 = vector.load %arg4[%c2_312, %c0_313, %c0_314] : memref<9x1x32xf32, #tpu.memory_space<vmem>>, vector<1x1x32xf32>
    %548 = vector.shape_cast %547 : vector<1x1x32xf32> to vector<1x32xf32>
    %549 = vector.broadcast %548 : vector<1x32xf32> to vector<49x32xf32>
    %550 = arith.mulf %118, %549 : vector<49x32xf32>
    %551 = arith.addf %546, %550 : vector<49x32xf32>
    %c6_315 = arith.constant 6 : index
    %c0_316 = arith.constant 0 : index
    %c0_317 = arith.constant 0 : index
    %552 = vector.load %arg4[%c6_315, %c0_316, %c0_317] : memref<9x1x32xf32, #tpu.memory_space<vmem>>, vector<1x1x32xf32>
    %553 = vector.shape_cast %552 : vector<1x1x32xf32> to vector<1x32xf32>
    %554 = vector.broadcast %553 : vector<1x32xf32> to vector<49x32xf32>
    %555 = arith.mulf %146, %554 : vector<49x32xf32>
    %556 = arith.addf %551, %555 : vector<49x32xf32>
    %c8_318 = arith.constant 8 : index
    %c0_319 = arith.constant 0 : index
    %c0_320 = arith.constant 0 : index
    %557 = vector.load %arg4[%c8_318, %c0_319, %c0_320] : memref<9x1x32xf32, #tpu.memory_space<vmem>>, vector<1x1x32xf32>
    %558 = vector.shape_cast %557 : vector<1x1x32xf32> to vector<1x32xf32>
    %559 = vector.broadcast %558 : vector<1x32xf32> to vector<49x32xf32>
    %560 = arith.mulf %177, %559 : vector<49x32xf32>
    %561 = arith.addf %556, %560 : vector<49x32xf32>
    %cst_321 = arith.constant dense<0.000000e+00> : vector<49xf32>
    %562 = vector.multi_reduction <add>, %561, %cst_321 [1] : vector<49x32xf32> to vector<49xf32>
    %563 = vector.shape_cast %562 : vector<49xf32> to vector<49x1xf32>
    %c0_322 = arith.constant 0 : index
    %c0_323 = arith.constant 0 : index
    %564 = vector.load %arg5[%c0_322, %c0_323] : memref<1x1xf32, #tpu.memory_space<vmem>>, vector<1x1xf32>
    %565 = vector.broadcast %564 : vector<1x1xf32> to vector<49x1xf32>
    %566 = arith.addf %563, %565 : vector<49x1xf32>
    %cst_324 = arith.constant 0.000000e+00 : f32
    %567 = vector.broadcast %cst_324 : f32 to vector<49x1xf32>
    %568 = arith.subf %567, %566 : vector<49x1xf32>
    %569 = math.exp %568 : vector<49x1xf32>
    %cst_325 = arith.constant 1.000000e+00 : f32
    %570 = vector.broadcast %cst_325 : f32 to vector<49x1xf32>
    %571 = arith.addf %570, %569 : vector<49x1xf32>
    %cst_326 = arith.constant 1.000000e+00 : f32
    %572 = vector.broadcast %cst_326 : f32 to vector<49x1xf32>
    %573 = arith.divf %572, %571 : vector<49x1xf32>
    %c0_327 = arith.constant 0 : index
    %c13 = arith.constant 13 : index
    %c0_328 = arith.constant 0 : index
    %c0_329 = arith.constant 0 : index
    %574 = vector.load %arg6[%c0_327, %c13, %c0_328, %c0_329] : memref<1x16x49x1xf32, #tpu.memory_space<vmem>>, vector<1x1x49x1xf32>
    %575 = vector.shape_cast %574 : vector<1x1x49x1xf32> to vector<49x1xf32>
    %576 = vector.shape_cast %573 : vector<49x1xf32> to vector<1x1x49x1xf32>
    tpu.vector_store %arg6[%c0_327, %c13, %c0_328, %c0_329], %576 {strides = array<i32>} : memref<1x16x49x1xf32, #tpu.memory_space<vmem>>, vector<1x1x49x1xf32>,
    %cst_330 = arith.constant 0.000000e+00 : f32
    %577 = vector.broadcast %cst_330 : f32 to vector<49x32xf32>
    %c1_331 = arith.constant 1 : index
    %c0_332 = arith.constant 0 : index
    %c0_333 = arith.constant 0 : index
    %578 = vector.load %arg4[%c1_331, %c0_332, %c0_333] : memref<9x1x32xf32, #tpu.memory_space<vmem>>, vector<1x1x32xf32>
    %579 = vector.shape_cast %578 : vector<1x1x32xf32> to vector<1x32xf32>
    %580 = vector.broadcast %579 : vector<1x32xf32> to vector<49x32xf32>
    %581 = arith.mulf %118, %580 : vector<49x32xf32>
    %582 = arith.addf %577, %581 : vector<49x32xf32>
    %c7_334 = arith.constant 7 : index
    %c0_335 = arith.constant 0 : index
    %c0_336 = arith.constant 0 : index
    %583 = vector.load %arg4[%c7_334, %c0_335, %c0_336] : memref<9x1x32xf32, #tpu.memory_space<vmem>>, vector<1x1x32xf32>
    %584 = vector.shape_cast %583 : vector<1x1x32xf32> to vector<1x32xf32>
    %585 = vector.broadcast %584 : vector<1x32xf32> to vector<49x32xf32>
    %586 = arith.mulf %177, %585 : vector<49x32xf32>
    %587 = arith.addf %582, %586 : vector<49x32xf32>
    %cst_337 = arith.constant dense<0.000000e+00> : vector<49xf32>
    %588 = vector.multi_reduction <add>, %587, %cst_337 [1] : vector<49x32xf32> to vector<49xf32>
    %589 = vector.shape_cast %588 : vector<49xf32> to vector<49x1xf32>
    %c0_338 = arith.constant 0 : index
    %c0_339 = arith.constant 0 : index
    %590 = vector.load %arg5[%c0_338, %c0_339] : memref<1x1xf32, #tpu.memory_space<vmem>>, vector<1x1xf32>
    %591 = vector.broadcast %590 : vector<1x1xf32> to vector<49x1xf32>
    %592 = arith.addf %589, %591 : vector<49x1xf32>
    %cst_340 = arith.constant 0.000000e+00 : f32
    %593 = vector.broadcast %cst_340 : f32 to vector<49x1xf32>
    %594 = arith.subf %593, %592 : vector<49x1xf32>
    %595 = math.exp %594 : vector<49x1xf32>
    %cst_341 = arith.constant 1.000000e+00 : f32
    %596 = vector.broadcast %cst_341 : f32 to vector<49x1xf32>
    %597 = arith.addf %596, %595 : vector<49x1xf32>
    %cst_342 = arith.constant 1.000000e+00 : f32
    %598 = vector.broadcast %cst_342 : f32 to vector<49x1xf32>
    %599 = arith.divf %598, %597 : vector<49x1xf32>
    %c0_343 = arith.constant 0 : index
    %c14 = arith.constant 14 : index
    %c0_344 = arith.constant 0 : index
    %c0_345 = arith.constant 0 : index
    %600 = vector.load %arg6[%c0_343, %c14, %c0_344, %c0_345] : memref<1x16x49x1xf32, #tpu.memory_space<vmem>>, vector<1x1x49x1xf32>
    %601 = vector.shape_cast %600 : vector<1x1x49x1xf32> to vector<49x1xf32>
    %602 = vector.shape_cast %599 : vector<49x1xf32> to vector<1x1x49x1xf32>
    tpu.vector_store %arg6[%c0_343, %c14, %c0_344, %c0_345], %602 {strides = array<i32>} : memref<1x16x49x1xf32, #tpu.memory_space<vmem>>, vector<1x1x49x1xf32>,
    %cst_346 = arith.constant 0.000000e+00 : f32
    %603 = vector.broadcast %cst_346 : f32 to vector<49x32xf32>
    %c0_347 = arith.constant 0 : index
    %c0_348 = arith.constant 0 : index
    %c0_349 = arith.constant 0 : index
    %604 = vector.load %arg4[%c0_347, %c0_348, %c0_349] : memref<9x1x32xf32, #tpu.memory_space<vmem>>, vector<1x1x32xf32>
    %605 = vector.shape_cast %604 : vector<1x1x32xf32> to vector<1x32xf32>
    %606 = vector.broadcast %605 : vector<1x32xf32> to vector<49x32xf32>
    %607 = arith.mulf %118, %606 : vector<49x32xf32>
    %608 = arith.addf %603, %607 : vector<49x32xf32>
    %c2_350 = arith.constant 2 : index
    %c0_351 = arith.constant 0 : index
    %c0_352 = arith.constant 0 : index
    %609 = vector.load %arg4[%c2_350, %c0_351, %c0_352] : memref<9x1x32xf32, #tpu.memory_space<vmem>>, vector<1x1x32xf32>
    %610 = vector.shape_cast %609 : vector<1x1x32xf32> to vector<1x32xf32>
    %611 = vector.broadcast %610 : vector<1x32xf32> to vector<49x32xf32>
    %612 = arith.mulf %202, %611 : vector<49x32xf32>
    %613 = arith.addf %608, %612 : vector<49x32xf32>
    %c6_353 = arith.constant 6 : index
    %c0_354 = arith.constant 0 : index
    %c0_355 = arith.constant 0 : index
    %614 = vector.load %arg4[%c6_353, %c0_354, %c0_355] : memref<9x1x32xf32, #tpu.memory_space<vmem>>, vector<1x1x32xf32>
    %615 = vector.shape_cast %614 : vector<1x1x32xf32> to vector<1x32xf32>
    %616 = vector.broadcast %615 : vector<1x32xf32> to vector<49x32xf32>
    %617 = arith.mulf %177, %616 : vector<49x32xf32>
    %618 = arith.addf %613, %617 : vector<49x32xf32>
    %c8_356 = arith.constant 8 : index
    %c0_357 = arith.constant 0 : index
    %c0_358 = arith.constant 0 : index
    %619 = vector.load %arg4[%c8_356, %c0_357, %c0_358] : memref<9x1x32xf32, #tpu.memory_space<vmem>>, vector<1x1x32xf32>
    %620 = vector.shape_cast %619 : vector<1x1x32xf32> to vector<1x32xf32>
    %621 = vector.broadcast %620 : vector<1x32xf32> to vector<49x32xf32>
    %622 = arith.mulf %174, %621 : vector<49x32xf32>
    %623 = arith.addf %618, %622 : vector<49x32xf32>
    %cst_359 = arith.constant dense<0.000000e+00> : vector<49xf32>
    %624 = vector.multi_reduction <add>, %623, %cst_359 [1] : vector<49x32xf32> to vector<49xf32>
    %625 = vector.shape_cast %624 : vector<49xf32> to vector<49x1xf32>
    %c0_360 = arith.constant 0 : index
    %c0_361 = arith.constant 0 : index
    %626 = vector.load %arg5[%c0_360, %c0_361] : memref<1x1xf32, #tpu.memory_space<vmem>>, vector<1x1xf32>
    %627 = vector.broadcast %626 : vector<1x1xf32> to vector<49x1xf32>
    %628 = arith.addf %625, %627 : vector<49x1xf32>
    %cst_362 = arith.constant 0.000000e+00 : f32
    %629 = vector.broadcast %cst_362 : f32 to vector<49x1xf32>
    %630 = arith.subf %629, %628 : vector<49x1xf32>
    %631 = math.exp %630 : vector<49x1xf32>
    %cst_363 = arith.constant 1.000000e+00 : f32
    %632 = vector.broadcast %cst_363 : f32 to vector<49x1xf32>
    %633 = arith.addf %632, %631 : vector<49x1xf32>
    %cst_364 = arith.constant 1.000000e+00 : f32
    %634 = vector.broadcast %cst_364 : f32 to vector<49x1xf32>
    %635 = arith.divf %634, %633 : vector<49x1xf32>
    %c0_365 = arith.constant 0 : index
    %c15 = arith.constant 15 : index
    %c0_366 = arith.constant 0 : index
    %c0_367 = arith.constant 0 : index
    %636 = vector.load %arg6[%c0_365, %c15, %c0_366, %c0_367] : memref<1x16x49x1xf32, #tpu.memory_space<vmem>>, vector<1x1x49x1xf32>
    %637 = vector.shape_cast %636 : vector<1x1x49x1xf32> to vector<49x1xf32>
    %638 = vector.shape_cast %635 : vector<49x1xf32> to vector<1x1x49x1xf32>
    tpu.vector_store %arg6[%c0_365, %c15, %c0_366, %c0_367], %638 {strides = array<i32>} : memref<1x16x49x1xf32, #tpu.memory_space<vmem>>, vector<1x1x49x1xf32>,
    return
  }
  func.func @transform_0(%arg0: i32) -> (i32, i32, i32) {
    %c0_i32 = arith.constant 0 : i32
    %c0_i32_0 = arith.constant 0 : i32
    %c0_i32_1 = arith.constant 0 : i32
    return %arg0, %c0_i32, %c0_i32_0 : i32, i32, i32
  }
  func.func @transform_1(%arg0: i32) -> (i32, i32, i32) {
    %c0_i32 = arith.constant 0 : i32
    %c0_i32_0 = arith.constant 0 : i32
    %c0_i32_1 = arith.constant 0 : i32
    %c0_i32_2 = arith.constant 0 : i32
    return %c0_i32, %c0_i32_0, %c0_i32_1 : i32, i32, i32
  }
  func.func @transform_2(%arg0: i32) -> (i32, i32) {
    %c0_i32 = arith.constant 0 : i32
    %c0_i32_0 = arith.constant 0 : i32
    %c0_i32_1 = arith.constant 0 : i32
    return %c0_i32, %c0_i32_0 : i32, i32
  }
  func.func @transform_3(%arg0: i32) -> (i32, i32, i32) {
    %c0_i32 = arith.constant 0 : i32
    %c0_i32_0 = arith.constant 0 : i32
    %c0_i32_1 = arith.constant 0 : i32
    %c0_i32_2 = arith.constant 0 : i32
    return %c0_i32, %c0_i32_0, %c0_i32_1 : i32, i32, i32
  }
  func.func @transform_4(%arg0: i32) -> (i32, i32) {
    %c0_i32 = arith.constant 0 : i32
    %c0_i32_0 = arith.constant 0 : i32
    %c0_i32_1 = arith.constant 0 : i32
    return %c0_i32, %c0_i32_0 : i32, i32
  }
  func.func @transform_5(%arg0: i32) -> (i32, i32, i32, i32) {
    %c0_i32 = arith.constant 0 : i32
    %c0_i32_0 = arith.constant 0 : i32
    %c0_i32_1 = arith.constant 0 : i32
    %c0_i32_2 = arith.constant 0 : i32
    return %arg0, %c0_i32, %c0_i32_0, %c0_i32_1 : i32, i32, i32, i32
  }
}

</mosaic_0001>

<llo_original>
// kernel: vae_forward.3
$region0: #{vae_forward.3}
  #allocation0 [shape = 'u32[]', space=smem, size = 0x4, offset = 0x4, fixed_abs, tag = 'smem constant byte address 0x4 - core index']
  #allocation1 [shape = 'u32[144,128]{1,0:T(1,128)}', space=vmem, size = 0x12000, scoped, tag = 'internal scratch']
  %s0 = inlined_call_operand.vmem [shape: f32[2,4,49,9], index: 0, kind: input, shape index: {}]
  %s1 = inlined_call_operand.vmem [shape: f32[9,32], index: 1, kind: input, shape index: {}]
  %s2 = inlined_call_operand.vmem [shape: f32[1,32], index: 2, kind: input, shape index: {}]
  %s3 = inlined_call_operand.vmem [shape: f32[9,32,64], index: 3, kind: input, shape index: {}]
  %s4 = inlined_call_operand.vmem [shape: f32[1,64], index: 4, kind: input, shape index: {}]
  %s5 = inlined_call_operand.vmem [shape: f32[2,49,64], index: 5, kind: output, shape index: {}]
  %s6 = sld [smem:[#allocation0]]
  $region53: #{vae_forward.3} parent=0
    _
  %s8 = ssub.s32 1, %s6
  %s9 = scalar_select 0, %s8, %s6
  loop: start=0, step=1, limit=4
  $region2: #{vae_forward.3} parent=0 // loop_pre_header
    _
  $region3: #{vae_forward.3} parent=0 // loop_header
    %s11 = sphi 0, %s15
    %p12 = scmp.ge.s32.totalorder %s11, 4
    %s21 = sphi 0, %s23
    %s24 = sphi 0, %s21
    %s25 = sphi 0, %s24
    %s41 = sphi 0, %s25
    %s45 = sphi 0, %s45
    %s47 = sphi 0, %s45
    %s48 = sphi 0, %s47
    %s62 = sphi 0, %s48
    %s66 = sphi 0, %s66
    %s68 = sphi 0, %s66
    %s69 = sphi 0, %s68
    %s83 = sphi 0, %s69
    %s87 = sphi 0, %s87
    %s89 = sphi 0, %s87
    %s90 = sphi 0, %s89
    %s104 = sphi 0, %s90
    %s108 = sphi 0, %s108
    %s110 = sphi 0, %s108
    %s111 = sphi 0, %s110
    %s125 = sphi 0, %s111
    %s131 = sphi 0, %s133
    %s134 = sphi 0, %s131
    %s135 = sphi 0, %s134
    %s151 = sphi 0, %s135
  $region4: #{vae_forward.3} parent=0 // loop_header_branch
    %14 = sbr.rel (%p12) target = $region8
  $region5: #{vae_forward.3} parent=0 // loop_body
    %s16 = ssub.s32 %s11, 1
    %s17 = ssub.s32 %s11, 2
    %s18 = sadd.s32 %s11, 1
    %s19 = ssub.s32 %s11, %s18
    %p20 = scmp.eq.s32.totalorder %s19, 0
    %s22 = sadd.s32 %s21, 1
    %s23 = scalar_select %p20, %s21, %s22
    %p26 = pneg %p20
    %p27 = scmp.eq.s32.totalorder %s11, 1
    %p28 = por %p26, %p27
    %p29 = scmp.ne.s32.totalorder %s21, %s24
    %p30 = scmp.eq.s32.totalorder %s11, 0
    %p31 = por %p29, %p30
    %p32 = scmp.ne.s32.totalorder %s21, %s24
    %p33 = scmp.eq.s32.totalorder %s16, 1
    %p34 = por %p32, %p33
    %p35 = scmp.ne.s32.totalorder %s24, %s25
    %p36 = scmp.eq.s32.totalorder %s16, 0
    %p37 = por %p35, %p36
    %p38 = scmp.ne.s32.totalorder %s24, %s25
    %p39 = scmp.eq.s32.totalorder %s17, 1
    %p40 = por %p38, %p39
    %p42 = scmp.ne.s32.totalorder %s25, %s41
    %p43 = scmp.eq.s32.totalorder %s17, 0
    %p44 = por %p42, %p43
    %s46 = sadd.s32 %s45, 1
    %p49 = scmp.eq.s32.totalorder %s11, 1
    %p50 = scmp.ne.s32.totalorder %s45, %s47
    %p51 = scmp.eq.s32.totalorder %s11, 0
    %p52 = por %p50, %p51
    %p53 = scmp.ne.s32.totalorder %s45, %s47
    %p54 = scmp.eq.s32.totalorder %s16, 1
    %p55 = por %p53, %p54
    %p56 = scmp.ne.s32.totalorder %s47, %s48
    %p57 = scmp.eq.s32.totalorder %s16, 0
    %p58 = por %p56, %p57
    %p59 = scmp.ne.s32.totalorder %s47, %s48
    %p60 = scmp.eq.s32.totalorder %s17, 1
    %p61 = por %p59, %p60
    %p63 = scmp.ne.s32.totalorder %s48, %s62
    %p64 = scmp.eq.s32.totalorder %s17, 0
    %p65 = por %p63, %p64
    %s67 = sadd.s32 %s66, 1
    %p70 = scmp.eq.s32.totalorder %s11, 1
    %p71 = scmp.ne.s32.totalorder %s66, %s68
    %p72 = scmp.eq.s32.totalorder %s11, 0
    %p73 = por %p71, %p72
    %p74 = scmp.ne.s32.totalorder %s66, %s68
    %p75 = scmp.eq.s32.totalorder %s16, 1
    %p76 = por %p74, %p75
    %p77 = scmp.ne.s32.totalorder %s68, %s69
    %p78 = scmp.eq.s32.totalorder %s16, 0
    %p79 = por %p77, %p78
    %p80 = scmp.ne.s32.totalorder %s68, %s69
    %p81 = scmp.eq.s32.totalorder %s17, 1
    %p82 = por %p80, %p81
    %p84 = scmp.ne.s32.totalorder %s69, %s83
    %p85 = scmp.eq.s32.totalorder %s17, 0
    %p86 = por %p84, %p85
    %s88 = sadd.s32 %s87, 1
    %p91 = scmp.eq.s32.totalorder %s11, 1
    %p92 = scmp.ne.s32.totalorder %s87, %s89
    %p93 = scmp.eq.s32.totalorder %s11, 0
    %p94 = por %p92, %p93
    %p95 = scmp.ne.s32.totalorder %s87, %s89
    %p96 = scmp.eq.s32.totalorder %s16, 1
    %p97 = por %p95, %p96
    %p98 = scmp.ne.s32.totalorder %s89, %s90
    %p99 = scmp.eq.s32.totalorder %s16, 0
    %p100 = por %p98, %p99
    %p101 = scmp.ne.s32.totalorder %s89, %s90
    %p102 = scmp.eq.s32.totalorder %s17, 1
    %p103 = por %p101, %p102
    %p105 = scmp.ne.s32.totalorder %s90, %s104
    %p106 = scmp.eq.s32.totalorder %s17, 0
    %p107 = por %p105, %p106
    %s109 = sadd.s32 %s108, 1
    %p112 = scmp.eq.s32.totalorder %s11, 1
    %p113 = scmp.ne.s32.totalorder %s108, %s110
    %p114 = scmp.eq.s32.totalorder %s11, 0
    %p115 = por %p113, %p114
    %p116 = scmp.ne.s32.totalorder %s108, %s110
    %p117 = scmp.eq.s32.totalorder %s16, 1
    %p118 = por %p116, %p117
    %p119 = scmp.ne.s32.totalorder %s110, %s111
    %p120 = scmp.eq.s32.totalorder %s16, 0
    %p121 = por %p119, %p120
    %p122 = scmp.ne.s32.totalorder %s110, %s111
    %p123 = scmp.eq.s32.totalorder %s17, 1
    %p124 = por %p122, %p123
    %p126 = scmp.ne.s32.totalorder %s111, %s125
    %p127 = scmp.eq.s32.totalorder %s17, 0
    %p128 = por %p126, %p127
    %s129 = ssub.s32 %s11, %s18
    %p130 = scmp.eq.s32.totalorder %s129, 0
    %s132 = sadd.s32 %s131, 1
    %s133 = scalar_select %p130, %s131, %s132
    %p136 = pneg %p130
    %p137 = scmp.eq.s32.totalorder %s11, 1
    %p138 = por %p136, %p137
    %p139 = scmp.ne.s32.totalorder %s131, %s134
    %p140 = scmp.eq.s32.totalorder %s11, 0
    %p141 = por %p139, %p140
    %p142 = scmp.ne.s32.totalorder %s131, %s134
    %p143 = scmp.eq.s32.totalorder %s16, 1
    %p144 = por %p142, %p143
    %p145 = scmp.ne.s32.totalorder %s134, %s135
    %p146 = scmp.eq.s32.totalorder %s16, 0
    %p147 = por %p145, %p146
    %p148 = scmp.ne.s32.totalorder %s134, %s135
    %p149 = scmp.eq.s32.totalorder %s17, 1
    %p150 = por %p148, %p149
    %p152 = scmp.ne.s32.totalorder %s135, %s151
    %p153 = scmp.eq.s32.totalorder %s17, 0
    %p154 = por %p152, %p153
    %p155 = scmp.le.s32.totalorder 1, %s11
    %p156 = scmp.lt.s32.totalorder %s11, 3
    %p157 = pnand %p155, %p156
    %p158 = pneg %p157
    // Predicated region
    $region9: #{vae_forward.3} parent=5 // pred_check
      _
    $region10: #{vae_forward.3} parent=5 // pred_check_branch
      %160 = sbr.rel (%p157) target = $region12
    $region11: #{vae_forward.3} parent=5 // pred_region
      %s161 = ssub.s32 %s11, 1
      // Predicated region
      $region13: #{vae_forward.3} parent=11 // pred_check
        %p162 = pneg %p58
      $region14: #{vae_forward.3} parent=11 // pred_check_branch
        %164 = sbr.rel (%p162) target = $region16
      $region15: #{vae_forward.3} parent=11 // pred_region
        _
      $region16: #{vae_forward.3} parent=11 // pred_fallthru
        _
      // Predicated region
      $region17: #{vae_forward.3} parent=11 // pred_check
        %p165 = pneg %p79
      $region18: #{vae_forward.3} parent=11 // pred_check_branch
        %167 = sbr.rel (%p165) target = $region20
      $region19: #{vae_forward.3} parent=11 // pred_region
        _
      $region20: #{vae_forward.3} parent=11 // pred_fallthru
        _
      // Predicated region
      $region21: #{vae_forward.3} parent=11 // pred_check
        %p168 = pneg %p100
      $region22: #{vae_forward.3} parent=11 // pred_check_branch
        %170 = sbr.rel (%p168) target = $region24
      $region23: #{vae_forward.3} parent=11 // pred_region
        _
      $region24: #{vae_forward.3} parent=11 // pred_fallthru
        _
      // Predicated region
      $region25: #{vae_forward.3} parent=11 // pred_check
        %p171 = pneg %p121
      $region26: #{vae_forward.3} parent=11 // pred_check_branch
        %173 = sbr.rel (%p171) target = $region28
      $region27: #{vae_forward.3} parent=11 // pred_region
        _
      $region28: #{vae_forward.3} parent=11 // pred_fallthru
        _
    $region12: #{vae_forward.3} parent=5 // pred_fallthru
      _
    %p174 = scmp.lt.s32.totalorder %s11, 2
    // Predicated region
    $region29: #{vae_forward.3} parent=5 // pred_check
      %p175 = pneg %p174
    $region30: #{vae_forward.3} parent=5 // pred_check_branch
      %177 = sbr.rel (%p175) target = $region32
    $region31: #{vae_forward.3} parent=5 // pred_region
      // Predicated region
      $region33: #{vae_forward.3} parent=31 // pred_check
        %p178 = pneg %p31
      $region34: #{vae_forward.3} parent=31 // pred_check_branch
        %180 = sbr.rel (%p178) target = $region36
      $region35: #{vae_forward.3} parent=31 // pred_region
        %p181 = scmp.lt.s32.totalorder %s11, 1
        %s182 = scalar_select %p181, %s11, 1
        %s183 = smul.addr %s182, 28
        %s184 = smul.addr %s183, 8
        %s185 = scalar_lea.vmem %s0, %s184
      $region36: #{vae_forward.3} parent=31 // pred_fallthru
        _
    $region32: #{vae_forward.3} parent=5 // pred_fallthru
      _
    %p186 = scmp.le.s32.totalorder 1, %s11
    %p187 = scmp.lt.s32.totalorder %s11, 3
    %p188 = pnand %p186, %p187
    %p189 = pneg %p188
    // Predicated region
    $region37: #{vae_forward.3} parent=5 // pred_check
      _
    $region38: #{vae_forward.3} parent=5 // pred_check_branch
      %191 = sbr.rel (%p188) target = $region40
    $region39: #{vae_forward.3} parent=5 // pred_region
      %s192 = ssub.s32 %s11, 1
      %p193 = scmp.lt.s32.totalorder %s16, 1
      %s194 = scalar_select %p193, %s16, 1
      %s195 = smul.addr %s194, 28
      %s196 = smul.addr %s195, 8
      %s197 = scalar_lea.vmem %s0, %s196
      %p198 = pneg %p37
      %p199 = pneg %p34
      %p200 = pneg %p58
      %p201 = pneg %p55
      %p202 = pneg %p79
      %p203 = pneg %p76
      %p204 = pneg %p100
      %p205 = pneg %p97
      %p206 = pneg %p121
      %p207 = pneg %p118
      %p208 = pneg %p147
      %p209 = pneg %p144
      %p210 = scmp.lt.s32.totalorder %s16, 1
      %s211 = scalar_select %p210, %s16, 1
      %s212 = smul.addr %s211, 7
      %s213 = smul.addr %s212, 8
      %s214 = scalar_lea.vmem %s5, %s213
      %p215 = scmp.lt.s32.totalorder %s16, 1
      %s216 = scalar_select %p215, %s16, 1
      %s217 = smul.addr %s216, 28
      %s218 = smul.addr %s217, 8
      %s219 = scalar_lea.vmem %s0, %s218
      %p220 = scmp.lt.s32.totalorder %s16, 1
      %s221 = scalar_select %p220, %s16, 1
      %s222 = smul.addr %s221, 7
      %s223 = smul.addr %s222, 8
      %s224 = scalar_lea.vmem %s5, %s223
      %v225 = vlaneseq
      %v226 = vshrl.u32 %v225, 7
      %v227 = vadd.s32 %v226, 8
      %v228 = vadd.s32 %v226, 16
      %v229 = vadd.s32 %v226, 24
      %v230 = vadd.s32 %v226, 32
      %v231 = vadd.s32 %v226, 40
      %v232 = vadd.s32 %v226, 48
      %v233 = vld [vmem:[%s219] sm:$0xff]
      %v234 = vld [vmem:[%s219 + $0x8] sm:$0xff]
      %v235 = vld [vmem:[%s219 + $0x10] sm:$0xff]
      %v236 = vld [vmem:[%s219 + $0x18] sm:$0xff]
      %v237 = vld [vmem:[%s219 + $0x20] sm:$0xff]
      %v238 = vld [vmem:[%s219 + $0x28] sm:$0xff]
      %v239 = vld [vmem:[%s219 + $0x30] sm:$0x1]
      %v240 = vld [vmem:[%s1] sm:$0xff]
      %v241 = vld [vmem:[%s1 + $0x8] sm:$0x1]
      %v242 = vld [vmem:[%s2] sm:$0x1]
      %v244 = vlaneseq
      %v245 = vshrl.u32 %v244, 7
      %v246 = vsub.s32 0, %v245
      %v247 = vrot.slane %v242, %v246
      %vm249 = vcmask 72704
      %v251 = vsel %vm249, %v233, 0
      %v254 = vsel %vm249, %v234, 0
      %v257 = vsel %vm249, %v235, 0
      %v260 = vsel %vm249, %v236, 0
      %v263 = vsel %vm249, %v237, 0
      %v266 = vsel %vm249, %v238, 0
      %v269 = vsel %vm249, %v239, 0
      %vm271 = vcmask 1040384
      %v273 = vsel %vm271, %v241, 0
      %275 = vmatprep.subr.mxu0 0.0
      %276 = vmatpush1.msra.mxu0 0.0
      %277 = vmatprep.subr.mxu0 0.0
      %278 = vmatpush1.msra.mxu0 0.0
      %279 = vmatprep.subr.mxu0 0.0
      %280 = vmatpush1.msra.mxu0 0.0
      %281 = vmatprep.subr.mxu0 0.0
      %282 = vmatpush1.msra.mxu0 0.0
      %283 = vmatprep.subr.mxu0 0.0
      %284 = vmatpush1.msra.mxu0 0.0
      %285 = vmatprep.subr.mxu0 0.0
      %286 = vmatpush1.msra.mxu0 0.0
      %287 = vmatprep.subr.mxu0 0.0
      %288 = vmatpush1.msra.mxu0 0.0
      %289 = vmatprep.subr.mxu0 0.0
      %290 = vmatpush1.msra.mxu0 0.0
      %291 = vmatprep.subr.mxu0 0.0
      %292 = vmatpush1.msra.mxu0 0.0
      %293 = vmatprep.subr.mxu0 0.0
      %294 = vmatpush1.msra.mxu0 0.0
      %295 = vmatprep.subr.mxu0 0.0
      %296 = vmatpush1.msra.mxu0 0.0
      %297 = vmatprep.subr.mxu0 0.0
      %298 = vmatpush1.msra.mxu0 0.0
      %299 = vmatprep.subr.mxu0 0.0
      %300 = vmatpush1.msra.mxu0 0.0
      %301 = vmatprep.subr.mxu0 0.0
      %302 = vmatpush1.msra.mxu0 0.0
      %303 = vmatprep.subr.mxu0 0.0
      %304 = vmatpush1.msra.mxu0 %v273
      %305 = vmatprep.subr.mxu0 0.0
      %306 = vmatpush1.msra.mxu0 %v240
      %307 = vmatprep.subr.mxu0 0.0
      %308 = vmatpush2.msra.mxu0 0.0
      %309 = vmatprep.subr.mxu0 0.0
      %310 = vmatpush2.msra.mxu0 0.0
      %311 = vmatprep.subr.mxu0 0.0
      %312 = vmatpush2.msra.mxu0 0.0
      %313 = vmatprep.subr.mxu0 0.0
      %314 = vmatpush2.msra.mxu0 0.0
      %315 = vmatprep.subr.mxu0 0.0
      %316 = vmatpush2.msra.mxu0 0.0
      %317 = vmatprep.subr.mxu0 0.0
      %318 = vmatpush2.msra.mxu0 0.0
      %319 = vmatprep.subr.mxu0 0.0
      %320 = vmatpush2.msra.mxu0 0.0
      %321 = vmatprep.subr.mxu0 0.0
      %322 = vmatpush2.msra.mxu0 0.0
      %323 = vmatprep.subr.mxu0 0.0
      %324 = vmatpush2.msra.mxu0 0.0
      %325 = vmatprep.subr.mxu0 0.0
      %326 = vmatpush2.msra.mxu0 0.0
      %327 = vmatprep.subr.mxu0 0.0
      %328 = vmatpush2.msra.mxu0 0.0
      %329 = vmatprep.subr.mxu0 0.0
      %330 = vmatpush2.msra.mxu0 0.0
      %331 = vmatprep.subr.mxu0 0.0
      %332 = vmatpush2.msra.mxu0 0.0
      %333 = vmatprep.subr.mxu0 0.0
      %334 = vmatpush2.msra.mxu0 0.0
      %335 = vmatprep.subr.mxu0 0.0
      %336 = vmatpush2.msra.mxu0 0.0
      %337 = vmatprep.subr.mxu0 0.0
      %338 = vmatpush2.msra.mxu0 0.0
      %339 = vmatprep.mubr.f32.mxu0 0.0
      %340 = vmatmul.mubr.f32.gmra.mxu0 %v251
      %v341 = vpop.f32.mrf.mxu0
      %v342 = vadd.f32 %v247, %v341
      %v343 = vpop.f32.mrf.mxu0
      %344 = vmatprep.mubr.f32.mxu0 0.0
      %345 = vmatmul.mubr.f32.gmra.mxu0 %v254
      %v346 = vpop.f32.mrf.mxu0
      %v347 = vadd.f32 %v247, %v346
      %v348 = vpop.f32.mrf.mxu0
      %349 = vmatprep.mubr.f32.mxu0 0.0
      %350 = vmatmul.mubr.f32.gmra.mxu0 %v257
      %v351 = vpop.f32.mrf.mxu0
      %v352 = vadd.f32 %v247, %v351
      %v353 = vpop.f32.mrf.mxu0
      %354 = vmatprep.mubr.f32.mxu0 0.0
      %355 = vmatmul.mubr.f32.gmra.mxu0 %v260
      %v356 = vpop.f32.mrf.mxu0
      %v357 = vadd.f32 %v247, %v356
      %v358 = vpop.f32.mrf.mxu0
      %359 = vmatprep.mubr.f32.mxu0 0.0
      %360 = vmatmul.mubr.f32.gmra.mxu0 %v263
      %v361 = vpop.f32.mrf.mxu0
      %v362 = vadd.f32 %v247, %v361
      %v363 = vpop.f32.mrf.mxu0
      %364 = vmatprep.mubr.f32.mxu0 0.0
      %365 = vmatmul.mubr.f32.gmra.mxu0 %v266
      %v366 = vpop.f32.mrf.mxu0
      %v367 = vadd.f32 %v247, %v366
      %v368 = vpop.f32.mrf.mxu0
      %369 = vmatprep.mubr.f32.mxu0 0.0
      %370 = vmatmul.mubr.f32.gmra.mxu0 %v269
      %v371 = vpop.f32.mrf.mxu0
      %v372 = vadd.f32 %v247, %v371
      %v373 = vpop.f32.mrf.mxu0
      %374 = vdwg.mxu0
      %v375 = vmax.f32 %v342, 0.0
      %v376 = vmax.f32 %v347, 0.0
      %v377 = vmax.f32 %v352, 0.0
      %v378 = vmax.f32 %v357, 0.0
      %v379 = vmax.f32 %v362, 0.0
      %v380 = vmax.f32 %v367, 0.0
      %v381 = vmax.f32 %v372, 0.0
      %s382 = scalar_lea.vmem %s219, 56
      %v383 = vld [vmem:[%s382] sm:$0xff]
      %v384 = vld [vmem:[%s382 + $0x8] sm:$0xff]
      %v385 = vld [vmem:[%s382 + $0x10] sm:$0xff]
      %v386 = vld [vmem:[%s382 + $0x18] sm:$0xff]
      %v387 = vld [vmem:[%s382 + $0x20] sm:$0xff]
      %v388 = vld [vmem:[%s382 + $0x28] sm:$0xff]
      %v389 = vld [vmem:[%s382 + $0x30] sm:$0x1]
      %v391 = vsel %vm249, %v383, 0
      %v394 = vsel %vm249, %v384, 0
      %v397 = vsel %vm249, %v385, 0
      %v400 = vsel %vm249, %v386, 0
      %v403 = vsel %vm249, %v387, 0
      %v406 = vsel %vm249, %v388, 0
      %v409 = vsel %vm249, %v389, 0
      %411 = vmatprep.subr.mxu0 0.0
      %412 = vmatpush1.msra.mxu0 0.0
      %413 = vmatprep.subr.mxu0 0.0
      %414 = vmatpush1.msra.mxu0 0.0
      %415 = vmatprep.subr.mxu0 0.0
      %416 = vmatpush1.msra.mxu0 0.0
      %417 = vmatprep.subr.mxu0 0.0
      %418 = vmatpush1.msra.mxu0 0.0
      %419 = vmatprep.subr.mxu0 0.0
      %420 = vmatpush1.msra.mxu0 0.0
      %421 = vmatprep.subr.mxu0 0.0
      %422 = vmatpush1.msra.mxu0 0.0
      %423 = vmatprep.subr.mxu0 0.0
      %424 = vmatpush1.msra.mxu0 0.0
      %425 = vmatprep.subr.mxu0 0.0
      %426 = vmatpush1.msra.mxu0 0.0
      %427 = vmatprep.subr.mxu0 0.0
      %428 = vmatpush1.msra.mxu0 0.0
      %429 = vmatprep.subr.mxu0 0.0
      %430 = vmatpush1.msra.mxu0 0.0
      %431 = vmatprep.subr.mxu0 0.0
      %432 = vmatpush1.msra.mxu0 0.0
      %433 = vmatprep.subr.mxu0 0.0
      %434 = vmatpush1.msra.mxu0 0.0
      %435 = vmatprep.subr.mxu0 0.0
      %436 = vmatpush1.msra.mxu0 0.0
      %437 = vmatprep.subr.mxu0 0.0
      %438 = vmatpush1.msra.mxu0 0.0
      %439 = vmatprep.subr.mxu0 0.0
      %440 = vmatpush1.msra.mxu0 %v273
      %441 = vmatprep.subr.mxu0 0.0
      %442 = vmatpush1.msra.mxu0 %v240
      %443 = vmatprep.subr.mxu0 0.0
      %444 = vmatpush2.msra.mxu0 0.0
      %445 = vmatprep.subr.mxu0 0.0
      %446 = vmatpush2.msra.mxu0 0.0
      %447 = vmatprep.subr.mxu0 0.0
      %448 = vmatpush2.msra.mxu0 0.0
      %449 = vmatprep.subr.mxu0 0.0
      %450 = vmatpush2.msra.mxu0 0.0
      %451 = vmatprep.subr.mxu0 0.0
      %452 = vmatpush2.msra.mxu0 0.0
      %453 = vmatprep.subr.mxu0 0.0
      %454 = vmatpush2.msra.mxu0 0.0
      %455 = vmatprep.subr.mxu0 0.0
      %456 = vmatpush2.msra.mxu0 0.0
      %457 = vmatprep.subr.mxu0 0.0
      %458 = vmatpush2.msra.mxu0 0.0
      %459 = vmatprep.subr.mxu0 0.0
      %460 = vmatpush2.msra.mxu0 0.0
      %461 = vmatprep.subr.mxu0 0.0
      %462 = vmatpush2.msra.mxu0 0.0
      %463 = vmatprep.subr.mxu0 0.0
      %464 = vmatpush2.msra.mxu0 0.0
      %465 = vmatprep.subr.mxu0 0.0
      %466 = vmatpush2.msra.mxu0 0.0
      %467 = vmatprep.subr.mxu0 0.0
      %468 = vmatpush2.msra.mxu0 0.0
      %469 = vmatprep.subr.mxu0 0.0
      %470 = vmatpush2.msra.mxu0 0.0
      %471 = vmatprep.subr.mxu0 0.0
      %472 = vmatpush2.msra.mxu0 0.0
      %473 = vmatprep.subr.mxu0 0.0
      %474 = vmatpush2.msra.mxu0 0.0
      %475 = vmatprep.mubr.f32.mxu0 0.0
      %476 = vmatmul.mubr.f32.gmra.mxu0 %v391
      %v477 = vpop.f32.mrf.mxu0
      %v478 = vadd.f32 %v247, %v477
      %v479 = vpop.f32.mrf.mxu0
      %480 = vmatprep.mubr.f32.mxu0 0.0
      %481 = vmatmul.mubr.f32.gmra.mxu0 %v394
      %v482 = vpop.f32.mrf.mxu0
      %v483 = vadd.f32 %v247, %v482
      %v484 = vpop.f32.mrf.mxu0
      %485 = vmatprep.mubr.f32.mxu0 0.0
      %486 = vmatmul.mubr.f32.gmra.mxu0 %v397
      %v487 = vpop.f32.mrf.mxu0
      %v488 = vadd.f32 %v247, %v487
      %v489 = vpop.f32.mrf.mxu0
      %490 = vmatprep.mubr.f32.mxu0 0.0
      %491 = vmatmul.mubr.f32.gmra.mxu0 %v400
      %v492 = vpop.f32.mrf.mxu0
      %v493 = vadd.f32 %v247, %v492
      %v494 = vpop.f32.mrf.mxu0
      %495 = vmatprep.mubr.f32.mxu0 0.0
      %496 = vmatmul.mubr.f32.gmra.mxu0 %v403
      %v497 = vpop.f32.mrf.mxu0
      %v498 = vadd.f32 %v247, %v497
      %v499 = vpop.f32.mrf.mxu0
      %500 = vmatprep.mubr.f32.mxu0 0.0
      %501 = vmatmul.mubr.f32.gmra.mxu0 %v406
      %v502 = vpop.f32.mrf.mxu0
      %v503 = vadd.f32 %v247, %v502
      %v504 = vpop.f32.mrf.mxu0
      %505 = vmatprep.mubr.f32.mxu0 0.0
      %506 = vmatmul.mubr.f32.gmra.mxu0 %v409
      %v507 = vpop.f32.mrf.mxu0
      %v508 = vadd.f32 %v247, %v507
      %v509 = vpop.f32.mrf.mxu0
      %510 = vdwg.mxu0
      %v511 = vmax.f32 %v478, 0.0
      %v512 = vmax.f32 %v483, 0.0
      %v513 = vmax.f32 %v488, 0.0
      %v514 = vmax.f32 %v493, 0.0
      %v515 = vmax.f32 %v498, 0.0
      %v516 = vmax.f32 %v503, 0.0
      %v517 = vmax.f32 %v508, 0.0
      %s518 = scalar_lea.vmem %s219, 112
      %v519 = vld [vmem:[%s518] sm:$0xff]
      %v520 = vld [vmem:[%s518 + $0x8] sm:$0xff]
      %v521 = vld [vmem:[%s518 + $0x10] sm:$0xff]
      %v522 = vld [vmem:[%s518 + $0x18] sm:$0xff]
      %v523 = vld [vmem:[%s518 + $0x20] sm:$0xff]
      %v524 = vld [vmem:[%s518 + $0x28] sm:$0xff]
      %v525 = vld [vmem:[%s518 + $0x30] sm:$0x1]
      %v527 = vsel %vm249, %v519, 0
      %v530 = vsel %vm249, %v520, 0
      %v533 = vsel %vm249, %v521, 0
      %v536 = vsel %vm249, %v522, 0
      %v539 = vsel %vm249, %v523, 0
      %v542 = vsel %vm249, %v524, 0
      %v545 = vsel %vm249, %v525, 0
      %547 = vmatprep.subr.mxu0 0.0
      %548 = vmatpush1.msra.mxu0 0.0
      %549 = vmatprep.subr.mxu0 0.0
      %550 = vmatpush1.msra.mxu0 0.0
      %551 = vmatprep.subr.mxu0 0.0
      %552 = vmatpush1.msra.mxu0 0.0
      %553 = vmatprep.subr.mxu0 0.0
      %554 = vmatpush1.msra.mxu0 0.0
      %555 = vmatprep.subr.mxu0 0.0
      %556 = vmatpush1.msra.mxu0 0.0
      %557 = vmatprep.subr.mxu0 0.0
      %558 = vmatpush1.msra.mxu0 0.0
      %559 = vmatprep.subr.mxu0 0.0
      %560 = vmatpush1.msra.mxu0 0.0
      %561 = vmatprep.subr.mxu0 0.0
      %562 = vmatpush1.msra.mxu0 0.0
      %563 = vmatprep.subr.mxu0 0.0
      %564 = vmatpush1.msra.mxu0 0.0
      %565 = vmatprep.subr.mxu0 0.0
      %566 = vmatpush1.msra.mxu0 0.0
      %567 = vmatprep.subr.mxu0 0.0
      %568 = vmatpush1.msra.mxu0 0.0
      %569 = vmatprep.subr.mxu0 0.0
      %570 = vmatpush1.msra.mxu0 0.0
      %571 = vmatprep.subr.mxu0 0.0
      %572 = vmatpush1.msra.mxu0 0.0
      %573 = vmatprep.subr.mxu0 0.0
      %574 = vmatpush1.msra.mxu0 0.0
      %575 = vmatprep.subr.mxu0 0.0
      %576 = vmatpush1.msra.mxu0 %v273
      %577 = vmatprep.subr.mxu0 0.0
      %578 = vmatpush1.msra.mxu0 %v240
      %579 = vmatprep.subr.mxu0 0.0
      %580 = vmatpush2.msra.mxu0 0.0
      %581 = vmatprep.subr.mxu0 0.0
      %582 = vmatpush2.msra.mxu0 0.0
      %583 = vmatprep.subr.mxu0 0.0
      %584 = vmatpush2.msra.mxu0 0.0
      %585 = vmatprep.subr.mxu0 0.0
      %586 = vmatpush2.msra.mxu0 0.0
      %587 = vmatprep.subr.mxu0 0.0
      %588 = vmatpush2.msra.mxu0 0.0
      %589 = vmatprep.subr.mxu0 0.0
      %590 = vmatpush2.msra.mxu0 0.0
      %591 = vmatprep.subr.mxu0 0.0
      %592 = vmatpush2.msra.mxu0 0.0
      %593 = vmatprep.subr.mxu0 0.0
      %594 = vmatpush2.msra.mxu0 0.0
      %595 = vmatprep.subr.mxu0 0.0
      %596 = vmatpush2.msra.mxu0 0.0
      %597 = vmatprep.subr.mxu0 0.0
      %598 = vmatpush2.msra.mxu0 0.0
      %599 = vmatprep.subr.mxu0 0.0
      %600 = vmatpush2.msra.mxu0 0.0
      %601 = vmatprep.subr.mxu0 0.0
      %602 = vmatpush2.msra.mxu0 0.0
      %603 = vmatprep.subr.mxu0 0.0
      %604 = vmatpush2.msra.mxu0 0.0
      %605 = vmatprep.subr.mxu0 0.0
      %606 = vmatpush2.msra.mxu0 0.0
      %607 = vmatprep.subr.mxu0 0.0
      %608 = vmatpush2.msra.mxu0 0.0
      %609 = vmatprep.subr.mxu0 0.0
      %610 = vmatpush2.msra.mxu0 0.0
      %611 = vmatprep.mubr.f32.mxu0 0.0
      %612 = vmatmul.mubr.f32.gmra.mxu0 %v527
      %v613 = vpop.f32.mrf.mxu0
      %v614 = vadd.f32 %v247, %v613
      %v615 = vpop.f32.mrf.mxu0
      %616 = vmatprep.mubr.f32.mxu0 0.0
      %617 = vmatmul.mubr.f32.gmra.mxu0 %v530
      %v618 = vpop.f32.mrf.mxu0
      %v619 = vadd.f32 %v247, %v618
      %v620 = vpop.f32.mrf.mxu0
      %621 = vmatprep.mubr.f32.mxu0 0.0
      %622 = vmatmul.mubr.f32.gmra.mxu0 %v533
      %v623 = vpop.f32.mrf.mxu0
      %v624 = vadd.f32 %v247, %v623
      %v625 = vpop.f32.mrf.mxu0
      %626 = vmatprep.mubr.f32.mxu0 0.0
      %627 = vmatmul.mubr.f32.gmra.mxu0 %v536
      %v628 = vpop.f32.mrf.mxu0
      %v629 = vadd.f32 %v247, %v628
      %v630 = vpop.f32.mrf.mxu0
      %631 = vmatprep.mubr.f32.mxu0 0.0
      %632 = vmatmul.mubr.f32.gmra.mxu0 %v539
      %v633 = vpop.f32.mrf.mxu0
      %v634 = vadd.f32 %v247, %v633
      %v635 = vpop.f32.mrf.mxu0
      %636 = vmatprep.mubr.f32.mxu0 0.0
      %637 = vmatmul.mubr.f32.gmra.mxu0 %v542
      %v638 = vpop.f32.mrf.mxu0
      %v639 = vadd.f32 %v247, %v638
      %v640 = vpop.f32.mrf.mxu0
      %641 = vmatprep.mubr.f32.mxu0 0.0
      %642 = vmatmul.mubr.f32.gmra.mxu0 %v545
      %v643 = vpop.f32.mrf.mxu0
      %v644 = vadd.f32 %v247, %v643
      %v645 = vpop.f32.mrf.mxu0
      %646 = vdwg.mxu0
      %v647 = vmax.f32 %v614, 0.0
      %v648 = vmax.f32 %v619, 0.0
      %v649 = vmax.f32 %v624, 0.0
      %v650 = vmax.f32 %v629, 0.0
      %v651 = vmax.f32 %v634, 0.0
      %v652 = vmax.f32 %v639, 0.0
      %v653 = vmax.f32 %v644, 0.0
      %s654 = scalar_lea.vmem %s219, 168
      %v655 = vld [vmem:[%s654] sm:$0xff]
      %v656 = vld [vmem:[%s654 + $0x8] sm:$0xff]
      %v657 = vld [vmem:[%s654 + $0x10] sm:$0xff]
      %v658 = vld [vmem:[%s654 + $0x18] sm:$0xff]
      %v659 = vld [vmem:[%s654 + $0x20] sm:$0xff]
      %v660 = vld [vmem:[%s654 + $0x28] sm:$0xff]
      %v661 = vld [vmem:[%s654 + $0x30] sm:$0x1]
      %v663 = vsel %vm249, %v655, 0
      %v666 = vsel %vm249, %v656, 0
      %v669 = vsel %vm249, %v657, 0
      %v672 = vsel %vm249, %v658, 0
      %v675 = vsel %vm249, %v659, 0
      %v678 = vsel %vm249, %v660, 0
      %v681 = vsel %vm249, %v661, 0
      %683 = vmatprep.subr.mxu0 0.0
      %684 = vmatpush1.msra.mxu0 0.0
      %685 = vmatprep.subr.mxu0 0.0
      %686 = vmatpush1.msra.mxu0 0.0
      %687 = vmatprep.subr.mxu0 0.0
      %688 = vmatpush1.msra.mxu0 0.0
      %689 = vmatprep.subr.mxu0 0.0
      %690 = vmatpush1.msra.mxu0 0.0
      %691 = vmatprep.subr.mxu0 0.0
      %692 = vmatpush1.msra.mxu0 0.0
      %693 = vmatprep.subr.mxu0 0.0
      %694 = vmatpush1.msra.mxu0 0.0
      %695 = vmatprep.subr.mxu0 0.0
      %696 = vmatpush1.msra.mxu0 0.0
      %697 = vmatprep.subr.mxu0 0.0
      %698 = vmatpush1.msra.mxu0 0.0
      %699 = vmatprep.subr.mxu0 0.0
      %700 = vmatpush1.msra.mxu0 0.0
      %701 = vmatprep.subr.mxu0 0.0
      %702 = vmatpush1.msra.mxu0 0.0
      %703 = vmatprep.subr.mxu0 0.0
      %704 = vmatpush1.msra.mxu0 0.0
      %705 = vmatprep.subr.mxu0 0.0
      %706 = vmatpush1.msra.mxu0 0.0
      %707 = vmatprep.subr.mxu0 0.0
      %708 = vmatpush1.msra.mxu0 0.0
      %709 = vmatprep.subr.mxu0 0.0
      %710 = vmatpush1.msra.mxu0 0.0
      %711 = vmatprep.subr.mxu0 0.0
      %712 = vmatpush1.msra.mxu0 %v273
      %713 = vmatprep.subr.mxu0 0.0
      %714 = vmatpush1.msra.mxu0 %v240
      %715 = vmatprep.subr.mxu0 0.0
      %716 = vmatpush2.msra.mxu0 0.0
      %717 = vmatprep.subr.mxu0 0.0
      %718 = vmatpush2.msra.mxu0 0.0
      %719 = vmatprep.subr.mxu0 0.0
      %720 = vmatpush2.msra.mxu0 0.0
      %721 = vmatprep.subr.mxu0 0.0
      %722 = vmatpush2.msra.mxu0 0.0
      %723 = vmatprep.subr.mxu0 0.0
      %724 = vmatpush2.msra.mxu0 0.0
      %725 = vmatprep.subr.mxu0 0.0
      %726 = vmatpush2.msra.mxu0 0.0
      %727 = vmatprep.subr.mxu0 0.0
      %728 = vmatpush2.msra.mxu0 0.0
      %729 = vmatprep.subr.mxu0 0.0
      %730 = vmatpush2.msra.mxu0 0.0
      %731 = vmatprep.subr.mxu0 0.0
      %732 = vmatpush2.msra.mxu0 0.0
      %733 = vmatprep.subr.mxu0 0.0
      %734 = vmatpush2.msra.mxu0 0.0
      %735 = vmatprep.subr.mxu0 0.0
      %736 = vmatpush2.msra.mxu0 0.0
      %737 = vmatprep.subr.mxu0 0.0
      %738 = vmatpush2.msra.mxu0 0.0
      %739 = vmatprep.subr.mxu0 0.0
      %740 = vmatpush2.msra.mxu0 0.0
      %741 = vmatprep.subr.mxu0 0.0
      %742 = vmatpush2.msra.mxu0 0.0
      %743 = vmatprep.subr.mxu0 0.0
      %744 = vmatpush2.msra.mxu0 0.0
      %745 = vmatprep.subr.mxu0 0.0
      %746 = vmatpush2.msra.mxu0 0.0
      %747 = vmatprep.mubr.f32.mxu0 0.0
      %748 = vmatmul.mubr.f32.gmra.mxu0 %v663
      %v749 = vpop.f32.mrf.mxu0
      %v750 = vadd.f32 %v247, %v749
      %v751 = vpop.f32.mrf.mxu0
      %752 = vmatprep.mubr.f32.mxu0 0.0
      %753 = vmatmul.mubr.f32.gmra.mxu0 %v666
      %v754 = vpop.f32.mrf.mxu0
      %v755 = vadd.f32 %v247, %v754
      %v756 = vpop.f32.mrf.mxu0
      %757 = vmatprep.mubr.f32.mxu0 0.0
      %758 = vmatmul.mubr.f32.gmra.mxu0 %v669
      %v759 = vpop.f32.mrf.mxu0
      %v760 = vadd.f32 %v247, %v759
      %v761 = vpop.f32.mrf.mxu0
      %762 = vmatprep.mubr.f32.mxu0 0.0
      %763 = vmatmul.mubr.f32.gmra.mxu0 %v672
      %v764 = vpop.f32.mrf.mxu0
      %v765 = vadd.f32 %v247, %v764
      %v766 = vpop.f32.mrf.mxu0
      %767 = vmatprep.mubr.f32.mxu0 0.0
      %768 = vmatmul.mubr.f32.gmra.mxu0 %v675
      %v769 = vpop.f32.mrf.mxu0
      %v770 = vadd.f32 %v247, %v769
      %v771 = vpop.f32.mrf.mxu0
      %772 = vmatprep.mubr.f32.mxu0 0.0
      %773 = vmatmul.mubr.f32.gmra.mxu0 %v678
      %v774 = vpop.f32.mrf.mxu0
      %v775 = vadd.f32 %v247, %v774
      %v776 = vpop.f32.mrf.mxu0
      %777 = vmatprep.mubr.f32.mxu0 0.0
      %778 = vmatmul.mubr.f32.gmra.mxu0 %v681
      %v779 = vpop.f32.mrf.mxu0
      %v780 = vadd.f32 %v247, %v779
      %v781 = vpop.f32.mrf.mxu0
      %782 = vdwg.mxu0
      %v783 = vmax.f32 %v750, 0.0
      %v784 = vmax.f32 %v755, 0.0
      %v785 = vmax.f32 %v760, 0.0
      %v786 = vmax.f32 %v765, 0.0
      %v787 = vmax.f32 %v770, 0.0
      %v788 = vmax.f32 %v775, 0.0
      %v789 = vmax.f32 %v780, 0.0
      %vm796 = vcmask 1046528
      %v797 = vrot.slane %v783, 1
      %v798 = vrot.slane %v784, 1
      %v799 = vsel %vm796, %v797, %v798
      %v800 = vrot.slane %v785, 1
      %v801 = vsel %vm796, %v798, %v800
      %v802 = vrot.slane %v786, 1
      %v803 = vsel %vm796, %v800, %v802
      %v804 = vrot.slane %v787, 1
      %v805 = vsel %vm796, %v802, %v804
      %v806 = vrot.slane %v788, 1
      %v807 = vsel %vm796, %v804, %v806
      %v809 = vsel %vm796, 0.0, %v797
      %v811 = vrot.slane %v809, 7
      %v812 = vrot.slane %v799, 7
      %v813 = vsel %vm271, %v811, %v812
      %v814 = vrot.slane %v801, 7
      %v815 = vsel %vm271, %v812, %v814
      %v816 = vrot.slane %v803, 7
      %v817 = vsel %vm271, %v814, %v816
      %v818 = vrot.slane %v805, 7
      %v819 = vsel %vm271, %v816, %v818
      %v820 = vrot.slane %v807, 7
      %v821 = vsel %vm271, %v818, %v820
      %v829 = vsel %vm271, 0.0, %v811
      %vm830 = vcmp.lt.s32.totalorder %v226, 0
      %v831 = vsub.s32 0, %v226
      %v832 = vsel %vm830, %v831, %v226
      %v833 = vmul.u32.u64.compose %v832, 2454267026
      %v834 = vextract.low.u32 %v833
      %v835 = vextract.high.u32 %v833
      %vm836 = vc.u32 %v834, 2454267026
      %v837 = vsel %vm836, 1, 0
      %v838 = vadd.s32 %v835, %v837
      %v839 = vshrl.u32 %v838, 2
      %v840 = vmul.u32 %v839, 7
      %v841 = vsub.s32 %v832, %v840
      %v842 = vsub.s32 0, %v841
      %v843 = vsel %vm830, %v842, %v841
      %vm844 = vcmp.lt.s32.totalorder %v227, 0
      %v845 = vsub.s32 0, %v227
      %v846 = vsel %vm844, %v845, %v227
      %v847 = vmul.u32.u64.compose %v846, 2454267026
      %v848 = vextract.low.u32 %v847
      %v849 = vextract.high.u32 %v847
      %vm850 = vc.u32 %v848, 2454267026
      %v851 = vsel %vm850, 1, 0
      %v852 = vadd.s32 %v849, %v851
      %v853 = vshrl.u32 %v852, 2
      %v854 = vmul.u32 %v853, 7
      %v855 = vsub.s32 %v846, %v854
      %v856 = vsub.s32 0, %v855
      %v857 = vsel %vm844, %v856, %v855
      %vm858 = vcmp.lt.s32.totalorder %v228, 0
      %v859 = vsub.s32 0, %v228
      %v860 = vsel %vm858, %v859, %v228
      %v861 = vmul.u32.u64.compose %v860, 2454267026
      %v862 = vextract.low.u32 %v861
      %v863 = vextract.high.u32 %v861
      %vm864 = vc.u32 %v862, 2454267026
      %v865 = vsel %vm864, 1, 0
      %v866 = vadd.s32 %v863, %v865
      %v867 = vshrl.u32 %v866, 2
      %v868 = vmul.u32 %v867, 7
      %v869 = vsub.s32 %v860, %v868
      %v870 = vsub.s32 0, %v869
      %v871 = vsel %vm858, %v870, %v869
      %vm872 = vcmp.lt.s32.totalorder %v229, 0
      %v873 = vsub.s32 0, %v229
      %v874 = vsel %vm872, %v873, %v229
      %v875 = vmul.u32.u64.compose %v874, 2454267026
      %v876 = vextract.low.u32 %v875
      %v877 = vextract.high.u32 %v875
      %vm878 = vc.u32 %v876, 2454267026
      %v879 = vsel %vm878, 1, 0
      %v880 = vadd.s32 %v877, %v879
      %v881 = vshrl.u32 %v880, 2
      %v882 = vmul.u32 %v881, 7
      %v883 = vsub.s32 %v874, %v882
      %v884 = vsub.s32 0, %v883
      %v885 = vsel %vm872, %v884, %v883
      %vm886 = vcmp.lt.s32.totalorder %v230, 0
      %v887 = vsub.s32 0, %v230
      %v888 = vsel %vm886, %v887, %v230
      %v889 = vmul.u32.u64.compose %v888, 2454267026
      %v890 = vextract.low.u32 %v889
      %v891 = vextract.high.u32 %v889
      %vm892 = vc.u32 %v890, 2454267026
      %v893 = vsel %vm892, 1, 0
      %v894 = vadd.s32 %v891, %v893
      %v895 = vshrl.u32 %v894, 2
      %v896 = vmul.u32 %v895, 7
      %v897 = vsub.s32 %v888, %v896
      %v898 = vsub.s32 0, %v897
      %v899 = vsel %vm886, %v898, %v897
      %vm900 = vcmp.lt.s32.totalorder %v231, 0
      %v901 = vsub.s32 0, %v231
      %v902 = vsel %vm900, %v901, %v231
      %v903 = vmul.u32.u64.compose %v902, 2454267026
      %v904 = vextract.low.u32 %v903
      %v905 = vextract.high.u32 %v903
      %vm906 = vc.u32 %v904, 2454267026
      %v907 = vsel %vm906, 1, 0
      %v908 = vadd.s32 %v905, %v907
      %v909 = vshrl.u32 %v908, 2
      %v910 = vmul.u32 %v909, 7
      %v911 = vsub.s32 %v902, %v910
      %v912 = vsub.s32 0, %v911
      %v913 = vsel %vm900, %v912, %v911
      %vm914 = vcmp.lt.s32.totalorder %v232, 0
      %v915 = vsub.s32 0, %v232
      %v916 = vsel %vm914, %v915, %v232
      %v917 = vmul.u32.u64.compose %v916, 2454267026
      %v918 = vextract.low.u32 %v917
      %v919 = vextract.high.u32 %v917
      %vm920 = vc.u32 %v918, 2454267026
      %v921 = vsel %vm920, 1, 0
      %v922 = vadd.s32 %v919, %v921
      %v923 = vshrl.u32 %v922, 2
      %v924 = vmul.u32 %v923, 7
      %v925 = vsub.s32 %v916, %v924
      %v926 = vsub.s32 0, %v925
      %v927 = vsel %vm914, %v926, %v925
      %vm928 = vcmp.ne.s32.totalorder %v843, 0
      %vm929 = vcmp.ne.s32.totalorder %v857, 0
      %vm930 = vcmp.ne.s32.totalorder %v871, 0
      %vm931 = vcmp.ne.s32.totalorder %v885, 0
      %vm932 = vcmp.ne.s32.totalorder %v899, 0
      %vm933 = vcmp.ne.s32.totalorder %v913, 0
      %vm934 = vcmp.ne.s32.totalorder %v927, 0
      %vm935 = vcmp.lt.s32.totalorder %v843, 0
      %vm936 = vcmp.lt.s32.totalorder %v857, 0
      %vm937 = vcmp.lt.s32.totalorder %v871, 0
      %vm938 = vcmp.lt.s32.totalorder %v885, 0
      %vm939 = vcmp.lt.s32.totalorder %v899, 0
      %vm940 = vcmp.lt.s32.totalorder %v913, 0
      %vm941 = vcmp.lt.s32.totalorder %v927, 0
      %vm942 = vmand %vm935, %vm928
      %vm943 = vmand %vm936, %vm929
      %vm944 = vmand %vm937, %vm930
      %vm945 = vmand %vm938, %vm931
      %vm946 = vmand %vm939, %vm932
      %vm947 = vmand %vm940, %vm933
      %vm948 = vmand %vm941, %vm934
      %v949 = vadd.s32 %v843, 7
      %v950 = vadd.s32 %v857, 7
      %v951 = vadd.s32 %v871, 7
      %v952 = vadd.s32 %v885, 7
      %v953 = vadd.s32 %v899, 7
      %v954 = vadd.s32 %v913, 7
      %v955 = vadd.s32 %v927, 7
      %v956 = vsel %vm942, %v949, %v843
      %v957 = vsel %vm943, %v950, %v857
      %v958 = vsel %vm944, %v951, %v871
      %v959 = vsel %vm945, %v952, %v885
      %v960 = vsel %vm946, %v953, %v899
      %v961 = vsel %vm947, %v954, %v913
      %v962 = vsel %vm948, %v955, %v927
      %vm963 = vcmp.ge.s32.totalorder %v956, 1
      %vm964 = vcmp.ge.s32.totalorder %v957, 1
      %vm965 = vcmp.ge.s32.totalorder %v958, 1
      %vm966 = vcmp.ge.s32.totalorder %v959, 1
      %vm967 = vcmp.ge.s32.totalorder %v960, 1
      %vm968 = vcmp.ge.s32.totalorder %v961, 1
      %vm969 = vcmp.ge.s32.totalorder %v962, 1
      %v970 = vsel %vm963, 1, 0
      %v971 = vsel %vm964, 1, 0
      %v972 = vsel %vm965, 1, 0
      %v973 = vsel %vm966, 1, 0
      %v974 = vsel %vm967, 1, 0
      %v975 = vsel %vm968, 1, 0
      %v976 = vsel %vm969, 1, 0
      %vm977 = vcmp.eq.s32.totalorder %v970, 1
      %vm978 = vcmp.eq.s32.totalorder %v971, 1
      %vm979 = vcmp.eq.s32.totalorder %v972, 1
      %vm980 = vcmp.eq.s32.totalorder %v973, 1
      %vm981 = vcmp.eq.s32.totalorder %v974, 1
      %vm982 = vcmp.eq.s32.totalorder %v975, 1
      %vm983 = vcmp.eq.s32.totalorder %v976, 1
      %v984 = vsel %vm977, %v829, 0.0
      %v985 = vsel %vm978, %v813, 0.0
      %v986 = vsel %vm979, %v815, 0.0
      %v987 = vsel %vm980, %v817, 0.0
      %v988 = vsel %vm981, %v819, 0.0
      %v989 = vsel %vm982, %v821, 0.0
      %v990 = vsel %vm983, %v820, 0.0
      %v991 = vld [vmem:[%s3] sm:$0xff]
      %v992 = vld [vmem:[%s3 + $0x8] sm:$0xff]
      %v993 = vld [vmem:[%s3 + $0x10] sm:$0xff]
      %v994 = vld [vmem:[%s3 + $0x18] sm:$0xff]
      %v1001 = vrot.slane %v647, 1
      %v1002 = vrot.slane %v648, 1
      %v1003 = vsel %vm796, %v1001, %v1002
      %v1004 = vrot.slane %v649, 1
      %v1005 = vsel %vm796, %v1002, %v1004
      %v1006 = vrot.slane %v650, 1
      %v1007 = vsel %vm796, %v1004, %v1006
      %v1008 = vrot.slane %v651, 1
      %v1009 = vsel %vm796, %v1006, %v1008
      %v1010 = vrot.slane %v652, 1
      %v1011 = vsel %vm796, %v1008, %v1010
      %v1013 = vsel %vm796, 0.0, %v1001
      %s1014 = scalar_lea.vmem %s3, 32
      %v1015 = vld [vmem:[%s1014] sm:$0xff]
      %v1016 = vld [vmem:[%s1014 + $0x8] sm:$0xff]
      %v1017 = vld [vmem:[%s1014 + $0x10] sm:$0xff]
      %v1018 = vld [vmem:[%s1014 + $0x18] sm:$0xff]
      %vm1019 = vcmask 261120
      %v1021 = vsel %vm1019, %v1013, 0
      %v1023 = vsel %vm1019, %v1003, 0
      %v1025 = vsel %vm1019, %v1005, 0
      %v1027 = vsel %vm1019, %v1007, 0
      %v1029 = vsel %vm1019, %v1009, 0
      %v1031 = vsel %vm1019, %v1011, 0
      %v1033 = vsel %vm1019, %v1010, 0
      %1035 = vmatprep.subr.mxu0 0.0
      %1036 = vmatpush1.msra.mxu0 0.0
      %1037 = vmatprep.subr.mxu0 0.0
      %1038 = vmatpush1.msra.mxu0 0.0
      %1039 = vmatprep.subr.mxu0 0.0
      %1040 = vmatpush1.msra.mxu0 0.0
      %1041 = vmatprep.subr.mxu0 0.0
      %1042 = vmatpush1.msra.mxu0 0.0
      %1043 = vmatprep.subr.mxu0 0.0
      %1044 = vmatpush1.msra.mxu0 0.0
      %1045 = vmatprep.subr.mxu0 0.0
      %1046 = vmatpush1.msra.mxu0 0.0
      %1047 = vmatprep.subr.mxu0 0.0
      %1048 = vmatpush1.msra.mxu0 0.0
      %1049 = vmatprep.subr.mxu0 0.0
      %1050 = vmatpush1.msra.mxu0 0.0
      %1051 = vmatprep.subr.mxu0 0.0
      %1052 = vmatpush1.msra.mxu0 0.0
      %1053 = vmatprep.subr.mxu0 0.0
      %1054 = vmatpush1.msra.mxu0 0.0
      %1055 = vmatprep.subr.mxu0 0.0
      %1056 = vmatpush1.msra.mxu0 0.0
      %1057 = vmatprep.subr.mxu0 0.0
      %1058 = vmatpush1.msra.mxu0 0.0
      %1059 = vmatprep.subr.mxu0 0.0
      %1060 = vmatpush1.msra.mxu0 %v1018
      %1061 = vmatprep.subr.mxu0 0.0
      %1062 = vmatpush1.msra.mxu0 %v1017
      %1063 = vmatprep.subr.mxu0 0.0
      %1064 = vmatpush1.msra.mxu0 %v1016
      %1065 = vmatprep.subr.mxu0 0.0
      %1066 = vmatpush1.msra.mxu0 %v1015
      %1067 = vmatprep.subr.mxu0 0.0
      %1068 = vmatpush2.msra.mxu0 0.0
      %1069 = vmatprep.subr.mxu0 0.0
      %1070 = vmatpush2.msra.mxu0 0.0
      %1071 = vmatprep.subr.mxu0 0.0
      %1072 = vmatpush2.msra.mxu0 0.0
      %1073 = vmatprep.subr.mxu0 0.0
      %1074 = vmatpush2.msra.mxu0 0.0
      %1075 = vmatprep.subr.mxu0 0.0
      %1076 = vmatpush2.msra.mxu0 0.0
      %1077 = vmatprep.subr.mxu0 0.0
      %1078 = vmatpush2.msra.mxu0 0.0
      %1079 = vmatprep.subr.mxu0 0.0
      %1080 = vmatpush2.msra.mxu0 0.0
      %1081 = vmatprep.subr.mxu0 0.0
      %1082 = vmatpush2.msra.mxu0 0.0
      %1083 = vmatprep.subr.mxu0 0.0
      %1084 = vmatpush2.msra.mxu0 0.0
      %1085 = vmatprep.subr.mxu0 0.0
      %1086 = vmatpush2.msra.mxu0 0.0
      %1087 = vmatprep.subr.mxu0 0.0
      %1088 = vmatpush2.msra.mxu0 0.0
      %1089 = vmatprep.subr.mxu0 0.0
      %1090 = vmatpush2.msra.mxu0 0.0
      %1091 = vmatprep.subr.mxu0 0.0
      %1092 = vmatpush2.msra.mxu0 0.0
      %1093 = vmatprep.subr.mxu0 0.0
      %1094 = vmatpush2.msra.mxu0 0.0
      %1095 = vmatprep.subr.mxu0 0.0
      %1096 = vmatpush2.msra.mxu0 0.0
      %1097 = vmatprep.subr.mxu0 0.0
      %1098 = vmatpush2.msra.mxu0 0.0
      %1099 = vmatprep.mubr.f32.mxu0 0.0
      %1100 = vmatmul.mubr.f32.gmra.mxu0 %v1021
      %v1101 = vpop.f32.mrf.mxu0
      %v1102 = vadd.f32 0.0, %v1101
      %v1103 = vpop.f32.mrf.mxu0
      %1104 = vmatprep.mubr.f32.mxu0 0.0
      %1105 = vmatmul.mubr.f32.gmra.mxu0 %v1023
      %v1106 = vpop.f32.mrf.mxu0
      %v1107 = vadd.f32 0.0, %v1106
      %v1108 = vpop.f32.mrf.mxu0
      %1109 = vmatprep.mubr.f32.mxu0 0.0
      %1110 = vmatmul.mubr.f32.gmra.mxu0 %v1025
      %v1111 = vpop.f32.mrf.mxu0
      %v1112 = vadd.f32 0.0, %v1111
      %v1113 = vpop.f32.mrf.mxu0
      %1114 = vmatprep.mubr.f32.mxu0 0.0
      %1115 = vmatmul.mubr.f32.gmra.mxu0 %v1027
      %v1116 = vpop.f32.mrf.mxu0
      %v1117 = vadd.f32 0.0, %v1116
      %v1118 = vpop.f32.mrf.mxu0
      %1119 = vmatprep.mubr.f32.mxu0 0.0
      %1120 = vmatmul.mubr.f32.gmra.mxu0 %v1029
      %v1121 = vpop.f32.mrf.mxu0
      %v1122 = vadd.f32 0.0, %v1121
      %v1123 = vpop.f32.mrf.mxu0
      %1124 = vmatprep.mubr.f32.mxu0 0.0
      %1125 = vmatmul.mubr.f32.gmra.mxu0 %v1031
      %v1126 = vpop.f32.mrf.mxu0
      %v1127 = vadd.f32 0.0, %v1126
      %v1128 = vpop.f32.mrf.mxu0
      %1129 = vmatprep.mubr.f32.mxu0 0.0
      %1130 = vmatmul.mubr.f32.gmra.mxu0 %v1033
      %v1131 = vpop.f32.mrf.mxu0
      %v1132 = vadd.f32 0.0, %v1131
      %v1133 = vpop.f32.mrf.mxu0
      %1134 = vdwg.mxu0
      %v1136 = vsel %vm1019, %v984, 0
      %v1139 = vsel %vm1019, %v985, 0
      %v1142 = vsel %vm1019, %v986, 0
      %v1145 = vsel %vm1019, %v987, 0
      %v1148 = vsel %vm1019, %v988, 0
      %v1151 = vsel %vm1019, %v989, 0
      %v1154 = vsel %vm1019, %v990, 0
      %1156 = vmatprep.subr.mxu0 0.0
      %1157 = vmatpush1.msra.mxu0 0.0
      %1158 = vmatprep.subr.mxu0 0.0
      %1159 = vmatpush1.msra.mxu0 0.0
      %1160 = vmatprep.subr.mxu0 0.0
      %1161 = vmatpush1.msra.mxu0 0.0
      %1162 = vmatprep.subr.mxu0 0.0
      %1163 = vmatpush1.msra.mxu0 0.0
      %1164 = vmatprep.subr.mxu0 0.0
      %1165 = vmatpush1.msra.mxu0 0.0
      %1166 = vmatprep.subr.mxu0 0.0
      %1167 = vmatpush1.msra.mxu0 0.0
      %1168 = vmatprep.subr.mxu0 0.0
      %1169 = vmatpush1.msra.mxu0 0.0
      %1170 = vmatprep.subr.mxu0 0.0
      %1171 = vmatpush1.msra.mxu0 0.0
      %1172 = vmatprep.subr.mxu0 0.0
      %1173 = vmatpush1.msra.mxu0 0.0
      %1174 = vmatprep.subr.mxu0 0.0
      %1175 = vmatpush1.msra.mxu0 0.0
      %1176 = vmatprep.subr.mxu0 0.0
      %1177 = vmatpush1.msra.mxu0 0.0
      %1178 = vmatprep.subr.mxu0 0.0
      %1179 = vmatpush1.msra.mxu0 0.0
      %1180 = vmatprep.subr.mxu0 0.0
      %1181 = vmatpush1.msra.mxu0 %v994
      %1182 = vmatprep.subr.mxu0 0.0
      %1183 = vmatpush1.msra.mxu0 %v993
      %1184 = vmatprep.subr.mxu0 0.0
      %1185 = vmatpush1.msra.mxu0 %v992
      %1186 = vmatprep.subr.mxu0 0.0
      %1187 = vmatpush1.msra.mxu0 %v991
      %1188 = vmatprep.subr.mxu0 0.0
      %1189 = vmatpush2.msra.mxu0 0.0
      %1190 = vmatprep.subr.mxu0 0.0
      %1191 = vmatpush2.msra.mxu0 0.0
      %1192 = vmatprep.subr.mxu0 0.0
      %1193 = vmatpush2.msra.mxu0 0.0
      %1194 = vmatprep.subr.mxu0 0.0
      %1195 = vmatpush2.msra.mxu0 0.0
      %1196 = vmatprep.subr.mxu0 0.0
      %1197 = vmatpush2.msra.mxu0 0.0
      %1198 = vmatprep.subr.mxu0 0.0
      %1199 = vmatpush2.msra.mxu0 0.0
      %1200 = vmatprep.subr.mxu0 0.0
      %1201 = vmatpush2.msra.mxu0 0.0
      %1202 = vmatprep.subr.mxu0 0.0
      %1203 = vmatpush2.msra.mxu0 0.0
      %1204 = vmatprep.subr.mxu0 0.0
      %1205 = vmatpush2.msra.mxu0 0.0
      %1206 = vmatprep.subr.mxu0 0.0
      %1207 = vmatpush2.msra.mxu0 0.0
      %1208 = vmatprep.subr.mxu0 0.0
      %1209 = vmatpush2.msra.mxu0 0.0
      %1210 = vmatprep.subr.mxu0 0.0
      %1211 = vmatpush2.msra.mxu0 0.0
      %1212 = vmatprep.subr.mxu0 0.0
      %1213 = vmatpush2.msra.mxu0 0.0
      %1214 = vmatprep.subr.mxu0 0.0
      %1215 = vmatpush2.msra.mxu0 0.0
      %1216 = vmatprep.subr.mxu0 0.0
      %1217 = vmatpush2.msra.mxu0 0.0
      %1218 = vmatprep.subr.mxu0 0.0
      %1219 = vmatpush2.msra.mxu0 0.0
      %1220 = vmatprep.mubr.f32.mxu0 0.0
      %1221 = vmatmul.mubr.f32.gmra.mxu0 %v1136
      %v1222 = vpop.f32.mrf.mxu0
      %v1223 = vadd.f32 %v1102, %v1222
      %v1224 = vpop.f32.mrf.mxu0
      %1225 = vmatprep.mubr.f32.mxu0 0.0
      %1226 = vmatmul.mubr.f32.gmra.mxu0 %v1139
      %v1227 = vpop.f32.mrf.mxu0
      %v1228 = vadd.f32 %v1107, %v1227
      %v1229 = vpop.f32.mrf.mxu0
      %1230 = vmatprep.mubr.f32.mxu0 0.0
      %1231 = vmatmul.mubr.f32.gmra.mxu0 %v1142
      %v1232 = vpop.f32.mrf.mxu0
      %v1233 = vadd.f32 %v1112, %v1232
      %v1234 = vpop.f32.mrf.mxu0
      %1235 = vmatprep.mubr.f32.mxu0 0.0
      %1236 = vmatmul.mubr.f32.gmra.mxu0 %v1145
      %v1237 = vpop.f32.mrf.mxu0
      %v1238 = vadd.f32 %v1117, %v1237
      %v1239 = vpop.f32.mrf.mxu0
      %1240 = vmatprep.mubr.f32.mxu0 0.0
      %1241 = vmatmul.mubr.f32.gmra.mxu0 %v1148
      %v1242 = vpop.f32.mrf.mxu0
      %v1243 = vadd.f32 %v1122, %v1242
      %v1244 = vpop.f32.mrf.mxu0
      %1245 = vmatprep.mubr.f32.mxu0 0.0
      %1246 = vmatmul.mubr.f32.gmra.mxu0 %v1151
      %v1247 = vpop.f32.mrf.mxu0
      %v1248 = vadd.f32 %v1127, %v1247
      %v1249 = vpop.f32.mrf.mxu0
      %1250 = vmatprep.mubr.f32.mxu0 0.0
      %1251 = vmatmul.mubr.f32.gmra.mxu0 %v1154
      %v1252 = vpop.f32.mrf.mxu0
      %v1253 = vadd.f32 %v1132, %v1252
      %v1254 = vpop.f32.mrf.mxu0
      %1255 = vdwg.mxu0
      %s1256 = scalar_lea.vmem %s3, 64
      %v1257 = vld [vmem:[%s1256] sm:$0xff]
      %v1258 = vld [vmem:[%s1256 + $0x8] sm:$0xff]
      %v1259 = vld [vmem:[%s1256 + $0x10] sm:$0xff]
      %v1260 = vld [vmem:[%s1256 + $0x18] sm:$0xff]
      %v1261 = vsel %vm1019, %v809, 0
      %v1263 = vsel %vm1019, %v799, 0
      %v1265 = vsel %vm1019, %v801, 0
      %v1267 = vsel %vm1019, %v803, 0
      %v1269 = vsel %vm1019, %v805, 0
      %v1271 = vsel %vm1019, %v807, 0
      %v1273 = vsel %vm1019, %v806, 0
      %1275 = vmatprep.subr.mxu0 0.0
      %1276 = vmatpush1.msra.mxu0 0.0
      %1277 = vmatprep.subr.mxu0 0.0
      %1278 = vmatpush1.msra.mxu0 0.0
      %1279 = vmatprep.subr.mxu0 0.0
      %1280 = vmatpush1.msra.mxu0 0.0
      %1281 = vmatprep.subr.mxu0 0.0
      %1282 = vmatpush1.msra.mxu0 0.0
      %1283 = vmatprep.subr.mxu0 0.0
      %1284 = vmatpush1.msra.mxu0 0.0
      %1285 = vmatprep.subr.mxu0 0.0
      %1286 = vmatpush1.msra.mxu0 0.0
      %1287 = vmatprep.subr.mxu0 0.0
      %1288 = vmatpush1.msra.mxu0 0.0
      %1289 = vmatprep.subr.mxu0 0.0
      %1290 = vmatpush1.msra.mxu0 0.0
      %1291 = vmatprep.subr.mxu0 0.0
      %1292 = vmatpush1.msra.mxu0 0.0
      %1293 = vmatprep.subr.mxu0 0.0
      %1294 = vmatpush1.msra.mxu0 0.0
      %1295 = vmatprep.subr.mxu0 0.0
      %1296 = vmatpush1.msra.mxu0 0.0
      %1297 = vmatprep.subr.mxu0 0.0
      %1298 = vmatpush1.msra.mxu0 0.0
      %1299 = vmatprep.subr.mxu0 0.0
      %1300 = vmatpush1.msra.mxu0 %v1260
      %1301 = vmatprep.subr.mxu0 0.0
      %1302 = vmatpush1.msra.mxu0 %v1259
      %1303 = vmatprep.subr.mxu0 0.0
      %1304 = vmatpush1.msra.mxu0 %v1258
      %1305 = vmatprep.subr.mxu0 0.0
      %1306 = vmatpush1.msra.mxu0 %v1257
      %1307 = vmatprep.subr.mxu0 0.0
      %1308 = vmatpush2.msra.mxu0 0.0
      %1309 = vmatprep.subr.mxu0 0.0
      %1310 = vmatpush2.msra.mxu0 0.0
      %1311 = vmatprep.subr.mxu0 0.0
      %1312 = vmatpush2.msra.mxu0 0.0
      %1313 = vmatprep.subr.mxu0 0.0
      %1314 = vmatpush2.msra.mxu0 0.0
      %1315 = vmatprep.subr.mxu0 0.0
      %1316 = vmatpush2.msra.mxu0 0.0
      %1317 = vmatprep.subr.mxu0 0.0
      %1318 = vmatpush2.msra.mxu0 0.0
      %1319 = vmatprep.subr.mxu0 0.0
      %1320 = vmatpush2.msra.mxu0 0.0
      %1321 = vmatprep.subr.mxu0 0.0
      %1322 = vmatpush2.msra.mxu0 0.0
      %1323 = vmatprep.subr.mxu0 0.0
      %1324 = vmatpush2.msra.mxu0 0.0
      %1325 = vmatprep.subr.mxu0 0.0
      %1326 = vmatpush2.msra.mxu0 0.0
      %1327 = vmatprep.subr.mxu0 0.0
      %1328 = vmatpush2.msra.mxu0 0.0
      %1329 = vmatprep.subr.mxu0 0.0
      %1330 = vmatpush2.msra.mxu0 0.0
      %1331 = vmatprep.subr.mxu0 0.0
      %1332 = vmatpush2.msra.mxu0 0.0
      %1333 = vmatprep.subr.mxu0 0.0
      %1334 = vmatpush2.msra.mxu0 0.0
      %1335 = vmatprep.subr.mxu0 0.0
      %1336 = vmatpush2.msra.mxu0 0.0
      %1337 = vmatprep.subr.mxu0 0.0
      %1338 = vmatpush2.msra.mxu0 0.0
      %1339 = vmatprep.mubr.f32.mxu0 0.0
      %1340 = vmatmul.mubr.f32.gmra.mxu0 %v1261
      %v1341 = vpop.f32.mrf.mxu0
      %v1342 = vadd.f32 0.0, %v1341
      %v1343 = vpop.f32.mrf.mxu0
      %1344 = vmatprep.mubr.f32.mxu0 0.0
      %1345 = vmatmul.mubr.f32.gmra.mxu0 %v1263
      %v1346 = vpop.f32.mrf.mxu0
      %v1347 = vadd.f32 0.0, %v1346
      %v1348 = vpop.f32.mrf.mxu0
      %1349 = vmatprep.mubr.f32.mxu0 0.0
      %1350 = vmatmul.mubr.f32.gmra.mxu0 %v1265
      %v1351 = vpop.f32.mrf.mxu0
      %v1352 = vadd.f32 0.0, %v1351
      %v1353 = vpop.f32.mrf.mxu0
      %1354 = vmatprep.mubr.f32.mxu0 0.0
      %1355 = vmatmul.mubr.f32.gmra.mxu0 %v1267
      %v1356 = vpop.f32.mrf.mxu0
      %v1357 = vadd.f32 0.0, %v1356
      %v1358 = vpop.f32.mrf.mxu0
      %1359 = vmatprep.mubr.f32.mxu0 0.0
      %1360 = vmatmul.mubr.f32.gmra.mxu0 %v1269
      %v1361 = vpop.f32.mrf.mxu0
      %v1362 = vadd.f32 0.0, %v1361
      %v1363 = vpop.f32.mrf.mxu0
      %1364 = vmatprep.mubr.f32.mxu0 0.0
      %1365 = vmatmul.mubr.f32.gmra.mxu0 %v1271
      %v1366 = vpop.f32.mrf.mxu0
      %v1367 = vadd.f32 0.0, %v1366
      %v1368 = vpop.f32.mrf.mxu0
      %1369 = vmatprep.mubr.f32.mxu0 0.0
      %1370 = vmatmul.mubr.f32.gmra.mxu0 %v1273
      %v1371 = vpop.f32.mrf.mxu0
      %v1372 = vadd.f32 0.0, %v1371
      %v1373 = vpop.f32.mrf.mxu0
      %1374 = vdwg.mxu0
      %v1375 = vadd.f32 %v1223, %v1342
      %v1376 = vadd.f32 %v1228, %v1347
      %v1377 = vadd.f32 %v1233, %v1352
      %v1378 = vadd.f32 %v1238, %v1357
      %v1379 = vadd.f32 %v1243, %v1362
      %v1380 = vadd.f32 %v1248, %v1367
      %v1381 = vadd.f32 %v1253, %v1372
      %v1388 = vrot.slane %v511, 7
      %v1389 = vrot.slane %v512, 7
      %v1390 = vsel %vm271, %v1388, %v1389
      %v1391 = vrot.slane %v513, 7
      %v1392 = vsel %vm271, %v1389, %v1391
      %v1393 = vrot.slane %v514, 7
      %v1394 = vsel %vm271, %v1391, %v1393
      %v1395 = vrot.slane %v515, 7
      %v1396 = vsel %vm271, %v1393, %v1395
      %v1397 = vrot.slane %v516, 7
      %v1398 = vsel %vm271, %v1395, %v1397
      %v1406 = vsel %vm271, 0.0, %v1388
      %v1407 = vsel %vm977, %v1406, 0.0
      %v1408 = vsel %vm978, %v1390, 0.0
      %v1409 = vsel %vm979, %v1392, 0.0
      %v1410 = vsel %vm980, %v1394, 0.0
      %v1411 = vsel %vm981, %v1396, 0.0
      %v1412 = vsel %vm982, %v1398, 0.0
      %v1413 = vsel %vm983, %v1397, 0.0
      %s1414 = scalar_lea.vmem %s3, 96
      %v1415 = vld [vmem:[%s1414] sm:$0xff]
      %v1416 = vld [vmem:[%s1414 + $0x8] sm:$0xff]
      %v1417 = vld [vmem:[%s1414 + $0x10] sm:$0xff]
      %v1418 = vld [vmem:[%s1414 + $0x18] sm:$0xff]
      %v1420 = vsel %vm1019, %v1407, 0
      %v1423 = vsel %vm1019, %v1408, 0
      %v1426 = vsel %vm1019, %v1409, 0
      %v1429 = vsel %vm1019, %v1410, 0
      %v1432 = vsel %vm1019, %v1411, 0
      %v1435 = vsel %vm1019, %v1412, 0
      %v1438 = vsel %vm1019, %v1413, 0
      %1440 = vmatprep.subr.mxu0 0.0
      %1441 = vmatpush1.msra.mxu0 0.0
      %1442 = vmatprep.subr.mxu0 0.0
      %1443 = vmatpush1.msra.mxu0 0.0
      %1444 = vmatprep.subr.mxu0 0.0
      %1445 = vmatpush1.msra.mxu0 0.0
      %1446 = vmatprep.subr.mxu0 0.0
      %1447 = vmatpush1.msra.mxu0 0.0
      %1448 = vmatprep.subr.mxu0 0.0
      %1449 = vmatpush1.msra.mxu0 0.0
      %1450 = vmatprep.subr.mxu0 0.0
      %1451 = vmatpush1.msra.mxu0 0.0
      %1452 = vmatprep.subr.mxu0 0.0
      %1453 = vmatpush1.msra.mxu0 0.0
      %1454 = vmatprep.subr.mxu0 0.0
      %1455 = vmatpush1.msra.mxu0 0.0
      %1456 = vmatprep.subr.mxu0 0.0
      %1457 = vmatpush1.msra.mxu0 0.0
      %1458 = vmatprep.subr.mxu0 0.0
      %1459 = vmatpush1.msra.mxu0 0.0
      %1460 = vmatprep.subr.mxu0 0.0
      %1461 = vmatpush1.msra.mxu0 0.0
      %1462 = vmatprep.subr.mxu0 0.0
      %1463 = vmatpush1.msra.mxu0 0.0
      %1464 = vmatprep.subr.mxu0 0.0
      %1465 = vmatpush1.msra.mxu0 %v1418
      %1466 = vmatprep.subr.mxu0 0.0
      %1467 = vmatpush1.msra.mxu0 %v1417
      %1468 = vmatprep.subr.mxu0 0.0
      %1469 = vmatpush1.msra.mxu0 %v1416
      %1470 = vmatprep.subr.mxu0 0.0
      %1471 = vmatpush1.msra.mxu0 %v1415
      %1472 = vmatprep.subr.mxu0 0.0
      %1473 = vmatpush2.msra.mxu0 0.0
      %1474 = vmatprep.subr.mxu0 0.0
      %1475 = vmatpush2.msra.mxu0 0.0
      %1476 = vmatprep.subr.mxu0 0.0
      %1477 = vmatpush2.msra.mxu0 0.0
      %1478 = vmatprep.subr.mxu0 0.0
      %1479 = vmatpush2.msra.mxu0 0.0
      %1480 = vmatprep.subr.mxu0 0.0
      %1481 = vmatpush2.msra.mxu0 0.0
      %1482 = vmatprep.subr.mxu0 0.0
      %1483 = vmatpush2.msra.mxu0 0.0
      %1484 = vmatprep.subr.mxu0 0.0
      %1485 = vmatpush2.msra.mxu0 0.0
      %1486 = vmatprep.subr.mxu0 0.0
      %1487 = vmatpush2.msra.mxu0 0.0
      %1488 = vmatprep.subr.mxu0 0.0
      %1489 = vmatpush2.msra.mxu0 0.0
      %1490 = vmatprep.subr.mxu0 0.0
      %1491 = vmatpush2.msra.mxu0 0.0
      %1492 = vmatprep.subr.mxu0 0.0
      %1493 = vmatpush2.msra.mxu0 0.0
      %1494 = vmatprep.subr.mxu0 0.0
      %1495 = vmatpush2.msra.mxu0 0.0
      %1496 = vmatprep.subr.mxu0 0.0
      %1497 = vmatpush2.msra.mxu0 0.0
      %1498 = vmatprep.subr.mxu0 0.0
      %1499 = vmatpush2.msra.mxu0 0.0
      %1500 = vmatprep.subr.mxu0 0.0
      %1501 = vmatpush2.msra.mxu0 0.0
      %1502 = vmatprep.subr.mxu0 0.0
      %1503 = vmatpush2.msra.mxu0 0.0
      %1504 = vmatprep.mubr.f32.mxu0 0.0
      %1505 = vmatmul.mubr.f32.gmra.mxu0 %v1420
      %v1506 = vpop.f32.mrf.mxu0
      %v1507 = vadd.f32 0.0, %v1506
      %v1508 = vpop.f32.mrf.mxu0
      %1509 = vmatprep.mubr.f32.mxu0 0.0
      %1510 = vmatmul.mubr.f32.gmra.mxu0 %v1423
      %v1511 = vpop.f32.mrf.mxu0
      %v1512 = vadd.f32 0.0, %v1511
      %v1513 = vpop.f32.mrf.mxu0
      %1514 = vmatprep.mubr.f32.mxu0 0.0
      %1515 = vmatmul.mubr.f32.gmra.mxu0 %v1426
      %v1516 = vpop.f32.mrf.mxu0
      %v1517 = vadd.f32 0.0, %v1516
      %v1518 = vpop.f32.mrf.mxu0
      %1519 = vmatprep.mubr.f32.mxu0 0.0
      %1520 = vmatmul.mubr.f32.gmra.mxu0 %v1429
      %v1521 = vpop.f32.mrf.mxu0
      %v1522 = vadd.f32 0.0, %v1521
      %v1523 = vpop.f32.mrf.mxu0
      %1524 = vmatprep.mubr.f32.mxu0 0.0
      %1525 = vmatmul.mubr.f32.gmra.mxu0 %v1432
      %v1526 = vpop.f32.mrf.mxu0
      %v1527 = vadd.f32 0.0, %v1526
      %v1528 = vpop.f32.mrf.mxu0
      %1529 = vmatprep.mubr.f32.mxu0 0.0
      %1530 = vmatmul.mubr.f32.gmra.mxu0 %v1435
      %v1531 = vpop.f32.mrf.mxu0
      %v1532 = vadd.f32 0.0, %v1531
      %v1533 = vpop.f32.mrf.mxu0
      %1534 = vmatprep.mubr.f32.mxu0 0.0
      %1535 = vmatmul.mubr.f32.gmra.mxu0 %v1438
      %v1536 = vpop.f32.mrf.mxu0
      %v1537 = vadd.f32 0.0, %v1536
      %v1538 = vpop.f32.mrf.mxu0
      %1539 = vdwg.mxu0
      %v1540 = vadd.f32 %v1375, %v1507
      %v1541 = vadd.f32 %v1376, %v1512
      %v1542 = vadd.f32 %v1377, %v1517
      %v1543 = vadd.f32 %v1378, %v1522
      %v1544 = vadd.f32 %v1379, %v1527
      %v1545 = vadd.f32 %v1380, %v1532
      %v1546 = vadd.f32 %v1381, %v1537
      %s1547 = scalar_lea.vmem %s3, 128
      %v1548 = vld [vmem:[%s1547] sm:$0xff]
      %v1549 = vld [vmem:[%s1547 + $0x8] sm:$0xff]
      %v1550 = vld [vmem:[%s1547 + $0x10] sm:$0xff]
      %v1551 = vld [vmem:[%s1547 + $0x18] sm:$0xff]
      %v1553 = vsel %vm1019, %v375, 0
      %v1556 = vsel %vm1019, %v376, 0
      %v1559 = vsel %vm1019, %v377, 0
      %v1562 = vsel %vm1019, %v378, 0
      %v1565 = vsel %vm1019, %v379, 0
      %v1568 = vsel %vm1019, %v380, 0
      %v1571 = vsel %vm1019, %v381, 0
      %1573 = vmatprep.subr.mxu0 0.0
      %1574 = vmatpush1.msra.mxu0 0.0
      %1575 = vmatprep.subr.mxu0 0.0
      %1576 = vmatpush1.msra.mxu0 0.0
      %1577 = vmatprep.subr.mxu0 0.0
      %1578 = vmatpush1.msra.mxu0 0.0
      %1579 = vmatprep.subr.mxu0 0.0
      %1580 = vmatpush1.msra.mxu0 0.0
      %1581 = vmatprep.subr.mxu0 0.0
      %1582 = vmatpush1.msra.mxu0 0.0
      %1583 = vmatprep.subr.mxu0 0.0
      %1584 = vmatpush1.msra.mxu0 0.0
      %1585 = vmatprep.subr.mxu0 0.0
      %1586 = vmatpush1.msra.mxu0 0.0
      %1587 = vmatprep.subr.mxu0 0.0
      %1588 = vmatpush1.msra.mxu0 0.0
      %1589 = vmatprep.subr.mxu0 0.0
      %1590 = vmatpush1.msra.mxu0 0.0
      %1591 = vmatprep.subr.mxu0 0.0
      %1592 = vmatpush1.msra.mxu0 0.0
      %1593 = vmatprep.subr.mxu0 0.0
      %1594 = vmatpush1.msra.mxu0 0.0
      %1595 = vmatprep.subr.mxu0 0.0
      %1596 = vmatpush1.msra.mxu0 0.0
      %1597 = vmatprep.subr.mxu0 0.0
      %1598 = vmatpush1.msra.mxu0 %v1551
      %1599 = vmatprep.subr.mxu0 0.0
      %1600 = vmatpush1.msra.mxu0 %v1550
      %1601 = vmatprep.subr.mxu0 0.0
      %1602 = vmatpush1.msra.mxu0 %v1549
      %1603 = vmatprep.subr.mxu0 0.0
      %1604 = vmatpush1.msra.mxu0 %v1548
      %1605 = vmatprep.subr.mxu0 0.0
      %1606 = vmatpush2.msra.mxu0 0.0
      %1607 = vmatprep.subr.mxu0 0.0
      %1608 = vmatpush2.msra.mxu0 0.0
      %1609 = vmatprep.subr.mxu0 0.0
      %1610 = vmatpush2.msra.mxu0 0.0
      %1611 = vmatprep.subr.mxu0 0.0
      %1612 = vmatpush2.msra.mxu0 0.0
      %1613 = vmatprep.subr.mxu0 0.0
      %1614 = vmatpush2.msra.mxu0 0.0
      %1615 = vmatprep.subr.mxu0 0.0
      %1616 = vmatpush2.msra.mxu0 0.0
      %1617 = vmatprep.subr.mxu0 0.0
      %1618 = vmatpush2.msra.mxu0 0.0
      %1619 = vmatprep.subr.mxu0 0.0
      %1620 = vmatpush2.msra.mxu0 0.0
      %1621 = vmatprep.subr.mxu0 0.0
      %1622 = vmatpush2.msra.mxu0 0.0
      %1623 = vmatprep.subr.mxu0 0.0
      %1624 = vmatpush2.msra.mxu0 0.0
      %1625 = vmatprep.subr.mxu0 0.0
      %1626 = vmatpush2.msra.mxu0 0.0
      %1627 = vmatprep.subr.mxu0 0.0
      %1628 = vmatpush2.msra.mxu0 0.0
      %1629 = vmatprep.subr.mxu0 0.0
      %1630 = vmatpush2.msra.mxu0 0.0
      %1631 = vmatprep.subr.mxu0 0.0
      %1632 = vmatpush2.msra.mxu0 0.0
      %1633 = vmatprep.subr.mxu0 0.0
      %1634 = vmatpush2.msra.mxu0 0.0
      %1635 = vmatprep.subr.mxu0 0.0
      %1636 = vmatpush2.msra.mxu0 0.0
      %1637 = vmatprep.mubr.f32.mxu0 0.0
      %1638 = vmatmul.mubr.f32.gmra.mxu0 %v1553
      %v1639 = vpop.f32.mrf.mxu0
      %v1640 = vadd.f32 0.0, %v1639
      %v1641 = vpop.f32.mrf.mxu0
      %1642 = vmatprep.mubr.f32.mxu0 0.0
      %1643 = vmatmul.mubr.f32.gmra.mxu0 %v1556
      %v1644 = vpop.f32.mrf.mxu0
      %v1645 = vadd.f32 0.0, %v1644
      %v1646 = vpop.f32.mrf.mxu0
      %1647 = vmatprep.mubr.f32.mxu0 0.0
      %1648 = vmatmul.mubr.f32.gmra.mxu0 %v1559
      %v1649 = vpop.f32.mrf.mxu0
      %v1650 = vadd.f32 0.0, %v1649
      %v1651 = vpop.f32.mrf.mxu0
      %1652 = vmatprep.mubr.f32.mxu0 0.0
      %1653 = vmatmul.mubr.f32.gmra.mxu0 %v1562
      %v1654 = vpop.f32.mrf.mxu0
      %v1655 = vadd.f32 0.0, %v1654
      %v1656 = vpop.f32.mrf.mxu0
      %1657 = vmatprep.mubr.f32.mxu0 0.0
      %1658 = vmatmul.mubr.f32.gmra.mxu0 %v1565
      %v1659 = vpop.f32.mrf.mxu0
      %v1660 = vadd.f32 0.0, %v1659
      %v1661 = vpop.f32.mrf.mxu0
      %1662 = vmatprep.mubr.f32.mxu0 0.0
      %1663 = vmatmul.mubr.f32.gmra.mxu0 %v1568
      %v1664 = vpop.f32.mrf.mxu0
      %v1665 = vadd.f32 0.0, %v1664
      %v1666 = vpop.f32.mrf.mxu0
      %1667 = vmatprep.mubr.f32.mxu0 0.0
      %1668 = vmatmul.mubr.f32.gmra.mxu0 %v1571
      %v1669 = vpop.f32.mrf.mxu0
      %v1670 = vadd.f32 0.0, %v1669
      %v1671 = vpop.f32.mrf.mxu0
      %1672 = vdwg.mxu0
      %v1673 = vadd.f32 %v1540, %v1640
      %v1674 = vadd.f32 %v1541, %v1645
      %v1675 = vadd.f32 %v1542, %v1650
      %v1676 = vadd.f32 %v1543, %v1655
      %v1677 = vadd.f32 %v1544, %v1660
      %v1678 = vadd.f32 %v1545, %v1665
      %v1679 = vadd.f32 %v1546, %v1670
      %s1680 = scalar_lea.vmem %s3, 160
      %v1681 = vld [vmem:[%s1680] sm:$0xff]
      %v1682 = vld [vmem:[%s1680 + $0x8] sm:$0xff]
      %v1683 = vld [vmem:[%s1680 + $0x10] sm:$0xff]
      %v1684 = vld [vmem:[%s1680 + $0x18] sm:$0xff]
      %v1685 = vsel %vm1019, %v511, 0
      %v1687 = vsel %vm1019, %v512, 0
      %v1689 = vsel %vm1019, %v513, 0
      %v1691 = vsel %vm1019, %v514, 0
      %v1693 = vsel %vm1019, %v515, 0
      %v1695 = vsel %vm1019, %v516, 0
      %v1698 = vsel %vm1019, %v517, 0
      %1700 = vmatprep.subr.mxu0 0.0
      %1701 = vmatpush1.msra.mxu0 0.0
      %1702 = vmatprep.subr.mxu0 0.0
      %1703 = vmatpush1.msra.mxu0 0.0
      %1704 = vmatprep.subr.mxu0 0.0
      %1705 = vmatpush1.msra.mxu0 0.0
      %1706 = vmatprep.subr.mxu0 0.0
      %1707 = vmatpush1.msra.mxu0 0.0
      %1708 = vmatprep.subr.mxu0 0.0
      %1709 = vmatpush1.msra.mxu0 0.0
      %1710 = vmatprep.subr.mxu0 0.0
      %1711 = vmatpush1.msra.mxu0 0.0
      %1712 = vmatprep.subr.mxu0 0.0
      %1713 = vmatpush1.msra.mxu0 0.0
      %1714 = vmatprep.subr.mxu0 0.0
      %1715 = vmatpush1.msra.mxu0 0.0
      %1716 = vmatprep.subr.mxu0 0.0
      %1717 = vmatpush1.msra.mxu0 0.0
      %1718 = vmatprep.subr.mxu0 0.0
      %1719 = vmatpush1.msra.mxu0 0.0
      %1720 = vmatprep.subr.mxu0 0.0
      %1721 = vmatpush1.msra.mxu0 0.0
      %1722 = vmatprep.subr.mxu0 0.0
      %1723 = vmatpush1.msra.mxu0 0.0
      %1724 = vmatprep.subr.mxu0 0.0
      %1725 = vmatpush1.msra.mxu0 %v1684
      %1726 = vmatprep.subr.mxu0 0.0
      %1727 = vmatpush1.msra.mxu0 %v1683
      %1728 = vmatprep.subr.mxu0 0.0
      %1729 = vmatpush1.msra.mxu0 %v1682
      %1730 = vmatprep.subr.mxu0 0.0
      %1731 = vmatpush1.msra.mxu0 %v1681
      %1732 = vmatprep.subr.mxu0 0.0
      %1733 = vmatpush2.msra.mxu0 0.0
      %1734 = vmatprep.subr.mxu0 0.0
      %1735 = vmatpush2.msra.mxu0 0.0
      %1736 = vmatprep.subr.mxu0 0.0
      %1737 = vmatpush2.msra.mxu0 0.0
      %1738 = vmatprep.subr.mxu0 0.0
      %1739 = vmatpush2.msra.mxu0 0.0
      %1740 = vmatprep.subr.mxu0 0.0
      %1741 = vmatpush2.msra.mxu0 0.0
      %1742 = vmatprep.subr.mxu0 0.0
      %1743 = vmatpush2.msra.mxu0 0.0
      %1744 = vmatprep.subr.mxu0 0.0
      %1745 = vmatpush2.msra.mxu0 0.0
      %1746 = vmatprep.subr.mxu0 0.0
      %1747 = vmatpush2.msra.mxu0 0.0
      %1748 = vmatprep.subr.mxu0 0.0
      %1749 = vmatpush2.msra.mxu0 0.0
      %1750 = vmatprep.subr.mxu0 0.0
      %1751 = vmatpush2.msra.mxu0 0.0
      %1752 = vmatprep.subr.mxu0 0.0
      %1753 = vmatpush2.msra.mxu0 0.0
      %1754 = vmatprep.subr.mxu0 0.0
      %1755 = vmatpush2.msra.mxu0 0.0
      %1756 = vmatprep.subr.mxu0 0.0
      %1757 = vmatpush2.msra.mxu0 0.0
      %1758 = vmatprep.subr.mxu0 0.0
      %1759 = vmatpush2.msra.mxu0 0.0
      %1760 = vmatprep.subr.mxu0 0.0
      %1761 = vmatpush2.msra.mxu0 0.0
      %1762 = vmatprep.subr.mxu0 0.0
      %1763 = vmatpush2.msra.mxu0 0.0
      %1764 = vmatprep.mubr.f32.mxu0 0.0
      %1765 = vmatmul.mubr.f32.gmra.mxu0 %v1685
      %v1766 = vpop.f32.mrf.mxu0
      %v1767 = vadd.f32 0.0, %v1766
      %v1768 = vpop.f32.mrf.mxu0
      %1769 = vmatprep.mubr.f32.mxu0 0.0
      %1770 = vmatmul.mubr.f32.gmra.mxu0 %v1687
      %v1771 = vpop.f32.mrf.mxu0
      %v1772 = vadd.f32 0.0, %v1771
      %v1773 = vpop.f32.mrf.mxu0
      %1774 = vmatprep.mubr.f32.mxu0 0.0
      %1775 = vmatmul.mubr.f32.gmra.mxu0 %v1689
      %v1776 = vpop.f32.mrf.mxu0
      %v1777 = vadd.f32 0.0, %v1776
      %v1778 = vpop.f32.mrf.mxu0
      %1779 = vmatprep.mubr.f32.mxu0 0.0
      %1780 = vmatmul.mubr.f32.gmra.mxu0 %v1691
      %v1781 = vpop.f32.mrf.mxu0
      %v1782 = vadd.f32 0.0, %v1781
      %v1783 = vpop.f32.mrf.mxu0
      %1784 = vmatprep.mubr.f32.mxu0 0.0
      %1785 = vmatmul.mubr.f32.gmra.mxu0 %v1693
      %v1786 = vpop.f32.mrf.mxu0
      %v1787 = vadd.f32 0.0, %v1786
      %v1788 = vpop.f32.mrf.mxu0
      %1789 = vmatprep.mubr.f32.mxu0 0.0
      %1790 = vmatmul.mubr.f32.gmra.mxu0 %v1695
      %v1791 = vpop.f32.mrf.mxu0
      %v1792 = vadd.f32 0.0, %v1791
      %v1793 = vpop.f32.mrf.mxu0
      %1794 = vmatprep.mubr.f32.mxu0 0.0
      %1795 = vmatmul.mubr.f32.gmra.mxu0 %v1698
      %v1796 = vpop.f32.mrf.mxu0
      %v1797 = vadd.f32 0.0, %v1796
      %v1798 = vpop.f32.mrf.mxu0
      %1799 = vdwg.mxu0
      %v1800 = vadd.f32 %v1673, %v1767
      %v1801 = vadd.f32 %v1674, %v1772
      %v1802 = vadd.f32 %v1675, %v1777
      %v1803 = vadd.f32 %v1676, %v1782
      %v1804 = vadd.f32 %v1677, %v1787
      %v1805 = vadd.f32 %v1678, %v1792
      %v1806 = vadd.f32 %v1679, %v1797
      %v1807 = vrot.slane %v783, 7
      %v1808 = vrot.slane %v784, 7
      %v1809 = vsel %vm271, %v1807, %v1808
      %v1810 = vrot.slane %v785, 7
      %v1811 = vsel %vm271, %v1808, %v1810
      %v1812 = vrot.slane %v786, 7
      %v1813 = vsel %vm271, %v1810, %v1812
      %v1814 = vrot.slane %v787, 7
      %v1815 = vsel %vm271, %v1812, %v1814
      %v1816 = vrot.slane %v788, 7
      %v1817 = vsel %vm271, %v1814, %v1816
      %v1825 = vsel %vm271, 0.0, %v1807
      %v1826 = vsel %vm977, %v1825, 0.0
      %v1827 = vsel %vm978, %v1809, 0.0
      %v1828 = vsel %vm979, %v1811, 0.0
      %v1829 = vsel %vm980, %v1813, 0.0
      %v1830 = vsel %vm981, %v1815, 0.0
      %v1831 = vsel %vm982, %v1817, 0.0
      %v1832 = vsel %vm983, %v1816, 0.0
      %s1833 = scalar_lea.vmem %s3, 192
      %v1834 = vld [vmem:[%s1833] sm:$0xff]
      %v1835 = vld [vmem:[%s1833 + $0x8] sm:$0xff]
      %v1836 = vld [vmem:[%s1833 + $0x10] sm:$0xff]
      %v1837 = vld [vmem:[%s1833 + $0x18] sm:$0xff]
      %v1839 = vsel %vm1019, %v1826, 0
      %v1842 = vsel %vm1019, %v1827, 0
      %v1845 = vsel %vm1019, %v1828, 0
      %v1848 = vsel %vm1019, %v1829, 0
      %v1851 = vsel %vm1019, %v1830, 0
      %v1854 = vsel %vm1019, %v1831, 0
      %v1857 = vsel %vm1019, %v1832, 0
      %1859 = vmatprep.subr.mxu0 0.0
      %1860 = vmatpush1.msra.mxu0 0.0
      %1861 = vmatprep.subr.mxu0 0.0
      %1862 = vmatpush1.msra.mxu0 0.0
      %1863 = vmatprep.subr.mxu0 0.0
      %1864 = vmatpush1.msra.mxu0 0.0
      %1865 = vmatprep.subr.mxu0 0.0
      %1866 = vmatpush1.msra.mxu0 0.0
      %1867 = vmatprep.subr.mxu0 0.0
      %1868 = vmatpush1.msra.mxu0 0.0
      %1869 = vmatprep.subr.mxu0 0.0
      %1870 = vmatpush1.msra.mxu0 0.0
      %1871 = vmatprep.subr.mxu0 0.0
      %1872 = vmatpush1.msra.mxu0 0.0
      %1873 = vmatprep.subr.mxu0 0.0
      %1874 = vmatpush1.msra.mxu0 0.0
      %1875 = vmatprep.subr.mxu0 0.0
      %1876 = vmatpush1.msra.mxu0 0.0
      %1877 = vmatprep.subr.mxu0 0.0
      %1878 = vmatpush1.msra.mxu0 0.0
      %1879 = vmatprep.subr.mxu0 0.0
      %1880 = vmatpush1.msra.mxu0 0.0
      %1881 = vmatprep.subr.mxu0 0.0
      %1882 = vmatpush1.msra.mxu0 0.0
      %1883 = vmatprep.subr.mxu0 0.0
      %1884 = vmatpush1.msra.mxu0 %v1837
      %1885 = vmatprep.subr.mxu0 0.0
      %1886 = vmatpush1.msra.mxu0 %v1836
      %1887 = vmatprep.subr.mxu0 0.0
      %1888 = vmatpush1.msra.mxu0 %v1835
      %1889 = vmatprep.subr.mxu0 0.0
      %1890 = vmatpush1.msra.mxu0 %v1834
      %1891 = vmatprep.subr.mxu0 0.0
      %1892 = vmatpush2.msra.mxu0 0.0
      %1893 = vmatprep.subr.mxu0 0.0
      %1894 = vmatpush2.msra.mxu0 0.0
      %1895 = vmatprep.subr.mxu0 0.0
      %1896 = vmatpush2.msra.mxu0 0.0
      %1897 = vmatprep.subr.mxu0 0.0
      %1898 = vmatpush2.msra.mxu0 0.0
      %1899 = vmatprep.subr.mxu0 0.0
      %1900 = vmatpush2.msra.mxu0 0.0
      %1901 = vmatprep.subr.mxu0 0.0
      %1902 = vmatpush2.msra.mxu0 0.0
      %1903 = vmatprep.subr.mxu0 0.0
      %1904 = vmatpush2.msra.mxu0 0.0
      %1905 = vmatprep.subr.mxu0 0.0
      %1906 = vmatpush2.msra.mxu0 0.0
      %1907 = vmatprep.subr.mxu0 0.0
      %1908 = vmatpush2.msra.mxu0 0.0
      %1909 = vmatprep.subr.mxu0 0.0
      %1910 = vmatpush2.msra.mxu0 0.0
      %1911 = vmatprep.subr.mxu0 0.0
      %1912 = vmatpush2.msra.mxu0 0.0
      %1913 = vmatprep.subr.mxu0 0.0
      %1914 = vmatpush2.msra.mxu0 0.0
      %1915 = vmatprep.subr.mxu0 0.0
      %1916 = vmatpush2.msra.mxu0 0.0
      %1917 = vmatprep.subr.mxu0 0.0
      %1918 = vmatpush2.msra.mxu0 0.0
      %1919 = vmatprep.subr.mxu0 0.0
      %1920 = vmatpush2.msra.mxu0 0.0
      %1921 = vmatprep.subr.mxu0 0.0
      %1922 = vmatpush2.msra.mxu0 0.0
      %1923 = vmatprep.mubr.f32.mxu0 0.0
      %1924 = vmatmul.mubr.f32.gmra.mxu0 %v1839
      %v1925 = vpop.f32.mrf.mxu0
      %v1926 = vadd.f32 0.0, %v1925
      %v1927 = vpop.f32.mrf.mxu0
      %1928 = vmatprep.mubr.f32.mxu0 0.0
      %1929 = vmatmul.mubr.f32.gmra.mxu0 %v1842
      %v1930 = vpop.f32.mrf.mxu0
      %v1931 = vadd.f32 0.0, %v1930
      %v1932 = vpop.f32.mrf.mxu0
      %1933 = vmatprep.mubr.f32.mxu0 0.0
      %1934 = vmatmul.mubr.f32.gmra.mxu0 %v1845
      %v1935 = vpop.f32.mrf.mxu0
      %v1936 = vadd.f32 0.0, %v1935
      %v1937 = vpop.f32.mrf.mxu0
      %1938 = vmatprep.mubr.f32.mxu0 0.0
      %1939 = vmatmul.mubr.f32.gmra.mxu0 %v1848
      %v1940 = vpop.f32.mrf.mxu0
      %v1941 = vadd.f32 0.0, %v1940
      %v1942 = vpop.f32.mrf.mxu0
      %1943 = vmatprep.mubr.f32.mxu0 0.0
      %1944 = vmatmul.mubr.f32.gmra.mxu0 %v1851
      %v1945 = vpop.f32.mrf.mxu0
      %v1946 = vadd.f32 0.0, %v1945
      %v1947 = vpop.f32.mrf.mxu0
      %1948 = vmatprep.mubr.f32.mxu0 0.0
      %1949 = vmatmul.mubr.f32.gmra.mxu0 %v1854
      %v1950 = vpop.f32.mrf.mxu0
      %v1951 = vadd.f32 0.0, %v1950
      %v1952 = vpop.f32.mrf.mxu0
      %1953 = vmatprep.mubr.f32.mxu0 0.0
      %1954 = vmatmul.mubr.f32.gmra.mxu0 %v1857
      %v1955 = vpop.f32.mrf.mxu0
      %v1956 = vadd.f32 0.0, %v1955
      %v1957 = vpop.f32.mrf.mxu0
      %1958 = vdwg.mxu0
      %v1959 = vadd.f32 %v1800, %v1926
      %v1960 = vadd.f32 %v1801, %v1931
      %v1961 = vadd.f32 %v1802, %v1936
      %v1962 = vadd.f32 %v1803, %v1941
      %v1963 = vadd.f32 %v1804, %v1946
      %v1964 = vadd.f32 %v1805, %v1951
      %v1965 = vadd.f32 %v1806, %v1956
      %s1966 = scalar_lea.vmem %s3, 224
      %v1967 = vld [vmem:[%s1966] sm:$0xff]
      %v1968 = vld [vmem:[%s1966 + $0x8] sm:$0xff]
      %v1969 = vld [vmem:[%s1966 + $0x10] sm:$0xff]
      %v1970 = vld [vmem:[%s1966 + $0x18] sm:$0xff]
      %v1971 = vsel %vm1019, %v647, 0
      %v1973 = vsel %vm1019, %v648, 0
      %v1975 = vsel %vm1019, %v649, 0
      %v1977 = vsel %vm1019, %v650, 0
      %v1979 = vsel %vm1019, %v651, 0
      %v1981 = vsel %vm1019, %v652, 0
      %v1984 = vsel %vm1019, %v653, 0
      %1986 = vmatprep.subr.mxu0 0.0
      %1987 = vmatpush1.msra.mxu0 0.0
      %1988 = vmatprep.subr.mxu0 0.0
      %1989 = vmatpush1.msra.mxu0 0.0
      %1990 = vmatprep.subr.mxu0 0.0
      %1991 = vmatpush1.msra.mxu0 0.0
      %1992 = vmatprep.subr.mxu0 0.0
      %1993 = vmatpush1.msra.mxu0 0.0
      %1994 = vmatprep.subr.mxu0 0.0
      %1995 = vmatpush1.msra.mxu0 0.0
      %1996 = vmatprep.subr.mxu0 0.0
      %1997 = vmatpush1.msra.mxu0 0.0
      %1998 = vmatprep.subr.mxu0 0.0
      %1999 = vmatpush1.msra.mxu0 0.0
      %2000 = vmatprep.subr.mxu0 0.0
      %2001 = vmatpush1.msra.mxu0 0.0
      %2002 = vmatprep.subr.mxu0 0.0
      %2003 = vmatpush1.msra.mxu0 0.0
      %2004 = vmatprep.subr.mxu0 0.0
      %2005 = vmatpush1.msra.mxu0 0.0
      %2006 = vmatprep.subr.mxu0 0.0
      %2007 = vmatpush1.msra.mxu0 0.0
      %2008 = vmatprep.subr.mxu0 0.0
      %2009 = vmatpush1.msra.mxu0 0.0
      %2010 = vmatprep.subr.mxu0 0.0
      %2011 = vmatpush1.msra.mxu0 %v1970
      %2012 = vmatprep.subr.mxu0 0.0
      %2013 = vmatpush1.msra.mxu0 %v1969
      %2014 = vmatprep.subr.mxu0 0.0
      %2015 = vmatpush1.msra.mxu0 %v1968
      %2016 = vmatprep.subr.mxu0 0.0
      %2017 = vmatpush1.msra.mxu0 %v1967
      %2018 = vmatprep.subr.mxu0 0.0
      %2019 = vmatpush2.msra.mxu0 0.0
      %2020 = vmatprep.subr.mxu0 0.0
      %2021 = vmatpush2.msra.mxu0 0.0
      %2022 = vmatprep.subr.mxu0 0.0
      %2023 = vmatpush2.msra.mxu0 0.0
      %2024 = vmatprep.subr.mxu0 0.0
      %2025 = vmatpush2.msra.mxu0 0.0
      %2026 = vmatprep.subr.mxu0 0.0
      %2027 = vmatpush2.msra.mxu0 0.0
      %2028 = vmatprep.subr.mxu0 0.0
      %2029 = vmatpush2.msra.mxu0 0.0
      %2030 = vmatprep.subr.mxu0 0.0
      %2031 = vmatpush2.msra.mxu0 0.0
      %2032 = vmatprep.subr.mxu0 0.0
      %2033 = vmatpush2.msra.mxu0 0.0
      %2034 = vmatprep.subr.mxu0 0.0
      %2035 = vmatpush2.msra.mxu0 0.0
      %2036 = vmatprep.subr.mxu0 0.0
      %2037 = vmatpush2.msra.mxu0 0.0
      %2038 = vmatprep.subr.mxu0 0.0
      %2039 = vmatpush2.msra.mxu0 0.0
      %2040 = vmatprep.subr.mxu0 0.0
      %2041 = vmatpush2.msra.mxu0 0.0
      %2042 = vmatprep.subr.mxu0 0.0
      %2043 = vmatpush2.msra.mxu0 0.0
      %2044 = vmatprep.subr.mxu0 0.0
      %2045 = vmatpush2.msra.mxu0 0.0
      %2046 = vmatprep.subr.mxu0 0.0
      %2047 = vmatpush2.msra.mxu0 0.0
      %2048 = vmatprep.subr.mxu0 0.0
      %2049 = vmatpush2.msra.mxu0 0.0
      %2050 = vmatprep.mubr.f32.mxu0 0.0
      %2051 = vmatmul.mubr.f32.gmra.mxu0 %v1971
      %v2052 = vpop.f32.mrf.mxu0
      %v2053 = vadd.f32 0.0, %v2052
      %v2054 = vpop.f32.mrf.mxu0
      %2055 = vmatprep.mubr.f32.mxu0 0.0
      %2056 = vmatmul.mubr.f32.gmra.mxu0 %v1973
      %v2057 = vpop.f32.mrf.mxu0
      %v2058 = vadd.f32 0.0, %v2057
      %v2059 = vpop.f32.mrf.mxu0
      %2060 = vmatprep.mubr.f32.mxu0 0.0
      %2061 = vmatmul.mubr.f32.gmra.mxu0 %v1975
      %v2062 = vpop.f32.mrf.mxu0
      %v2063 = vadd.f32 0.0, %v2062
      %v2064 = vpop.f32.mrf.mxu0
      %2065 = vmatprep.mubr.f32.mxu0 0.0
      %2066 = vmatmul.mubr.f32.gmra.mxu0 %v1977
      %v2067 = vpop.f32.mrf.mxu0
      %v2068 = vadd.f32 0.0, %v2067
      %v2069 = vpop.f32.mrf.mxu0
      %2070 = vmatprep.mubr.f32.mxu0 0.0
      %2071 = vmatmul.mubr.f32.gmra.mxu0 %v1979
      %v2072 = vpop.f32.mrf.mxu0
      %v2073 = vadd.f32 0.0, %v2072
      %v2074 = vpop.f32.mrf.mxu0
      %2075 = vmatprep.mubr.f32.mxu0 0.0
      %2076 = vmatmul.mubr.f32.gmra.mxu0 %v1981
      %v2077 = vpop.f32.mrf.mxu0
      %v2078 = vadd.f32 0.0, %v2077
      %v2079 = vpop.f32.mrf.mxu0
      %2080 = vmatprep.mubr.f32.mxu0 0.0
      %2081 = vmatmul.mubr.f32.gmra.mxu0 %v1984
      %v2082 = vpop.f32.mrf.mxu0
      %v2083 = vadd.f32 0.0, %v2082
      %v2084 = vpop.f32.mrf.mxu0
      %2085 = vdwg.mxu0
      %v2086 = vadd.f32 %v1959, %v2053
      %v2087 = vadd.f32 %v1960, %v2058
      %v2088 = vadd.f32 %v1961, %v2063
      %v2089 = vadd.f32 %v1962, %v2068
      %v2090 = vadd.f32 %v1963, %v2073
      %v2091 = vadd.f32 %v1964, %v2078
      %v2092 = vadd.f32 %v1965, %v2083
      %s2093 = scalar_lea.vmem %s3, 256
      %v2094 = vld [vmem:[%s2093] sm:$0xff]
      %v2095 = vld [vmem:[%s2093 + $0x8] sm:$0xff]
      %v2096 = vld [vmem:[%s2093 + $0x10] sm:$0xff]
      %v2097 = vld [vmem:[%s2093 + $0x18] sm:$0xff]
      %v2098 = vsel %vm1019, %v783, 0
      %v2100 = vsel %vm1019, %v784, 0
      %v2102 = vsel %vm1019, %v785, 0
      %v2104 = vsel %vm1019, %v786, 0
      %v2106 = vsel %vm1019, %v787, 0
      %v2108 = vsel %vm1019, %v788, 0
      %v2111 = vsel %vm1019, %v789, 0
      %2113 = vmatprep.subr.mxu0 0.0
      %2114 = vmatpush1.msra.mxu0 0.0
      %2115 = vmatprep.subr.mxu0 0.0
      %2116 = vmatpush1.msra.mxu0 0.0
      %2117 = vmatprep.subr.mxu0 0.0
      %2118 = vmatpush1.msra.mxu0 0.0
      %2119 = vmatprep.subr.mxu0 0.0
      %2120 = vmatpush1.msra.mxu0 0.0
      %2121 = vmatprep.subr.mxu0 0.0
      %2122 = vmatpush1.msra.mxu0 0.0
      %2123 = vmatprep.subr.mxu0 0.0
      %2124 = vmatpush1.msra.mxu0 0.0
      %2125 = vmatprep.subr.mxu0 0.0
      %2126 = vmatpush1.msra.mxu0 0.0
      %2127 = vmatprep.subr.mxu0 0.0
      %2128 = vmatpush1.msra.mxu0 0.0
      %2129 = vmatprep.subr.mxu0 0.0
      %2130 = vmatpush1.msra.mxu0 0.0
      %2131 = vmatprep.subr.mxu0 0.0
      %2132 = vmatpush1.msra.mxu0 0.0
      %2133 = vmatprep.subr.mxu0 0.0
      %2134 = vmatpush1.msra.mxu0 0.0
      %2135 = vmatprep.subr.mxu0 0.0
      %2136 = vmatpush1.msra.mxu0 0.0
      %2137 = vmatprep.subr.mxu0 0.0
      %2138 = vmatpush1.msra.mxu0 %v2097
      %2139 = vmatprep.subr.mxu0 0.0
      %2140 = vmatpush1.msra.mxu0 %v2096
      %2141 = vmatprep.subr.mxu0 0.0
      %2142 = vmatpush1.msra.mxu0 %v2095
      %2143 = vmatprep.subr.mxu0 0.0
      %2144 = vmatpush1.msra.mxu0 %v2094
      %2145 = vmatprep.subr.mxu0 0.0
      %2146 = vmatpush2.msra.mxu0 0.0
      %2147 = vmatprep.subr.mxu0 0.0
      %2148 = vmatpush2.msra.mxu0 0.0
      %2149 = vmatprep.subr.mxu0 0.0
      %2150 = vmatpush2.msra.mxu0 0.0
      %2151 = vmatprep.subr.mxu0 0.0
      %2152 = vmatpush2.msra.mxu0 0.0
      %2153 = vmatprep.subr.mxu0 0.0
      %2154 = vmatpush2.msra.mxu0 0.0
      %2155 = vmatprep.subr.mxu0 0.0
      %2156 = vmatpush2.msra.mxu0 0.0
      %2157 = vmatprep.subr.mxu0 0.0
      %2158 = vmatpush2.msra.mxu0 0.0
      %2159 = vmatprep.subr.mxu0 0.0
      %2160 = vmatpush2.msra.mxu0 0.0
      %2161 = vmatprep.subr.mxu0 0.0
      %2162 = vmatpush2.msra.mxu0 0.0
      %2163 = vmatprep.subr.mxu0 0.0
      %2164 = vmatpush2.msra.mxu0 0.0
      %2165 = vmatprep.subr.mxu0 0.0
      %2166 = vmatpush2.msra.mxu0 0.0
      %2167 = vmatprep.subr.mxu0 0.0
      %2168 = vmatpush2.msra.mxu0 0.0
      %2169 = vmatprep.subr.mxu0 0.0
      %2170 = vmatpush2.msra.mxu0 0.0
      %2171 = vmatprep.subr.mxu0 0.0
      %2172 = vmatpush2.msra.mxu0 0.0
      %2173 = vmatprep.subr.mxu0 0.0
      %2174 = vmatpush2.msra.mxu0 0.0
      %2175 = vmatprep.subr.mxu0 0.0
      %2176 = vmatpush2.msra.mxu0 0.0
      %2177 = vmatprep.mubr.f32.mxu0 0.0
      %2178 = vmatmul.mubr.f32.gmra.mxu0 %v2098
      %v2179 = vpop.f32.mrf.mxu0
      %v2180 = vadd.f32 0.0, %v2179
      %v2181 = vpop.f32.mrf.mxu0
      %2182 = vmatprep.mubr.f32.mxu0 0.0
      %2183 = vmatmul.mubr.f32.gmra.mxu0 %v2100
      %v2184 = vpop.f32.mrf.mxu0
      %v2185 = vadd.f32 0.0, %v2184
      %v2186 = vpop.f32.mrf.mxu0
      %2187 = vmatprep.mubr.f32.mxu0 0.0
      %2188 = vmatmul.mubr.f32.gmra.mxu0 %v2102
      %v2189 = vpop.f32.mrf.mxu0
      %v2190 = vadd.f32 0.0, %v2189
      %v2191 = vpop.f32.mrf.mxu0
      %2192 = vmatprep.mubr.f32.mxu0 0.0
      %2193 = vmatmul.mubr.f32.gmra.mxu0 %v2104
      %v2194 = vpop.f32.mrf.mxu0
      %v2195 = vadd.f32 0.0, %v2194
      %v2196 = vpop.f32.mrf.mxu0
      %2197 = vmatprep.mubr.f32.mxu0 0.0
      %2198 = vmatmul.mubr.f32.gmra.mxu0 %v2106
      %v2199 = vpop.f32.mrf.mxu0
      %v2200 = vadd.f32 0.0, %v2199
      %v2201 = vpop.f32.mrf.mxu0
      %2202 = vmatprep.mubr.f32.mxu0 0.0
      %2203 = vmatmul.mubr.f32.gmra.mxu0 %v2108
      %v2204 = vpop.f32.mrf.mxu0
      %v2205 = vadd.f32 0.0, %v2204
      %v2206 = vpop.f32.mrf.mxu0
      %2207 = vmatprep.mubr.f32.mxu0 0.0
      %2208 = vmatmul.mubr.f32.gmra.mxu0 %v2111
      %v2209 = vpop.f32.mrf.mxu0
      %v2210 = vadd.f32 0.0, %v2209
      %v2211 = vpop.f32.mrf.mxu0
      %2212 = vdwg.mxu0
      %v2213 = vadd.f32 %v2086, %v2180
      %v2214 = vadd.f32 %v2087, %v2185
      %v2215 = vadd.f32 %v2088, %v2190
      %v2216 = vadd.f32 %v2089, %v2195
      %v2217 = vadd.f32 %v2090, %v2200
      %v2218 = vadd.f32 %v2091, %v2205
      %v2219 = vadd.f32 %v2092, %v2210
      %v2220 = vld [vmem:[%s4] sm:$0x1]
      %v2222 = vlaneseq
      %v2223 = vshrl.u32 %v2222, 7
      %v2224 = vsub.s32 0, %v2223
      %v2225 = vrot.slane %v2220, %v2224
      %v2227 = vadd.f32 %v2213, %v2225
      %v2228 = vadd.f32 %v2214, %v2225
      %v2229 = vadd.f32 %v2215, %v2225
      %v2230 = vadd.f32 %v2216, %v2225
      %v2231 = vadd.f32 %v2217, %v2225
      %v2232 = vadd.f32 %v2218, %v2225
      %v2233 = vadd.f32 %v2219, %v2225
      %v2234 = vmax.f32 %v2227, 0.0
      %v2235 = vmax.f32 %v2228, 0.0
      %v2236 = vmax.f32 %v2229, 0.0
      %v2237 = vmax.f32 %v2230, 0.0
      %v2238 = vmax.f32 %v2231, 0.0
      %v2239 = vmax.f32 %v2232, 0.0
      %v2240 = vmax.f32 %v2233, 0.0
      %vm2241 = vcmask 523264
      %2242 = vst.msk [vmem:[%s224] sm:$0xff] %vm2241, %v2234
      %2243 = vst.msk [vmem:[%s224 + $0x8] sm:$0xff] %vm2241, %v2235
      %2244 = vst.msk [vmem:[%s224 + $0x10] sm:$0xff] %vm2241, %v2236
      %2245 = vst.msk [vmem:[%s224 + $0x18] sm:$0xff] %vm2241, %v2237
      %2246 = vst.msk [vmem:[%s224 + $0x20] sm:$0xff] %vm2241, %v2238
      %2247 = vst.msk [vmem:[%s224 + $0x28] sm:$0xff] %vm2241, %v2239
      %vm2248 = vcmask 516096
      %2249 = vst.msk [vmem:[%s224 + $0x30] sm:$0x1] %vm2248, %v2240
      %p2250 = scmp.lt.s32.totalorder %s16, 1
      %s2251 = scalar_select %p2250, %s16, 1
      %s2252 = smul.addr %s2251, 7
      %s2253 = smul.addr %s2252, 8
      %s2254 = scalar_lea.vmem %s5, %s2253
      // Predicated region
      $region41: #{vae_forward.3} parent=39 // pred_check
        %p2255 = pneg %p144
      $region42: #{vae_forward.3} parent=39 // pred_check_branch
        %2257 = sbr.rel (%p2255) target = $region44
      $region43: #{vae_forward.3} parent=39 // pred_region
        _
      $region44: #{vae_forward.3} parent=39 // pred_fallthru
        _
    $region40: #{vae_forward.3} parent=5 // pred_fallthru
      _
    %p2258 = scmp.le.s32.totalorder 2, %s11
    // Predicated region
    $region45: #{vae_forward.3} parent=5 // pred_check
      %p2259 = pneg %p2258
    $region46: #{vae_forward.3} parent=5 // pred_check_branch
      %2261 = sbr.rel (%p2259) target = $region48
    $region47: #{vae_forward.3} parent=5 // pred_region
      %s2262 = ssub.s32 %s11, 2
      // Predicated region
      $region49: #{vae_forward.3} parent=47 // pred_check
        %p2263 = pneg %p150
      $region50: #{vae_forward.3} parent=47 // pred_check_branch
        %2265 = sbr.rel (%p2263) target = $region52
      $region51: #{vae_forward.3} parent=47 // pred_region
        %p2266 = scmp.lt.s32.totalorder %s17, 1
        %s2267 = scalar_select %p2266, %s17, 1
        %s2268 = smul.addr %s2267, 7
        %s2269 = smul.addr %s2268, 8
        %s2270 = scalar_lea.vmem %s5, %s2269
      $region52: #{vae_forward.3} parent=47 // pred_fallthru
        _
    $region48: #{vae_forward.3} parent=5 // pred_fallthru
      _
  $region6: #{vae_forward.3} parent=0 // loop_footer
    %s15 = sadd.s32 1, %s11
  $region7: #{vae_forward.3} parent=0 // loop_footer_branch
    %10 = sbr.rel target = $region3
  $region8: #{vae_forward.3} parent=0 // loop_exit
    _

// kernel: vae_forward.4
$region0: #{vae_forward.4}
  #allocation0 [shape = 'u32[]', space=smem, size = 0x4, offset = 0x4, fixed_abs, tag = 'smem constant byte address 0x4 - core index']
  #allocation1 [shape = 'u32[144,128]{1,0:T(1,128)}', space=vmem, size = 0x12000, scoped, tag = 'internal scratch']
  %s0 = inlined_call_operand.vmem [shape: f32[8,3136], index: 0, kind: input, shape index: {}]
  %s1 = inlined_call_operand.vmem [shape: f32[8,20], index: 1, kind: input, shape index: {}]
  %s2 = inlined_call_operand.vmem [shape: f32[3136,40], index: 2, kind: input, shape index: {}]
  %s3 = inlined_call_operand.vmem [shape: f32[1,40], index: 3, kind: input, shape index: {}]
  %s4 = inlined_call_operand.vmem [shape: f32[20,3200], index: 4, kind: input, shape index: {}]
  %s5 = inlined_call_operand.vmem [shape: f32[1,3200], index: 5, kind: input, shape index: {}]
  %s6 = inlined_call_operand.vmem [shape: f32[8,3200], index: 6, kind: output, shape index: {0}]
  %s7 = inlined_call_operand.vmem [shape: f32[8,20], index: 7, kind: output, shape index: {1}]
  %s8 = inlined_call_operand.vmem [shape: f32[8,20], index: 8, kind: output, shape index: {2}]
  %9 = xla_tuple %s6, %s7, %s8
  %s10 = sld [smem:[#allocation0]]
  $region50: #{vae_forward.4} parent=0
    _
  %s12 = ssub.s32 1, %s10
  %s13 = scalar_select 0, %s12, %s10
  // Predicated region
  $region2: #{vae_forward.4} parent=0 // pred_check
    _
  $region3: #{vae_forward.4} parent=0 // pred_check_branch
    %15 = sbr.rel (0) target = $region5
  $region4: #{vae_forward.4} parent=0 // pred_region
    _
  $region5: #{vae_forward.4} parent=0 // pred_fallthru
    _
  // Predicated region
  $region6: #{vae_forward.4} parent=0 // pred_check
    _
  $region7: #{vae_forward.4} parent=0 // pred_check_branch
    %17 = sbr.rel (0) target = $region9
  $region8: #{vae_forward.4} parent=0 // pred_region
    _
  $region9: #{vae_forward.4} parent=0 // pred_fallthru
    _
  // Predicated region
  $region10: #{vae_forward.4} parent=0 // pred_check
    _
  $region11: #{vae_forward.4} parent=0 // pred_check_branch
    %19 = sbr.rel (0) target = $region13
  $region12: #{vae_forward.4} parent=0 // pred_region
    _
  $region13: #{vae_forward.4} parent=0 // pred_fallthru
    _
  // Predicated region
  $region14: #{vae_forward.4} parent=0 // pred_check
    _
  $region15: #{vae_forward.4} parent=0 // pred_check_branch
    %21 = sbr.rel (0) target = $region17
  $region16: #{vae_forward.4} parent=0 // pred_region
    _
  $region17: #{vae_forward.4} parent=0 // pred_fallthru
    _
  // Predicated region
  $region18: #{vae_forward.4} parent=0 // pred_check
    _
  $region19: #{vae_forward.4} parent=0 // pred_check_branch
    %23 = sbr.rel (0) target = $region21
  $region20: #{vae_forward.4} parent=0 // pred_region
    _
  $region21: #{vae_forward.4} parent=0 // pred_fallthru
    _
  // Predicated region
  $region22: #{vae_forward.4} parent=0 // pred_check
    _
  $region23: #{vae_forward.4} parent=0 // pred_check_branch
    %25 = sbr.rel (0) target = $region25
  $region24: #{vae_forward.4} parent=0 // pred_region
    _
  $region25: #{vae_forward.4} parent=0 // pred_fallthru
    _
  %v26 = vld [vmem:[%s0] sm:$0xff]
  %v27 = vld [vmem:[%s0 + $0x8] sm:$0xff]
  %v28 = vld [vmem:[%s0 + $0x10] sm:$0xff]
  %v29 = vld [vmem:[%s0 + $0x18] sm:$0xff]
  %v30 = vld [vmem:[%s0 + $0x20] sm:$0xff]
  %v31 = vld [vmem:[%s0 + $0x28] sm:$0xff]
  %v32 = vld [vmem:[%s0 + $0x30] sm:$0xff]
  %v33 = vld [vmem:[%s0 + $0x38] sm:$0xff]
  %v34 = vld [vmem:[%s0 + $0x40] sm:$0xff]
  %v35 = vld [vmem:[%s0 + $0x48] sm:$0xff]
  %v36 = vld [vmem:[%s0 + $0x50] sm:$0xff]
  %v37 = vld [vmem:[%s0 + $0x58] sm:$0xff]
  %v38 = vld [vmem:[%s0 + $0x60] sm:$0xff]
  %v39 = vld [vmem:[%s0 + $0x68] sm:$0xff]
  %v40 = vld [vmem:[%s0 + $0x70] sm:$0xff]
  %v41 = vld [vmem:[%s0 + $0x78] sm:$0xff]
  %v42 = vld [vmem:[%s0 + $0x80] sm:$0xff]
  %v43 = vld [vmem:[%s0 + $0x88] sm:$0xff]
  %v44 = vld [vmem:[%s0 + $0x90] sm:$0xff]
  %v45 = vld [vmem:[%s0 + $0x98] sm:$0xff]
  %v46 = vld [vmem:[%s0 + $0xa0] sm:$0xff]
  %v47 = vld [vmem:[%s0 + $0xa8] sm:$0xff]
  %v48 = vld [vmem:[%s0 + $0xb0] sm:$0xff]
  %v49 = vld [vmem:[%s0 + $0xb8] sm:$0xff]
  %v50 = vld [vmem:[%s0 + $0xc0] sm:$0xff]
  %v51 = vld [vmem:[%s2] sm:$0xff]
  %v52 = vld [vmem:[%s2 + $0x8] sm:$0xff]
  %v53 = vld [vmem:[%s2 + $0x10] sm:$0xff]
  %v54 = vld [vmem:[%s2 + $0x18] sm:$0xff]
  %v55 = vld [vmem:[%s2 + $0x20] sm:$0xff]
  %v56 = vld [vmem:[%s2 + $0x28] sm:$0xff]
  %v57 = vld [vmem:[%s2 + $0x30] sm:$0xff]
  %v58 = vld [vmem:[%s2 + $0x38] sm:$0xff]
  %v59 = vld [vmem:[%s2 + $0x40] sm:$0xff]
  %v60 = vld [vmem:[%s2 + $0x48] sm:$0xff]
  %v61 = vld [vmem:[%s2 + $0x50] sm:$0xff]
  %v62 = vld [vmem:[%s2 + $0x58] sm:$0xff]
  %v63 = vld [vmem:[%s2 + $0x60] sm:$0xff]
  %v64 = vld [vmem:[%s2 + $0x68] sm:$0xff]
  %v65 = vld [vmem:[%s2 + $0x70] sm:$0xff]
  %v66 = vld [vmem:[%s2 + $0x78] sm:$0xff]
  %v67 = vld [vmem:[%s2 + $0x80] sm:$0xff]
  %v68 = vld [vmem:[%s2 + $0x88] sm:$0xff]
  %v69 = vld [vmem:[%s2 + $0x90] sm:$0xff]
  %v70 = vld [vmem:[%s2 + $0x98] sm:$0xff]
  %v71 = vld [vmem:[%s2 + $0xa0] sm:$0xff]
  %v72 = vld [vmem:[%s2 + $0xa8] sm:$0xff]
  %v73 = vld [vmem:[%s2 + $0xb0] sm:$0xff]
  %v74 = vld [vmem:[%s2 + $0xb8] sm:$0xff]
  %v75 = vld [vmem:[%s2 + $0xc0] sm:$0xff]
  %v76 = vld [vmem:[%s2 + $0xc8] sm:$0xff]
  %v77 = vld [vmem:[%s2 + $0xd0] sm:$0xff]
  %v78 = vld [vmem:[%s2 + $0xd8] sm:$0xff]
  %v79 = vld [vmem:[%s2 + $0xe0] sm:$0xff]
  %v80 = vld [vmem:[%s2 + $0xe8] sm:$0xff]
  %v81 = vld [vmem:[%s2 + $0xf0] sm:$0xff]
  %v82 = vld [vmem:[%s2 + $0xf8] sm:$0xff]
  %v83 = vld [vmem:[%s2 + $0x100] sm:$0xff]
  %v84 = vld [vmem:[%s2 + $0x108] sm:$0xff]
  %v85 = vld [vmem:[%s2 + $0x110] sm:$0xff]
  %v86 = vld [vmem:[%s2 + $0x118] sm:$0xff]
  %v87 = vld [vmem:[%s2 + $0x120] sm:$0xff]
  %v88 = vld [vmem:[%s2 + $0x128] sm:$0xff]
  %v89 = vld [vmem:[%s2 + $0x130] sm:$0xff]
  %v90 = vld [vmem:[%s2 + $0x138] sm:$0xff]
  %v91 = vld [vmem:[%s2 + $0x140] sm:$0xff]
  %v92 = vld [vmem:[%s2 + $0x148] sm:$0xff]
  %v93 = vld [vmem:[%s2 + $0x150] sm:$0xff]
  %v94 = vld [vmem:[%s2 + $0x158] sm:$0xff]
  %v95 = vld [vmem:[%s2 + $0x160] sm:$0xff]
  %v96 = vld [vmem:[%s2 + $0x168] sm:$0xff]
  %v97 = vld [vmem:[%s2 + $0x170] sm:$0xff]
  %v98 = vld [vmem:[%s2 + $0x178] sm:$0xff]
  %v99 = vld [vmem:[%s2 + $0x180] sm:$0xff]
  %v100 = vld [vmem:[%s2 + $0x188] sm:$0xff]
  %v101 = vld [vmem:[%s2 + $0x190] sm:$0xff]
  %v102 = vld [vmem:[%s2 + $0x198] sm:$0xff]
  %v103 = vld [vmem:[%s2 + $0x1a0] sm:$0xff]
  %v104 = vld [vmem:[%s2 + $0x1a8] sm:$0xff]
  %v105 = vld [vmem:[%s2 + $0x1b0] sm:$0xff]
  %v106 = vld [vmem:[%s2 + $0x1b8] sm:$0xff]
  %v107 = vld [vmem:[%s2 + $0x1c0] sm:$0xff]
  %v108 = vld [vmem:[%s2 + $0x1c8] sm:$0xff]
  %v109 = vld [vmem:[%s2 + $0x1d0] sm:$0xff]
  %v110 = vld [vmem:[%s2 + $0x1d8] sm:$0xff]
  %v111 = vld [vmem:[%s2 + $0x1e0] sm:$0xff]
  %v112 = vld [vmem:[%s2 + $0x1e8] sm:$0xff]
  %v113 = vld [vmem:[%s2 + $0x1f0] sm:$0xff]
  %v114 = vld [vmem:[%s2 + $0x1f8] sm:$0xff]
  %v115 = vld [vmem:[%s2 + $0x200] sm:$0xff]
  %v116 = vld [vmem:[%s2 + $0x208] sm:$0xff]
  %v117 = vld [vmem:[%s2 + $0x210] sm:$0xff]
  %v118 = vld [vmem:[%s2 + $0x218] sm:$0xff]
  %v119 = vld [vmem:[%s2 + $0x220] sm:$0xff]
  %v120 = vld [vmem:[%s2 + $0x228] sm:$0xff]
  %v121 = vld [vmem:[%s2 + $0x230] sm:$0xff]
  %v122 = vld [vmem:[%s2 + $0x238] sm:$0xff]
  %v123 = vld [vmem:[%s2 + $0x240] sm:$0xff]
  %v124 = vld [vmem:[%s2 + $0x248] sm:$0xff]
  %v125 = vld [vmem:[%s2 + $0x250] sm:$0xff]
  %v126 = vld [vmem:[%s2 + $0x258] sm:$0xff]
  %v127 = vld [vmem:[%s2 + $0x260] sm:$0xff]
  %v128 = vld [vmem:[%s2 + $0x268] sm:$0xff]
  %v129 = vld [vmem:[%s2 + $0x270] sm:$0xff]
  %v130 = vld [vmem:[%s2 + $0x278] sm:$0xff]
  %v131 = vld [vmem:[%s2 + $0x280] sm:$0xff]
  %v132 = vld [vmem:[%s2 + $0x288] sm:$0xff]
  %v133 = vld [vmem:[%s2 + $0x290] sm:$0xff]
  %v134 = vld [vmem:[%s2 + $0x298] sm:$0xff]
  %v135 = vld [vmem:[%s2 + $0x2a0] sm:$0xff]
  %v136 = vld [vmem:[%s2 + $0x2a8] sm:$0xff]
  %v137 = vld [vmem:[%s2 + $0x2b0] sm:$0xff]
  %v138 = vld [vmem:[%s2 + $0x2b8] sm:$0xff]
  %v139 = vld [vmem:[%s2 + $0x2c0] sm:$0xff]
  %v140 = vld [vmem:[%s2 + $0x2c8] sm:$0xff]
  %v141 = vld [vmem:[%s2 + $0x2d0] sm:$0xff]
  %v142 = vld [vmem:[%s2 + $0x2d8] sm:$0xff]
  %v143 = vld [vmem:[%s2 + $0x2e0] sm:$0xff]
  %v144 = vld [vmem:[%s2 + $0x2e8] sm:$0xff]
  %v145 = vld [vmem:[%s2 + $0x2f0] sm:$0xff]
  %v146 = vld [vmem:[%s2 + $0x2f8] sm:$0xff]
  %v147 = vld [vmem:[%s2 + $0x300] sm:$0xff]
  %v148 = vld [vmem:[%s2 + $0x308] sm:$0xff]
  %v149 = vld [vmem:[%s2 + $0x310] sm:$0xff]
  %v150 = vld [vmem:[%s2 + $0x318] sm:$0xff]
  %v151 = vld [vmem:[%s2 + $0x320] sm:$0xff]
  %v152 = vld [vmem:[%s2 + $0x328] sm:$0xff]
  %v153 = vld [vmem:[%s2 + $0x330] sm:$0xff]
  %v154 = vld [vmem:[%s2 + $0x338] sm:$0xff]
  %v155 = vld [vmem:[%s2 + $0x340] sm:$0xff]
  %v156 = vld [vmem:[%s2 + $0x348] sm:$0xff]
  %v157 = vld [vmem:[%s2 + $0x350] sm:$0xff]
  %v158 = vld [vmem:[%s2 + $0x358] sm:$0xff]
  %v159 = vld [vmem:[%s2 + $0x360] sm:$0xff]
  %v160 = vld [vmem:[%s2 + $0x368] sm:$0xff]
  %v161 = vld [vmem:[%s2 + $0x370] sm:$0xff]
  %v162 = vld [vmem:[%s2 + $0x378] sm:$0xff]
  %v163 = vld [vmem:[%s2 + $0x380] sm:$0xff]
  %v164 = vld [vmem:[%s2 + $0x388] sm:$0xff]
  %v165 = vld [vmem:[%s2 + $0x390] sm:$0xff]
  %v166 = vld [vmem:[%s2 + $0x398] sm:$0xff]
  %v167 = vld [vmem:[%s2 + $0x3a0] sm:$0xff]
  %v168 = vld [vmem:[%s2 + $0x3a8] sm:$0xff]
  %v169 = vld [vmem:[%s2 + $0x3b0] sm:$0xff]
  %v170 = vld [vmem:[%s2 + $0x3b8] sm:$0xff]
  %v171 = vld [vmem:[%s2 + $0x3c0] sm:$0xff]
  %v172 = vld [vmem:[%s2 + $0x3c8] sm:$0xff]
  %v173 = vld [vmem:[%s2 + $0x3d0] sm:$0xff]
  %v174 = vld [vmem:[%s2 + $0x3d8] sm:$0xff]
  %v175 = vld [vmem:[%s2 + $0x3e0] sm:$0xff]
  %v176 = vld [vmem:[%s2 + $0x3e8] sm:$0xff]
  %v177 = vld [vmem:[%s2 + $0x3f0] sm:$0xff]
  %v178 = vld [vmem:[%s2 + $0x3f8] sm:$0xff]
  %v179 = vld [vmem:[%s2 + $0x400] sm:$0xff]
  %v180 = vld [vmem:[%s2 + $0x408] sm:$0xff]
  %v181 = vld [vmem:[%s2 + $0x410] sm:$0xff]
  %v182 = vld [vmem:[%s2 + $0x418] sm:$0xff]
  %v183 = vld [vmem:[%s2 + $0x420] sm:$0xff]
  %v184 = vld [vmem:[%s2 + $0x428] sm:$0xff]
  %v185 = vld [vmem:[%s2 + $0x430] sm:$0xff]
  %v186 = vld [vmem:[%s2 + $0x438] sm:$0xff]
  %v187 = vld [vmem:[%s2 + $0x440] sm:$0xff]
  %v188 = vld [vmem:[%s2 + $0x448] sm:$0xff]
  %v189 = vld [vmem:[%s2 + $0x450] sm:$0xff]
  %v190 = vld [vmem:[%s2 + $0x458] sm:$0xff]
  %v191 = vld [vmem:[%s2 + $0x460] sm:$0xff]
  %v192 = vld [vmem:[%s2 + $0x468] sm:$0xff]
  %v193 = vld [vmem:[%s2 + $0x470] sm:$0xff]
  %v194 = vld [vmem:[%s2 + $0x478] sm:$0xff]
  %v195 = vld [vmem:[%s2 + $0x480] sm:$0xff]
  %v196 = vld [vmem:[%s2 + $0x488] sm:$0xff]
  %v197 = vld [vmem:[%s2 + $0x490] sm:$0xff]
  %v198 = vld [vmem:[%s2 + $0x498] sm:$0xff]
  %v199 = vld [vmem:[%s2 + $0x4a0] sm:$0xff]
  %v200 = vld [vmem:[%s2 + $0x4a8] sm:$0xff]
  %v201 = vld [vmem:[%s2 + $0x4b0] sm:$0xff]
  %v202 = vld [vmem:[%s2 + $0x4b8] sm:$0xff]
  %v203 = vld [vmem:[%s2 + $0x4c0] sm:$0xff]
  %v204 = vld [vmem:[%s2 + $0x4c8] sm:$0xff]
  %v205 = vld [vmem:[%s2 + $0x4d0] sm:$0xff]
  %v206 = vld [vmem:[%s2 + $0x4d8] sm:$0xff]
  %v207 = vld [vmem:[%s2 + $0x4e0] sm:$0xff]
  %v208 = vld [vmem:[%s2 + $0x4e8] sm:$0xff]
  %v209 = vld [vmem:[%s2 + $0x4f0] sm:$0xff]
  %v210 = vld [vmem:[%s2 + $0x4f8] sm:$0xff]
  %v211 = vld [vmem:[%s2 + $0x500] sm:$0xff]
  %v212 = vld [vmem:[%s2 + $0x508] sm:$0xff]
  %v213 = vld [vmem:[%s2 + $0x510] sm:$0xff]
  %v214 = vld [vmem:[%s2 + $0x518] sm:$0xff]
  %v215 = vld [vmem:[%s2 + $0x520] sm:$0xff]
  %v216 = vld [vmem:[%s2 + $0x528] sm:$0xff]
  %v217 = vld [vmem:[%s2 + $0x530] sm:$0xff]
  %v218 = vld [vmem:[%s2 + $0x538] sm:$0xff]
  %v219 = vld [vmem:[%s2 + $0x540] sm:$0xff]
  %v220 = vld [vmem:[%s2 + $0x548] sm:$0xff]
  %v221 = vld [vmem:[%s2 + $0x550] sm:$0xff]
  %v222 = vld [vmem:[%s2 + $0x558] sm:$0xff]
  %v223 = vld [vmem:[%s2 + $0x560] sm:$0xff]
  %v224 = vld [vmem:[%s2 + $0x568] sm:$0xff]
  %v225 = vld [vmem:[%s2 + $0x570] sm:$0xff]
  %v226 = vld [vmem:[%s2 + $0x578] sm:$0xff]
  %v227 = vld [vmem:[%s2 + $0x580] sm:$0xff]
  %v228 = vld [vmem:[%s2 + $0x588] sm:$0xff]
  %v229 = vld [vmem:[%s2 + $0x590] sm:$0xff]
  %v230 = vld [vmem:[%s2 + $0x598] sm:$0xff]
  %v231 = vld [vmem:[%s2 + $0x5a0] sm:$0xff]
  %v232 = vld [vmem:[%s2 + $0x5a8] sm:$0xff]
  %v233 = vld [vmem:[%s2 + $0x5b0] sm:$0xff]
  %v234 = vld [vmem:[%s2 + $0x5b8] sm:$0xff]
  %v235 = vld [vmem:[%s2 + $0x5c0] sm:$0xff]
  %v236 = vld [vmem:[%s2 + $0x5c8] sm:$0xff]
  %v237 = vld [vmem:[%s2 + $0x5d0] sm:$0xff]
  %v238 = vld [vmem:[%s2 + $0x5d8] sm:$0xff]
  %v239 = vld [vmem:[%s2 + $0x5e0] sm:$0xff]
  %v240 = vld [vmem:[%s2 + $0x5e8] sm:$0xff]
  %v241 = vld [vmem:[%s2 + $0x5f0] sm:$0xff]
  %v242 = vld [vmem:[%s2 + $0x5f8] sm:$0xff]
  %v243 = vld [vmem:[%s2 + $0x600] sm:$0xff]
  %v244 = vld [vmem:[%s2 + $0x608] sm:$0xff]
  %v245 = vld [vmem:[%s2 + $0x610] sm:$0xff]
  %v246 = vld [vmem:[%s2 + $0x618] sm:$0xff]
  %v247 = vld [vmem:[%s2 + $0x620] sm:$0xff]
  %v248 = vld [vmem:[%s2 + $0x628] sm:$0xff]
  %v249 = vld [vmem:[%s2 + $0x630] sm:$0xff]
  %v250 = vld [vmem:[%s2 + $0x638] sm:$0xff]
  %v251 = vld [vmem:[%s2 + $0x640] sm:$0xff]
  %v252 = vld [vmem:[%s2 + $0x648] sm:$0xff]
  %v253 = vld [vmem:[%s2 + $0x650] sm:$0xff]
  %v254 = vld [vmem:[%s2 + $0x658] sm:$0xff]
  %v255 = vld [vmem:[%s2 + $0x660] sm:$0xff]
  %v256 = vld [vmem:[%s2 + $0x668] sm:$0xff]
  %v257 = vld [vmem:[%s2 + $0x670] sm:$0xff]
  %v258 = vld [vmem:[%s2 + $0x678] sm:$0xff]
  %v259 = vld [vmem:[%s2 + $0x680] sm:$0xff]
  %v260 = vld [vmem:[%s2 + $0x688] sm:$0xff]
  %v261 = vld [vmem:[%s2 + $0x690] sm:$0xff]
  %v262 = vld [vmem:[%s2 + $0x698] sm:$0xff]
  %v263 = vld [vmem:[%s2 + $0x6a0] sm:$0xff]
  %v264 = vld [vmem:[%s2 + $0x6a8] sm:$0xff]
  %v265 = vld [vmem:[%s2 + $0x6b0] sm:$0xff]
  %v266 = vld [vmem:[%s2 + $0x6b8] sm:$0xff]
  %v267 = vld [vmem:[%s2 + $0x6c0] sm:$0xff]
  %v268 = vld [vmem:[%s2 + $0x6c8] sm:$0xff]
  %v269 = vld [vmem:[%s2 + $0x6d0] sm:$0xff]
  %v270 = vld [vmem:[%s2 + $0x6d8] sm:$0xff]
  %v271 = vld [vmem:[%s2 + $0x6e0] sm:$0xff]
  %v272 = vld [vmem:[%s2 + $0x6e8] sm:$0xff]
  %v273 = vld [vmem:[%s2 + $0x6f0] sm:$0xff]
  %v274 = vld [vmem:[%s2 + $0x6f8] sm:$0xff]
  %v275 = vld [vmem:[%s2 + $0x700] sm:$0xff]
  %v276 = vld [vmem:[%s2 + $0x708] sm:$0xff]
  %v277 = vld [vmem:[%s2 + $0x710] sm:$0xff]
  %v278 = vld [vmem:[%s2 + $0x718] sm:$0xff]
  %v279 = vld [vmem:[%s2 + $0x720] sm:$0xff]
  %v280 = vld [vmem:[%s2 + $0x728] sm:$0xff]
  %v281 = vld [vmem:[%s2 + $0x730] sm:$0xff]
  %v282 = vld [vmem:[%s2 + $0x738] sm:$0xff]
  %v283 = vld [vmem:[%s2 + $0x740] sm:$0xff]
  %v284 = vld [vmem:[%s2 + $0x748] sm:$0xff]
  %v285 = vld [vmem:[%s2 + $0x750] sm:$0xff]
  %v286 = vld [vmem:[%s2 + $0x758] sm:$0xff]
  %v287 = vld [vmem:[%s2 + $0x760] sm:$0xff]
  %v288 = vld [vmem:[%s2 + $0x768] sm:$0xff]
  %v289 = vld [vmem:[%s2 + $0x770] sm:$0xff]
  %v290 = vld [vmem:[%s2 + $0x778] sm:$0xff]
  %v291 = vld [vmem:[%s2 + $0x780] sm:$0xff]
  %v292 = vld [vmem:[%s2 + $0x788] sm:$0xff]
  %v293 = vld [vmem:[%s2 + $0x790] sm:$0xff]
  %v294 = vld [vmem:[%s2 + $0x798] sm:$0xff]
  %v295 = vld [vmem:[%s2 + $0x7a0] sm:$0xff]
  %v296 = vld [vmem:[%s2 + $0x7a8] sm:$0xff]
  %v297 = vld [vmem:[%s2 + $0x7b0] sm:$0xff]
  %v298 = vld [vmem:[%s2 + $0x7b8] sm:$0xff]
  %v299 = vld [vmem:[%s2 + $0x7c0] sm:$0xff]
  %v300 = vld [vmem:[%s2 + $0x7c8] sm:$0xff]
  %v301 = vld [vmem:[%s2 + $0x7d0] sm:$0xff]
  %v302 = vld [vmem:[%s2 + $0x7d8] sm:$0xff]
  %v303 = vld [vmem:[%s2 + $0x7e0] sm:$0xff]
  %v304 = vld [vmem:[%s2 + $0x7e8] sm:$0xff]
  %v305 = vld [vmem:[%s2 + $0x7f0] sm:$0xff]
  %v306 = vld [vmem:[%s2 + $0x7f8] sm:$0xff]
  %v307 = vld [vmem:[%s2 + $0x800] sm:$0xff]
  %v308 = vld [vmem:[%s2 + $0x808] sm:$0xff]
  %v309 = vld [vmem:[%s2 + $0x810] sm:$0xff]
  %v310 = vld [vmem:[%s2 + $0x818] sm:$0xff]
  %v311 = vld [vmem:[%s2 + $0x820] sm:$0xff]
  %v312 = vld [vmem:[%s2 + $0x828] sm:$0xff]
  %v313 = vld [vmem:[%s2 + $0x830] sm:$0xff]
  %v314 = vld [vmem:[%s2 + $0x838] sm:$0xff]
  %v315 = vld [vmem:[%s2 + $0x840] sm:$0xff]
  %v316 = vld [vmem:[%s2 + $0x848] sm:$0xff]
  %v317 = vld [vmem:[%s2 + $0x850] sm:$0xff]
  %v318 = vld [vmem:[%s2 + $0x858] sm:$0xff]
  %v319 = vld [vmem:[%s2 + $0x860] sm:$0xff]
  %v320 = vld [vmem:[%s2 + $0x868] sm:$0xff]
  %v321 = vld [vmem:[%s2 + $0x870] sm:$0xff]
  %v322 = vld [vmem:[%s2 + $0x878] sm:$0xff]
  %v323 = vld [vmem:[%s2 + $0x880] sm:$0xff]
  %v324 = vld [vmem:[%s2 + $0x888] sm:$0xff]
  %v325 = vld [vmem:[%s2 + $0x890] sm:$0xff]
  %v326 = vld [vmem:[%s2 + $0x898] sm:$0xff]
  %v327 = vld [vmem:[%s2 + $0x8a0] sm:$0xff]
  %v328 = vld [vmem:[%s2 + $0x8a8] sm:$0xff]
  %v329 = vld [vmem:[%s2 + $0x8b0] sm:$0xff]
  %v330 = vld [vmem:[%s2 + $0x8b8] sm:$0xff]
  %v331 = vld [vmem:[%s2 + $0x8c0] sm:$0xff]
  %v332 = vld [vmem:[%s2 + $0x8c8] sm:$0xff]
  %v333 = vld [vmem:[%s2 + $0x8d0] sm:$0xff]
  %v334 = vld [vmem:[%s2 + $0x8d8] sm:$0xff]
  %v335 = vld [vmem:[%s2 + $0x8e0] sm:$0xff]
  %v336 = vld [vmem:[%s2 + $0x8e8] sm:$0xff]
  %v337 = vld [vmem:[%s2 + $0x8f0] sm:$0xff]
  %v338 = vld [vmem:[%s2 + $0x8f8] sm:$0xff]
  %v339 = vld [vmem:[%s2 + $0x900] sm:$0xff]
  %v340 = vld [vmem:[%s2 + $0x908] sm:$0xff]
  %v341 = vld [vmem:[%s2 + $0x910] sm:$0xff]
  %v342 = vld [vmem:[%s2 + $0x918] sm:$0xff]
  %v343 = vld [vmem:[%s2 + $0x920] sm:$0xff]
  %v344 = vld [vmem:[%s2 + $0x928] sm:$0xff]
  %v345 = vld [vmem:[%s2 + $0x930] sm:$0xff]
  %v346 = vld [vmem:[%s2 + $0x938] sm:$0xff]
  %v347 = vld [vmem:[%s2 + $0x940] sm:$0xff]
  %v348 = vld [vmem:[%s2 + $0x948] sm:$0xff]
  %v349 = vld [vmem:[%s2 + $0x950] sm:$0xff]
  %v350 = vld [vmem:[%s2 + $0x958] sm:$0xff]
  %v351 = vld [vmem:[%s2 + $0x960] sm:$0xff]
  %v352 = vld [vmem:[%s2 + $0x968] sm:$0xff]
  %v353 = vld [vmem:[%s2 + $0x970] sm:$0xff]
  %v354 = vld [vmem:[%s2 + $0x978] sm:$0xff]
  %v355 = vld [vmem:[%s2 + $0x980] sm:$0xff]
  %v356 = vld [vmem:[%s2 + $0x988] sm:$0xff]
  %v357 = vld [vmem:[%s2 + $0x990] sm:$0xff]
  %v358 = vld [vmem:[%s2 + $0x998] sm:$0xff]
  %v359 = vld [vmem:[%s2 + $0x9a0] sm:$0xff]
  %v360 = vld [vmem:[%s2 + $0x9a8] sm:$0xff]
  %v361 = vld [vmem:[%s2 + $0x9b0] sm:$0xff]
  %v362 = vld [vmem:[%s2 + $0x9b8] sm:$0xff]
  %v363 = vld [vmem:[%s2 + $0x9c0] sm:$0xff]
  %v364 = vld [vmem:[%s2 + $0x9c8] sm:$0xff]
  %v365 = vld [vmem:[%s2 + $0x9d0] sm:$0xff]
  %v366 = vld [vmem:[%s2 + $0x9d8] sm:$0xff]
  %v367 = vld [vmem:[%s2 + $0x9e0] sm:$0xff]
  %v368 = vld [vmem:[%s2 + $0x9e8] sm:$0xff]
  %v369 = vld [vmem:[%s2 + $0x9f0] sm:$0xff]
  %v370 = vld [vmem:[%s2 + $0x9f8] sm:$0xff]
  %v371 = vld [vmem:[%s2 + $0xa00] sm:$0xff]
  %v372 = vld [vmem:[%s2 + $0xa08] sm:$0xff]
  %v373 = vld [vmem:[%s2 + $0xa10] sm:$0xff]
  %v374 = vld [vmem:[%s2 + $0xa18] sm:$0xff]
  %v375 = vld [vmem:[%s2 + $0xa20] sm:$0xff]
  %v376 = vld [vmem:[%s2 + $0xa28] sm:$0xff]
  %v377 = vld [vmem:[%s2 + $0xa30] sm:$0xff]
  %v378 = vld [vmem:[%s2 + $0xa38] sm:$0xff]
  %v379 = vld [vmem:[%s2 + $0xa40] sm:$0xff]
  %v380 = vld [vmem:[%s2 + $0xa48] sm:$0xff]
  %v381 = vld [vmem:[%s2 + $0xa50] sm:$0xff]
  %v382 = vld [vmem:[%s2 + $0xa58] sm:$0xff]
  %v383 = vld [vmem:[%s2 + $0xa60] sm:$0xff]
  %v384 = vld [vmem:[%s2 + $0xa68] sm:$0xff]
  %v385 = vld [vmem:[%s2 + $0xa70] sm:$0xff]
  %v386 = vld [vmem:[%s2 + $0xa78] sm:$0xff]
  %v387 = vld [vmem:[%s2 + $0xa80] sm:$0xff]
  %v388 = vld [vmem:[%s2 + $0xa88] sm:$0xff]
  %v389 = vld [vmem:[%s2 + $0xa90] sm:$0xff]
  %v390 = vld [vmem:[%s2 + $0xa98] sm:$0xff]
  %v391 = vld [vmem:[%s2 + $0xaa0] sm:$0xff]
  %v392 = vld [vmem:[%s2 + $0xaa8] sm:$0xff]
  %v393 = vld [vmem:[%s2 + $0xab0] sm:$0xff]
  %v394 = vld [vmem:[%s2 + $0xab8] sm:$0xff]
  %v395 = vld [vmem:[%s2 + $0xac0] sm:$0xff]
  %v396 = vld [vmem:[%s2 + $0xac8] sm:$0xff]
  %v397 = vld [vmem:[%s2 + $0xad0] sm:$0xff]
  %v398 = vld [vmem:[%s2 + $0xad8] sm:$0xff]
  %v399 = vld [vmem:[%s2 + $0xae0] sm:$0xff]
  %v400 = vld [vmem:[%s2 + $0xae8] sm:$0xff]
  %v401 = vld [vmem:[%s2 + $0xaf0] sm:$0xff]
  %v402 = vld [vmem:[%s2 + $0xaf8] sm:$0xff]
  %v403 = vld [vmem:[%s2 + $0xb00] sm:$0xff]
  %v404 = vld [vmem:[%s2 + $0xb08] sm:$0xff]
  %v405 = vld [vmem:[%s2 + $0xb10] sm:$0xff]
  %v406 = vld [vmem:[%s2 + $0xb18] sm:$0xff]
  %v407 = vld [vmem:[%s2 + $0xb20] sm:$0xff]
  %v408 = vld [vmem:[%s2 + $0xb28] sm:$0xff]
  %v409 = vld [vmem:[%s2 + $0xb30] sm:$0xff]
  %v410 = vld [vmem:[%s2 + $0xb38] sm:$0xff]
  %v411 = vld [vmem:[%s2 + $0xb40] sm:$0xff]
  %v412 = vld [vmem:[%s2 + $0xb48] sm:$0xff]
  %v413 = vld [vmem:[%s2 + $0xb50] sm:$0xff]
  %v414 = vld [vmem:[%s2 + $0xb58] sm:$0xff]
  %v415 = vld [vmem:[%s2 + $0xb60] sm:$0xff]
  %v416 = vld [vmem:[%s2 + $0xb68] sm:$0xff]
  %v417 = vld [vmem:[%s2 + $0xb70] sm:$0xff]
  %v418 = vld [vmem:[%s2 + $0xb78] sm:$0xff]
  %v419 = vld [vmem:[%s2 + $0xb80] sm:$0xff]
  %v420 = vld [vmem:[%s2 + $0xb88] sm:$0xff]
  %v421 = vld [vmem:[%s2 + $0xb90] sm:$0xff]
  %v422 = vld [vmem:[%s2 + $0xb98] sm:$0xff]
  %v423 = vld [vmem:[%s2 + $0xba0] sm:$0xff]
  %v424 = vld [vmem:[%s2 + $0xba8] sm:$0xff]
  %v425 = vld [vmem:[%s2 + $0xbb0] sm:$0xff]
  %v426 = vld [vmem:[%s2 + $0xbb8] sm:$0xff]
  %v427 = vld [vmem:[%s2 + $0xbc0] sm:$0xff]
  %v428 = vld [vmem:[%s2 + $0xbc8] sm:$0xff]
  %v429 = vld [vmem:[%s2 + $0xbd0] sm:$0xff]
  %v430 = vld [vmem:[%s2 + $0xbd8] sm:$0xff]
  %v431 = vld [vmem:[%s2 + $0xbe0] sm:$0xff]
  %v432 = vld [vmem:[%s2 + $0xbe8] sm:$0xff]
  %v433 = vld [vmem:[%s2 + $0xbf0] sm:$0xff]
  %v434 = vld [vmem:[%s2 + $0xbf8] sm:$0xff]
  %v435 = vld [vmem:[%s2 + $0xc00] sm:$0xff]
  %v436 = vld [vmem:[%s2 + $0xc08] sm:$0xff]
  %v437 = vld [vmem:[%s2 + $0xc10] sm:$0xff]
  %v438 = vld [vmem:[%s2 + $0xc18] sm:$0xff]
  %v439 = vld [vmem:[%s2 + $0xc20] sm:$0xff]
  %v440 = vld [vmem:[%s2 + $0xc28] sm:$0xff]
  %v441 = vld [vmem:[%s2 + $0xc30] sm:$0xff]
  %v442 = vld [vmem:[%s2 + $0xc38] sm:$0xff]
  %v443 = vld [vmem:[%s3] sm:$0x1]
  %v445 = vlaneseq
  %v446 = vshrl.u32 %v445, 7
  %v447 = vsub.s32 0, %v446
  %v448 = vrot.slane %v443, %v447
  %vm450 = vcmask 523264
  %v452 = vsel %vm450, %v50, 0
  %454 = vmatprep.subr.mxu0 0.0
  %455 = vmatpush1.msra.mxu0 %v66
  %456 = vmatprep.subr.mxu0 0.0
  %457 = vmatpush1.msra.mxu0 %v65
  %458 = vmatprep.subr.mxu0 0.0
  %459 = vmatpush1.msra.mxu0 %v64
  %460 = vmatprep.subr.mxu0 0.0
  %461 = vmatpush1.msra.mxu0 %v63
  %462 = vmatprep.subr.mxu0 0.0
  %463 = vmatpush1.msra.mxu0 %v62
  %464 = vmatprep.subr.mxu0 0.0
  %465 = vmatpush1.msra.mxu0 %v61
  %466 = vmatprep.subr.mxu0 0.0
  %467 = vmatpush1.msra.mxu0 %v60
  %468 = vmatprep.subr.mxu0 0.0
  %469 = vmatpush1.msra.mxu0 %v59
  %470 = vmatprep.subr.mxu0 0.0
  %471 = vmatpush1.msra.mxu0 %v58
  %472 = vmatprep.subr.mxu0 0.0
  %473 = vmatpush1.msra.mxu0 %v57
  %474 = vmatprep.subr.mxu0 0.0
  %475 = vmatpush1.msra.mxu0 %v56
  %476 = vmatprep.subr.mxu0 0.0
  %477 = vmatpush1.msra.mxu0 %v55
  %478 = vmatprep.subr.mxu0 0.0
  %479 = vmatpush1.msra.mxu0 %v54
  %480 = vmatprep.subr.mxu0 0.0
  %481 = vmatpush1.msra.mxu0 %v53
  %482 = vmatprep.subr.mxu0 0.0
  %483 = vmatpush1.msra.mxu0 %v52
  %484 = vmatprep.subr.mxu0 0.0
  %485 = vmatpush1.msra.mxu0 %v51
  %486 = vmatprep.subr.mxu0 0.0
  %487 = vmatpush2.msra.mxu0 %v82
  %488 = vmatprep.subr.mxu0 0.0
  %489 = vmatpush2.msra.mxu0 %v81
  %490 = vmatprep.subr.mxu0 0.0
  %491 = vmatpush2.msra.mxu0 %v80
  %492 = vmatprep.subr.mxu0 0.0
  %493 = vmatpush2.msra.mxu0 %v79
  %494 = vmatprep.subr.mxu0 0.0
  %495 = vmatpush2.msra.mxu0 %v78
  %496 = vmatprep.subr.mxu0 0.0
  %497 = vmatpush2.msra.mxu0 %v77
  %498 = vmatprep.subr.mxu0 0.0
  %499 = vmatpush2.msra.mxu0 %v76
  %500 = vmatprep.subr.mxu0 0.0
  %501 = vmatpush2.msra.mxu0 %v75
  %502 = vmatprep.subr.mxu0 0.0
  %503 = vmatpush2.msra.mxu0 %v74
  %504 = vmatprep.subr.mxu0 0.0
  %505 = vmatpush2.msra.mxu0 %v73
  %506 = vmatprep.subr.mxu0 0.0
  %507 = vmatpush2.msra.mxu0 %v72
  %508 = vmatprep.subr.mxu0 0.0
  %509 = vmatpush2.msra.mxu0 %v71
  %510 = vmatprep.subr.mxu0 0.0
  %511 = vmatpush2.msra.mxu0 %v70
  %512 = vmatprep.subr.mxu0 0.0
  %513 = vmatpush2.msra.mxu0 %v69
  %514 = vmatprep.subr.mxu0 0.0
  %515 = vmatpush2.msra.mxu0 %v68
  %516 = vmatprep.subr.mxu0 0.0
  %517 = vmatpush2.msra.mxu0 %v67
  %518 = vmatprep.mubr.f32.mxu0 %v27
  %519 = vmatmul.mubr.f32.gmra.mxu0 %v26
  %v520 = vpop.f32.mrf.mxu0
  %v521 = vadd.f32 %v448, %v520
  %v522 = vpop.f32.mrf.mxu0
  %523 = vdwg.mxu0
  %524 = vmatprep.subr.mxu0 0.0
  %525 = vmatpush1.msra.mxu0 %v98
  %526 = vmatprep.subr.mxu0 0.0
  %527 = vmatpush1.msra.mxu0 %v97
  %528 = vmatprep.subr.mxu0 0.0
  %529 = vmatpush1.msra.mxu0 %v96
  %530 = vmatprep.subr.mxu0 0.0
  %531 = vmatpush1.msra.mxu0 %v95
  %532 = vmatprep.subr.mxu0 0.0
  %533 = vmatpush1.msra.mxu0 %v94
  %534 = vmatprep.subr.mxu0 0.0
  %535 = vmatpush1.msra.mxu0 %v93
  %536 = vmatprep.subr.mxu0 0.0
  %537 = vmatpush1.msra.mxu0 %v92
  %538 = vmatprep.subr.mxu0 0.0
  %539 = vmatpush1.msra.mxu0 %v91
  %540 = vmatprep.subr.mxu0 0.0
  %541 = vmatpush1.msra.mxu0 %v90
  %542 = vmatprep.subr.mxu0 0.0
  %543 = vmatpush1.msra.mxu0 %v89
  %544 = vmatprep.subr.mxu0 0.0
  %545 = vmatpush1.msra.mxu0 %v88
  %546 = vmatprep.subr.mxu0 0.0
  %547 = vmatpush1.msra.mxu0 %v87
  %548 = vmatprep.subr.mxu0 0.0
  %549 = vmatpush1.msra.mxu0 %v86
  %550 = vmatprep.subr.mxu0 0.0
  %551 = vmatpush1.msra.mxu0 %v85
  %552 = vmatprep.subr.mxu0 0.0
  %553 = vmatpush1.msra.mxu0 %v84
  %554 = vmatprep.subr.mxu0 0.0
  %555 = vmatpush1.msra.mxu0 %v83
  %556 = vmatprep.subr.mxu0 0.0
  %557 = vmatpush2.msra.mxu0 %v114
  %558 = vmatprep.subr.mxu0 0.0
  %559 = vmatpush2.msra.mxu0 %v113
  %560 = vmatprep.subr.mxu0 0.0
  %561 = vmatpush2.msra.mxu0 %v112
  %562 = vmatprep.subr.mxu0 0.0
  %563 = vmatpush2.msra.mxu0 %v111
  %564 = vmatprep.subr.mxu0 0.0
  %565 = vmatpush2.msra.mxu0 %v110
  %566 = vmatprep.subr.mxu0 0.0
  %567 = vmatpush2.msra.mxu0 %v109
  %568 = vmatprep.subr.mxu0 0.0
  %569 = vmatpush2.msra.mxu0 %v108
  %570 = vmatprep.subr.mxu0 0.0
  %571 = vmatpush2.msra.mxu0 %v107
  %572 = vmatprep.subr.mxu0 0.0
  %573 = vmatpush2.msra.mxu0 %v106
  %574 = vmatprep.subr.mxu0 0.0
  %575 = vmatpush2.msra.mxu0 %v105
  %576 = vmatprep.subr.mxu0 0.0
  %577 = vmatpush2.msra.mxu0 %v104
  %578 = vmatprep.subr.mxu0 0.0
  %579 = vmatpush2.msra.mxu0 %v103
  %580 = vmatprep.subr.mxu0 0.0
  %581 = vmatpush2.msra.mxu0 %v102
  %582 = vmatprep.subr.mxu0 0.0
  %583 = vmatpush2.msra.mxu0 %v101
  %584 = vmatprep.subr.mxu0 0.0
  %585 = vmatpush2.msra.mxu0 %v100
  %586 = vmatprep.subr.mxu0 0.0
  %587 = vmatpush2.msra.mxu0 %v99
  %588 = vmatprep.mubr.f32.mxu0 %v29
  %589 = vmatmul.mubr.f32.gmra.mxu0 %v28
  %v590 = vpop.f32.mrf.mxu0
  %v591 = vadd.f32 %v521, %v590
  %v592 = vpop.f32.mrf.mxu0
  %593 = vdwg.mxu0
  %594 = vmatprep.subr.mxu0 0.0
  %595 = vmatpush1.msra.mxu0 %v130
  %596 = vmatprep.subr.mxu0 0.0
  %597 = vmatpush1.msra.mxu0 %v129
  %598 = vmatprep.subr.mxu0 0.0
  %599 = vmatpush1.msra.mxu0 %v128
  %600 = vmatprep.subr.mxu0 0.0
  %601 = vmatpush1.msra.mxu0 %v127
  %602 = vmatprep.subr.mxu0 0.0
  %603 = vmatpush1.msra.mxu0 %v126
  %604 = vmatprep.subr.mxu0 0.0
  %605 = vmatpush1.msra.mxu0 %v125
  %606 = vmatprep.subr.mxu0 0.0
  %607 = vmatpush1.msra.mxu0 %v124
  %608 = vmatprep.subr.mxu0 0.0
  %609 = vmatpush1.msra.mxu0 %v123
  %610 = vmatprep.subr.mxu0 0.0
  %611 = vmatpush1.msra.mxu0 %v122
  %612 = vmatprep.subr.mxu0 0.0
  %613 = vmatpush1.msra.mxu0 %v121
  %614 = vmatprep.subr.mxu0 0.0
  %615 = vmatpush1.msra.mxu0 %v120
  %616 = vmatprep.subr.mxu0 0.0
  %617 = vmatpush1.msra.mxu0 %v119
  %618 = vmatprep.subr.mxu0 0.0
  %619 = vmatpush1.msra.mxu0 %v118
  %620 = vmatprep.subr.mxu0 0.0
  %621 = vmatpush1.msra.mxu0 %v117
  %622 = vmatprep.subr.mxu0 0.0
  %623 = vmatpush1.msra.mxu0 %v116
  %624 = vmatprep.subr.mxu0 0.0
  %625 = vmatpush1.msra.mxu0 %v115
  %626 = vmatprep.subr.mxu0 0.0
  %627 = vmatpush2.msra.mxu0 %v146
  %628 = vmatprep.subr.mxu0 0.0
  %629 = vmatpush2.msra.mxu0 %v145
  %630 = vmatprep.subr.mxu0 0.0
  %631 = vmatpush2.msra.mxu0 %v144
  %632 = vmatprep.subr.mxu0 0.0
  %633 = vmatpush2.msra.mxu0 %v143
  %634 = vmatprep.subr.mxu0 0.0
  %635 = vmatpush2.msra.mxu0 %v142
  %636 = vmatprep.subr.mxu0 0.0
  %637 = vmatpush2.msra.mxu0 %v141
  %638 = vmatprep.subr.mxu0 0.0
  %639 = vmatpush2.msra.mxu0 %v140
  %640 = vmatprep.subr.mxu0 0.0
  %641 = vmatpush2.msra.mxu0 %v139
  %642 = vmatprep.subr.mxu0 0.0
  %643 = vmatpush2.msra.mxu0 %v138
  %644 = vmatprep.subr.mxu0 0.0
  %645 = vmatpush2.msra.mxu0 %v137
  %646 = vmatprep.subr.mxu0 0.0
  %647 = vmatpush2.msra.mxu0 %v136
  %648 = vmatprep.subr.mxu0 0.0
  %649 = vmatpush2.msra.mxu0 %v135
  %650 = vmatprep.subr.mxu0 0.0
  %651 = vmatpush2.msra.mxu0 %v134
  %652 = vmatprep.subr.mxu0 0.0
  %653 = vmatpush2.msra.mxu0 %v133
  %654 = vmatprep.subr.mxu0 0.0
  %655 = vmatpush2.msra.mxu0 %v132
  %656 = vmatprep.subr.mxu0 0.0
  %657 = vmatpush2.msra.mxu0 %v131
  %658 = vmatprep.mubr.f32.mxu0 %v31
  %659 = vmatmul.mubr.f32.gmra.mxu0 %v30
  %v660 = vpop.f32.mrf.mxu0
  %v661 = vadd.f32 %v591, %v660
  %v662 = vpop.f32.mrf.mxu0
  %663 = vdwg.mxu0
  %664 = vmatprep.subr.mxu0 0.0
  %665 = vmatpush1.msra.mxu0 %v162
  %666 = vmatprep.subr.mxu0 0.0
  %667 = vmatpush1.msra.mxu0 %v161
  %668 = vmatprep.subr.mxu0 0.0
  %669 = vmatpush1.msra.mxu0 %v160
  %670 = vmatprep.subr.mxu0 0.0
  %671 = vmatpush1.msra.mxu0 %v159
  %672 = vmatprep.subr.mxu0 0.0
  %673 = vmatpush1.msra.mxu0 %v158
  %674 = vmatprep.subr.mxu0 0.0
  %675 = vmatpush1.msra.mxu0 %v157
  %676 = vmatprep.subr.mxu0 0.0
  %677 = vmatpush1.msra.mxu0 %v156
  %678 = vmatprep.subr.mxu0 0.0
  %679 = vmatpush1.msra.mxu0 %v155
  %680 = vmatprep.subr.mxu0 0.0
  %681 = vmatpush1.msra.mxu0 %v154
  %682 = vmatprep.subr.mxu0 0.0
  %683 = vmatpush1.msra.mxu0 %v153
  %684 = vmatprep.subr.mxu0 0.0
  %685 = vmatpush1.msra.mxu0 %v152
  %686 = vmatprep.subr.mxu0 0.0
  %687 = vmatpush1.msra.mxu0 %v151
  %688 = vmatprep.subr.mxu0 0.0
  %689 = vmatpush1.msra.mxu0 %v150
  %690 = vmatprep.subr.mxu0 0.0
  %691 = vmatpush1.msra.mxu0 %v149
  %692 = vmatprep.subr.mxu0 0.0
  %693 = vmatpush1.msra.mxu0 %v148
  %694 = vmatprep.subr.mxu0 0.0
  %695 = vmatpush1.msra.mxu0 %v147
  %696 = vmatprep.subr.mxu0 0.0
  %697 = vmatpush2.msra.mxu0 %v178
  %698 = vmatprep.subr.mxu0 0.0
  %699 = vmatpush2.msra.mxu0 %v177
  %700 = vmatprep.subr.mxu0 0.0
  %701 = vmatpush2.msra.mxu0 %v176
  %702 = vmatprep.subr.mxu0 0.0
  %703 = vmatpush2.msra.mxu0 %v175
  %704 = vmatprep.subr.mxu0 0.0
  %705 = vmatpush2.msra.mxu0 %v174
  %706 = vmatprep.subr.mxu0 0.0
  %707 = vmatpush2.msra.mxu0 %v173
  %708 = vmatprep.subr.mxu0 0.0
  %709 = vmatpush2.msra.mxu0 %v172
  %710 = vmatprep.subr.mxu0 0.0
  %711 = vmatpush2.msra.mxu0 %v171
  %712 = vmatprep.subr.mxu0 0.0
  %713 = vmatpush2.msra.mxu0 %v170
  %714 = vmatprep.subr.mxu0 0.0
  %715 = vmatpush2.msra.mxu0 %v169
  %716 = vmatprep.subr.mxu0 0.0
  %717 = vmatpush2.msra.mxu0 %v168
  %718 = vmatprep.subr.mxu0 0.0
  %719 = vmatpush2.msra.mxu0 %v167
  %720 = vmatprep.subr.mxu0 0.0
  %721 = vmatpush2.msra.mxu0 %v166
  %722 = vmatprep.subr.mxu0 0.0
  %723 = vmatpush2.msra.mxu0 %v165
  %724 = vmatprep.subr.mxu0 0.0
  %725 = vmatpush2.msra.mxu0 %v164
  %726 = vmatprep.subr.mxu0 0.0
  %727 = vmatpush2.msra.mxu0 %v163
  %728 = vmatprep.mubr.f32.mxu0 %v33
  %729 = vmatmul.mubr.f32.gmra.mxu0 %v32
  %v730 = vpop.f32.mrf.mxu0
  %v731 = vadd.f32 %v661, %v730
  %v732 = vpop.f32.mrf.mxu0
  %733 = vdwg.mxu0
  %734 = vmatprep.subr.mxu0 0.0
  %735 = vmatpush1.msra.mxu0 %v194
  %736 = vmatprep.subr.mxu0 0.0
  %737 = vmatpush1.msra.mxu0 %v193
  %738 = vmatprep.subr.mxu0 0.0
  %739 = vmatpush1.msra.mxu0 %v192
  %740 = vmatprep.subr.mxu0 0.0
  %741 = vmatpush1.msra.mxu0 %v191
  %742 = vmatprep.subr.mxu0 0.0
  %743 = vmatpush1.msra.mxu0 %v190
  %744 = vmatprep.subr.mxu0 0.0
  %745 = vmatpush1.msra.mxu0 %v189
  %746 = vmatprep.subr.mxu0 0.0
  %747 = vmatpush1.msra.mxu0 %v188
  %748 = vmatprep.subr.mxu0 0.0
  %749 = vmatpush1.msra.mxu0 %v187
  %750 = vmatprep.subr.mxu0 0.0
  %751 = vmatpush1.msra.mxu0 %v186
  %752 = vmatprep.subr.mxu0 0.0
  %753 = vmatpush1.msra.mxu0 %v185
  %754 = vmatprep.subr.mxu0 0.0
  %755 = vmatpush1.msra.mxu0 %v184
  %756 = vmatprep.subr.mxu0 0.0
  %757 = vmatpush1.msra.mxu0 %v183
  %758 = vmatprep.subr.mxu0 0.0
  %759 = vmatpush1.msra.mxu0 %v182
  %760 = vmatprep.subr.mxu0 0.0
  %761 = vmatpush1.msra.mxu0 %v181
  %762 = vmatprep.subr.mxu0 0.0
  %763 = vmatpush1.msra.mxu0 %v180
  %764 = vmatprep.subr.mxu0 0.0
  %765 = vmatpush1.msra.mxu0 %v179
  %766 = vmatprep.subr.mxu0 0.0
  %767 = vmatpush2.msra.mxu0 %v210
  %768 = vmatprep.subr.mxu0 0.0
  %769 = vmatpush2.msra.mxu0 %v209
  %770 = vmatprep.subr.mxu0 0.0
  %771 = vmatpush2.msra.mxu0 %v208
  %772 = vmatprep.subr.mxu0 0.0
  %773 = vmatpush2.msra.mxu0 %v207
  %774 = vmatprep.subr.mxu0 0.0
  %775 = vmatpush2.msra.mxu0 %v206
  %776 = vmatprep.subr.mxu0 0.0
  %777 = vmatpush2.msra.mxu0 %v205
  %778 = vmatprep.subr.mxu0 0.0
  %779 = vmatpush2.msra.mxu0 %v204
  %780 = vmatprep.subr.mxu0 0.0
  %781 = vmatpush2.msra.mxu0 %v203
  %782 = vmatprep.subr.mxu0 0.0
  %783 = vmatpush2.msra.mxu0 %v202
  %784 = vmatprep.subr.mxu0 0.0
  %785 = vmatpush2.msra.mxu0 %v201
  %786 = vmatprep.subr.mxu0 0.0
  %787 = vmatpush2.msra.mxu0 %v200
  %788 = vmatprep.subr.mxu0 0.0
  %789 = vmatpush2.msra.mxu0 %v199
  %790 = vmatprep.subr.mxu0 0.0
  %791 = vmatpush2.msra.mxu0 %v198
  %792 = vmatprep.subr.mxu0 0.0
  %793 = vmatpush2.msra.mxu0 %v197
  %794 = vmatprep.subr.mxu0 0.0
  %795 = vmatpush2.msra.mxu0 %v196
  %796 = vmatprep.subr.mxu0 0.0
  %797 = vmatpush2.msra.mxu0 %v195
  %798 = vmatprep.mubr.f32.mxu0 %v35
  %799 = vmatmul.mubr.f32.gmra.mxu0 %v34
  %v800 = vpop.f32.mrf.mxu0
  %v801 = vadd.f32 %v731, %v800
  %v802 = vpop.f32.mrf.mxu0
  %803 = vdwg.mxu0
  %804 = vmatprep.subr.mxu0 0.0
  %805 = vmatpush1.msra.mxu0 %v226
  %806 = vmatprep.subr.mxu0 0.0
  %807 = vmatpush1.msra.mxu0 %v225
  %808 = vmatprep.subr.mxu0 0.0
  %809 = vmatpush1.msra.mxu0 %v224
  %810 = vmatprep.subr.mxu0 0.0
  %811 = vmatpush1.msra.mxu0 %v223
  %812 = vmatprep.subr.mxu0 0.0
  %813 = vmatpush1.msra.mxu0 %v222
  %814 = vmatprep.subr.mxu0 0.0
  %815 = vmatpush1.msra.mxu0 %v221
  %816 = vmatprep.subr.mxu0 0.0
  %817 = vmatpush1.msra.mxu0 %v220
  %818 = vmatprep.subr.mxu0 0.0
  %819 = vmatpush1.msra.mxu0 %v219
  %820 = vmatprep.subr.mxu0 0.0
  %821 = vmatpush1.msra.mxu0 %v218
  %822 = vmatprep.subr.mxu0 0.0
  %823 = vmatpush1.msra.mxu0 %v217
  %824 = vmatprep.subr.mxu0 0.0
  %825 = vmatpush1.msra.mxu0 %v216
  %826 = vmatprep.subr.mxu0 0.0
  %827 = vmatpush1.msra.mxu0 %v215
  %828 = vmatprep.subr.mxu0 0.0
  %829 = vmatpush1.msra.mxu0 %v214
  %830 = vmatprep.subr.mxu0 0.0
  %831 = vmatpush1.msra.mxu0 %v213
  %832 = vmatprep.subr.mxu0 0.0
  %833 = vmatpush1.msra.mxu0 %v212
  %834 = vmatprep.subr.mxu0 0.0
  %835 = vmatpush1.msra.mxu0 %v211
  %836 = vmatprep.subr.mxu0 0.0
  %837 = vmatpush2.msra.mxu0 %v242
  %838 = vmatprep.subr.mxu0 0.0
  %839 = vmatpush2.msra.mxu0 %v241
  %840 = vmatprep.subr.mxu0 0.0
  %841 = vmatpush2.msra.mxu0 %v240
  %842 = vmatprep.subr.mxu0 0.0
  %843 = vmatpush2.msra.mxu0 %v239
  %844 = vmatprep.subr.mxu0 0.0
  %845 = vmatpush2.msra.mxu0 %v238
  %846 = vmatprep.subr.mxu0 0.0
  %847 = vmatpush2.msra.mxu0 %v237
  %848 = vmatprep.subr.mxu0 0.0
  %849 = vmatpush2.msra.mxu0 %v236
  %850 = vmatprep.subr.mxu0 0.0
  %851 = vmatpush2.msra.mxu0 %v235
  %852 = vmatprep.subr.mxu0 0.0
  %853 = vmatpush2.msra.mxu0 %v234
  %854 = vmatprep.subr.mxu0 0.0
  %855 = vmatpush2.msra.mxu0 %v233
  %856 = vmatprep.subr.mxu0 0.0
  %857 = vmatpush2.msra.mxu0 %v232
  %858 = vmatprep.subr.mxu0 0.0
  %859 = vmatpush2.msra.mxu0 %v231
  %860 = vmatprep.subr.mxu0 0.0
  %861 = vmatpush2.msra.mxu0 %v230
  %862 = vmatprep.subr.mxu0 0.0
  %863 = vmatpush2.msra.mxu0 %v229
  %864 = vmatprep.subr.mxu0 0.0
  %865 = vmatpush2.msra.mxu0 %v228
  %866 = vmatprep.subr.mxu0 0.0
  %867 = vmatpush2.msra.mxu0 %v227
  %868 = vmatprep.mubr.f32.mxu0 %v37
  %869 = vmatmul.mubr.f32.gmra.mxu0 %v36
  %v870 = vpop.f32.mrf.mxu0
  %v871 = vadd.f32 %v801, %v870
  %v872 = vpop.f32.mrf.mxu0
  %873 = vdwg.mxu0
  %874 = vmatprep.subr.mxu0 0.0
  %875 = vmatpush1.msra.mxu0 %v258
  %876 = vmatprep.subr.mxu0 0.0
  %877 = vmatpush1.msra.mxu0 %v257
  %878 = vmatprep.subr.mxu0 0.0
  %879 = vmatpush1.msra.mxu0 %v256
  %880 = vmatprep.subr.mxu0 0.0
  %881 = vmatpush1.msra.mxu0 %v255
  %882 = vmatprep.subr.mxu0 0.0
  %883 = vmatpush1.msra.mxu0 %v254
  %884 = vmatprep.subr.mxu0 0.0
  %885 = vmatpush1.msra.mxu0 %v253
  %886 = vmatprep.subr.mxu0 0.0
  %887 = vmatpush1.msra.mxu0 %v252
  %888 = vmatprep.subr.mxu0 0.0
  %889 = vmatpush1.msra.mxu0 %v251
  %890 = vmatprep.subr.mxu0 0.0
  %891 = vmatpush1.msra.mxu0 %v250
  %892 = vmatprep.subr.mxu0 0.0
  %893 = vmatpush1.msra.mxu0 %v249
  %894 = vmatprep.subr.mxu0 0.0
  %895 = vmatpush1.msra.mxu0 %v248
  %896 = vmatprep.subr.mxu0 0.0
  %897 = vmatpush1.msra.mxu0 %v247
  %898 = vmatprep.subr.mxu0 0.0
  %899 = vmatpush1.msra.mxu0 %v246
  %900 = vmatprep.subr.mxu0 0.0
  %901 = vmatpush1.msra.mxu0 %v245
  %902 = vmatprep.subr.mxu0 0.0
  %903 = vmatpush1.msra.mxu0 %v244
  %904 = vmatprep.subr.mxu0 0.0
  %905 = vmatpush1.msra.mxu0 %v243
  %906 = vmatprep.subr.mxu0 0.0
  %907 = vmatpush2.msra.mxu0 %v274
  %908 = vmatprep.subr.mxu0 0.0
  %909 = vmatpush2.msra.mxu0 %v273
  %910 = vmatprep.subr.mxu0 0.0
  %911 = vmatpush2.msra.mxu0 %v272
  %912 = vmatprep.subr.mxu0 0.0
  %913 = vmatpush2.msra.mxu0 %v271
  %914 = vmatprep.subr.mxu0 0.0
  %915 = vmatpush2.msra.mxu0 %v270
  %916 = vmatprep.subr.mxu0 0.0
  %917 = vmatpush2.msra.mxu0 %v269
  %918 = vmatprep.subr.mxu0 0.0
  %919 = vmatpush2.msra.mxu0 %v268
  %920 = vmatprep.subr.mxu0 0.0
  %921 = vmatpush2.msra.mxu0 %v267
  %922 = vmatprep.subr.mxu0 0.0
  %923 = vmatpush2.msra.mxu0 %v266
  %924 = vmatprep.subr.mxu0 0.0
  %925 = vmatpush2.msra.mxu0 %v265
  %926 = vmatprep.subr.mxu0 0.0
  %927 = vmatpush2.msra.mxu0 %v264
  %928 = vmatprep.subr.mxu0 0.0
  %929 = vmatpush2.msra.mxu0 %v263
  %930 = vmatprep.subr.mxu0 0.0
  %931 = vmatpush2.msra.mxu0 %v262
  %932 = vmatprep.subr.mxu0 0.0
  %933 = vmatpush2.msra.mxu0 %v261
  %934 = vmatprep.subr.mxu0 0.0
  %935 = vmatpush2.msra.mxu0 %v260
  %936 = vmatprep.subr.mxu0 0.0
  %937 = vmatpush2.msra.mxu0 %v259
  %938 = vmatprep.mubr.f32.mxu0 %v39
  %939 = vmatmul.mubr.f32.gmra.mxu0 %v38
  %v940 = vpop.f32.mrf.mxu0
  %v941 = vadd.f32 %v871, %v940
  %v942 = vpop.f32.mrf.mxu0
  %943 = vdwg.mxu0
  %944 = vmatprep.subr.mxu0 0.0
  %945 = vmatpush1.msra.mxu0 %v290
  %946 = vmatprep.subr.mxu0 0.0
  %947 = vmatpush1.msra.mxu0 %v289
  %948 = vmatprep.subr.mxu0 0.0
  %949 = vmatpush1.msra.mxu0 %v288
  %950 = vmatprep.subr.mxu0 0.0
  %951 = vmatpush1.msra.mxu0 %v287
  %952 = vmatprep.subr.mxu0 0.0
  %953 = vmatpush1.msra.mxu0 %v286
  %954 = vmatprep.subr.mxu0 0.0
  %955 = vmatpush1.msra.mxu0 %v285
  %956 = vmatprep.subr.mxu0 0.0
  %957 = vmatpush1.msra.mxu0 %v284
  %958 = vmatprep.subr.mxu0 0.0
  %959 = vmatpush1.msra.mxu0 %v283
  %960 = vmatprep.subr.mxu0 0.0
  %961 = vmatpush1.msra.mxu0 %v282
  %962 = vmatprep.subr.mxu0 0.0
  %963 = vmatpush1.msra.mxu0 %v281
  %964 = vmatprep.subr.mxu0 0.0
  %965 = vmatpush1.msra.mxu0 %v280
  %966 = vmatprep.subr.mxu0 0.0
  %967 = vmatpush1.msra.mxu0 %v279
  %968 = vmatprep.subr.mxu0 0.0
  %969 = vmatpush1.msra.mxu0 %v278
  %970 = vmatprep.subr.mxu0 0.0
  %971 = vmatpush1.msra.mxu0 %v277
  %972 = vmatprep.subr.mxu0 0.0
  %973 = vmatpush1.msra.mxu0 %v276
  %974 = vmatprep.subr.mxu0 0.0
  %975 = vmatpush1.msra.mxu0 %v275
  %976 = vmatprep.subr.mxu0 0.0
  %977 = vmatpush2.msra.mxu0 %v306
  %978 = vmatprep.subr.mxu0 0.0
  %979 = vmatpush2.msra.mxu0 %v305
  %980 = vmatprep.subr.mxu0 0.0
  %981 = vmatpush2.msra.mxu0 %v304
  %982 = vmatprep.subr.mxu0 0.0
  %983 = vmatpush2.msra.mxu0 %v303
  %984 = vmatprep.subr.mxu0 0.0
  %985 = vmatpush2.msra.mxu0 %v302
  %986 = vmatprep.subr.mxu0 0.0
  %987 = vmatpush2.msra.mxu0 %v301
  %988 = vmatprep.subr.mxu0 0.0
  %989 = vmatpush2.msra.mxu0 %v300
  %990 = vmatprep.subr.mxu0 0.0
  %991 = vmatpush2.msra.mxu0 %v299
  %992 = vmatprep.subr.mxu0 0.0
  %993 = vmatpush2.msra.mxu0 %v298
  %994 = vmatprep.subr.mxu0 0.0
  %995 = vmatpush2.msra.mxu0 %v297
  %996 = vmatprep.subr.mxu0 0.0
  %997 = vmatpush2.msra.mxu0 %v296
  %998 = vmatprep.subr.mxu0 0.0
  %999 = vmatpush2.msra.mxu0 %v295
  %1000 = vmatprep.subr.mxu0 0.0
  %1001 = vmatpush2.msra.mxu0 %v294
  %1002 = vmatprep.subr.mxu0 0.0
  %1003 = vmatpush2.msra.mxu0 %v293
  %1004 = vmatprep.subr.mxu0 0.0
  %1005 = vmatpush2.msra.mxu0 %v292
  %1006 = vmatprep.subr.mxu0 0.0
  %1007 = vmatpush2.msra.mxu0 %v291
  %1008 = vmatprep.mubr.f32.mxu0 %v41
  %1009 = vmatmul.mubr.f32.gmra.mxu0 %v40
  %v1010 = vpop.f32.mrf.mxu0
  %v1011 = vadd.f32 %v941, %v1010
  %v1012 = vpop.f32.mrf.mxu0
  %1013 = vdwg.mxu0
  %1014 = vmatprep.subr.mxu0 0.0
  %1015 = vmatpush1.msra.mxu0 %v322
  %1016 = vmatprep.subr.mxu0 0.0
  %1017 = vmatpush1.msra.mxu0 %v321
  %1018 = vmatprep.subr.mxu0 0.0
  %1019 = vmatpush1.msra.mxu0 %v320
  %1020 = vmatprep.subr.mxu0 0.0
  %1021 = vmatpush1.msra.mxu0 %v319
  %1022 = vmatprep.subr.mxu0 0.0
  %1023 = vmatpush1.msra.mxu0 %v318
  %1024 = vmatprep.subr.mxu0 0.0
  %1025 = vmatpush1.msra.mxu0 %v317
  %1026 = vmatprep.subr.mxu0 0.0
  %1027 = vmatpush1.msra.mxu0 %v316
  %1028 = vmatprep.subr.mxu0 0.0
  %1029 = vmatpush1.msra.mxu0 %v315
  %1030 = vmatprep.subr.mxu0 0.0
  %1031 = vmatpush1.msra.mxu0 %v314
  %1032 = vmatprep.subr.mxu0 0.0
  %1033 = vmatpush1.msra.mxu0 %v313
  %1034 = vmatprep.subr.mxu0 0.0
  %1035 = vmatpush1.msra.mxu0 %v312
  %1036 = vmatprep.subr.mxu0 0.0
  %1037 = vmatpush1.msra.mxu0 %v311
  %1038 = vmatprep.subr.mxu0 0.0
  %1039 = vmatpush1.msra.mxu0 %v310
  %1040 = vmatprep.subr.mxu0 0.0
  %1041 = vmatpush1.msra.mxu0 %v309
  %1042 = vmatprep.subr.mxu0 0.0
  %1043 = vmatpush1.msra.mxu0 %v308
  %1044 = vmatprep.subr.mxu0 0.0
  %1045 = vmatpush1.msra.mxu0 %v307
  %1046 = vmatprep.subr.mxu0 0.0
  %1047 = vmatpush2.msra.mxu0 %v338
  %1048 = vmatprep.subr.mxu0 0.0
  %1049 = vmatpush2.msra.mxu0 %v337
  %1050 = vmatprep.subr.mxu0 0.0
  %1051 = vmatpush2.msra.mxu0 %v336
  %1052 = vmatprep.subr.mxu0 0.0
  %1053 = vmatpush2.msra.mxu0 %v335
  %1054 = vmatprep.subr.mxu0 0.0
  %1055 = vmatpush2.msra.mxu0 %v334
  %1056 = vmatprep.subr.mxu0 0.0
  %1057 = vmatpush2.msra.mxu0 %v333
  %1058 = vmatprep.subr.mxu0 0.0
  %1059 = vmatpush2.msra.mxu0 %v332
  %1060 = vmatprep.subr.mxu0 0.0
  %1061 = vmatpush2.msra.mxu0 %v331
  %1062 = vmatprep.subr.mxu0 0.0
  %1063 = vmatpush2.msra.mxu0 %v330
  %1064 = vmatprep.subr.mxu0 0.0
  %1065 = vmatpush2.msra.mxu0 %v329
  %1066 = vmatprep.subr.mxu0 0.0
  %1067 = vmatpush2.msra.mxu0 %v328
  %1068 = vmatprep.subr.mxu0 0.0
  %1069 = vmatpush2.msra.mxu0 %v327
  %1070 = vmatprep.subr.mxu0 0.0
  %1071 = vmatpush2.msra.mxu0 %v326
  %1072 = vmatprep.subr.mxu0 0.0
  %1073 = vmatpush2.msra.mxu0 %v325
  %1074 = vmatprep.subr.mxu0 0.0
  %1075 = vmatpush2.msra.mxu0 %v324
  %1076 = vmatprep.subr.mxu0 0.0
  %1077 = vmatpush2.msra.mxu0 %v323
  %1078 = vmatprep.mubr.f32.mxu0 %v43
  %1079 = vmatmul.mubr.f32.gmra.mxu0 %v42
  %v1080 = vpop.f32.mrf.mxu0
  %v1081 = vadd.f32 %v1011, %v1080
  %v1082 = vpop.f32.mrf.mxu0
  %1083 = vdwg.mxu0
  %1084 = vmatprep.subr.mxu0 0.0
  %1085 = vmatpush1.msra.mxu0 %v354
  %1086 = vmatprep.subr.mxu0 0.0
  %1087 = vmatpush1.msra.mxu0 %v353
  %1088 = vmatprep.subr.mxu0 0.0
  %1089 = vmatpush1.msra.mxu0 %v352
  %1090 = vmatprep.subr.mxu0 0.0
  %1091 = vmatpush1.msra.mxu0 %v351
  %1092 = vmatprep.subr.mxu0 0.0
  %1093 = vmatpush1.msra.mxu0 %v350
  %1094 = vmatprep.subr.mxu0 0.0
  %1095 = vmatpush1.msra.mxu0 %v349
  %1096 = vmatprep.subr.mxu0 0.0
  %1097 = vmatpush1.msra.mxu0 %v348
  %1098 = vmatprep.subr.mxu0 0.0
  %1099 = vmatpush1.msra.mxu0 %v347
  %1100 = vmatprep.subr.mxu0 0.0
  %1101 = vmatpush1.msra.mxu0 %v346
  %1102 = vmatprep.subr.mxu0 0.0
  %1103 = vmatpush1.msra.mxu0 %v345
  %1104 = vmatprep.subr.mxu0 0.0
  %1105 = vmatpush1.msra.mxu0 %v344
  %1106 = vmatprep.subr.mxu0 0.0
  %1107 = vmatpush1.msra.mxu0 %v343
  %1108 = vmatprep.subr.mxu0 0.0
  %1109 = vmatpush1.msra.mxu0 %v342
  %1110 = vmatprep.subr.mxu0 0.0
  %1111 = vmatpush1.msra.mxu0 %v341
  %1112 = vmatprep.subr.mxu0 0.0
  %1113 = vmatpush1.msra.mxu0 %v340
  %1114 = vmatprep.subr.mxu0 0.0
  %1115 = vmatpush1.msra.mxu0 %v339
  %1116 = vmatprep.subr.mxu0 0.0
  %1117 = vmatpush2.msra.mxu0 %v370
  %1118 = vmatprep.subr.mxu0 0.0
  %1119 = vmatpush2.msra.mxu0 %v369
  %1120 = vmatprep.subr.mxu0 0.0
  %1121 = vmatpush2.msra.mxu0 %v368
  %1122 = vmatprep.subr.mxu0 0.0
  %1123 = vmatpush2.msra.mxu0 %v367
  %1124 = vmatprep.subr.mxu0 0.0
  %1125 = vmatpush2.msra.mxu0 %v366
  %1126 = vmatprep.subr.mxu0 0.0
  %1127 = vmatpush2.msra.mxu0 %v365
  %1128 = vmatprep.subr.mxu0 0.0
  %1129 = vmatpush2.msra.mxu0 %v364
  %1130 = vmatprep.subr.mxu0 0.0
  %1131 = vmatpush2.msra.mxu0 %v363
  %1132 = vmatprep.subr.mxu0 0.0
  %1133 = vmatpush2.msra.mxu0 %v362
  %1134 = vmatprep.subr.mxu0 0.0
  %1135 = vmatpush2.msra.mxu0 %v361
  %1136 = vmatprep.subr.mxu0 0.0
  %1137 = vmatpush2.msra.mxu0 %v360
  %1138 = vmatprep.subr.mxu0 0.0
  %1139 = vmatpush2.msra.mxu0 %v359
  %1140 = vmatprep.subr.mxu0 0.0
  %1141 = vmatpush2.msra.mxu0 %v358
  %1142 = vmatprep.subr.mxu0 0.0
  %1143 = vmatpush2.msra.mxu0 %v357
  %1144 = vmatprep.subr.mxu0 0.0
  %1145 = vmatpush2.msra.mxu0 %v356
  %1146 = vmatprep.subr.mxu0 0.0
  %1147 = vmatpush2.msra.mxu0 %v355
  %1148 = vmatprep.mubr.f32.mxu0 %v45
  %1149 = vmatmul.mubr.f32.gmra.mxu0 %v44
  %v1150 = vpop.f32.mrf.mxu0
  %v1151 = vadd.f32 %v1081, %v1150
  %v1152 = vpop.f32.mrf.mxu0
  %1153 = vdwg.mxu0
  %1154 = vmatprep.subr.mxu0 0.0
  %1155 = vmatpush1.msra.mxu0 %v386
  %1156 = vmatprep.subr.mxu0 0.0
  %1157 = vmatpush1.msra.mxu0 %v385
  %1158 = vmatprep.subr.mxu0 0.0
  %1159 = vmatpush1.msra.mxu0 %v384
  %1160 = vmatprep.subr.mxu0 0.0
  %1161 = vmatpush1.msra.mxu0 %v383
  %1162 = vmatprep.subr.mxu0 0.0
  %1163 = vmatpush1.msra.mxu0 %v382
  %1164 = vmatprep.subr.mxu0 0.0
  %1165 = vmatpush1.msra.mxu0 %v381
  %1166 = vmatprep.subr.mxu0 0.0
  %1167 = vmatpush1.msra.mxu0 %v380
  %1168 = vmatprep.subr.mxu0 0.0
  %1169 = vmatpush1.msra.mxu0 %v379
  %1170 = vmatprep.subr.mxu0 0.0
  %1171 = vmatpush1.msra.mxu0 %v378
  %1172 = vmatprep.subr.mxu0 0.0
  %1173 = vmatpush1.msra.mxu0 %v377
  %1174 = vmatprep.subr.mxu0 0.0
  %1175 = vmatpush1.msra.mxu0 %v376
  %1176 = vmatprep.subr.mxu0 0.0
  %1177 = vmatpush1.msra.mxu0 %v375
  %1178 = vmatprep.subr.mxu0 0.0
  %1179 = vmatpush1.msra.mxu0 %v374
  %1180 = vmatprep.subr.mxu0 0.0
  %1181 = vmatpush1.msra.mxu0 %v373
  %1182 = vmatprep.subr.mxu0 0.0
  %1183 = vmatpush1.msra.mxu0 %v372
  %1184 = vmatprep.subr.mxu0 0.0
  %1185 = vmatpush1.msra.mxu0 %v371
  %1186 = vmatprep.subr.mxu0 0.0
  %1187 = vmatpush2.msra.mxu0 %v402
  %1188 = vmatprep.subr.mxu0 0.0
  %1189 = vmatpush2.msra.mxu0 %v401
  %1190 = vmatprep.subr.mxu0 0.0
  %1191 = vmatpush2.msra.mxu0 %v400
  %1192 = vmatprep.subr.mxu0 0.0
  %1193 = vmatpush2.msra.mxu0 %v399
  %1194 = vmatprep.subr.mxu0 0.0
  %1195 = vmatpush2.msra.mxu0 %v398
  %1196 = vmatprep.subr.mxu0 0.0
  %1197 = vmatpush2.msra.mxu0 %v397
  %1198 = vmatprep.subr.mxu0 0.0
  %1199 = vmatpush2.msra.mxu0 %v396
  %1200 = vmatprep.subr.mxu0 0.0
  %1201 = vmatpush2.msra.mxu0 %v395
  %1202 = vmatprep.subr.mxu0 0.0
  %1203 = vmatpush2.msra.mxu0 %v394
  %1204 = vmatprep.subr.mxu0 0.0
  %1205 = vmatpush2.msra.mxu0 %v393
  %1206 = vmatprep.subr.mxu0 0.0
  %1207 = vmatpush2.msra.mxu0 %v392
  %1208 = vmatprep.subr.mxu0 0.0
  %1209 = vmatpush2.msra.mxu0 %v391
  %1210 = vmatprep.subr.mxu0 0.0
  %1211 = vmatpush2.msra.mxu0 %v390
  %1212 = vmatprep.subr.mxu0 0.0
  %1213 = vmatpush2.msra.mxu0 %v389
  %1214 = vmatprep.subr.mxu0 0.0
  %1215 = vmatpush2.msra.mxu0 %v388
  %1216 = vmatprep.subr.mxu0 0.0
  %1217 = vmatpush2.msra.mxu0 %v387
  %1218 = vmatprep.mubr.f32.mxu0 %v47
  %1219 = vmatmul.mubr.f32.gmra.mxu0 %v46
  %v1220 = vpop.f32.mrf.mxu0
  %v1221 = vadd.f32 %v1151, %v1220
  %v1222 = vpop.f32.mrf.mxu0
  %1223 = vdwg.mxu0
  %1224 = vmatprep.subr.mxu0 0.0
  %1225 = vmatpush1.msra.mxu0 %v418
  %1226 = vmatprep.subr.mxu0 0.0
  %1227 = vmatpush1.msra.mxu0 %v417
  %1228 = vmatprep.subr.mxu0 0.0
  %1229 = vmatpush1.msra.mxu0 %v416
  %1230 = vmatprep.subr.mxu0 0.0
  %1231 = vmatpush1.msra.mxu0 %v415
  %1232 = vmatprep.subr.mxu0 0.0
  %1233 = vmatpush1.msra.mxu0 %v414
  %1234 = vmatprep.subr.mxu0 0.0
  %1235 = vmatpush1.msra.mxu0 %v413
  %1236 = vmatprep.subr.mxu0 0.0
  %1237 = vmatpush1.msra.mxu0 %v412
  %1238 = vmatprep.subr.mxu0 0.0
  %1239 = vmatpush1.msra.mxu0 %v411
  %1240 = vmatprep.subr.mxu0 0.0
  %1241 = vmatpush1.msra.mxu0 %v410
  %1242 = vmatprep.subr.mxu0 0.0
  %1243 = vmatpush1.msra.mxu0 %v409
  %1244 = vmatprep.subr.mxu0 0.0
  %1245 = vmatpush1.msra.mxu0 %v408
  %1246 = vmatprep.subr.mxu0 0.0
  %1247 = vmatpush1.msra.mxu0 %v407
  %1248 = vmatprep.subr.mxu0 0.0
  %1249 = vmatpush1.msra.mxu0 %v406
  %1250 = vmatprep.subr.mxu0 0.0
  %1251 = vmatpush1.msra.mxu0 %v405
  %1252 = vmatprep.subr.mxu0 0.0
  %1253 = vmatpush1.msra.mxu0 %v404
  %1254 = vmatprep.subr.mxu0 0.0
  %1255 = vmatpush1.msra.mxu0 %v403
  %1256 = vmatprep.subr.mxu0 0.0
  %1257 = vmatpush2.msra.mxu0 %v434
  %1258 = vmatprep.subr.mxu0 0.0
  %1259 = vmatpush2.msra.mxu0 %v433
  %1260 = vmatprep.subr.mxu0 0.0
  %1261 = vmatpush2.msra.mxu0 %v432
  %1262 = vmatprep.subr.mxu0 0.0
  %1263 = vmatpush2.msra.mxu0 %v431
  %1264 = vmatprep.subr.mxu0 0.0
  %1265 = vmatpush2.msra.mxu0 %v430
  %1266 = vmatprep.subr.mxu0 0.0
  %1267 = vmatpush2.msra.mxu0 %v429
  %1268 = vmatprep.subr.mxu0 0.0
  %1269 = vmatpush2.msra.mxu0 %v428
  %1270 = vmatprep.subr.mxu0 0.0
  %1271 = vmatpush2.msra.mxu0 %v427
  %1272 = vmatprep.subr.mxu0 0.0
  %1273 = vmatpush2.msra.mxu0 %v426
  %1274 = vmatprep.subr.mxu0 0.0
  %1275 = vmatpush2.msra.mxu0 %v425
  %1276 = vmatprep.subr.mxu0 0.0
  %1277 = vmatpush2.msra.mxu0 %v424
  %1278 = vmatprep.subr.mxu0 0.0
  %1279 = vmatpush2.msra.mxu0 %v423
  %1280 = vmatprep.subr.mxu0 0.0
  %1281 = vmatpush2.msra.mxu0 %v422
  %1282 = vmatprep.subr.mxu0 0.0
  %1283 = vmatpush2.msra.mxu0 %v421
  %1284 = vmatprep.subr.mxu0 0.0
  %1285 = vmatpush2.msra.mxu0 %v420
  %1286 = vmatprep.subr.mxu0 0.0
  %1287 = vmatpush2.msra.mxu0 %v419
  %1288 = vmatprep.mubr.f32.mxu0 %v49
  %1289 = vmatmul.mubr.f32.gmra.mxu0 %v48
  %v1290 = vpop.f32.mrf.mxu0
  %v1291 = vadd.f32 %v1221, %v1290
  %v1292 = vpop.f32.mrf.mxu0
  %1293 = vdwg.mxu0
  %1294 = vmatprep.subr.mxu0 0.0
  %1295 = vmatpush1.msra.mxu0 0.0
  %1296 = vmatprep.subr.mxu0 0.0
  %1297 = vmatpush1.msra.mxu0 0.0
  %1298 = vmatprep.subr.mxu0 0.0
  %1299 = vmatpush1.msra.mxu0 0.0
  %1300 = vmatprep.subr.mxu0 0.0
  %1301 = vmatpush1.msra.mxu0 0.0
  %1302 = vmatprep.subr.mxu0 0.0
  %1303 = vmatpush1.msra.mxu0 0.0
  %1304 = vmatprep.subr.mxu0 0.0
  %1305 = vmatpush1.msra.mxu0 0.0
  %1306 = vmatprep.subr.mxu0 0.0
  %1307 = vmatpush1.msra.mxu0 0.0
  %1308 = vmatprep.subr.mxu0 0.0
  %1309 = vmatpush1.msra.mxu0 0.0
  %1310 = vmatprep.subr.mxu0 0.0
  %1311 = vmatpush1.msra.mxu0 %v442
  %1312 = vmatprep.subr.mxu0 0.0
  %1313 = vmatpush1.msra.mxu0 %v441
  %1314 = vmatprep.subr.mxu0 0.0
  %1315 = vmatpush1.msra.mxu0 %v440
  %1316 = vmatprep.subr.mxu0 0.0
  %1317 = vmatpush1.msra.mxu0 %v439
  %1318 = vmatprep.subr.mxu0 0.0
  %1319 = vmatpush1.msra.mxu0 %v438
  %1320 = vmatprep.subr.mxu0 0.0
  %1321 = vmatpush1.msra.mxu0 %v437
  %1322 = vmatprep.subr.mxu0 0.0
  %1323 = vmatpush1.msra.mxu0 %v436
  %1324 = vmatprep.subr.mxu0 0.0
  %1325 = vmatpush1.msra.mxu0 %v435
  %1326 = vmatprep.subr.mxu0 0.0
  %1327 = vmatpush2.msra.mxu0 0.0
  %1328 = vmatprep.subr.mxu0 0.0
  %1329 = vmatpush2.msra.mxu0 0.0
  %1330 = vmatprep.subr.mxu0 0.0
  %1331 = vmatpush2.msra.mxu0 0.0
  %1332 = vmatprep.subr.mxu0 0.0
  %1333 = vmatpush2.msra.mxu0 0.0
  %1334 = vmatprep.subr.mxu0 0.0
  %1335 = vmatpush2.msra.mxu0 0.0
  %1336 = vmatprep.subr.mxu0 0.0
  %1337 = vmatpush2.msra.mxu0 0.0
  %1338 = vmatprep.subr.mxu0 0.0
  %1339 = vmatpush2.msra.mxu0 0.0
  %1340 = vmatprep.subr.mxu0 0.0
  %1341 = vmatpush2.msra.mxu0 0.0
  %1342 = vmatprep.subr.mxu0 0.0
  %1343 = vmatpush2.msra.mxu0 0.0
  %1344 = vmatprep.subr.mxu0 0.0
  %1345 = vmatpush2.msra.mxu0 0.0
  %1346 = vmatprep.subr.mxu0 0.0
  %1347 = vmatpush2.msra.mxu0 0.0
  %1348 = vmatprep.subr.mxu0 0.0
  %1349 = vmatpush2.msra.mxu0 0.0
  %1350 = vmatprep.subr.mxu0 0.0
  %1351 = vmatpush2.msra.mxu0 0.0
  %1352 = vmatprep.subr.mxu0 0.0
  %1353 = vmatpush2.msra.mxu0 0.0
  %1354 = vmatprep.subr.mxu0 0.0
  %1355 = vmatpush2.msra.mxu0 0.0
  %1356 = vmatprep.subr.mxu0 0.0
  %1357 = vmatpush2.msra.mxu0 0.0
  %1358 = vmatprep.mubr.f32.mxu0 0.0
  %1359 = vmatmul.mubr.f32.gmra.mxu0 %v452
  %v1360 = vpop.f32.mrf.mxu0
  %v1361 = vadd.f32 %v1291, %v1360
  %v1362 = vpop.f32.mrf.mxu0
  %1363 = vdwg.mxu0
  %v1364 = vmul.f32 %v1361, 0.5
  %v1365 = vmul.f32 %v1364, 1.442695
  %v1366 = vpow.pop %v1365
  %v1367 = vld [vmem:[%s1] sm:$0xff]
  %1369 = vrot.lane.b32.xlu0 %v1367, 20
  %v1370 = vpop.permute.xlu0 %1369
  %v1372 = vmul.f32 %v1366, %v1370
  %1374 = vrot.lane.b32.xlu0 %v1372, 108
  %v1375 = vpop.permute.xlu0 %1374
  %v1377 = vadd.f32 %v1361, %v1375
  %v1378 = vld [vmem:[%s4] sm:$0xff]
  %v1379 = vld [vmem:[%s4 + $0x8] sm:$0xff]
  %v1380 = vld [vmem:[%s4 + $0x10] sm:$0xff]
  %v1381 = vld [vmem:[%s4 + $0x18] sm:$0xff]
  %v1382 = vld [vmem:[%s4 + $0x20] sm:$0xff]
  %v1383 = vld [vmem:[%s4 + $0x28] sm:$0xff]
  %v1384 = vld [vmem:[%s4 + $0x30] sm:$0xff]
  %v1385 = vld [vmem:[%s4 + $0x38] sm:$0xff]
  %v1386 = vld [vmem:[%s4 + $0x40] sm:$0xff]
  %v1387 = vld [vmem:[%s4 + $0x48] sm:$0xff]
  %v1388 = vld [vmem:[%s4 + $0x50] sm:$0xff]
  %v1389 = vld [vmem:[%s4 + $0x58] sm:$0xff]
  %v1390 = vld [vmem:[%s4 + $0x60] sm:$0xff]
  %v1391 = vld [vmem:[%s4 + $0x68] sm:$0xff]
  %v1392 = vld [vmem:[%s4 + $0x70] sm:$0xff]
  %v1393 = vld [vmem:[%s4 + $0x78] sm:$0xff]
  %v1394 = vld [vmem:[%s4 + $0x80] sm:$0xff]
  %v1395 = vld [vmem:[%s4 + $0x88] sm:$0xff]
  %v1396 = vld [vmem:[%s4 + $0x90] sm:$0xff]
  %v1397 = vld [vmem:[%s4 + $0x98] sm:$0xff]
  %v1398 = vld [vmem:[%s4 + $0xa0] sm:$0xff]
  %v1399 = vld [vmem:[%s4 + $0xa8] sm:$0xff]
  %v1400 = vld [vmem:[%s4 + $0xb0] sm:$0xff]
  %v1401 = vld [vmem:[%s4 + $0xb8] sm:$0xff]
  %v1402 = vld [vmem:[%s4 + $0xc0] sm:$0xff]
  %v1403 = vld [vmem:[%s4 + $0xc8] sm:$0xff]
  %v1404 = vld [vmem:[%s4 + $0xd0] sm:$0xff]
  %v1405 = vld [vmem:[%s4 + $0xd8] sm:$0xff]
  %v1406 = vld [vmem:[%s4 + $0xe0] sm:$0xff]
  %v1407 = vld [vmem:[%s4 + $0xe8] sm:$0xff]
  %v1408 = vld [vmem:[%s4 + $0xf0] sm:$0xff]
  %v1409 = vld [vmem:[%s4 + $0xf8] sm:$0xff]
  %v1410 = vld [vmem:[%s4 + $0x100] sm:$0xff]
  %v1411 = vld [vmem:[%s4 + $0x108] sm:$0xff]
  %v1412 = vld [vmem:[%s4 + $0x110] sm:$0xff]
  %v1413 = vld [vmem:[%s4 + $0x118] sm:$0xff]
  %v1414 = vld [vmem:[%s4 + $0x120] sm:$0xff]
  %v1415 = vld [vmem:[%s4 + $0x128] sm:$0xff]
  %v1416 = vld [vmem:[%s4 + $0x130] sm:$0xff]
  %v1417 = vld [vmem:[%s4 + $0x138] sm:$0xff]
  %v1418 = vld [vmem:[%s4 + $0x140] sm:$0xff]
  %v1419 = vld [vmem:[%s4 + $0x148] sm:$0xff]
  %v1420 = vld [vmem:[%s4 + $0x150] sm:$0xff]
  %v1421 = vld [vmem:[%s4 + $0x158] sm:$0xff]
  %v1422 = vld [vmem:[%s4 + $0x160] sm:$0xff]
  %v1423 = vld [vmem:[%s4 + $0x168] sm:$0xff]
  %v1424 = vld [vmem:[%s4 + $0x170] sm:$0xff]
  %v1425 = vld [vmem:[%s4 + $0x178] sm:$0xff]
  %v1426 = vld [vmem:[%s4 + $0x180] sm:$0xff]
  %v1427 = vld [vmem:[%s4 + $0x188] sm:$0xff]
  %v1428 = vld [vmem:[%s4 + $0x190] sm:$0xf]
  %v1429 = vld [vmem:[%s4 + $0x198] sm:$0xf]
  %v1430 = vld [vmem:[%s4 + $0x1a0] sm:$0xf]
  %v1431 = vld [vmem:[%s4 + $0x1a8] sm:$0xf]
  %v1432 = vld [vmem:[%s4 + $0x1b0] sm:$0xf]
  %v1433 = vld [vmem:[%s4 + $0x1b8] sm:$0xf]
  %v1434 = vld [vmem:[%s4 + $0x1c0] sm:$0xf]
  %v1435 = vld [vmem:[%s4 + $0x1c8] sm:$0xf]
  %v1436 = vld [vmem:[%s4 + $0x1d0] sm:$0xf]
  %v1437 = vld [vmem:[%s4 + $0x1d8] sm:$0xf]
  %v1438 = vld [vmem:[%s4 + $0x1e0] sm:$0xf]
  %v1439 = vld [vmem:[%s4 + $0x1e8] sm:$0xf]
  %v1440 = vld [vmem:[%s4 + $0x1f0] sm:$0xf]
  %v1441 = vld [vmem:[%s4 + $0x1f8] sm:$0xf]
  %v1442 = vld [vmem:[%s4 + $0x200] sm:$0xf]
  %v1443 = vld [vmem:[%s4 + $0x208] sm:$0xf]
  %v1444 = vld [vmem:[%s4 + $0x210] sm:$0xf]
  %v1445 = vld [vmem:[%s4 + $0x218] sm:$0xf]
  %v1446 = vld [vmem:[%s4 + $0x220] sm:$0xf]
  %v1447 = vld [vmem:[%s4 + $0x228] sm:$0xf]
  %v1448 = vld [vmem:[%s4 + $0x230] sm:$0xf]
  %v1449 = vld [vmem:[%s4 + $0x238] sm:$0xf]
  %v1450 = vld [vmem:[%s4 + $0x240] sm:$0xf]
  %v1451 = vld [vmem:[%s4 + $0x248] sm:$0xf]
  %v1452 = vld [vmem:[%s4 + $0x250] sm:$0xf]
  %v1453 = vld [vmem:[%s5] sm:$0xff]
  %v1454 = vld [vmem:[%s5 + $0x8] sm:$0xff]
  %v1455 = vld [vmem:[%s5 + $0x10] sm:$0xff]
  %v1456 = vld [vmem:[%s5 + $0x18] sm:$0x1]
  %v1461 = vlaneseq
  %v1462 = vshrl.u32 %v1461, 7
  %v1463 = vsub.s32 0, %v1462
  %v1464 = vrot.slane %v1453, %v1463
  %v1465 = vlaneseq
  %v1466 = vshrl.u32 %v1465, 7
  %v1467 = vsub.s32 1, %v1466
  %v1468 = vrot.slane %v1453, %v1467
  %v1469 = vlaneseq
  %v1470 = vshrl.u32 %v1469, 7
  %v1471 = vsub.s32 2, %v1470
  %v1472 = vrot.slane %v1453, %v1471
  %v1473 = vlaneseq
  %v1474 = vshrl.u32 %v1473, 7
  %v1475 = vsub.s32 3, %v1474
  %v1476 = vrot.slane %v1453, %v1475
  %v1477 = vlaneseq
  %v1478 = vshrl.u32 %v1477, 7
  %v1479 = vsub.s32 4, %v1478
  %v1480 = vrot.slane %v1453, %v1479
  %v1481 = vlaneseq
  %v1482 = vshrl.u32 %v1481, 7
  %v1483 = vsub.s32 5, %v1482
  %v1484 = vrot.slane %v1453, %v1483
  %v1485 = vlaneseq
  %v1486 = vshrl.u32 %v1485, 7
  %v1487 = vsub.s32 6, %v1486
  %v1488 = vrot.slane %v1453, %v1487
  %v1489 = vlaneseq
  %v1490 = vshrl.u32 %v1489, 7
  %v1491 = vsub.s32 7, %v1490
  %v1492 = vrot.slane %v1453, %v1491
  %v1493 = vlaneseq
  %v1494 = vshrl.u32 %v1493, 7
  %v1495 = vsub.s32 0, %v1494
  %v1496 = vrot.slane %v1454, %v1495
  %v1497 = vlaneseq
  %v1498 = vshrl.u32 %v1497, 7
  %v1499 = vsub.s32 1, %v1498
  %v1500 = vrot.slane %v1454, %v1499
  %v1501 = vlaneseq
  %v1502 = vshrl.u32 %v1501, 7
  %v1503 = vsub.s32 2, %v1502
  %v1504 = vrot.slane %v1454, %v1503
  %v1505 = vlaneseq
  %v1506 = vshrl.u32 %v1505, 7
  %v1507 = vsub.s32 3, %v1506
  %v1508 = vrot.slane %v1454, %v1507
  %v1509 = vlaneseq
  %v1510 = vshrl.u32 %v1509, 7
  %v1511 = vsub.s32 4, %v1510
  %v1512 = vrot.slane %v1454, %v1511
  %v1513 = vlaneseq
  %v1514 = vshrl.u32 %v1513, 7
  %v1515 = vsub.s32 5, %v1514
  %v1516 = vrot.slane %v1454, %v1515
  %v1517 = vlaneseq
  %v1518 = vshrl.u32 %v1517, 7
  %v1519 = vsub.s32 6, %v1518
  %v1520 = vrot.slane %v1454, %v1519
  %v1521 = vlaneseq
  %v1522 = vshrl.u32 %v1521, 7
  %v1523 = vsub.s32 7, %v1522
  %v1524 = vrot.slane %v1454, %v1523
  %v1525 = vlaneseq
  %v1526 = vshrl.u32 %v1525, 7
  %v1527 = vsub.s32 0, %v1526
  %v1528 = vrot.slane %v1455, %v1527
  %v1529 = vlaneseq
  %v1530 = vshrl.u32 %v1529, 7
  %v1531 = vsub.s32 1, %v1530
  %v1532 = vrot.slane %v1455, %v1531
  %v1533 = vlaneseq
  %v1534 = vshrl.u32 %v1533, 7
  %v1535 = vsub.s32 2, %v1534
  %v1536 = vrot.slane %v1455, %v1535
  %v1537 = vlaneseq
  %v1538 = vshrl.u32 %v1537, 7
  %v1539 = vsub.s32 3, %v1538
  %v1540 = vrot.slane %v1455, %v1539
  %v1541 = vlaneseq
  %v1542 = vshrl.u32 %v1541, 7
  %v1543 = vsub.s32 4, %v1542
  %v1544 = vrot.slane %v1455, %v1543
  %v1545 = vlaneseq
  %v1546 = vshrl.u32 %v1545, 7
  %v1547 = vsub.s32 5, %v1546
  %v1548 = vrot.slane %v1455, %v1547
  %v1549 = vlaneseq
  %v1550 = vshrl.u32 %v1549, 7
  %v1551 = vsub.s32 6, %v1550
  %v1552 = vrot.slane %v1455, %v1551
  %v1553 = vlaneseq
  %v1554 = vshrl.u32 %v1553, 7
  %v1555 = vsub.s32 7, %v1554
  %v1556 = vrot.slane %v1455, %v1555
  %v1557 = vlaneseq
  %v1558 = vshrl.u32 %v1557, 7
  %v1559 = vsub.s32 0, %v1558
  %v1560 = vrot.slane %v1456, %v1559
  %vm1586 = vcmask 162816
  %v1588 = vsel %vm1586, %v1377, 0
  %vm1590 = vcmask 1043456
  %v1592 = vsel %vm1590, %v1428, 0
  %v1595 = vsel %vm1590, %v1429, 0
  %v1598 = vsel %vm1590, %v1430, 0
  %v1601 = vsel %vm1590, %v1431, 0
  %v1604 = vsel %vm1590, %v1432, 0
  %v1607 = vsel %vm1590, %v1433, 0
  %v1610 = vsel %vm1590, %v1434, 0
  %v1613 = vsel %vm1590, %v1435, 0
  %v1616 = vsel %vm1590, %v1436, 0
  %v1619 = vsel %vm1590, %v1437, 0
  %v1622 = vsel %vm1590, %v1438, 0
  %v1625 = vsel %vm1590, %v1439, 0
  %v1628 = vsel %vm1590, %v1440, 0
  %v1631 = vsel %vm1590, %v1441, 0
  %v1634 = vsel %vm1590, %v1442, 0
  %v1637 = vsel %vm1590, %v1443, 0
  %v1640 = vsel %vm1590, %v1444, 0
  %v1643 = vsel %vm1590, %v1445, 0
  %v1646 = vsel %vm1590, %v1446, 0
  %v1649 = vsel %vm1590, %v1447, 0
  %v1652 = vsel %vm1590, %v1448, 0
  %v1655 = vsel %vm1590, %v1449, 0
  %v1658 = vsel %vm1590, %v1450, 0
  %v1661 = vsel %vm1590, %v1451, 0
  %v1664 = vsel %vm1590, %v1452, 0
  %1666 = vmatprep.subr.mxu0 0.0
  %1667 = vmatpush1.msra.mxu0 0.0
  %1668 = vmatprep.subr.mxu0 0.0
  %1669 = vmatpush1.msra.mxu0 0.0
  %1670 = vmatprep.subr.mxu0 0.0
  %1671 = vmatpush1.msra.mxu0 0.0
  %1672 = vmatprep.subr.mxu0 0.0
  %1673 = vmatpush1.msra.mxu0 0.0
  %1674 = vmatprep.subr.mxu0 0.0
  %1675 = vmatpush1.msra.mxu0 0.0
  %1676 = vmatprep.subr.mxu0 0.0
  %1677 = vmatpush1.msra.mxu0 0.0
  %1678 = vmatprep.subr.mxu0 0.0
  %1679 = vmatpush1.msra.mxu0 0.0
  %1680 = vmatprep.subr.mxu0 0.0
  %1681 = vmatpush1.msra.mxu0 0.0
  %1682 = vmatprep.subr.mxu0 0.0
  %1683 = vmatpush1.msra.mxu0 0.0
  %1684 = vmatprep.subr.mxu0 0.0
  %1685 = vmatpush1.msra.mxu0 0.0
  %1686 = vmatprep.subr.mxu0 0.0
  %1687 = vmatpush1.msra.mxu0 0.0
  %1688 = vmatprep.subr.mxu0 0.0
  %1689 = vmatpush1.msra.mxu0 0.0
  %1690 = vmatprep.subr.mxu0 0.0
  %1691 = vmatpush1.msra.mxu0 0.0
  %1692 = vmatprep.subr.mxu0 %v1595
  %1693 = vmatpush1.msra.mxu0 %v1592
  %1694 = vmatprep.subr.mxu0 %v1404
  %1695 = vmatpush1.msra.mxu0 %v1403
  %1696 = vmatprep.subr.mxu0 %v1379
  %1697 = vmatpush1.msra.mxu0 %v1378
  %1698 = vmatprep.subr.mxu0 0.0
  %1699 = vmatpush2.msra.mxu0 0.0
  %1700 = vmatprep.subr.mxu0 0.0
  %1701 = vmatpush2.msra.mxu0 0.0
  %1702 = vmatprep.subr.mxu0 0.0
  %1703 = vmatpush2.msra.mxu0 0.0
  %1704 = vmatprep.subr.mxu0 0.0
  %1705 = vmatpush2.msra.mxu0 0.0
  %1706 = vmatprep.subr.mxu0 0.0
  %1707 = vmatpush2.msra.mxu0 0.0
  %1708 = vmatprep.subr.mxu0 0.0
  %1709 = vmatpush2.msra.mxu0 0.0
  %1710 = vmatprep.subr.mxu0 0.0
  %1711 = vmatpush2.msra.mxu0 0.0
  %1712 = vmatprep.subr.mxu0 0.0
  %1713 = vmatpush2.msra.mxu0 0.0
  %1714 = vmatprep.subr.mxu0 0.0
  %1715 = vmatpush2.msra.mxu0 0.0
  %1716 = vmatprep.subr.mxu0 0.0
  %1717 = vmatpush2.msra.mxu0 0.0
  %1718 = vmatprep.subr.mxu0 0.0
  %1719 = vmatpush2.msra.mxu0 0.0
  %1720 = vmatprep.subr.mxu0 0.0
  %1721 = vmatpush2.msra.mxu0 0.0
  %1722 = vmatprep.subr.mxu0 0.0
  %1723 = vmatpush2.msra.mxu0 0.0
  %1724 = vmatprep.subr.mxu0 0.0
  %1725 = vmatpush2.msra.mxu0 0.0
  %1726 = vmatprep.subr.mxu0 0.0
  %1727 = vmatpush2.msra.mxu0 0.0
  %1728 = vmatprep.subr.mxu0 0.0
  %1729 = vmatpush2.msra.mxu0 0.0
  %1730 = vmatprep.mubr.f32.mxu0 0.0
  %1731 = vmatmul.mubr.f32.gmra.mxu0 %v1588
  %v1732 = vpop.f32.mrf.mxu0
  %v1733 = vadd.f32 %v1464, %v1732
  %v1734 = vpop.f32.mrf.mxu0
  %v1735 = vadd.f32 %v1468, %v1734
  %1736 = vdwg.mxu0
  %1737 = vmatprep.subr.mxu0 0.0
  %1738 = vmatpush1.msra.mxu0 0.0
  %1739 = vmatprep.subr.mxu0 0.0
  %1740 = vmatpush1.msra.mxu0 0.0
  %1741 = vmatprep.subr.mxu0 0.0
  %1742 = vmatpush1.msra.mxu0 0.0
  %1743 = vmatprep.subr.mxu0 0.0
  %1744 = vmatpush1.msra.mxu0 0.0
  %1745 = vmatprep.subr.mxu0 0.0
  %1746 = vmatpush1.msra.mxu0 0.0
  %1747 = vmatprep.subr.mxu0 0.0
  %1748 = vmatpush1.msra.mxu0 0.0
  %1749 = vmatprep.subr.mxu0 0.0
  %1750 = vmatpush1.msra.mxu0 0.0
  %1751 = vmatprep.subr.mxu0 0.0
  %1752 = vmatpush1.msra.mxu0 0.0
  %1753 = vmatprep.subr.mxu0 0.0
  %1754 = vmatpush1.msra.mxu0 0.0
  %1755 = vmatprep.subr.mxu0 0.0
  %1756 = vmatpush1.msra.mxu0 0.0
  %1757 = vmatprep.subr.mxu0 0.0
  %1758 = vmatpush1.msra.mxu0 0.0
  %1759 = vmatprep.subr.mxu0 0.0
  %1760 = vmatpush1.msra.mxu0 0.0
  %1761 = vmatprep.subr.mxu0 0.0
  %1762 = vmatpush1.msra.mxu0 0.0
  %1763 = vmatprep.subr.mxu0 %v1601
  %1764 = vmatpush1.msra.mxu0 %v1598
  %1765 = vmatprep.subr.mxu0 %v1406
  %1766 = vmatpush1.msra.mxu0 %v1405
  %1767 = vmatprep.subr.mxu0 %v1381
  %1768 = vmatpush1.msra.mxu0 %v1380
  %1769 = vmatprep.subr.mxu0 0.0
  %1770 = vmatpush2.msra.mxu0 0.0
  %1771 = vmatprep.subr.mxu0 0.0
  %1772 = vmatpush2.msra.mxu0 0.0
  %1773 = vmatprep.subr.mxu0 0.0
  %1774 = vmatpush2.msra.mxu0 0.0
  %1775 = vmatprep.subr.mxu0 0.0
  %1776 = vmatpush2.msra.mxu0 0.0
  %1777 = vmatprep.subr.mxu0 0.0
  %1778 = vmatpush2.msra.mxu0 0.0
  %1779 = vmatprep.subr.mxu0 0.0
  %1780 = vmatpush2.msra.mxu0 0.0
  %1781 = vmatprep.subr.mxu0 0.0
  %1782 = vmatpush2.msra.mxu0 0.0
  %1783 = vmatprep.subr.mxu0 0.0
  %1784 = vmatpush2.msra.mxu0 0.0
  %1785 = vmatprep.subr.mxu0 0.0
  %1786 = vmatpush2.msra.mxu0 0.0
  %1787 = vmatprep.subr.mxu0 0.0
  %1788 = vmatpush2.msra.mxu0 0.0
  %1789 = vmatprep.subr.mxu0 0.0
  %1790 = vmatpush2.msra.mxu0 0.0
  %1791 = vmatprep.subr.mxu0 0.0
  %1792 = vmatpush2.msra.mxu0 0.0
  %1793 = vmatprep.subr.mxu0 0.0
  %1794 = vmatpush2.msra.mxu0 0.0
  %1795 = vmatprep.subr.mxu0 0.0
  %1796 = vmatpush2.msra.mxu0 0.0
  %1797 = vmatprep.subr.mxu0 0.0
  %1798 = vmatpush2.msra.mxu0 0.0
  %1799 = vmatprep.subr.mxu0 0.0
  %1800 = vmatpush2.msra.mxu0 0.0
  %1801 = vmatprep.mubr.f32.mxu0 0.0
  %1802 = vmatmul.mubr.f32.gmra.mxu0 %v1588
  %v1803 = vpop.f32.mrf.mxu0
  %v1804 = vadd.f32 %v1472, %v1803
  %v1805 = vpop.f32.mrf.mxu0
  %v1806 = vadd.f32 %v1476, %v1805
  %1807 = vdwg.mxu0
  %1808 = vmatprep.subr.mxu0 0.0
  %1809 = vmatpush1.msra.mxu0 0.0
  %1810 = vmatprep.subr.mxu0 0.0
  %1811 = vmatpush1.msra.mxu0 0.0
  %1812 = vmatprep.subr.mxu0 0.0
  %1813 = vmatpush1.msra.mxu0 0.0
  %1814 = vmatprep.subr.mxu0 0.0
  %1815 = vmatpush1.msra.mxu0 0.0
  %1816 = vmatprep.subr.mxu0 0.0
  %1817 = vmatpush1.msra.mxu0 0.0
  %1818 = vmatprep.subr.mxu0 0.0
  %1819 = vmatpush1.msra.mxu0 0.0
  %1820 = vmatprep.subr.mxu0 0.0
  %1821 = vmatpush1.msra.mxu0 0.0
  %1822 = vmatprep.subr.mxu0 0.0
  %1823 = vmatpush1.msra.mxu0 0.0
  %1824 = vmatprep.subr.mxu0 0.0
  %1825 = vmatpush1.msra.mxu0 0.0
  %1826 = vmatprep.subr.mxu0 0.0
  %1827 = vmatpush1.msra.mxu0 0.0
  %1828 = vmatprep.subr.mxu0 0.0
  %1829 = vmatpush1.msra.mxu0 0.0
  %1830 = vmatprep.subr.mxu0 0.0
  %1831 = vmatpush1.msra.mxu0 0.0
  %1832 = vmatprep.subr.mxu0 0.0
  %1833 = vmatpush1.msra.mxu0 0.0
  %1834 = vmatprep.subr.mxu0 %v1607
  %1835 = vmatpush1.msra.mxu0 %v1604
  %1836 = vmatprep.subr.mxu0 %v1408
  %1837 = vmatpush1.msra.mxu0 %v1407
  %1838 = vmatprep.subr.mxu0 %v1383
  %1839 = vmatpush1.msra.mxu0 %v1382
  %1840 = vmatprep.subr.mxu0 0.0
  %1841 = vmatpush2.msra.mxu0 0.0
  %1842 = vmatprep.subr.mxu0 0.0
  %1843 = vmatpush2.msra.mxu0 0.0
  %1844 = vmatprep.subr.mxu0 0.0
  %1845 = vmatpush2.msra.mxu0 0.0
  %1846 = vmatprep.subr.mxu0 0.0
  %1847 = vmatpush2.msra.mxu0 0.0
  %1848 = vmatprep.subr.mxu0 0.0
  %1849 = vmatpush2.msra.mxu0 0.0
  %1850 = vmatprep.subr.mxu0 0.0
  %1851 = vmatpush2.msra.mxu0 0.0
  %1852 = vmatprep.subr.mxu0 0.0
  %1853 = vmatpush2.msra.mxu0 0.0
  %1854 = vmatprep.subr.mxu0 0.0
  %1855 = vmatpush2.msra.mxu0 0.0
  %1856 = vmatprep.subr.mxu0 0.0
  %1857 = vmatpush2.msra.mxu0 0.0
  %1858 = vmatprep.subr.mxu0 0.0
  %1859 = vmatpush2.msra.mxu0 0.0
  %1860 = vmatprep.subr.mxu0 0.0
  %1861 = vmatpush2.msra.mxu0 0.0
  %1862 = vmatprep.subr.mxu0 0.0
  %1863 = vmatpush2.msra.mxu0 0.0
  %1864 = vmatprep.subr.mxu0 0.0
  %1865 = vmatpush2.msra.mxu0 0.0
  %1866 = vmatprep.subr.mxu0 0.0
  %1867 = vmatpush2.msra.mxu0 0.0
  %1868 = vmatprep.subr.mxu0 0.0
  %1869 = vmatpush2.msra.mxu0 0.0
  %1870 = vmatprep.subr.mxu0 0.0
  %1871 = vmatpush2.msra.mxu0 0.0
  %1872 = vmatprep.mubr.f32.mxu0 0.0
  %1873 = vmatmul.mubr.f32.gmra.mxu0 %v1588
  %v1874 = vpop.f32.mrf.mxu0
  %v1875 = vadd.f32 %v1480, %v1874
  %v1876 = vpop.f32.mrf.mxu0
  %v1877 = vadd.f32 %v1484, %v1876
  %1878 = vdwg.mxu0
  %1879 = vmatprep.subr.mxu0 0.0
  %1880 = vmatpush1.msra.mxu0 0.0
  %1881 = vmatprep.subr.mxu0 0.0
  %1882 = vmatpush1.msra.mxu0 0.0
  %1883 = vmatprep.subr.mxu0 0.0
  %1884 = vmatpush1.msra.mxu0 0.0
  %1885 = vmatprep.subr.mxu0 0.0
  %1886 = vmatpush1.msra.mxu0 0.0
  %1887 = vmatprep.subr.mxu0 0.0
  %1888 = vmatpush1.msra.mxu0 0.0
  %1889 = vmatprep.subr.mxu0 0.0
  %1890 = vmatpush1.msra.mxu0 0.0
  %1891 = vmatprep.subr.mxu0 0.0
  %1892 = vmatpush1.msra.mxu0 0.0
  %1893 = vmatprep.subr.mxu0 0.0
  %1894 = vmatpush1.msra.mxu0 0.0
  %1895 = vmatprep.subr.mxu0 0.0
  %1896 = vmatpush1.msra.mxu0 0.0
  %1897 = vmatprep.subr.mxu0 0.0
  %1898 = vmatpush1.msra.mxu0 0.0
  %1899 = vmatprep.subr.mxu0 0.0
  %1900 = vmatpush1.msra.mxu0 0.0
  %1901 = vmatprep.subr.mxu0 0.0
  %1902 = vmatpush1.msra.mxu0 0.0
  %1903 = vmatprep.subr.mxu0 0.0
  %1904 = vmatpush1.msra.mxu0 0.0
  %1905 = vmatprep.subr.mxu0 %v1613
  %1906 = vmatpush1.msra.mxu0 %v1610
  %1907 = vmatprep.subr.mxu0 %v1410
  %1908 = vmatpush1.msra.mxu0 %v1409
  %1909 = vmatprep.subr.mxu0 %v1385
  %1910 = vmatpush1.msra.mxu0 %v1384
  %1911 = vmatprep.subr.mxu0 0.0
  %1912 = vmatpush2.msra.mxu0 0.0
  %1913 = vmatprep.subr.mxu0 0.0
  %1914 = vmatpush2.msra.mxu0 0.0
  %1915 = vmatprep.subr.mxu0 0.0
  %1916 = vmatpush2.msra.mxu0 0.0
  %1917 = vmatprep.subr.mxu0 0.0
  %1918 = vmatpush2.msra.mxu0 0.0
  %1919 = vmatprep.subr.mxu0 0.0
  %1920 = vmatpush2.msra.mxu0 0.0
  %1921 = vmatprep.subr.mxu0 0.0
  %1922 = vmatpush2.msra.mxu0 0.0
  %1923 = vmatprep.subr.mxu0 0.0
  %1924 = vmatpush2.msra.mxu0 0.0
  %1925 = vmatprep.subr.mxu0 0.0
  %1926 = vmatpush2.msra.mxu0 0.0
  %1927 = vmatprep.subr.mxu0 0.0
  %1928 = vmatpush2.msra.mxu0 0.0
  %1929 = vmatprep.subr.mxu0 0.0
  %1930 = vmatpush2.msra.mxu0 0.0
  %1931 = vmatprep.subr.mxu0 0.0
  %1932 = vmatpush2.msra.mxu0 0.0
  %1933 = vmatprep.subr.mxu0 0.0
  %1934 = vmatpush2.msra.mxu0 0.0
  %1935 = vmatprep.subr.mxu0 0.0
  %1936 = vmatpush2.msra.mxu0 0.0
  %1937 = vmatprep.subr.mxu0 0.0
  %1938 = vmatpush2.msra.mxu0 0.0
  %1939 = vmatprep.subr.mxu0 0.0
  %1940 = vmatpush2.msra.mxu0 0.0
  %1941 = vmatprep.subr.mxu0 0.0
  %1942 = vmatpush2.msra.mxu0 0.0
  %1943 = vmatprep.mubr.f32.mxu0 0.0
  %1944 = vmatmul.mubr.f32.gmra.mxu0 %v1588
  %v1945 = vpop.f32.mrf.mxu0
  %v1946 = vadd.f32 %v1488, %v1945
  %v1947 = vpop.f32.mrf.mxu0
  %v1948 = vadd.f32 %v1492, %v1947
  %1949 = vdwg.mxu0
  %1950 = vmatprep.subr.mxu0 0.0
  %1951 = vmatpush1.msra.mxu0 0.0
  %1952 = vmatprep.subr.mxu0 0.0
  %1953 = vmatpush1.msra.mxu0 0.0
  %1954 = vmatprep.subr.mxu0 0.0
  %1955 = vmatpush1.msra.mxu0 0.0
  %1956 = vmatprep.subr.mxu0 0.0
  %1957 = vmatpush1.msra.mxu0 0.0
  %1958 = vmatprep.subr.mxu0 0.0
  %1959 = vmatpush1.msra.mxu0 0.0
  %1960 = vmatprep.subr.mxu0 0.0
  %1961 = vmatpush1.msra.mxu0 0.0
  %1962 = vmatprep.subr.mxu0 0.0
  %1963 = vmatpush1.msra.mxu0 0.0
  %1964 = vmatprep.subr.mxu0 0.0
  %1965 = vmatpush1.msra.mxu0 0.0
  %1966 = vmatprep.subr.mxu0 0.0
  %1967 = vmatpush1.msra.mxu0 0.0
  %1968 = vmatprep.subr.mxu0 0.0
  %1969 = vmatpush1.msra.mxu0 0.0
  %1970 = vmatprep.subr.mxu0 0.0
  %1971 = vmatpush1.msra.mxu0 0.0
  %1972 = vmatprep.subr.mxu0 0.0
  %1973 = vmatpush1.msra.mxu0 0.0
  %1974 = vmatprep.subr.mxu0 0.0
  %1975 = vmatpush1.msra.mxu0 0.0
  %1976 = vmatprep.subr.mxu0 %v1619
  %1977 = vmatpush1.msra.mxu0 %v1616
  %1978 = vmatprep.subr.mxu0 %v1412
  %1979 = vmatpush1.msra.mxu0 %v1411
  %1980 = vmatprep.subr.mxu0 %v1387
  %1981 = vmatpush1.msra.mxu0 %v1386
  %1982 = vmatprep.subr.mxu0 0.0
  %1983 = vmatpush2.msra.mxu0 0.0
  %1984 = vmatprep.subr.mxu0 0.0
  %1985 = vmatpush2.msra.mxu0 0.0
  %1986 = vmatprep.subr.mxu0 0.0
  %1987 = vmatpush2.msra.mxu0 0.0
  %1988 = vmatprep.subr.mxu0 0.0
  %1989 = vmatpush2.msra.mxu0 0.0
  %1990 = vmatprep.subr.mxu0 0.0
  %1991 = vmatpush2.msra.mxu0 0.0
  %1992 = vmatprep.subr.mxu0 0.0
  %1993 = vmatpush2.msra.mxu0 0.0
  %1994 = vmatprep.subr.mxu0 0.0
  %1995 = vmatpush2.msra.mxu0 0.0
  %1996 = vmatprep.subr.mxu0 0.0
  %1997 = vmatpush2.msra.mxu0 0.0
  %1998 = vmatprep.subr.mxu0 0.0
  %1999 = vmatpush2.msra.mxu0 0.0
  %2000 = vmatprep.subr.mxu0 0.0
  %2001 = vmatpush2.msra.mxu0 0.0
  %2002 = vmatprep.subr.mxu0 0.0
  %2003 = vmatpush2.msra.mxu0 0.0
  %2004 = vmatprep.subr.mxu0 0.0
  %2005 = vmatpush2.msra.mxu0 0.0
  %2006 = vmatprep.subr.mxu0 0.0
  %2007 = vmatpush2.msra.mxu0 0.0
  %2008 = vmatprep.subr.mxu0 0.0
  %2009 = vmatpush2.msra.mxu0 0.0
  %2010 = vmatprep.subr.mxu0 0.0
  %2011 = vmatpush2.msra.mxu0 0.0
  %2012 = vmatprep.subr.mxu0 0.0
  %2013 = vmatpush2.msra.mxu0 0.0
  %2014 = vmatprep.mubr.f32.mxu0 0.0
  %2015 = vmatmul.mubr.f32.gmra.mxu0 %v1588
  %v2016 = vpop.f32.mrf.mxu0
  %v2017 = vadd.f32 %v1496, %v2016
  %v2018 = vpop.f32.mrf.mxu0
  %v2019 = vadd.f32 %v1500, %v2018
  %2020 = vdwg.mxu0
  %2021 = vmatprep.subr.mxu0 0.0
  %2022 = vmatpush1.msra.mxu0 0.0
  %2023 = vmatprep.subr.mxu0 0.0
  %2024 = vmatpush1.msra.mxu0 0.0
  %2025 = vmatprep.subr.mxu0 0.0
  %2026 = vmatpush1.msra.mxu0 0.0
  %2027 = vmatprep.subr.mxu0 0.0
  %2028 = vmatpush1.msra.mxu0 0.0
  %2029 = vmatprep.subr.mxu0 0.0
  %2030 = vmatpush1.msra.mxu0 0.0
  %2031 = vmatprep.subr.mxu0 0.0
  %2032 = vmatpush1.msra.mxu0 0.0
  %2033 = vmatprep.subr.mxu0 0.0
  %2034 = vmatpush1.msra.mxu0 0.0
  %2035 = vmatprep.subr.mxu0 0.0
  %2036 = vmatpush1.msra.mxu0 0.0
  %2037 = vmatprep.subr.mxu0 0.0
  %2038 = vmatpush1.msra.mxu0 0.0
  %2039 = vmatprep.subr.mxu0 0.0
  %2040 = vmatpush1.msra.mxu0 0.0
  %2041 = vmatprep.subr.mxu0 0.0
  %2042 = vmatpush1.msra.mxu0 0.0
  %2043 = vmatprep.subr.mxu0 0.0
  %2044 = vmatpush1.msra.mxu0 0.0
  %2045 = vmatprep.subr.mxu0 0.0
  %2046 = vmatpush1.msra.mxu0 0.0
  %2047 = vmatprep.subr.mxu0 %v1625
  %2048 = vmatpush1.msra.mxu0 %v1622
  %2049 = vmatprep.subr.mxu0 %v1414
  %2050 = vmatpush1.msra.mxu0 %v1413
  %2051 = vmatprep.subr.mxu0 %v1389
  %2052 = vmatpush1.msra.mxu0 %v1388
  %2053 = vmatprep.subr.mxu0 0.0
  %2054 = vmatpush2.msra.mxu0 0.0
  %2055 = vmatprep.subr.mxu0 0.0
  %2056 = vmatpush2.msra.mxu0 0.0
  %2057 = vmatprep.subr.mxu0 0.0
  %2058 = vmatpush2.msra.mxu0 0.0
  %2059 = vmatprep.subr.mxu0 0.0
  %2060 = vmatpush2.msra.mxu0 0.0
  %2061 = vmatprep.subr.mxu0 0.0
  %2062 = vmatpush2.msra.mxu0 0.0
  %2063 = vmatprep.subr.mxu0 0.0
  %2064 = vmatpush2.msra.mxu0 0.0
  %2065 = vmatprep.subr.mxu0 0.0
  %2066 = vmatpush2.msra.mxu0 0.0
  %2067 = vmatprep.subr.mxu0 0.0
  %2068 = vmatpush2.msra.mxu0 0.0
  %2069 = vmatprep.subr.mxu0 0.0
  %2070 = vmatpush2.msra.mxu0 0.0
  %2071 = vmatprep.subr.mxu0 0.0
  %2072 = vmatpush2.msra.mxu0 0.0
  %2073 = vmatprep.subr.mxu0 0.0
  %2074 = vmatpush2.msra.mxu0 0.0
  %2075 = vmatprep.subr.mxu0 0.0
  %2076 = vmatpush2.msra.mxu0 0.0
  %2077 = vmatprep.subr.mxu0 0.0
  %2078 = vmatpush2.msra.mxu0 0.0
  %2079 = vmatprep.subr.mxu0 0.0
  %2080 = vmatpush2.msra.mxu0 0.0
  %2081 = vmatprep.subr.mxu0 0.0
  %2082 = vmatpush2.msra.mxu0 0.0
  %2083 = vmatprep.subr.mxu0 0.0
  %2084 = vmatpush2.msra.mxu0 0.0
  %2085 = vmatprep.mubr.f32.mxu0 0.0
  %2086 = vmatmul.mubr.f32.gmra.mxu0 %v1588
  %v2087 = vpop.f32.mrf.mxu0
  %v2088 = vadd.f32 %v1504, %v2087
  %v2089 = vpop.f32.mrf.mxu0
  %v2090 = vadd.f32 %v1508, %v2089
  %2091 = vdwg.mxu0
  %2092 = vmatprep.subr.mxu0 0.0
  %2093 = vmatpush1.msra.mxu0 0.0
  %2094 = vmatprep.subr.mxu0 0.0
  %2095 = vmatpush1.msra.mxu0 0.0
  %2096 = vmatprep.subr.mxu0 0.0
  %2097 = vmatpush1.msra.mxu0 0.0
  %2098 = vmatprep.subr.mxu0 0.0
  %2099 = vmatpush1.msra.mxu0 0.0
  %2100 = vmatprep.subr.mxu0 0.0
  %2101 = vmatpush1.msra.mxu0 0.0
  %2102 = vmatprep.subr.mxu0 0.0
  %2103 = vmatpush1.msra.mxu0 0.0
  %2104 = vmatprep.subr.mxu0 0.0
  %2105 = vmatpush1.msra.mxu0 0.0
  %2106 = vmatprep.subr.mxu0 0.0
  %2107 = vmatpush1.msra.mxu0 0.0
  %2108 = vmatprep.subr.mxu0 0.0
  %2109 = vmatpush1.msra.mxu0 0.0
  %2110 = vmatprep.subr.mxu0 0.0
  %2111 = vmatpush1.msra.mxu0 0.0
  %2112 = vmatprep.subr.mxu0 0.0
  %2113 = vmatpush1.msra.mxu0 0.0
  %2114 = vmatprep.subr.mxu0 0.0
  %2115 = vmatpush1.msra.mxu0 0.0
  %2116 = vmatprep.subr.mxu0 0.0
  %2117 = vmatpush1.msra.mxu0 0.0
  %2118 = vmatprep.subr.mxu0 %v1631
  %2119 = vmatpush1.msra.mxu0 %v1628
  %2120 = vmatprep.subr.mxu0 %v1416
  %2121 = vmatpush1.msra.mxu0 %v1415
  %2122 = vmatprep.subr.mxu0 %v1391
  %2123 = vmatpush1.msra.mxu0 %v1390
  %2124 = vmatprep.subr.mxu0 0.0
  %2125 = vmatpush2.msra.mxu0 0.0
  %2126 = vmatprep.subr.mxu0 0.0
  %2127 = vmatpush2.msra.mxu0 0.0
  %2128 = vmatprep.subr.mxu0 0.0
  %2129 = vmatpush2.msra.mxu0 0.0
  %2130 = vmatprep.subr.mxu0 0.0
  %2131 = vmatpush2.msra.mxu0 0.0
  %2132 = vmatprep.subr.mxu0 0.0
  %2133 = vmatpush2.msra.mxu0 0.0
  %2134 = vmatprep.subr.mxu0 0.0
  %2135 = vmatpush2.msra.mxu0 0.0
  %2136 = vmatprep.subr.mxu0 0.0
  %2137 = vmatpush2.msra.mxu0 0.0
  %2138 = vmatprep.subr.mxu0 0.0
  %2139 = vmatpush2.msra.mxu0 0.0
  %2140 = vmatprep.subr.mxu0 0.0
  %2141 = vmatpush2.msra.mxu0 0.0
  %2142 = vmatprep.subr.mxu0 0.0
  %2143 = vmatpush2.msra.mxu0 0.0
  %2144 = vmatprep.subr.mxu0 0.0
  %2145 = vmatpush2.msra.mxu0 0.0
  %2146 = vmatprep.subr.mxu0 0.0
  %2147 = vmatpush2.msra.mxu0 0.0
  %2148 = vmatprep.subr.mxu0 0.0
  %2149 = vmatpush2.msra.mxu0 0.0
  %2150 = vmatprep.subr.mxu0 0.0
  %2151 = vmatpush2.msra.mxu0 0.0
  %2152 = vmatprep.subr.mxu0 0.0
  %2153 = vmatpush2.msra.mxu0 0.0
  %2154 = vmatprep.subr.mxu0 0.0
  %2155 = vmatpush2.msra.mxu0 0.0
  %2156 = vmatprep.mubr.f32.mxu0 0.0
  %2157 = vmatmul.mubr.f32.gmra.mxu0 %v1588
  %v2158 = vpop.f32.mrf.mxu0
  %v2159 = vadd.f32 %v1512, %v2158
  %v2160 = vpop.f32.mrf.mxu0
  %v2161 = vadd.f32 %v1516, %v2160
  %2162 = vdwg.mxu0
  %2163 = vmatprep.subr.mxu0 0.0
  %2164 = vmatpush1.msra.mxu0 0.0
  %2165 = vmatprep.subr.mxu0 0.0
  %2166 = vmatpush1.msra.mxu0 0.0
  %2167 = vmatprep.subr.mxu0 0.0
  %2168 = vmatpush1.msra.mxu0 0.0
  %2169 = vmatprep.subr.mxu0 0.0
  %2170 = vmatpush1.msra.mxu0 0.0
  %2171 = vmatprep.subr.mxu0 0.0
  %2172 = vmatpush1.msra.mxu0 0.0
  %2173 = vmatprep.subr.mxu0 0.0
  %2174 = vmatpush1.msra.mxu0 0.0
  %2175 = vmatprep.subr.mxu0 0.0
  %2176 = vmatpush1.msra.mxu0 0.0
  %2177 = vmatprep.subr.mxu0 0.0
  %2178 = vmatpush1.msra.mxu0 0.0
  %2179 = vmatprep.subr.mxu0 0.0
  %2180 = vmatpush1.msra.mxu0 0.0
  %2181 = vmatprep.subr.mxu0 0.0
  %2182 = vmatpush1.msra.mxu0 0.0
  %2183 = vmatprep.subr.mxu0 0.0
  %2184 = vmatpush1.msra.mxu0 0.0
  %2185 = vmatprep.subr.mxu0 0.0
  %2186 = vmatpush1.msra.mxu0 0.0
  %2187 = vmatprep.subr.mxu0 0.0
  %2188 = vmatpush1.msra.mxu0 0.0
  %2189 = vmatprep.subr.mxu0 %v1637
  %2190 = vmatpush1.msra.mxu0 %v1634
  %2191 = vmatprep.subr.mxu0 %v1418
  %2192 = vmatpush1.msra.mxu0 %v1417
  %2193 = vmatprep.subr.mxu0 %v1393
  %2194 = vmatpush1.msra.mxu0 %v1392
  %2195 = vmatprep.subr.mxu0 0.0
  %2196 = vmatpush2.msra.mxu0 0.0
  %2197 = vmatprep.subr.mxu0 0.0
  %2198 = vmatpush2.msra.mxu0 0.0
  %2199 = vmatprep.subr.mxu0 0.0
  %2200 = vmatpush2.msra.mxu0 0.0
  %2201 = vmatprep.subr.mxu0 0.0
  %2202 = vmatpush2.msra.mxu0 0.0
  %2203 = vmatprep.subr.mxu0 0.0
  %2204 = vmatpush2.msra.mxu0 0.0
  %2205 = vmatprep.subr.mxu0 0.0
  %2206 = vmatpush2.msra.mxu0 0.0
  %2207 = vmatprep.subr.mxu0 0.0
  %2208 = vmatpush2.msra.mxu0 0.0
  %2209 = vmatprep.subr.mxu0 0.0
  %2210 = vmatpush2.msra.mxu0 0.0
  %2211 = vmatprep.subr.mxu0 0.0
  %2212 = vmatpush2.msra.mxu0 0.0
  %2213 = vmatprep.subr.mxu0 0.0
  %2214 = vmatpush2.msra.mxu0 0.0
  %2215 = vmatprep.subr.mxu0 0.0
  %2216 = vmatpush2.msra.mxu0 0.0
  %2217 = vmatprep.subr.mxu0 0.0
  %2218 = vmatpush2.msra.mxu0 0.0
  %2219 = vmatprep.subr.mxu0 0.0
  %2220 = vmatpush2.msra.mxu0 0.0
  %2221 = vmatprep.subr.mxu0 0.0
  %2222 = vmatpush2.msra.mxu0 0.0
  %2223 = vmatprep.subr.mxu0 0.0
  %2224 = vmatpush2.msra.mxu0 0.0
  %2225 = vmatprep.subr.mxu0 0.0
  %2226 = vmatpush2.msra.mxu0 0.0
  %2227 = vmatprep.mubr.f32.mxu0 0.0
  %2228 = vmatmul.mubr.f32.gmra.mxu0 %v1588
  %v2229 = vpop.f32.mrf.mxu0
  %v2230 = vadd.f32 %v1520, %v2229
  %v2231 = vpop.f32.mrf.mxu0
  %v2232 = vadd.f32 %v1524, %v2231
  %2233 = vdwg.mxu0
  %2234 = vmatprep.subr.mxu0 0.0
  %2235 = vmatpush1.msra.mxu0 0.0
  %2236 = vmatprep.subr.mxu0 0.0
  %2237 = vmatpush1.msra.mxu0 0.0
  %2238 = vmatprep.subr.mxu0 0.0
  %2239 = vmatpush1.msra.mxu0 0.0
  %2240 = vmatprep.subr.mxu0 0.0
  %2241 = vmatpush1.msra.mxu0 0.0
  %2242 = vmatprep.subr.mxu0 0.0
  %2243 = vmatpush1.msra.mxu0 0.0
  %2244 = vmatprep.subr.mxu0 0.0
  %2245 = vmatpush1.msra.mxu0 0.0
  %2246 = vmatprep.subr.mxu0 0.0
  %2247 = vmatpush1.msra.mxu0 0.0
  %2248 = vmatprep.subr.mxu0 0.0
  %2249 = vmatpush1.msra.mxu0 0.0
  %2250 = vmatprep.subr.mxu0 0.0
  %2251 = vmatpush1.msra.mxu0 0.0
  %2252 = vmatprep.subr.mxu0 0.0
  %2253 = vmatpush1.msra.mxu0 0.0
  %2254 = vmatprep.subr.mxu0 0.0
  %2255 = vmatpush1.msra.mxu0 0.0
  %2256 = vmatprep.subr.mxu0 0.0
  %2257 = vmatpush1.msra.mxu0 0.0
  %2258 = vmatprep.subr.mxu0 0.0
  %2259 = vmatpush1.msra.mxu0 0.0
  %2260 = vmatprep.subr.mxu0 %v1643
  %2261 = vmatpush1.msra.mxu0 %v1640
  %2262 = vmatprep.subr.mxu0 %v1420
  %2263 = vmatpush1.msra.mxu0 %v1419
  %2264 = vmatprep.subr.mxu0 %v1395
  %2265 = vmatpush1.msra.mxu0 %v1394
  %2266 = vmatprep.subr.mxu0 0.0
  %2267 = vmatpush2.msra.mxu0 0.0
  %2268 = vmatprep.subr.mxu0 0.0
  %2269 = vmatpush2.msra.mxu0 0.0
  %2270 = vmatprep.subr.mxu0 0.0
  %2271 = vmatpush2.msra.mxu0 0.0
  %2272 = vmatprep.subr.mxu0 0.0
  %2273 = vmatpush2.msra.mxu0 0.0
  %2274 = vmatprep.subr.mxu0 0.0
  %2275 = vmatpush2.msra.mxu0 0.0
  %2276 = vmatprep.subr.mxu0 0.0
  %2277 = vmatpush2.msra.mxu0 0.0
  %2278 = vmatprep.subr.mxu0 0.0
  %2279 = vmatpush2.msra.mxu0 0.0
  %2280 = vmatprep.subr.mxu0 0.0
  %2281 = vmatpush2.msra.mxu0 0.0
  %2282 = vmatprep.subr.mxu0 0.0
  %2283 = vmatpush2.msra.mxu0 0.0
  %2284 = vmatprep.subr.mxu0 0.0
  %2285 = vmatpush2.msra.mxu0 0.0
  %2286 = vmatprep.subr.mxu0 0.0
  %2287 = vmatpush2.msra.mxu0 0.0
  %2288 = vmatprep.subr.mxu0 0.0
  %2289 = vmatpush2.msra.mxu0 0.0
  %2290 = vmatprep.subr.mxu0 0.0
  %2291 = vmatpush2.msra.mxu0 0.0
  %2292 = vmatprep.subr.mxu0 0.0
  %2293 = vmatpush2.msra.mxu0 0.0
  %2294 = vmatprep.subr.mxu0 0.0
  %2295 = vmatpush2.msra.mxu0 0.0
  %2296 = vmatprep.subr.mxu0 0.0
  %2297 = vmatpush2.msra.mxu0 0.0
  %2298 = vmatprep.mubr.f32.mxu0 0.0
  %2299 = vmatmul.mubr.f32.gmra.mxu0 %v1588
  %v2300 = vpop.f32.mrf.mxu0
  %v2301 = vadd.f32 %v1528, %v2300
  %v2302 = vpop.f32.mrf.mxu0
  %v2303 = vadd.f32 %v1532, %v2302
  %2304 = vdwg.mxu0
  %2305 = vmatprep.subr.mxu0 0.0
  %2306 = vmatpush1.msra.mxu0 0.0
  %2307 = vmatprep.subr.mxu0 0.0
  %2308 = vmatpush1.msra.mxu0 0.0
  %2309 = vmatprep.subr.mxu0 0.0
  %2310 = vmatpush1.msra.mxu0 0.0
  %2311 = vmatprep.subr.mxu0 0.0
  %2312 = vmatpush1.msra.mxu0 0.0
  %2313 = vmatprep.subr.mxu0 0.0
  %2314 = vmatpush1.msra.mxu0 0.0
  %2315 = vmatprep.subr.mxu0 0.0
  %2316 = vmatpush1.msra.mxu0 0.0
  %2317 = vmatprep.subr.mxu0 0.0
  %2318 = vmatpush1.msra.mxu0 0.0
  %2319 = vmatprep.subr.mxu0 0.0
  %2320 = vmatpush1.msra.mxu0 0.0
  %2321 = vmatprep.subr.mxu0 0.0
  %2322 = vmatpush1.msra.mxu0 0.0
  %2323 = vmatprep.subr.mxu0 0.0
  %2324 = vmatpush1.msra.mxu0 0.0
  %2325 = vmatprep.subr.mxu0 0.0
  %2326 = vmatpush1.msra.mxu0 0.0
  %2327 = vmatprep.subr.mxu0 0.0
  %2328 = vmatpush1.msra.mxu0 0.0
  %2329 = vmatprep.subr.mxu0 0.0
  %2330 = vmatpush1.msra.mxu0 0.0
  %2331 = vmatprep.subr.mxu0 %v1649
  %2332 = vmatpush1.msra.mxu0 %v1646
  %2333 = vmatprep.subr.mxu0 %v1422
  %2334 = vmatpush1.msra.mxu0 %v1421
  %2335 = vmatprep.subr.mxu0 %v1397
  %2336 = vmatpush1.msra.mxu0 %v1396
  %2337 = vmatprep.subr.mxu0 0.0
  %2338 = vmatpush2.msra.mxu0 0.0
  %2339 = vmatprep.subr.mxu0 0.0
  %2340 = vmatpush2.msra.mxu0 0.0
  %2341 = vmatprep.subr.mxu0 0.0
  %2342 = vmatpush2.msra.mxu0 0.0
  %2343 = vmatprep.subr.mxu0 0.0
  %2344 = vmatpush2.msra.mxu0 0.0
  %2345 = vmatprep.subr.mxu0 0.0
  %2346 = vmatpush2.msra.mxu0 0.0
  %2347 = vmatprep.subr.mxu0 0.0
  %2348 = vmatpush2.msra.mxu0 0.0
  %2349 = vmatprep.subr.mxu0 0.0
  %2350 = vmatpush2.msra.mxu0 0.0
  %2351 = vmatprep.subr.mxu0 0.0
  %2352 = vmatpush2.msra.mxu0 0.0
  %2353 = vmatprep.subr.mxu0 0.0
  %2354 = vmatpush2.msra.mxu0 0.0
  %2355 = vmatprep.subr.mxu0 0.0
  %2356 = vmatpush2.msra.mxu0 0.0
  %2357 = vmatprep.subr.mxu0 0.0
  %2358 = vmatpush2.msra.mxu0 0.0
  %2359 = vmatprep.subr.mxu0 0.0
  %2360 = vmatpush2.msra.mxu0 0.0
  %2361 = vmatprep.subr.mxu0 0.0
  %2362 = vmatpush2.msra.mxu0 0.0
  %2363 = vmatprep.subr.mxu0 0.0
  %2364 = vmatpush2.msra.mxu0 0.0
  %2365 = vmatprep.subr.mxu0 0.0
  %2366 = vmatpush2.msra.mxu0 0.0
  %2367 = vmatprep.subr.mxu0 0.0
  %2368 = vmatpush2.msra.mxu0 0.0
  %2369 = vmatprep.mubr.f32.mxu0 0.0
  %2370 = vmatmul.mubr.f32.gmra.mxu0 %v1588
  %v2371 = vpop.f32.mrf.mxu0
  %v2372 = vadd.f32 %v1536, %v2371
  %v2373 = vpop.f32.mrf.mxu0
  %v2374 = vadd.f32 %v1540, %v2373
  %2375 = vdwg.mxu0
  %2376 = vmatprep.subr.mxu0 0.0
  %2377 = vmatpush1.msra.mxu0 0.0
  %2378 = vmatprep.subr.mxu0 0.0
  %2379 = vmatpush1.msra.mxu0 0.0
  %2380 = vmatprep.subr.mxu0 0.0
  %2381 = vmatpush1.msra.mxu0 0.0
  %2382 = vmatprep.subr.mxu0 0.0
  %2383 = vmatpush1.msra.mxu0 0.0
  %2384 = vmatprep.subr.mxu0 0.0
  %2385 = vmatpush1.msra.mxu0 0.0
  %2386 = vmatprep.subr.mxu0 0.0
  %2387 = vmatpush1.msra.mxu0 0.0
  %2388 = vmatprep.subr.mxu0 0.0
  %2389 = vmatpush1.msra.mxu0 0.0
  %2390 = vmatprep.subr.mxu0 0.0
  %2391 = vmatpush1.msra.mxu0 0.0
  %2392 = vmatprep.subr.mxu0 0.0
  %2393 = vmatpush1.msra.mxu0 0.0
  %2394 = vmatprep.subr.mxu0 0.0
  %2395 = vmatpush1.msra.mxu0 0.0
  %2396 = vmatprep.subr.mxu0 0.0
  %2397 = vmatpush1.msra.mxu0 0.0
  %2398 = vmatprep.subr.mxu0 0.0
  %2399 = vmatpush1.msra.mxu0 0.0
  %2400 = vmatprep.subr.mxu0 0.0
  %2401 = vmatpush1.msra.mxu0 0.0
  %2402 = vmatprep.subr.mxu0 %v1655
  %2403 = vmatpush1.msra.mxu0 %v1652
  %2404 = vmatprep.subr.mxu0 %v1424
  %2405 = vmatpush1.msra.mxu0 %v1423
  %2406 = vmatprep.subr.mxu0 %v1399
  %2407 = vmatpush1.msra.mxu0 %v1398
  %2408 = vmatprep.subr.mxu0 0.0
  %2409 = vmatpush2.msra.mxu0 0.0
  %2410 = vmatprep.subr.mxu0 0.0
  %2411 = vmatpush2.msra.mxu0 0.0
  %2412 = vmatprep.subr.mxu0 0.0
  %2413 = vmatpush2.msra.mxu0 0.0
  %2414 = vmatprep.subr.mxu0 0.0
  %2415 = vmatpush2.msra.mxu0 0.0
  %2416 = vmatprep.subr.mxu0 0.0
  %2417 = vmatpush2.msra.mxu0 0.0
  %2418 = vmatprep.subr.mxu0 0.0
  %2419 = vmatpush2.msra.mxu0 0.0
  %2420 = vmatprep.subr.mxu0 0.0
  %2421 = vmatpush2.msra.mxu0 0.0
  %2422 = vmatprep.subr.mxu0 0.0
  %2423 = vmatpush2.msra.mxu0 0.0
  %2424 = vmatprep.subr.mxu0 0.0
  %2425 = vmatpush2.msra.mxu0 0.0
  %2426 = vmatprep.subr.mxu0 0.0
  %2427 = vmatpush2.msra.mxu0 0.0
  %2428 = vmatprep.subr.mxu0 0.0
  %2429 = vmatpush2.msra.mxu0 0.0
  %2430 = vmatprep.subr.mxu0 0.0
  %2431 = vmatpush2.msra.mxu0 0.0
  %2432 = vmatprep.subr.mxu0 0.0
  %2433 = vmatpush2.msra.mxu0 0.0
  %2434 = vmatprep.subr.mxu0 0.0
  %2435 = vmatpush2.msra.mxu0 0.0
  %2436 = vmatprep.subr.mxu0 0.0
  %2437 = vmatpush2.msra.mxu0 0.0
  %2438 = vmatprep.subr.mxu0 0.0
  %2439 = vmatpush2.msra.mxu0 0.0
  %2440 = vmatprep.mubr.f32.mxu0 0.0
  %2441 = vmatmul.mubr.f32.gmra.mxu0 %v1588
  %v2442 = vpop.f32.mrf.mxu0
  %v2443 = vadd.f32 %v1544, %v2442
  %v2444 = vpop.f32.mrf.mxu0
  %v2445 = vadd.f32 %v1548, %v2444
  %2446 = vdwg.mxu0
  %2447 = vmatprep.subr.mxu0 0.0
  %2448 = vmatpush1.msra.mxu0 0.0
  %2449 = vmatprep.subr.mxu0 0.0
  %2450 = vmatpush1.msra.mxu0 0.0
  %2451 = vmatprep.subr.mxu0 0.0
  %2452 = vmatpush1.msra.mxu0 0.0
  %2453 = vmatprep.subr.mxu0 0.0
  %2454 = vmatpush1.msra.mxu0 0.0
  %2455 = vmatprep.subr.mxu0 0.0
  %2456 = vmatpush1.msra.mxu0 0.0
  %2457 = vmatprep.subr.mxu0 0.0
  %2458 = vmatpush1.msra.mxu0 0.0
  %2459 = vmatprep.subr.mxu0 0.0
  %2460 = vmatpush1.msra.mxu0 0.0
  %2461 = vmatprep.subr.mxu0 0.0
  %2462 = vmatpush1.msra.mxu0 0.0
  %2463 = vmatprep.subr.mxu0 0.0
  %2464 = vmatpush1.msra.mxu0 0.0
  %2465 = vmatprep.subr.mxu0 0.0
  %2466 = vmatpush1.msra.mxu0 0.0
  %2467 = vmatprep.subr.mxu0 0.0
  %2468 = vmatpush1.msra.mxu0 0.0
  %2469 = vmatprep.subr.mxu0 0.0
  %2470 = vmatpush1.msra.mxu0 0.0
  %2471 = vmatprep.subr.mxu0 0.0
  %2472 = vmatpush1.msra.mxu0 0.0
  %2473 = vmatprep.subr.mxu0 %v1661
  %2474 = vmatpush1.msra.mxu0 %v1658
  %2475 = vmatprep.subr.mxu0 %v1426
  %2476 = vmatpush1.msra.mxu0 %v1425
  %2477 = vmatprep.subr.mxu0 %v1401
  %2478 = vmatpush1.msra.mxu0 %v1400
  %2479 = vmatprep.subr.mxu0 0.0
  %2480 = vmatpush2.msra.mxu0 0.0
  %2481 = vmatprep.subr.mxu0 0.0
  %2482 = vmatpush2.msra.mxu0 0.0
  %2483 = vmatprep.subr.mxu0 0.0
  %2484 = vmatpush2.msra.mxu0 0.0
  %2485 = vmatprep.subr.mxu0 0.0
  %2486 = vmatpush2.msra.mxu0 0.0
  %2487 = vmatprep.subr.mxu0 0.0
  %2488 = vmatpush2.msra.mxu0 0.0
  %2489 = vmatprep.subr.mxu0 0.0
  %2490 = vmatpush2.msra.mxu0 0.0
  %2491 = vmatprep.subr.mxu0 0.0
  %2492 = vmatpush2.msra.mxu0 0.0
  %2493 = vmatprep.subr.mxu0 0.0
  %2494 = vmatpush2.msra.mxu0 0.0
  %2495 = vmatprep.subr.mxu0 0.0
  %2496 = vmatpush2.msra.mxu0 0.0
  %2497 = vmatprep.subr.mxu0 0.0
  %2498 = vmatpush2.msra.mxu0 0.0
  %2499 = vmatprep.subr.mxu0 0.0
  %2500 = vmatpush2.msra.mxu0 0.0
  %2501 = vmatprep.subr.mxu0 0.0
  %2502 = vmatpush2.msra.mxu0 0.0
  %2503 = vmatprep.subr.mxu0 0.0
  %2504 = vmatpush2.msra.mxu0 0.0
  %2505 = vmatprep.subr.mxu0 0.0
  %2506 = vmatpush2.msra.mxu0 0.0
  %2507 = vmatprep.subr.mxu0 0.0
  %2508 = vmatpush2.msra.mxu0 0.0
  %2509 = vmatprep.subr.mxu0 0.0
  %2510 = vmatpush2.msra.mxu0 0.0
  %2511 = vmatprep.mubr.f32.mxu0 0.0
  %2512 = vmatmul.mubr.f32.gmra.mxu0 %v1588
  %v2513 = vpop.f32.mrf.mxu0
  %v2514 = vadd.f32 %v1552, %v2513
  %v2515 = vpop.f32.mrf.mxu0
  %v2516 = vadd.f32 %v1556, %v2515
  %2517 = vdwg.mxu0
  %2518 = vmatprep.subr.mxu0 0.0
  %2519 = vmatpush1.msra.mxu0 0.0
  %2520 = vmatprep.subr.mxu0 0.0
  %2521 = vmatpush1.msra.mxu0 0.0
  %2522 = vmatprep.subr.mxu0 0.0
  %2523 = vmatpush1.msra.mxu0 0.0
  %2524 = vmatprep.subr.mxu0 0.0
  %2525 = vmatpush1.msra.mxu0 0.0
  %2526 = vmatprep.subr.mxu0 0.0
  %2527 = vmatpush1.msra.mxu0 0.0
  %2528 = vmatprep.subr.mxu0 0.0
  %2529 = vmatpush1.msra.mxu0 0.0
  %2530 = vmatprep.subr.mxu0 0.0
  %2531 = vmatpush1.msra.mxu0 0.0
  %2532 = vmatprep.subr.mxu0 0.0
  %2533 = vmatpush1.msra.mxu0 0.0
  %2534 = vmatprep.subr.mxu0 0.0
  %2535 = vmatpush1.msra.mxu0 0.0
  %2536 = vmatprep.subr.mxu0 0.0
  %2537 = vmatpush1.msra.mxu0 0.0
  %2538 = vmatprep.subr.mxu0 0.0
  %2539 = vmatpush1.msra.mxu0 0.0
  %2540 = vmatprep.subr.mxu0 0.0
  %2541 = vmatpush1.msra.mxu0 0.0
  %2542 = vmatprep.subr.mxu0 0.0
  %2543 = vmatpush1.msra.mxu0 0.0
  %2544 = vmatprep.subr.mxu0 0.0
  %2545 = vmatpush1.msra.mxu0 %v1664
  %2546 = vmatprep.subr.mxu0 0.0
  %2547 = vmatpush1.msra.mxu0 %v1427
  %2548 = vmatprep.subr.mxu0 0.0
  %2549 = vmatpush1.msra.mxu0 %v1402
  %2550 = vmatprep.subr.mxu0 0.0
  %2551 = vmatpush2.msra.mxu0 0.0
  %2552 = vmatprep.subr.mxu0 0.0
  %2553 = vmatpush2.msra.mxu0 0.0
  %2554 = vmatprep.subr.mxu0 0.0
  %2555 = vmatpush2.msra.mxu0 0.0
  %2556 = vmatprep.subr.mxu0 0.0
  %2557 = vmatpush2.msra.mxu0 0.0
  %2558 = vmatprep.subr.mxu0 0.0
  %2559 = vmatpush2.msra.mxu0 0.0
  %2560 = vmatprep.subr.mxu0 0.0
  %2561 = vmatpush2.msra.mxu0 0.0
  %2562 = vmatprep.subr.mxu0 0.0
  %2563 = vmatpush2.msra.mxu0 0.0
  %2564 = vmatprep.subr.mxu0 0.0
  %2565 = vmatpush2.msra.mxu0 0.0
  %2566 = vmatprep.subr.mxu0 0.0
  %2567 = vmatpush2.msra.mxu0 0.0
  %2568 = vmatprep.subr.mxu0 0.0
  %2569 = vmatpush2.msra.mxu0 0.0
  %2570 = vmatprep.subr.mxu0 0.0
  %2571 = vmatpush2.msra.mxu0 0.0
  %2572 = vmatprep.subr.mxu0 0.0
  %2573 = vmatpush2.msra.mxu0 0.0
  %2574 = vmatprep.subr.mxu0 0.0
  %2575 = vmatpush2.msra.mxu0 0.0
  %2576 = vmatprep.subr.mxu0 0.0
  %2577 = vmatpush2.msra.mxu0 0.0
  %2578 = vmatprep.subr.mxu0 0.0
  %2579 = vmatpush2.msra.mxu0 0.0
  %2580 = vmatprep.subr.mxu0 0.0
  %2581 = vmatpush2.msra.mxu0 0.0
  %2582 = vmatprep.mubr.f32.mxu0 0.0
  %2583 = vmatmul.mubr.f32.gmra.mxu0 %v1588
  %v2584 = vpop.f32.mrf.mxu0
  %v2585 = vadd.f32 %v1560, %v2584
  %v2586 = vpop.f32.mrf.mxu0
  %2587 = vdwg.mxu0
  %v2588 = vmax.f32 %v1733, 0.0
  %v2589 = vmax.f32 %v1735, 0.0
  %v2590 = vmax.f32 %v1804, 0.0
  %v2591 = vmax.f32 %v1806, 0.0
  %v2592 = vmax.f32 %v1875, 0.0
  %v2593 = vmax.f32 %v1877, 0.0
  %v2594 = vmax.f32 %v1946, 0.0
  %v2595 = vmax.f32 %v1948, 0.0
  %v2596 = vmax.f32 %v2017, 0.0
  %v2597 = vmax.f32 %v2019, 0.0
  %v2598 = vmax.f32 %v2088, 0.0
  %v2599 = vmax.f32 %v2090, 0.0
  %v2600 = vmax.f32 %v2159, 0.0
  %v2601 = vmax.f32 %v2161, 0.0
  %v2602 = vmax.f32 %v2230, 0.0
  %v2603 = vmax.f32 %v2232, 0.0
  %v2604 = vmax.f32 %v2301, 0.0
  %v2605 = vmax.f32 %v2303, 0.0
  %v2606 = vmax.f32 %v2372, 0.0
  %v2607 = vmax.f32 %v2374, 0.0
  %v2608 = vmax.f32 %v2443, 0.0
  %v2609 = vmax.f32 %v2445, 0.0
  %v2610 = vmax.f32 %v2514, 0.0
  %v2611 = vmax.f32 %v2516, 0.0
  %v2612 = vmax.f32 %v2585, 0.0
  %2613 = vst [vmem:[%s6] sm:$0xff] %v2588
  %2614 = vst [vmem:[%s6 + $0x8] sm:$0xff] %v2589
  %2615 = vst [vmem:[%s6 + $0x10] sm:$0xff] %v2590
  %2616 = vst [vmem:[%s6 + $0x18] sm:$0xff] %v2591
  %2617 = vst [vmem:[%s6 + $0x20] sm:$0xff] %v2592
  %2618 = vst [vmem:[%s6 + $0x28] sm:$0xff] %v2593
  %2619 = vst [vmem:[%s6 + $0x30] sm:$0xff] %v2594
  %2620 = vst [vmem:[%s6 + $0x38] sm:$0xff] %v2595
  %2621 = vst [vmem:[%s6 + $0x40] sm:$0xff] %v2596
  %2622 = vst [vmem:[%s6 + $0x48] sm:$0xff] %v2597
  %2623 = vst [vmem:[%s6 + $0x50] sm:$0xff] %v2598
  %2624 = vst [vmem:[%s6 + $0x58] sm:$0xff] %v2599
  %2625 = vst [vmem:[%s6 + $0x60] sm:$0xff] %v2600
  %2626 = vst [vmem:[%s6 + $0x68] sm:$0xff] %v2601
  %2627 = vst [vmem:[%s6 + $0x70] sm:$0xff] %v2602
  %2628 = vst [vmem:[%s6 + $0x78] sm:$0xff] %v2603
  %2629 = vst [vmem:[%s6 + $0x80] sm:$0xff] %v2604
  %2630 = vst [vmem:[%s6 + $0x88] sm:$0xff] %v2605
  %2631 = vst [vmem:[%s6 + $0x90] sm:$0xff] %v2606
  %2632 = vst [vmem:[%s6 + $0x98] sm:$0xff] %v2607
  %2633 = vst [vmem:[%s6 + $0xa0] sm:$0xff] %v2608
  %2634 = vst [vmem:[%s6 + $0xa8] sm:$0xff] %v2609
  %2635 = vst [vmem:[%s6 + $0xb0] sm:$0xff] %v2610
  %2636 = vst [vmem:[%s6 + $0xb8] sm:$0xff] %v2611
  %2637 = vst [vmem:[%s6 + $0xc0] sm:$0xff] %v2612
  %2638 = vst.msk [vmem:[%s7] sm:$0xff] %vm1586, %v1361
  %2640 = vrot.lane.b32.xlu0 %v1361, 108
  %v2641 = vpop.permute.xlu0 %2640
  %2643 = vst.msk [vmem:[%s8] sm:$0xff] %vm1586, %v2641
  // Predicated region
  $region26: #{vae_forward.4} parent=0 // pred_check
    _
  $region27: #{vae_forward.4} parent=0 // pred_check_branch
    %2645 = sbr.rel (0) target = $region29
  $region28: #{vae_forward.4} parent=0 // pred_region
    _
  $region29: #{vae_forward.4} parent=0 // pred_fallthru
    _
  // Predicated region
  $region30: #{vae_forward.4} parent=0 // pred_check
    _
  $region31: #{vae_forward.4} parent=0 // pred_check_branch
    %2647 = sbr.rel (0) target = $region33
  $region32: #{vae_forward.4} parent=0 // pred_region
    _
  $region33: #{vae_forward.4} parent=0 // pred_fallthru
    _
  // Predicated region
  $region34: #{vae_forward.4} parent=0 // pred_check
    _
  $region35: #{vae_forward.4} parent=0 // pred_check_branch
    %2649 = sbr.rel (0) target = $region37
  $region36: #{vae_forward.4} parent=0 // pred_region
    _
  $region37: #{vae_forward.4} parent=0 // pred_fallthru
    _
  // Predicated region
  $region38: #{vae_forward.4} parent=0 // pred_check
    _
  $region39: #{vae_forward.4} parent=0 // pred_check_branch
    %2651 = sbr.rel (0) target = $region41
  $region40: #{vae_forward.4} parent=0 // pred_region
    _
  $region41: #{vae_forward.4} parent=0 // pred_fallthru
    _
  // Predicated region
  $region42: #{vae_forward.4} parent=0 // pred_check
    _
  $region43: #{vae_forward.4} parent=0 // pred_check_branch
    %2653 = sbr.rel (0) target = $region45
  $region44: #{vae_forward.4} parent=0 // pred_region
    _
  $region45: #{vae_forward.4} parent=0 // pred_fallthru
    _
  // Predicated region
  $region46: #{vae_forward.4} parent=0 // pred_check
    _
  $region47: #{vae_forward.4} parent=0 // pred_check_branch
    %2655 = sbr.rel (0) target = $region49
  $region48: #{vae_forward.4} parent=0 // pred_region
    _
  $region49: #{vae_forward.4} parent=0 // pred_fallthru
    _

// kernel: vae_forward.5
$region0: #{vae_forward.5}
  #allocation0 [shape = 'u32[]', space=smem, size = 0x4, offset = 0x4, fixed_abs, tag = 'smem constant byte address 0x4 - core index']
  #allocation1 [shape = 'u32[144,128]{1,0:T(1,128)}', space=vmem, size = 0x12000, scoped, tag = 'internal scratch']
  #allocation2 [shape = 'f32[1,1]{1,0:T(1,128)S(1)}', space=vmem, size = 0x200, scoped, tag = 'scoped memory for vae_forward.5']
  %s0 = inlined_call_operand.vmem [shape: f32[2,49,64], index: 0, kind: input, shape index: {}]
  %s1 = inlined_call_operand.vmem [shape: f32[9,64,32], index: 1, kind: input, shape index: {}]
  %s2 = inlined_call_operand.vmem [shape: f32[1,32], index: 2, kind: input, shape index: {}]
  %s3 = inlined_call_operand.vmem [shape: f32[9,1,32], index: 3, kind: input, shape index: {}]
  %s4 = inlined_call_operand.<no memory space> [shape: f32[1,1], index: 4, kind: input, shape index: {}]
  %s5 = inlined_call_operand.vmem [shape: f32[2,16,49,1], index: 5, kind: output, shape index: {}]
  %s6 = sld [smem:[#allocation0]]
  $region53: #{vae_forward.5} parent=0
    _
  %s8 = ssub.s32 1, %s6
  %s9 = scalar_select 0, %s8, %s6
  %v10 = vstv %s4
  %11 = vst [vmem:[#allocation2] sm:$0x1] %v10
  loop: start=0, step=1, limit=4
  $region2: #{vae_forward.5} parent=0 // loop_pre_header
    _
  $region3: #{vae_forward.5} parent=0 // loop_header
    %s13 = sphi 0, %s17
    %p14 = scmp.ge.s32.totalorder %s13, 4
    %s23 = sphi 0, %s25
    %s26 = sphi 0, %s23
    %s27 = sphi 0, %s26
    %s43 = sphi 0, %s27
    %s47 = sphi 0, %s47
    %s49 = sphi 0, %s47
    %s50 = sphi 0, %s49
    %s64 = sphi 0, %s50
    %s68 = sphi 0, %s68
    %s70 = sphi 0, %s68
    %s71 = sphi 0, %s70
    %s85 = sphi 0, %s71
    %s89 = sphi 0, %s89
    %s91 = sphi 0, %s89
    %s92 = sphi 0, %s91
    %s106 = sphi 0, %s92
    %s110 = sphi 0, %s110
    %s112 = sphi 0, %s110
    %s113 = sphi 0, %s112
    %s127 = sphi 0, %s113
    %s133 = sphi 0, %s135
    %s136 = sphi 0, %s133
    %s137 = sphi 0, %s136
    %s153 = sphi 0, %s137
  $region4: #{vae_forward.5} parent=0 // loop_header_branch
    %16 = sbr.rel (%p14) target = $region8
  $region5: #{vae_forward.5} parent=0 // loop_body
    %s18 = ssub.s32 %s13, 1
    %s19 = ssub.s32 %s13, 2
    %s20 = sadd.s32 %s13, 1
    %s21 = ssub.s32 %s13, %s20
    %p22 = scmp.eq.s32.totalorder %s21, 0
    %s24 = sadd.s32 %s23, 1
    %s25 = scalar_select %p22, %s23, %s24
    %p28 = pneg %p22
    %p29 = scmp.eq.s32.totalorder %s13, 1
    %p30 = por %p28, %p29
    %p31 = scmp.ne.s32.totalorder %s23, %s26
    %p32 = scmp.eq.s32.totalorder %s13, 0
    %p33 = por %p31, %p32
    %p34 = scmp.ne.s32.totalorder %s23, %s26
    %p35 = scmp.eq.s32.totalorder %s18, 1
    %p36 = por %p34, %p35
    %p37 = scmp.ne.s32.totalorder %s26, %s27
    %p38 = scmp.eq.s32.totalorder %s18, 0
    %p39 = por %p37, %p38
    %p40 = scmp.ne.s32.totalorder %s26, %s27
    %p41 = scmp.eq.s32.totalorder %s19, 1
    %p42 = por %p40, %p41
    %p44 = scmp.ne.s32.totalorder %s27, %s43
    %p45 = scmp.eq.s32.totalorder %s19, 0
    %p46 = por %p44, %p45
    %s48 = sadd.s32 %s47, 1
    %p51 = scmp.eq.s32.totalorder %s13, 1
    %p52 = scmp.ne.s32.totalorder %s47, %s49
    %p53 = scmp.eq.s32.totalorder %s13, 0
    %p54 = por %p52, %p53
    %p55 = scmp.ne.s32.totalorder %s47, %s49
    %p56 = scmp.eq.s32.totalorder %s18, 1
    %p57 = por %p55, %p56
    %p58 = scmp.ne.s32.totalorder %s49, %s50
    %p59 = scmp.eq.s32.totalorder %s18, 0
    %p60 = por %p58, %p59
    %p61 = scmp.ne.s32.totalorder %s49, %s50
    %p62 = scmp.eq.s32.totalorder %s19, 1
    %p63 = por %p61, %p62
    %p65 = scmp.ne.s32.totalorder %s50, %s64
    %p66 = scmp.eq.s32.totalorder %s19, 0
    %p67 = por %p65, %p66
    %s69 = sadd.s32 %s68, 1
    %p72 = scmp.eq.s32.totalorder %s13, 1
    %p73 = scmp.ne.s32.totalorder %s68, %s70
    %p74 = scmp.eq.s32.totalorder %s13, 0
    %p75 = por %p73, %p74
    %p76 = scmp.ne.s32.totalorder %s68, %s70
    %p77 = scmp.eq.s32.totalorder %s18, 1
    %p78 = por %p76, %p77
    %p79 = scmp.ne.s32.totalorder %s70, %s71
    %p80 = scmp.eq.s32.totalorder %s18, 0
    %p81 = por %p79, %p80
    %p82 = scmp.ne.s32.totalorder %s70, %s71
    %p83 = scmp.eq.s32.totalorder %s19, 1
    %p84 = por %p82, %p83
    %p86 = scmp.ne.s32.totalorder %s71, %s85
    %p87 = scmp.eq.s32.totalorder %s19, 0
    %p88 = por %p86, %p87
    %s90 = sadd.s32 %s89, 1
    %p93 = scmp.eq.s32.totalorder %s13, 1
    %p94 = scmp.ne.s32.totalorder %s89, %s91
    %p95 = scmp.eq.s32.totalorder %s13, 0
    %p96 = por %p94, %p95
    %p97 = scmp.ne.s32.totalorder %s89, %s91
    %p98 = scmp.eq.s32.totalorder %s18, 1
    %p99 = por %p97, %p98
    %p100 = scmp.ne.s32.totalorder %s91, %s92
    %p101 = scmp.eq.s32.totalorder %s18, 0
    %p102 = por %p100, %p101
    %p103 = scmp.ne.s32.totalorder %s91, %s92
    %p104 = scmp.eq.s32.totalorder %s19, 1
    %p105 = por %p103, %p104
    %p107 = scmp.ne.s32.totalorder %s92, %s106
    %p108 = scmp.eq.s32.totalorder %s19, 0
    %p109 = por %p107, %p108
    %s111 = sadd.s32 %s110, 1
    %p114 = scmp.eq.s32.totalorder %s13, 1
    %p115 = scmp.ne.s32.totalorder %s110, %s112
    %p116 = scmp.eq.s32.totalorder %s13, 0
    %p117 = por %p115, %p116
    %p118 = scmp.ne.s32.totalorder %s110, %s112
    %p119 = scmp.eq.s32.totalorder %s18, 1
    %p120 = por %p118, %p119
    %p121 = scmp.ne.s32.totalorder %s112, %s113
    %p122 = scmp.eq.s32.totalorder %s18, 0
    %p123 = por %p121, %p122
    %p124 = scmp.ne.s32.totalorder %s112, %s113
    %p125 = scmp.eq.s32.totalorder %s19, 1
    %p126 = por %p124, %p125
    %p128 = scmp.ne.s32.totalorder %s113, %s127
    %p129 = scmp.eq.s32.totalorder %s19, 0
    %p130 = por %p128, %p129
    %s131 = ssub.s32 %s13, %s20
    %p132 = scmp.eq.s32.totalorder %s131, 0
    %s134 = sadd.s32 %s133, 1
    %s135 = scalar_select %p132, %s133, %s134
    %p138 = pneg %p132
    %p139 = scmp.eq.s32.totalorder %s13, 1
    %p140 = por %p138, %p139
    %p141 = scmp.ne.s32.totalorder %s133, %s136
    %p142 = scmp.eq.s32.totalorder %s13, 0
    %p143 = por %p141, %p142
    %p144 = scmp.ne.s32.totalorder %s133, %s136
    %p145 = scmp.eq.s32.totalorder %s18, 1
    %p146 = por %p144, %p145
    %p147 = scmp.ne.s32.totalorder %s136, %s137
    %p148 = scmp.eq.s32.totalorder %s18, 0
    %p149 = por %p147, %p148
    %p150 = scmp.ne.s32.totalorder %s136, %s137
    %p151 = scmp.eq.s32.totalorder %s19, 1
    %p152 = por %p150, %p151
    %p154 = scmp.ne.s32.totalorder %s137, %s153
    %p155 = scmp.eq.s32.totalorder %s19, 0
    %p156 = por %p154, %p155
    %p157 = scmp.le.s32.totalorder 1, %s13
    %p158 = scmp.lt.s32.totalorder %s13, 3
    %p159 = pnand %p157, %p158
    %p160 = pneg %p159
    // Predicated region
    $region9: #{vae_forward.5} parent=5 // pred_check
      _
    $region10: #{vae_forward.5} parent=5 // pred_check_branch
      %162 = sbr.rel (%p159) target = $region12
    $region11: #{vae_forward.5} parent=5 // pred_region
      %s163 = ssub.s32 %s13, 1
      // Predicated region
      $region13: #{vae_forward.5} parent=11 // pred_check
        %p164 = pneg %p60
      $region14: #{vae_forward.5} parent=11 // pred_check_branch
        %166 = sbr.rel (%p164) target = $region16
      $region15: #{vae_forward.5} parent=11 // pred_region
        _
      $region16: #{vae_forward.5} parent=11 // pred_fallthru
        _
      // Predicated region
      $region17: #{vae_forward.5} parent=11 // pred_check
        %p167 = pneg %p81
      $region18: #{vae_forward.5} parent=11 // pred_check_branch
        %169 = sbr.rel (%p167) target = $region20
      $region19: #{vae_forward.5} parent=11 // pred_region
        _
      $region20: #{vae_forward.5} parent=11 // pred_fallthru
        _
      // Predicated region
      $region21: #{vae_forward.5} parent=11 // pred_check
        %p170 = pneg %p102
      $region22: #{vae_forward.5} parent=11 // pred_check_branch
        %172 = sbr.rel (%p170) target = $region24
      $region23: #{vae_forward.5} parent=11 // pred_region
        _
      $region24: #{vae_forward.5} parent=11 // pred_fallthru
        _
      // Predicated region
      $region25: #{vae_forward.5} parent=11 // pred_check
        %p173 = pneg %p123
      $region26: #{vae_forward.5} parent=11 // pred_check_branch
        %175 = sbr.rel (%p173) target = $region28
      $region27: #{vae_forward.5} parent=11 // pred_region
        _
      $region28: #{vae_forward.5} parent=11 // pred_fallthru
        _
    $region12: #{vae_forward.5} parent=5 // pred_fallthru
      _
    %p176 = scmp.lt.s32.totalorder %s13, 2
    // Predicated region
    $region29: #{vae_forward.5} parent=5 // pred_check
      %p177 = pneg %p176
    $region30: #{vae_forward.5} parent=5 // pred_check_branch
      %179 = sbr.rel (%p177) target = $region32
    $region31: #{vae_forward.5} parent=5 // pred_region
      // Predicated region
      $region33: #{vae_forward.5} parent=31 // pred_check
        %p180 = pneg %p33
      $region34: #{vae_forward.5} parent=31 // pred_check_branch
        %182 = sbr.rel (%p180) target = $region36
      $region35: #{vae_forward.5} parent=31 // pred_region
        %p183 = scmp.lt.s32.totalorder %s13, 1
        %s184 = scalar_select %p183, %s13, 1
        %s185 = smul.addr %s184, 7
        %s186 = smul.addr %s185, 8
        %s187 = scalar_lea.vmem %s0, %s186
      $region36: #{vae_forward.5} parent=31 // pred_fallthru
        _
    $region32: #{vae_forward.5} parent=5 // pred_fallthru
      _
    %p188 = scmp.le.s32.totalorder 1, %s13
    %p189 = scmp.lt.s32.totalorder %s13, 3
    %p190 = pnand %p188, %p189
    %p191 = pneg %p190
    // Predicated region
    $region37: #{vae_forward.5} parent=5 // pred_check
      _
    $region38: #{vae_forward.5} parent=5 // pred_check_branch
      %193 = sbr.rel (%p190) target = $region40
    $region39: #{vae_forward.5} parent=5 // pred_region
      %s194 = ssub.s32 %s13, 1
      %p195 = scmp.lt.s32.totalorder %s18, 1
      %s196 = scalar_select %p195, %s18, 1
      %s197 = smul.addr %s196, 7
      %s198 = smul.addr %s197, 8
      %s199 = scalar_lea.vmem %s0, %s198
      %p200 = pneg %p39
      %p201 = pneg %p36
      %p202 = pneg %p60
      %p203 = pneg %p57
      %p204 = pneg %p81
      %p205 = pneg %p78
      %p206 = pneg %p102
      %p207 = pneg %p99
      %p208 = pneg %p123
      %p209 = pneg %p120
      %p210 = pneg %p149
      %p211 = pneg %p146
      %p212 = scmp.lt.s32.totalorder %s18, 1
      %s213 = scalar_select %p212, %s18, 1
      %s214 = smul.addr %s213, 112
      %s215 = smul.addr %s214, 8
      %s216 = scalar_lea.vmem %s5, %s215
      %p217 = scmp.lt.s32.totalorder %s18, 1
      %s218 = scalar_select %p217, %s18, 1
      %s219 = smul.addr %s218, 7
      %s220 = smul.addr %s219, 8
      %s221 = scalar_lea.vmem %s0, %s220
      %p222 = scmp.lt.s32.totalorder %s18, 1
      %s223 = scalar_select %p222, %s18, 1
      %s224 = smul.addr %s223, 112
      %s225 = smul.addr %s224, 8
      %s226 = scalar_lea.vmem %s5, %s225
      %v227 = vlaneseq
      %v228 = vshrl.u32 %v227, 7
      %v229 = vadd.s32 %v228, 8
      %v230 = vadd.s32 %v228, 16
      %v231 = vadd.s32 %v228, 24
      %v232 = vadd.s32 %v228, 32
      %v233 = vadd.s32 %v228, 40
      %v234 = vld [vmem:[%s221] sm:$0xff]
      %v235 = vld [vmem:[%s221 + $0x8] sm:$0xff]
      %v236 = vld [vmem:[%s221 + $0x10] sm:$0xff]
      %v237 = vld [vmem:[%s221 + $0x18] sm:$0xff]
      %v238 = vld [vmem:[%s221 + $0x20] sm:$0xff]
      %v239 = vld [vmem:[%s221 + $0x28] sm:$0xff]
      %v240 = vld [vmem:[%s221 + $0x30] sm:$0x1]
      %vm248 = vcmask 1046528
      %v249 = vrot.slane %v234, 1
      %v250 = vrot.slane %v235, 1
      %v251 = vsel %vm248, %v249, %v250
      %v252 = vrot.slane %v236, 1
      %v253 = vsel %vm248, %v250, %v252
      %v254 = vrot.slane %v237, 1
      %v255 = vsel %vm248, %v252, %v254
      %v256 = vrot.slane %v238, 1
      %v257 = vsel %vm248, %v254, %v256
      %v258 = vrot.slane %v239, 1
      %v259 = vsel %vm248, %v256, %v258
      %v260 = vrot.slane %v240, 1
      %v261 = vsel %vm248, %v258, %v260
      %vm268 = vcmp.lt.s32.totalorder %v228, 0
      %v269 = vsub.s32 0, %v228
      %v270 = vsel %vm268, %v269, %v228
      %v271 = vmul.u32.u64.compose %v270, 2454267026
      %v272 = vextract.low.u32 %v271
      %v273 = vextract.high.u32 %v271
      %vm274 = vc.u32 %v272, 2454267026
      %v275 = vsel %vm274, 1, 0
      %v276 = vadd.s32 %v273, %v275
      %v277 = vshrl.u32 %v276, 2
      %v278 = vmul.u32 %v277, 7
      %v279 = vsub.s32 %v270, %v278
      %v280 = vsub.s32 0, %v279
      %v281 = vsel %vm268, %v280, %v279
      %vm282 = vcmp.lt.s32.totalorder %v229, 0
      %v283 = vsub.s32 0, %v229
      %v284 = vsel %vm282, %v283, %v229
      %v285 = vmul.u32.u64.compose %v284, 2454267026
      %v286 = vextract.low.u32 %v285
      %v287 = vextract.high.u32 %v285
      %vm288 = vc.u32 %v286, 2454267026
      %v289 = vsel %vm288, 1, 0
      %v290 = vadd.s32 %v287, %v289
      %v291 = vshrl.u32 %v290, 2
      %v292 = vmul.u32 %v291, 7
      %v293 = vsub.s32 %v284, %v292
      %v294 = vsub.s32 0, %v293
      %v295 = vsel %vm282, %v294, %v293
      %vm296 = vcmp.lt.s32.totalorder %v230, 0
      %v297 = vsub.s32 0, %v230
      %v298 = vsel %vm296, %v297, %v230
      %v299 = vmul.u32.u64.compose %v298, 2454267026
      %v300 = vextract.low.u32 %v299
      %v301 = vextract.high.u32 %v299
      %vm302 = vc.u32 %v300, 2454267026
      %v303 = vsel %vm302, 1, 0
      %v304 = vadd.s32 %v301, %v303
      %v305 = vshrl.u32 %v304, 2
      %v306 = vmul.u32 %v305, 7
      %v307 = vsub.s32 %v298, %v306
      %v308 = vsub.s32 0, %v307
      %v309 = vsel %vm296, %v308, %v307
      %vm310 = vcmp.lt.s32.totalorder %v231, 0
      %v311 = vsub.s32 0, %v231
      %v312 = vsel %vm310, %v311, %v231
      %v313 = vmul.u32.u64.compose %v312, 2454267026
      %v314 = vextract.low.u32 %v313
      %v315 = vextract.high.u32 %v313
      %vm316 = vc.u32 %v314, 2454267026
      %v317 = vsel %vm316, 1, 0
      %v318 = vadd.s32 %v315, %v317
      %v319 = vshrl.u32 %v318, 2
      %v320 = vmul.u32 %v319, 7
      %v321 = vsub.s32 %v312, %v320
      %v322 = vsub.s32 0, %v321
      %v323 = vsel %vm310, %v322, %v321
      %vm324 = vcmp.lt.s32.totalorder %v232, 0
      %v325 = vsub.s32 0, %v232
      %v326 = vsel %vm324, %v325, %v232
      %v327 = vmul.u32.u64.compose %v326, 2454267026
      %v328 = vextract.low.u32 %v327
      %v329 = vextract.high.u32 %v327
      %vm330 = vc.u32 %v328, 2454267026
      %v331 = vsel %vm330, 1, 0
      %v332 = vadd.s32 %v329, %v331
      %v333 = vshrl.u32 %v332, 2
      %v334 = vmul.u32 %v333, 7
      %v335 = vsub.s32 %v326, %v334
      %v336 = vsub.s32 0, %v335
      %v337 = vsel %vm324, %v336, %v335
      %vm338 = vcmp.lt.s32.totalorder %v233, 0
      %v339 = vsub.s32 0, %v233
      %v340 = vsel %vm338, %v339, %v233
      %v341 = vmul.u32.u64.compose %v340, 2454267026
      %v342 = vextract.low.u32 %v341
      %v343 = vextract.high.u32 %v341
      %vm344 = vc.u32 %v342, 2454267026
      %v345 = vsel %vm344, 1, 0
      %v346 = vadd.s32 %v343, %v345
      %v347 = vshrl.u32 %v346, 2
      %v348 = vmul.u32 %v347, 7
      %v349 = vsub.s32 %v340, %v348
      %v350 = vsub.s32 0, %v349
      %v351 = vsel %vm338, %v350, %v349
      %vm352 = vcmp.ne.s32.totalorder %v281, 0
      %vm353 = vcmp.ne.s32.totalorder %v295, 0
      %vm354 = vcmp.ne.s32.totalorder %v309, 0
      %vm355 = vcmp.ne.s32.totalorder %v323, 0
      %vm356 = vcmp.ne.s32.totalorder %v337, 0
      %vm357 = vcmp.ne.s32.totalorder %v351, 0
      %vm358 = vcmp.lt.s32.totalorder %v281, 0
      %vm359 = vcmp.lt.s32.totalorder %v295, 0
      %vm360 = vcmp.lt.s32.totalorder %v309, 0
      %vm361 = vcmp.lt.s32.totalorder %v323, 0
      %vm362 = vcmp.lt.s32.totalorder %v337, 0
      %vm363 = vcmp.lt.s32.totalorder %v351, 0
      %vm364 = vmand %vm358, %vm352
      %vm365 = vmand %vm359, %vm353
      %vm366 = vmand %vm360, %vm354
      %vm367 = vmand %vm361, %vm355
      %vm368 = vmand %vm362, %vm356
      %vm369 = vmand %vm363, %vm357
      %v370 = vadd.s32 %v281, 7
      %v371 = vadd.s32 %v295, 7
      %v372 = vadd.s32 %v309, 7
      %v373 = vadd.s32 %v323, 7
      %v374 = vadd.s32 %v337, 7
      %v375 = vadd.s32 %v351, 7
      %v376 = vsel %vm364, %v370, %v281
      %v377 = vsel %vm365, %v371, %v295
      %v378 = vsel %vm366, %v372, %v309
      %v379 = vsel %vm367, %v373, %v323
      %v380 = vsel %vm368, %v374, %v337
      %v381 = vsel %vm369, %v375, %v351
      %vm382 = vcmp.lt.s32.totalorder %v376, 6
      %vm383 = vcmp.lt.s32.totalorder %v377, 6
      %vm384 = vcmp.lt.s32.totalorder %v378, 6
      %vm385 = vcmp.lt.s32.totalorder %v379, 6
      %vm386 = vcmp.lt.s32.totalorder %v380, 6
      %vm387 = vcmp.lt.s32.totalorder %v381, 6
      %v388 = vsel %vm382, 1, 0
      %v389 = vsel %vm383, 1, 0
      %v390 = vsel %vm384, 1, 0
      %v391 = vsel %vm385, 1, 0
      %v392 = vsel %vm386, 1, 0
      %v393 = vsel %vm387, 1, 0
      %vm394 = vcmp.eq.s32.totalorder %v388, 1
      %vm395 = vcmp.eq.s32.totalorder %v389, 1
      %vm396 = vcmp.eq.s32.totalorder %v390, 1
      %vm397 = vcmp.eq.s32.totalorder %v391, 1
      %vm398 = vcmp.eq.s32.totalorder %v392, 1
      %vm399 = vcmp.eq.s32.totalorder %v393, 1
      %v400 = vsel %vm394, %v251, 0.0
      %v401 = vsel %vm395, %v253, 0.0
      %v402 = vsel %vm396, %v255, 0.0
      %v403 = vsel %vm397, %v257, 0.0
      %v404 = vsel %vm398, %v259, 0.0
      %v405 = vsel %vm399, %v261, 0.0
      %vm406 = vcmask 1040384
      %v407 = vrot.slane %v234, 7
      %v408 = vrot.slane %v235, 7
      %v409 = vsel %vm406, %v407, %v408
      %v410 = vrot.slane %v236, 7
      %v411 = vsel %vm406, %v408, %v410
      %v412 = vrot.slane %v237, 7
      %v413 = vsel %vm406, %v410, %v412
      %v414 = vrot.slane %v238, 7
      %v415 = vsel %vm406, %v412, %v414
      %v416 = vrot.slane %v239, 7
      %v417 = vsel %vm406, %v414, %v416
      %v418 = vrot.slane %v240, 7
      %v419 = vsel %vm406, %v416, %v418
      %vm421 = vcmask 1041408
      %v422 = vsel %vm421, %v419, 0.0
      %v425 = vrot.slane %v409, 1
      %v426 = vrot.slane %v411, 1
      %v427 = vsel %vm248, %v425, %v426
      %v428 = vrot.slane %v413, 1
      %v429 = vsel %vm248, %v426, %v428
      %v430 = vrot.slane %v415, 1
      %v431 = vsel %vm248, %v428, %v430
      %v432 = vrot.slane %v417, 1
      %v433 = vsel %vm248, %v430, %v432
      %v434 = vrot.slane %v422, 1
      %v435 = vsel %vm248, %v432, %v434
      %v436 = vrot.slane 0.0, 1
      %v437 = vsel %vm248, %v434, %v436
      %v444 = vsel %vm394, %v427, 0.0
      %v445 = vsel %vm395, %v429, 0.0
      %v446 = vsel %vm396, %v431, 0.0
      %v447 = vsel %vm397, %v433, 0.0
      %v448 = vsel %vm398, %v435, 0.0
      %v449 = vsel %vm399, %v437, 0.0
      %s450 = scalar_lea.vmem %s1, 256
      %v451 = vld [vmem:[%s450] sm:$0xff]
      %v452 = vld [vmem:[%s450 + $0x8] sm:$0xff]
      %v453 = vld [vmem:[%s450 + $0x10] sm:$0xff]
      %v454 = vld [vmem:[%s450 + $0x18] sm:$0xff]
      %v455 = vld [vmem:[%s450 + $0x20] sm:$0xff]
      %v456 = vld [vmem:[%s450 + $0x28] sm:$0xff]
      %v457 = vld [vmem:[%s450 + $0x30] sm:$0xff]
      %v458 = vld [vmem:[%s450 + $0x38] sm:$0xff]
      %v459 = vld [vmem:[%s2] sm:$0x1]
      %v461 = vlaneseq
      %v462 = vshrl.u32 %v461, 7
      %v463 = vsub.s32 0, %v462
      %v464 = vrot.slane %v459, %v463
      %vm466 = vcmask 523264
      %v467 = vsel %vm466, %v234, 0
      %v469 = vsel %vm466, %v235, 0
      %v471 = vsel %vm466, %v236, 0
      %v473 = vsel %vm466, %v237, 0
      %v475 = vsel %vm466, %v238, 0
      %v477 = vsel %vm466, %v239, 0
      %v479 = vsel %vm466, %v240, 0
      %481 = vmatprep.subr.mxu0 0.0
      %482 = vmatpush1.msra.mxu0 0.0
      %483 = vmatprep.subr.mxu0 0.0
      %484 = vmatpush1.msra.mxu0 0.0
      %485 = vmatprep.subr.mxu0 0.0
      %486 = vmatpush1.msra.mxu0 0.0
      %487 = vmatprep.subr.mxu0 0.0
      %488 = vmatpush1.msra.mxu0 0.0
      %489 = vmatprep.subr.mxu0 0.0
      %490 = vmatpush1.msra.mxu0 0.0
      %491 = vmatprep.subr.mxu0 0.0
      %492 = vmatpush1.msra.mxu0 0.0
      %493 = vmatprep.subr.mxu0 0.0
      %494 = vmatpush1.msra.mxu0 0.0
      %495 = vmatprep.subr.mxu0 0.0
      %496 = vmatpush1.msra.mxu0 0.0
      %497 = vmatprep.subr.mxu0 0.0
      %498 = vmatpush1.msra.mxu0 %v458
      %499 = vmatprep.subr.mxu0 0.0
      %500 = vmatpush1.msra.mxu0 %v457
      %501 = vmatprep.subr.mxu0 0.0
      %502 = vmatpush1.msra.mxu0 %v456
      %503 = vmatprep.subr.mxu0 0.0
      %504 = vmatpush1.msra.mxu0 %v455
      %505 = vmatprep.subr.mxu0 0.0
      %506 = vmatpush1.msra.mxu0 %v454
      %507 = vmatprep.subr.mxu0 0.0
      %508 = vmatpush1.msra.mxu0 %v453
      %509 = vmatprep.subr.mxu0 0.0
      %510 = vmatpush1.msra.mxu0 %v452
      %511 = vmatprep.subr.mxu0 0.0
      %512 = vmatpush1.msra.mxu0 %v451
      %513 = vmatprep.subr.mxu0 0.0
      %514 = vmatpush2.msra.mxu0 0.0
      %515 = vmatprep.subr.mxu0 0.0
      %516 = vmatpush2.msra.mxu0 0.0
      %517 = vmatprep.subr.mxu0 0.0
      %518 = vmatpush2.msra.mxu0 0.0
      %519 = vmatprep.subr.mxu0 0.0
      %520 = vmatpush2.msra.mxu0 0.0
      %521 = vmatprep.subr.mxu0 0.0
      %522 = vmatpush2.msra.mxu0 0.0
      %523 = vmatprep.subr.mxu0 0.0
      %524 = vmatpush2.msra.mxu0 0.0
      %525 = vmatprep.subr.mxu0 0.0
      %526 = vmatpush2.msra.mxu0 0.0
      %527 = vmatprep.subr.mxu0 0.0
      %528 = vmatpush2.msra.mxu0 0.0
      %529 = vmatprep.subr.mxu0 0.0
      %530 = vmatpush2.msra.mxu0 0.0
      %531 = vmatprep.subr.mxu0 0.0
      %532 = vmatpush2.msra.mxu0 0.0
      %533 = vmatprep.subr.mxu0 0.0
      %534 = vmatpush2.msra.mxu0 0.0
      %535 = vmatprep.subr.mxu0 0.0
      %536 = vmatpush2.msra.mxu0 0.0
      %537 = vmatprep.subr.mxu0 0.0
      %538 = vmatpush2.msra.mxu0 0.0
      %539 = vmatprep.subr.mxu0 0.0
      %540 = vmatpush2.msra.mxu0 0.0
      %541 = vmatprep.subr.mxu0 0.0
      %542 = vmatpush2.msra.mxu0 0.0
      %543 = vmatprep.subr.mxu0 0.0
      %544 = vmatpush2.msra.mxu0 0.0
      %545 = vmatprep.mubr.f32.mxu0 0.0
      %546 = vmatmul.mubr.f32.gmra.mxu0 %v467
      %v547 = vpop.f32.mrf.mxu0
      %v548 = vadd.f32 %v464, %v547
      %v549 = vpop.f32.mrf.mxu0
      %550 = vmatprep.mubr.f32.mxu0 0.0
      %551 = vmatmul.mubr.f32.gmra.mxu0 %v469
      %v552 = vpop.f32.mrf.mxu0
      %v553 = vadd.f32 %v464, %v552
      %v554 = vpop.f32.mrf.mxu0
      %555 = vmatprep.mubr.f32.mxu0 0.0
      %556 = vmatmul.mubr.f32.gmra.mxu0 %v471
      %v557 = vpop.f32.mrf.mxu0
      %v558 = vadd.f32 %v464, %v557
      %v559 = vpop.f32.mrf.mxu0
      %560 = vmatprep.mubr.f32.mxu0 0.0
      %561 = vmatmul.mubr.f32.gmra.mxu0 %v473
      %v562 = vpop.f32.mrf.mxu0
      %v563 = vadd.f32 %v464, %v562
      %v564 = vpop.f32.mrf.mxu0
      %565 = vmatprep.mubr.f32.mxu0 0.0
      %566 = vmatmul.mubr.f32.gmra.mxu0 %v475
      %v567 = vpop.f32.mrf.mxu0
      %v568 = vadd.f32 %v464, %v567
      %v569 = vpop.f32.mrf.mxu0
      %570 = vmatprep.mubr.f32.mxu0 0.0
      %571 = vmatmul.mubr.f32.gmra.mxu0 %v477
      %v572 = vpop.f32.mrf.mxu0
      %v573 = vadd.f32 %v464, %v572
      %v574 = vpop.f32.mrf.mxu0
      %575 = vmatprep.mubr.f32.mxu0 0.0
      %576 = vmatmul.mubr.f32.gmra.mxu0 %v479
      %v577 = vpop.f32.mrf.mxu0
      %v578 = vadd.f32 %v464, %v577
      %v579 = vpop.f32.mrf.mxu0
      %580 = vdwg.mxu0
      %v581 = vmax.f32 %v548, 0.0
      %v582 = vmax.f32 %v553, 0.0
      %v583 = vmax.f32 %v558, 0.0
      %v584 = vmax.f32 %v563, 0.0
      %v585 = vmax.f32 %v568, 0.0
      %v586 = vmax.f32 %v573, 0.0
      %v587 = vmax.f32 %v578, 0.0
      %s588 = scalar_lea.vmem %s1, 192
      %v589 = vld [vmem:[%s588] sm:$0xff]
      %v590 = vld [vmem:[%s588 + $0x8] sm:$0xff]
      %v591 = vld [vmem:[%s588 + $0x10] sm:$0xff]
      %v592 = vld [vmem:[%s588 + $0x18] sm:$0xff]
      %v593 = vld [vmem:[%s588 + $0x20] sm:$0xff]
      %v594 = vld [vmem:[%s588 + $0x28] sm:$0xff]
      %v595 = vld [vmem:[%s588 + $0x30] sm:$0xff]
      %v596 = vld [vmem:[%s588 + $0x38] sm:$0xff]
      %s597 = scalar_lea.vmem %s1, 320
      %v598 = vld [vmem:[%s597] sm:$0xff]
      %v599 = vld [vmem:[%s597 + $0x8] sm:$0xff]
      %v600 = vld [vmem:[%s597 + $0x10] sm:$0xff]
      %v601 = vld [vmem:[%s597 + $0x18] sm:$0xff]
      %v602 = vld [vmem:[%s597 + $0x20] sm:$0xff]
      %v603 = vld [vmem:[%s597 + $0x28] sm:$0xff]
      %v604 = vld [vmem:[%s597 + $0x30] sm:$0xff]
      %v605 = vld [vmem:[%s597 + $0x38] sm:$0xff]
      %v607 = vsel %vm466, %v400, 0
      %v610 = vsel %vm466, %v401, 0
      %v613 = vsel %vm466, %v402, 0
      %v616 = vsel %vm466, %v403, 0
      %v619 = vsel %vm466, %v404, 0
      %v622 = vsel %vm466, %v405, 0
      %v624 = vsel %vm466, 0.0, 0
      %626 = vmatprep.subr.mxu0 0.0
      %627 = vmatpush1.msra.mxu0 0.0
      %628 = vmatprep.subr.mxu0 0.0
      %629 = vmatpush1.msra.mxu0 0.0
      %630 = vmatprep.subr.mxu0 0.0
      %631 = vmatpush1.msra.mxu0 0.0
      %632 = vmatprep.subr.mxu0 0.0
      %633 = vmatpush1.msra.mxu0 0.0
      %634 = vmatprep.subr.mxu0 0.0
      %635 = vmatpush1.msra.mxu0 0.0
      %636 = vmatprep.subr.mxu0 0.0
      %637 = vmatpush1.msra.mxu0 0.0
      %638 = vmatprep.subr.mxu0 0.0
      %639 = vmatpush1.msra.mxu0 0.0
      %640 = vmatprep.subr.mxu0 0.0
      %641 = vmatpush1.msra.mxu0 0.0
      %642 = vmatprep.subr.mxu0 0.0
      %643 = vmatpush1.msra.mxu0 %v605
      %644 = vmatprep.subr.mxu0 0.0
      %645 = vmatpush1.msra.mxu0 %v604
      %646 = vmatprep.subr.mxu0 0.0
      %647 = vmatpush1.msra.mxu0 %v603
      %648 = vmatprep.subr.mxu0 0.0
      %649 = vmatpush1.msra.mxu0 %v602
      %650 = vmatprep.subr.mxu0 0.0
      %651 = vmatpush1.msra.mxu0 %v601
      %652 = vmatprep.subr.mxu0 0.0
      %653 = vmatpush1.msra.mxu0 %v600
      %654 = vmatprep.subr.mxu0 0.0
      %655 = vmatpush1.msra.mxu0 %v599
      %656 = vmatprep.subr.mxu0 0.0
      %657 = vmatpush1.msra.mxu0 %v598
      %658 = vmatprep.subr.mxu0 0.0
      %659 = vmatpush2.msra.mxu0 0.0
      %660 = vmatprep.subr.mxu0 0.0
      %661 = vmatpush2.msra.mxu0 0.0
      %662 = vmatprep.subr.mxu0 0.0
      %663 = vmatpush2.msra.mxu0 0.0
      %664 = vmatprep.subr.mxu0 0.0
      %665 = vmatpush2.msra.mxu0 0.0
      %666 = vmatprep.subr.mxu0 0.0
      %667 = vmatpush2.msra.mxu0 0.0
      %668 = vmatprep.subr.mxu0 0.0
      %669 = vmatpush2.msra.mxu0 0.0
      %670 = vmatprep.subr.mxu0 0.0
      %671 = vmatpush2.msra.mxu0 0.0
      %672 = vmatprep.subr.mxu0 0.0
      %673 = vmatpush2.msra.mxu0 0.0
      %674 = vmatprep.subr.mxu0 0.0
      %675 = vmatpush2.msra.mxu0 0.0
      %676 = vmatprep.subr.mxu0 0.0
      %677 = vmatpush2.msra.mxu0 0.0
      %678 = vmatprep.subr.mxu0 0.0
      %679 = vmatpush2.msra.mxu0 0.0
      %680 = vmatprep.subr.mxu0 0.0
      %681 = vmatpush2.msra.mxu0 0.0
      %682 = vmatprep.subr.mxu0 0.0
      %683 = vmatpush2.msra.mxu0 0.0
      %684 = vmatprep.subr.mxu0 0.0
      %685 = vmatpush2.msra.mxu0 0.0
      %686 = vmatprep.subr.mxu0 0.0
      %687 = vmatpush2.msra.mxu0 0.0
      %688 = vmatprep.subr.mxu0 0.0
      %689 = vmatpush2.msra.mxu0 0.0
      %690 = vmatprep.mubr.f32.mxu0 0.0
      %691 = vmatmul.mubr.f32.gmra.mxu0 %v607
      %v692 = vpop.f32.mrf.mxu0
      %v693 = vadd.f32 0.0, %v692
      %v694 = vpop.f32.mrf.mxu0
      %695 = vmatprep.mubr.f32.mxu0 0.0
      %696 = vmatmul.mubr.f32.gmra.mxu0 %v610
      %v697 = vpop.f32.mrf.mxu0
      %v698 = vadd.f32 0.0, %v697
      %v699 = vpop.f32.mrf.mxu0
      %700 = vmatprep.mubr.f32.mxu0 0.0
      %701 = vmatmul.mubr.f32.gmra.mxu0 %v613
      %v702 = vpop.f32.mrf.mxu0
      %v703 = vadd.f32 0.0, %v702
      %v704 = vpop.f32.mrf.mxu0
      %705 = vmatprep.mubr.f32.mxu0 0.0
      %706 = vmatmul.mubr.f32.gmra.mxu0 %v616
      %v707 = vpop.f32.mrf.mxu0
      %v708 = vadd.f32 0.0, %v707
      %v709 = vpop.f32.mrf.mxu0
      %710 = vmatprep.mubr.f32.mxu0 0.0
      %711 = vmatmul.mubr.f32.gmra.mxu0 %v619
      %v712 = vpop.f32.mrf.mxu0
      %v713 = vadd.f32 0.0, %v712
      %v714 = vpop.f32.mrf.mxu0
      %715 = vmatprep.mubr.f32.mxu0 0.0
      %716 = vmatmul.mubr.f32.gmra.mxu0 %v622
      %v717 = vpop.f32.mrf.mxu0
      %v718 = vadd.f32 0.0, %v717
      %v719 = vpop.f32.mrf.mxu0
      %720 = vmatprep.mubr.f32.mxu0 0.0
      %721 = vmatmul.mubr.f32.gmra.mxu0 %v624
      %v722 = vpop.f32.mrf.mxu0
      %v723 = vadd.f32 0.0, %v722
      %v724 = vpop.f32.mrf.mxu0
      %725 = vdwg.mxu0
      %726 = vmatprep.subr.mxu0 0.0
      %727 = vmatpush1.msra.mxu0 0.0
      %728 = vmatprep.subr.mxu0 0.0
      %729 = vmatpush1.msra.mxu0 0.0
      %730 = vmatprep.subr.mxu0 0.0
      %731 = vmatpush1.msra.mxu0 0.0
      %732 = vmatprep.subr.mxu0 0.0
      %733 = vmatpush1.msra.mxu0 0.0
      %734 = vmatprep.subr.mxu0 0.0
      %735 = vmatpush1.msra.mxu0 0.0
      %736 = vmatprep.subr.mxu0 0.0
      %737 = vmatpush1.msra.mxu0 0.0
      %738 = vmatprep.subr.mxu0 0.0
      %739 = vmatpush1.msra.mxu0 0.0
      %740 = vmatprep.subr.mxu0 0.0
      %741 = vmatpush1.msra.mxu0 0.0
      %742 = vmatprep.subr.mxu0 0.0
      %743 = vmatpush1.msra.mxu0 %v596
      %744 = vmatprep.subr.mxu0 0.0
      %745 = vmatpush1.msra.mxu0 %v595
      %746 = vmatprep.subr.mxu0 0.0
      %747 = vmatpush1.msra.mxu0 %v594
      %748 = vmatprep.subr.mxu0 0.0
      %749 = vmatpush1.msra.mxu0 %v593
      %750 = vmatprep.subr.mxu0 0.0
      %751 = vmatpush1.msra.mxu0 %v592
      %752 = vmatprep.subr.mxu0 0.0
      %753 = vmatpush1.msra.mxu0 %v591
      %754 = vmatprep.subr.mxu0 0.0
      %755 = vmatpush1.msra.mxu0 %v590
      %756 = vmatprep.subr.mxu0 0.0
      %757 = vmatpush1.msra.mxu0 %v589
      %758 = vmatprep.subr.mxu0 0.0
      %759 = vmatpush2.msra.mxu0 0.0
      %760 = vmatprep.subr.mxu0 0.0
      %761 = vmatpush2.msra.mxu0 0.0
      %762 = vmatprep.subr.mxu0 0.0
      %763 = vmatpush2.msra.mxu0 0.0
      %764 = vmatprep.subr.mxu0 0.0
      %765 = vmatpush2.msra.mxu0 0.0
      %766 = vmatprep.subr.mxu0 0.0
      %767 = vmatpush2.msra.mxu0 0.0
      %768 = vmatprep.subr.mxu0 0.0
      %769 = vmatpush2.msra.mxu0 0.0
      %770 = vmatprep.subr.mxu0 0.0
      %771 = vmatpush2.msra.mxu0 0.0
      %772 = vmatprep.subr.mxu0 0.0
      %773 = vmatpush2.msra.mxu0 0.0
      %774 = vmatprep.subr.mxu0 0.0
      %775 = vmatpush2.msra.mxu0 0.0
      %776 = vmatprep.subr.mxu0 0.0
      %777 = vmatpush2.msra.mxu0 0.0
      %778 = vmatprep.subr.mxu0 0.0
      %779 = vmatpush2.msra.mxu0 0.0
      %780 = vmatprep.subr.mxu0 0.0
      %781 = vmatpush2.msra.mxu0 0.0
      %782 = vmatprep.subr.mxu0 0.0
      %783 = vmatpush2.msra.mxu0 0.0
      %784 = vmatprep.subr.mxu0 0.0
      %785 = vmatpush2.msra.mxu0 0.0
      %786 = vmatprep.subr.mxu0 0.0
      %787 = vmatpush2.msra.mxu0 0.0
      %788 = vmatprep.subr.mxu0 0.0
      %789 = vmatpush2.msra.mxu0 0.0
      %790 = vmatprep.mubr.f32.mxu0 0.0
      %791 = vmatmul.mubr.f32.gmra.mxu0 %v467
      %v792 = vpop.f32.mrf.mxu0
      %v793 = vadd.f32 %v693, %v792
      %v794 = vpop.f32.mrf.mxu0
      %795 = vmatprep.mubr.f32.mxu0 0.0
      %796 = vmatmul.mubr.f32.gmra.mxu0 %v469
      %v797 = vpop.f32.mrf.mxu0
      %v798 = vadd.f32 %v698, %v797
      %v799 = vpop.f32.mrf.mxu0
      %800 = vmatprep.mubr.f32.mxu0 0.0
      %801 = vmatmul.mubr.f32.gmra.mxu0 %v471
      %v802 = vpop.f32.mrf.mxu0
      %v803 = vadd.f32 %v703, %v802
      %v804 = vpop.f32.mrf.mxu0
      %805 = vmatprep.mubr.f32.mxu0 0.0
      %806 = vmatmul.mubr.f32.gmra.mxu0 %v473
      %v807 = vpop.f32.mrf.mxu0
      %v808 = vadd.f32 %v708, %v807
      %v809 = vpop.f32.mrf.mxu0
      %810 = vmatprep.mubr.f32.mxu0 0.0
      %811 = vmatmul.mubr.f32.gmra.mxu0 %v475
      %v812 = vpop.f32.mrf.mxu0
      %v813 = vadd.f32 %v713, %v812
      %v814 = vpop.f32.mrf.mxu0
      %815 = vmatprep.mubr.f32.mxu0 0.0
      %816 = vmatmul.mubr.f32.gmra.mxu0 %v477
      %v817 = vpop.f32.mrf.mxu0
      %v818 = vadd.f32 %v718, %v817
      %v819 = vpop.f32.mrf.mxu0
      %820 = vmatprep.mubr.f32.mxu0 0.0
      %821 = vmatmul.mubr.f32.gmra.mxu0 %v479
      %v822 = vpop.f32.mrf.mxu0
      %v823 = vadd.f32 %v723, %v822
      %v824 = vpop.f32.mrf.mxu0
      %825 = vdwg.mxu0
      %v826 = vadd.f32 %v793, %v464
      %v827 = vadd.f32 %v798, %v464
      %v828 = vadd.f32 %v803, %v464
      %v829 = vadd.f32 %v808, %v464
      %v830 = vadd.f32 %v813, %v464
      %v831 = vadd.f32 %v818, %v464
      %v832 = vadd.f32 %v823, %v464
      %v833 = vmax.f32 %v826, 0.0
      %v834 = vmax.f32 %v827, 0.0
      %v835 = vmax.f32 %v828, 0.0
      %v836 = vmax.f32 %v829, 0.0
      %v837 = vmax.f32 %v830, 0.0
      %v838 = vmax.f32 %v831, 0.0
      %v839 = vmax.f32 %v832, 0.0
      %s840 = scalar_lea.vmem %s1, 64
      %v841 = vld [vmem:[%s840] sm:$0xff]
      %v842 = vld [vmem:[%s840 + $0x8] sm:$0xff]
      %v843 = vld [vmem:[%s840 + $0x10] sm:$0xff]
      %v844 = vld [vmem:[%s840 + $0x18] sm:$0xff]
      %v845 = vld [vmem:[%s840 + $0x20] sm:$0xff]
      %v846 = vld [vmem:[%s840 + $0x28] sm:$0xff]
      %v847 = vld [vmem:[%s840 + $0x30] sm:$0xff]
      %v848 = vld [vmem:[%s840 + $0x38] sm:$0xff]
      %s849 = scalar_lea.vmem %s1, 448
      %v850 = vld [vmem:[%s849] sm:$0xff]
      %v851 = vld [vmem:[%s849 + $0x8] sm:$0xff]
      %v852 = vld [vmem:[%s849 + $0x10] sm:$0xff]
      %v853 = vld [vmem:[%s849 + $0x18] sm:$0xff]
      %v854 = vld [vmem:[%s849 + $0x20] sm:$0xff]
      %v855 = vld [vmem:[%s849 + $0x28] sm:$0xff]
      %v856 = vld [vmem:[%s849 + $0x30] sm:$0xff]
      %v857 = vld [vmem:[%s849 + $0x38] sm:$0xff]
      %v858 = vsel %vm466, %v409, 0
      %v860 = vsel %vm466, %v411, 0
      %v862 = vsel %vm466, %v413, 0
      %v864 = vsel %vm466, %v415, 0
      %v866 = vsel %vm466, %v417, 0
      %v868 = vsel %vm466, %v422, 0
      %870 = vmatprep.subr.mxu0 0.0
      %871 = vmatpush1.msra.mxu0 0.0
      %872 = vmatprep.subr.mxu0 0.0
      %873 = vmatpush1.msra.mxu0 0.0
      %874 = vmatprep.subr.mxu0 0.0
      %875 = vmatpush1.msra.mxu0 0.0
      %876 = vmatprep.subr.mxu0 0.0
      %877 = vmatpush1.msra.mxu0 0.0
      %878 = vmatprep.subr.mxu0 0.0
      %879 = vmatpush1.msra.mxu0 0.0
      %880 = vmatprep.subr.mxu0 0.0
      %881 = vmatpush1.msra.mxu0 0.0
      %882 = vmatprep.subr.mxu0 0.0
      %883 = vmatpush1.msra.mxu0 0.0
      %884 = vmatprep.subr.mxu0 0.0
      %885 = vmatpush1.msra.mxu0 0.0
      %886 = vmatprep.subr.mxu0 0.0
      %887 = vmatpush1.msra.mxu0 %v857
      %888 = vmatprep.subr.mxu0 0.0
      %889 = vmatpush1.msra.mxu0 %v856
      %890 = vmatprep.subr.mxu0 0.0
      %891 = vmatpush1.msra.mxu0 %v855
      %892 = vmatprep.subr.mxu0 0.0
      %893 = vmatpush1.msra.mxu0 %v854
      %894 = vmatprep.subr.mxu0 0.0
      %895 = vmatpush1.msra.mxu0 %v853
      %896 = vmatprep.subr.mxu0 0.0
      %897 = vmatpush1.msra.mxu0 %v852
      %898 = vmatprep.subr.mxu0 0.0
      %899 = vmatpush1.msra.mxu0 %v851
      %900 = vmatprep.subr.mxu0 0.0
      %901 = vmatpush1.msra.mxu0 %v850
      %902 = vmatprep.subr.mxu0 0.0
      %903 = vmatpush2.msra.mxu0 0.0
      %904 = vmatprep.subr.mxu0 0.0
      %905 = vmatpush2.msra.mxu0 0.0
      %906 = vmatprep.subr.mxu0 0.0
      %907 = vmatpush2.msra.mxu0 0.0
      %908 = vmatprep.subr.mxu0 0.0
      %909 = vmatpush2.msra.mxu0 0.0
      %910 = vmatprep.subr.mxu0 0.0
      %911 = vmatpush2.msra.mxu0 0.0
      %912 = vmatprep.subr.mxu0 0.0
      %913 = vmatpush2.msra.mxu0 0.0
      %914 = vmatprep.subr.mxu0 0.0
      %915 = vmatpush2.msra.mxu0 0.0
      %916 = vmatprep.subr.mxu0 0.0
      %917 = vmatpush2.msra.mxu0 0.0
      %918 = vmatprep.subr.mxu0 0.0
      %919 = vmatpush2.msra.mxu0 0.0
      %920 = vmatprep.subr.mxu0 0.0
      %921 = vmatpush2.msra.mxu0 0.0
      %922 = vmatprep.subr.mxu0 0.0
      %923 = vmatpush2.msra.mxu0 0.0
      %924 = vmatprep.subr.mxu0 0.0
      %925 = vmatpush2.msra.mxu0 0.0
      %926 = vmatprep.subr.mxu0 0.0
      %927 = vmatpush2.msra.mxu0 0.0
      %928 = vmatprep.subr.mxu0 0.0
      %929 = vmatpush2.msra.mxu0 0.0
      %930 = vmatprep.subr.mxu0 0.0
      %931 = vmatpush2.msra.mxu0 0.0
      %932 = vmatprep.subr.mxu0 0.0
      %933 = vmatpush2.msra.mxu0 0.0
      %934 = vmatprep.mubr.f32.mxu0 0.0
      %935 = vmatmul.mubr.f32.gmra.mxu0 %v858
      %v936 = vpop.f32.mrf.mxu0
      %v937 = vadd.f32 0.0, %v936
      %v938 = vpop.f32.mrf.mxu0
      %939 = vmatprep.mubr.f32.mxu0 0.0
      %940 = vmatmul.mubr.f32.gmra.mxu0 %v860
      %v941 = vpop.f32.mrf.mxu0
      %v942 = vadd.f32 0.0, %v941
      %v943 = vpop.f32.mrf.mxu0
      %944 = vmatprep.mubr.f32.mxu0 0.0
      %945 = vmatmul.mubr.f32.gmra.mxu0 %v862
      %v946 = vpop.f32.mrf.mxu0
      %v947 = vadd.f32 0.0, %v946
      %v948 = vpop.f32.mrf.mxu0
      %949 = vmatprep.mubr.f32.mxu0 0.0
      %950 = vmatmul.mubr.f32.gmra.mxu0 %v864
      %v951 = vpop.f32.mrf.mxu0
      %v952 = vadd.f32 0.0, %v951
      %v953 = vpop.f32.mrf.mxu0
      %954 = vmatprep.mubr.f32.mxu0 0.0
      %955 = vmatmul.mubr.f32.gmra.mxu0 %v866
      %v956 = vpop.f32.mrf.mxu0
      %v957 = vadd.f32 0.0, %v956
      %v958 = vpop.f32.mrf.mxu0
      %959 = vmatprep.mubr.f32.mxu0 0.0
      %960 = vmatmul.mubr.f32.gmra.mxu0 %v868
      %v961 = vpop.f32.mrf.mxu0
      %v962 = vadd.f32 0.0, %v961
      %v963 = vpop.f32.mrf.mxu0
      %964 = vmatprep.mubr.f32.mxu0 0.0
      %965 = vmatmul.mubr.f32.gmra.mxu0 %v624
      %v966 = vpop.f32.mrf.mxu0
      %v967 = vadd.f32 0.0, %v966
      %v968 = vpop.f32.mrf.mxu0
      %969 = vdwg.mxu0
      %970 = vmatprep.subr.mxu0 0.0
      %971 = vmatpush1.msra.mxu0 0.0
      %972 = vmatprep.subr.mxu0 0.0
      %973 = vmatpush1.msra.mxu0 0.0
      %974 = vmatprep.subr.mxu0 0.0
      %975 = vmatpush1.msra.mxu0 0.0
      %976 = vmatprep.subr.mxu0 0.0
      %977 = vmatpush1.msra.mxu0 0.0
      %978 = vmatprep.subr.mxu0 0.0
      %979 = vmatpush1.msra.mxu0 0.0
      %980 = vmatprep.subr.mxu0 0.0
      %981 = vmatpush1.msra.mxu0 0.0
      %982 = vmatprep.subr.mxu0 0.0
      %983 = vmatpush1.msra.mxu0 0.0
      %984 = vmatprep.subr.mxu0 0.0
      %985 = vmatpush1.msra.mxu0 0.0
      %986 = vmatprep.subr.mxu0 0.0
      %987 = vmatpush1.msra.mxu0 %v848
      %988 = vmatprep.subr.mxu0 0.0
      %989 = vmatpush1.msra.mxu0 %v847
      %990 = vmatprep.subr.mxu0 0.0
      %991 = vmatpush1.msra.mxu0 %v846
      %992 = vmatprep.subr.mxu0 0.0
      %993 = vmatpush1.msra.mxu0 %v845
      %994 = vmatprep.subr.mxu0 0.0
      %995 = vmatpush1.msra.mxu0 %v844
      %996 = vmatprep.subr.mxu0 0.0
      %997 = vmatpush1.msra.mxu0 %v843
      %998 = vmatprep.subr.mxu0 0.0
      %999 = vmatpush1.msra.mxu0 %v842
      %1000 = vmatprep.subr.mxu0 0.0
      %1001 = vmatpush1.msra.mxu0 %v841
      %1002 = vmatprep.subr.mxu0 0.0
      %1003 = vmatpush2.msra.mxu0 0.0
      %1004 = vmatprep.subr.mxu0 0.0
      %1005 = vmatpush2.msra.mxu0 0.0
      %1006 = vmatprep.subr.mxu0 0.0
      %1007 = vmatpush2.msra.mxu0 0.0
      %1008 = vmatprep.subr.mxu0 0.0
      %1009 = vmatpush2.msra.mxu0 0.0
      %1010 = vmatprep.subr.mxu0 0.0
      %1011 = vmatpush2.msra.mxu0 0.0
      %1012 = vmatprep.subr.mxu0 0.0
      %1013 = vmatpush2.msra.mxu0 0.0
      %1014 = vmatprep.subr.mxu0 0.0
      %1015 = vmatpush2.msra.mxu0 0.0
      %1016 = vmatprep.subr.mxu0 0.0
      %1017 = vmatpush2.msra.mxu0 0.0
      %1018 = vmatprep.subr.mxu0 0.0
      %1019 = vmatpush2.msra.mxu0 0.0
      %1020 = vmatprep.subr.mxu0 0.0
      %1021 = vmatpush2.msra.mxu0 0.0
      %1022 = vmatprep.subr.mxu0 0.0
      %1023 = vmatpush2.msra.mxu0 0.0
      %1024 = vmatprep.subr.mxu0 0.0
      %1025 = vmatpush2.msra.mxu0 0.0
      %1026 = vmatprep.subr.mxu0 0.0
      %1027 = vmatpush2.msra.mxu0 0.0
      %1028 = vmatprep.subr.mxu0 0.0
      %1029 = vmatpush2.msra.mxu0 0.0
      %1030 = vmatprep.subr.mxu0 0.0
      %1031 = vmatpush2.msra.mxu0 0.0
      %1032 = vmatprep.subr.mxu0 0.0
      %1033 = vmatpush2.msra.mxu0 0.0
      %1034 = vmatprep.mubr.f32.mxu0 0.0
      %1035 = vmatmul.mubr.f32.gmra.mxu0 %v467
      %v1036 = vpop.f32.mrf.mxu0
      %v1037 = vadd.f32 %v937, %v1036
      %v1038 = vpop.f32.mrf.mxu0
      %1039 = vmatprep.mubr.f32.mxu0 0.0
      %1040 = vmatmul.mubr.f32.gmra.mxu0 %v469
      %v1041 = vpop.f32.mrf.mxu0
      %v1042 = vadd.f32 %v942, %v1041
      %v1043 = vpop.f32.mrf.mxu0
      %1044 = vmatprep.mubr.f32.mxu0 0.0
      %1045 = vmatmul.mubr.f32.gmra.mxu0 %v471
      %v1046 = vpop.f32.mrf.mxu0
      %v1047 = vadd.f32 %v947, %v1046
      %v1048 = vpop.f32.mrf.mxu0
      %1049 = vmatprep.mubr.f32.mxu0 0.0
      %1050 = vmatmul.mubr.f32.gmra.mxu0 %v473
      %v1051 = vpop.f32.mrf.mxu0
      %v1052 = vadd.f32 %v952, %v1051
      %v1053 = vpop.f32.mrf.mxu0
      %1054 = vmatprep.mubr.f32.mxu0 0.0
      %1055 = vmatmul.mubr.f32.gmra.mxu0 %v475
      %v1056 = vpop.f32.mrf.mxu0
      %v1057 = vadd.f32 %v957, %v1056
      %v1058 = vpop.f32.mrf.mxu0
      %1059 = vmatprep.mubr.f32.mxu0 0.0
      %1060 = vmatmul.mubr.f32.gmra.mxu0 %v477
      %v1061 = vpop.f32.mrf.mxu0
      %v1062 = vadd.f32 %v962, %v1061
      %v1063 = vpop.f32.mrf.mxu0
      %1064 = vmatprep.mubr.f32.mxu0 0.0
      %1065 = vmatmul.mubr.f32.gmra.mxu0 %v479
      %v1066 = vpop.f32.mrf.mxu0
      %v1067 = vadd.f32 %v967, %v1066
      %v1068 = vpop.f32.mrf.mxu0
      %1069 = vdwg.mxu0
      %v1070 = vadd.f32 %v1037, %v464
      %v1071 = vadd.f32 %v1042, %v464
      %v1072 = vadd.f32 %v1047, %v464
      %v1073 = vadd.f32 %v1052, %v464
      %v1074 = vadd.f32 %v1057, %v464
      %v1075 = vadd.f32 %v1062, %v464
      %v1076 = vadd.f32 %v1067, %v464
      %v1077 = vmax.f32 %v1070, 0.0
      %v1078 = vmax.f32 %v1071, 0.0
      %v1079 = vmax.f32 %v1072, 0.0
      %v1080 = vmax.f32 %v1073, 0.0
      %v1081 = vmax.f32 %v1074, 0.0
      %v1082 = vmax.f32 %v1075, 0.0
      %v1083 = vmax.f32 %v1076, 0.0
      %v1084 = vld [vmem:[%s1] sm:$0xff]
      %v1085 = vld [vmem:[%s1 + $0x8] sm:$0xff]
      %v1086 = vld [vmem:[%s1 + $0x10] sm:$0xff]
      %v1087 = vld [vmem:[%s1 + $0x18] sm:$0xff]
      %v1088 = vld [vmem:[%s1 + $0x20] sm:$0xff]
      %v1089 = vld [vmem:[%s1 + $0x28] sm:$0xff]
      %v1090 = vld [vmem:[%s1 + $0x30] sm:$0xff]
      %v1091 = vld [vmem:[%s1 + $0x38] sm:$0xff]
      %s1092 = scalar_lea.vmem %s1, 128
      %v1093 = vld [vmem:[%s1092] sm:$0xff]
      %v1094 = vld [vmem:[%s1092 + $0x8] sm:$0xff]
      %v1095 = vld [vmem:[%s1092 + $0x10] sm:$0xff]
      %v1096 = vld [vmem:[%s1092 + $0x18] sm:$0xff]
      %v1097 = vld [vmem:[%s1092 + $0x20] sm:$0xff]
      %v1098 = vld [vmem:[%s1092 + $0x28] sm:$0xff]
      %v1099 = vld [vmem:[%s1092 + $0x30] sm:$0xff]
      %v1100 = vld [vmem:[%s1092 + $0x38] sm:$0xff]
      %1101 = vmatprep.subr.mxu0 0.0
      %1102 = vmatpush1.msra.mxu0 0.0
      %1103 = vmatprep.subr.mxu0 0.0
      %1104 = vmatpush1.msra.mxu0 0.0
      %1105 = vmatprep.subr.mxu0 0.0
      %1106 = vmatpush1.msra.mxu0 0.0
      %1107 = vmatprep.subr.mxu0 0.0
      %1108 = vmatpush1.msra.mxu0 0.0
      %1109 = vmatprep.subr.mxu0 0.0
      %1110 = vmatpush1.msra.mxu0 0.0
      %1111 = vmatprep.subr.mxu0 0.0
      %1112 = vmatpush1.msra.mxu0 0.0
      %1113 = vmatprep.subr.mxu0 0.0
      %1114 = vmatpush1.msra.mxu0 0.0
      %1115 = vmatprep.subr.mxu0 0.0
      %1116 = vmatpush1.msra.mxu0 0.0
      %1117 = vmatprep.subr.mxu0 0.0
      %1118 = vmatpush1.msra.mxu0 %v1100
      %1119 = vmatprep.subr.mxu0 0.0
      %1120 = vmatpush1.msra.mxu0 %v1099
      %1121 = vmatprep.subr.mxu0 0.0
      %1122 = vmatpush1.msra.mxu0 %v1098
      %1123 = vmatprep.subr.mxu0 0.0
      %1124 = vmatpush1.msra.mxu0 %v1097
      %1125 = vmatprep.subr.mxu0 0.0
      %1126 = vmatpush1.msra.mxu0 %v1096
      %1127 = vmatprep.subr.mxu0 0.0
      %1128 = vmatpush1.msra.mxu0 %v1095
      %1129 = vmatprep.subr.mxu0 0.0
      %1130 = vmatpush1.msra.mxu0 %v1094
      %1131 = vmatprep.subr.mxu0 0.0
      %1132 = vmatpush1.msra.mxu0 %v1093
      %1133 = vmatprep.subr.mxu0 0.0
      %1134 = vmatpush2.msra.mxu0 0.0
      %1135 = vmatprep.subr.mxu0 0.0
      %1136 = vmatpush2.msra.mxu0 0.0
      %1137 = vmatprep.subr.mxu0 0.0
      %1138 = vmatpush2.msra.mxu0 0.0
      %1139 = vmatprep.subr.mxu0 0.0
      %1140 = vmatpush2.msra.mxu0 0.0
      %1141 = vmatprep.subr.mxu0 0.0
      %1142 = vmatpush2.msra.mxu0 0.0
      %1143 = vmatprep.subr.mxu0 0.0
      %1144 = vmatpush2.msra.mxu0 0.0
      %1145 = vmatprep.subr.mxu0 0.0
      %1146 = vmatpush2.msra.mxu0 0.0
      %1147 = vmatprep.subr.mxu0 0.0
      %1148 = vmatpush2.msra.mxu0 0.0
      %1149 = vmatprep.subr.mxu0 0.0
      %1150 = vmatpush2.msra.mxu0 0.0
      %1151 = vmatprep.subr.mxu0 0.0
      %1152 = vmatpush2.msra.mxu0 0.0
      %1153 = vmatprep.subr.mxu0 0.0
      %1154 = vmatpush2.msra.mxu0 0.0
      %1155 = vmatprep.subr.mxu0 0.0
      %1156 = vmatpush2.msra.mxu0 0.0
      %1157 = vmatprep.subr.mxu0 0.0
      %1158 = vmatpush2.msra.mxu0 0.0
      %1159 = vmatprep.subr.mxu0 0.0
      %1160 = vmatpush2.msra.mxu0 0.0
      %1161 = vmatprep.subr.mxu0 0.0
      %1162 = vmatpush2.msra.mxu0 0.0
      %1163 = vmatprep.subr.mxu0 0.0
      %1164 = vmatpush2.msra.mxu0 0.0
      %1165 = vmatprep.mubr.f32.mxu0 0.0
      %1166 = vmatmul.mubr.f32.gmra.mxu0 %v607
      %v1167 = vpop.f32.mrf.mxu0
      %v1168 = vadd.f32 0.0, %v1167
      %v1169 = vpop.f32.mrf.mxu0
      %1170 = vmatprep.mubr.f32.mxu0 0.0
      %1171 = vmatmul.mubr.f32.gmra.mxu0 %v610
      %v1172 = vpop.f32.mrf.mxu0
      %v1173 = vadd.f32 0.0, %v1172
      %v1174 = vpop.f32.mrf.mxu0
      %1175 = vmatprep.mubr.f32.mxu0 0.0
      %1176 = vmatmul.mubr.f32.gmra.mxu0 %v613
      %v1177 = vpop.f32.mrf.mxu0
      %v1178 = vadd.f32 0.0, %v1177
      %v1179 = vpop.f32.mrf.mxu0
      %1180 = vmatprep.mubr.f32.mxu0 0.0
      %1181 = vmatmul.mubr.f32.gmra.mxu0 %v616
      %v1182 = vpop.f32.mrf.mxu0
      %v1183 = vadd.f32 0.0, %v1182
      %v1184 = vpop.f32.mrf.mxu0
      %1185 = vmatprep.mubr.f32.mxu0 0.0
      %1186 = vmatmul.mubr.f32.gmra.mxu0 %v619
      %v1187 = vpop.f32.mrf.mxu0
      %v1188 = vadd.f32 0.0, %v1187
      %v1189 = vpop.f32.mrf.mxu0
      %1190 = vmatprep.mubr.f32.mxu0 0.0
      %1191 = vmatmul.mubr.f32.gmra.mxu0 %v622
      %v1192 = vpop.f32.mrf.mxu0
      %v1193 = vadd.f32 0.0, %v1192
      %v1194 = vpop.f32.mrf.mxu0
      %1195 = vmatprep.mubr.f32.mxu0 0.0
      %1196 = vmatmul.mubr.f32.gmra.mxu0 %v624
      %v1197 = vpop.f32.mrf.mxu0
      %v1198 = vadd.f32 0.0, %v1197
      %v1199 = vpop.f32.mrf.mxu0
      %1200 = vdwg.mxu0
      %1201 = vmatprep.subr.mxu0 0.0
      %1202 = vmatpush1.msra.mxu0 0.0
      %1203 = vmatprep.subr.mxu0 0.0
      %1204 = vmatpush1.msra.mxu0 0.0
      %1205 = vmatprep.subr.mxu0 0.0
      %1206 = vmatpush1.msra.mxu0 0.0
      %1207 = vmatprep.subr.mxu0 0.0
      %1208 = vmatpush1.msra.mxu0 0.0
      %1209 = vmatprep.subr.mxu0 0.0
      %1210 = vmatpush1.msra.mxu0 0.0
      %1211 = vmatprep.subr.mxu0 0.0
      %1212 = vmatpush1.msra.mxu0 0.0
      %1213 = vmatprep.subr.mxu0 0.0
      %1214 = vmatpush1.msra.mxu0 0.0
      %1215 = vmatprep.subr.mxu0 0.0
      %1216 = vmatpush1.msra.mxu0 0.0
      %1217 = vmatprep.subr.mxu0 0.0
      %1218 = vmatpush1.msra.mxu0 %v1091
      %1219 = vmatprep.subr.mxu0 0.0
      %1220 = vmatpush1.msra.mxu0 %v1090
      %1221 = vmatprep.subr.mxu0 0.0
      %1222 = vmatpush1.msra.mxu0 %v1089
      %1223 = vmatprep.subr.mxu0 0.0
      %1224 = vmatpush1.msra.mxu0 %v1088
      %1225 = vmatprep.subr.mxu0 0.0
      %1226 = vmatpush1.msra.mxu0 %v1087
      %1227 = vmatprep.subr.mxu0 0.0
      %1228 = vmatpush1.msra.mxu0 %v1086
      %1229 = vmatprep.subr.mxu0 0.0
      %1230 = vmatpush1.msra.mxu0 %v1085
      %1231 = vmatprep.subr.mxu0 0.0
      %1232 = vmatpush1.msra.mxu0 %v1084
      %1233 = vmatprep.subr.mxu0 0.0
      %1234 = vmatpush2.msra.mxu0 0.0
      %1235 = vmatprep.subr.mxu0 0.0
      %1236 = vmatpush2.msra.mxu0 0.0
      %1237 = vmatprep.subr.mxu0 0.0
      %1238 = vmatpush2.msra.mxu0 0.0
      %1239 = vmatprep.subr.mxu0 0.0
      %1240 = vmatpush2.msra.mxu0 0.0
      %1241 = vmatprep.subr.mxu0 0.0
      %1242 = vmatpush2.msra.mxu0 0.0
      %1243 = vmatprep.subr.mxu0 0.0
      %1244 = vmatpush2.msra.mxu0 0.0
      %1245 = vmatprep.subr.mxu0 0.0
      %1246 = vmatpush2.msra.mxu0 0.0
      %1247 = vmatprep.subr.mxu0 0.0
      %1248 = vmatpush2.msra.mxu0 0.0
      %1249 = vmatprep.subr.mxu0 0.0
      %1250 = vmatpush2.msra.mxu0 0.0
      %1251 = vmatprep.subr.mxu0 0.0
      %1252 = vmatpush2.msra.mxu0 0.0
      %1253 = vmatprep.subr.mxu0 0.0
      %1254 = vmatpush2.msra.mxu0 0.0
      %1255 = vmatprep.subr.mxu0 0.0
      %1256 = vmatpush2.msra.mxu0 0.0
      %1257 = vmatprep.subr.mxu0 0.0
      %1258 = vmatpush2.msra.mxu0 0.0
      %1259 = vmatprep.subr.mxu0 0.0
      %1260 = vmatpush2.msra.mxu0 0.0
      %1261 = vmatprep.subr.mxu0 0.0
      %1262 = vmatpush2.msra.mxu0 0.0
      %1263 = vmatprep.subr.mxu0 0.0
      %1264 = vmatpush2.msra.mxu0 0.0
      %1265 = vmatprep.mubr.f32.mxu0 0.0
      %1266 = vmatmul.mubr.f32.gmra.mxu0 %v467
      %v1267 = vpop.f32.mrf.mxu0
      %v1268 = vadd.f32 %v1168, %v1267
      %v1269 = vpop.f32.mrf.mxu0
      %1270 = vmatprep.mubr.f32.mxu0 0.0
      %1271 = vmatmul.mubr.f32.gmra.mxu0 %v469
      %v1272 = vpop.f32.mrf.mxu0
      %v1273 = vadd.f32 %v1173, %v1272
      %v1274 = vpop.f32.mrf.mxu0
      %1275 = vmatprep.mubr.f32.mxu0 0.0
      %1276 = vmatmul.mubr.f32.gmra.mxu0 %v471
      %v1277 = vpop.f32.mrf.mxu0
      %v1278 = vadd.f32 %v1178, %v1277
      %v1279 = vpop.f32.mrf.mxu0
      %1280 = vmatprep.mubr.f32.mxu0 0.0
      %1281 = vmatmul.mubr.f32.gmra.mxu0 %v473
      %v1282 = vpop.f32.mrf.mxu0
      %v1283 = vadd.f32 %v1183, %v1282
      %v1284 = vpop.f32.mrf.mxu0
      %1285 = vmatprep.mubr.f32.mxu0 0.0
      %1286 = vmatmul.mubr.f32.gmra.mxu0 %v475
      %v1287 = vpop.f32.mrf.mxu0
      %v1288 = vadd.f32 %v1188, %v1287
      %v1289 = vpop.f32.mrf.mxu0
      %1290 = vmatprep.mubr.f32.mxu0 0.0
      %1291 = vmatmul.mubr.f32.gmra.mxu0 %v477
      %v1292 = vpop.f32.mrf.mxu0
      %v1293 = vadd.f32 %v1193, %v1292
      %v1294 = vpop.f32.mrf.mxu0
      %1295 = vmatprep.mubr.f32.mxu0 0.0
      %1296 = vmatmul.mubr.f32.gmra.mxu0 %v479
      %v1297 = vpop.f32.mrf.mxu0
      %v1298 = vadd.f32 %v1198, %v1297
      %v1299 = vpop.f32.mrf.mxu0
      %1300 = vdwg.mxu0
      %s1301 = scalar_lea.vmem %s1, 384
      %v1302 = vld [vmem:[%s1301] sm:$0xff]
      %v1303 = vld [vmem:[%s1301 + $0x8] sm:$0xff]
      %v1304 = vld [vmem:[%s1301 + $0x10] sm:$0xff]
      %v1305 = vld [vmem:[%s1301 + $0x18] sm:$0xff]
      %v1306 = vld [vmem:[%s1301 + $0x20] sm:$0xff]
      %v1307 = vld [vmem:[%s1301 + $0x28] sm:$0xff]
      %v1308 = vld [vmem:[%s1301 + $0x30] sm:$0xff]
      %v1309 = vld [vmem:[%s1301 + $0x38] sm:$0xff]
      %1310 = vmatprep.subr.mxu0 0.0
      %1311 = vmatpush1.msra.mxu0 0.0
      %1312 = vmatprep.subr.mxu0 0.0
      %1313 = vmatpush1.msra.mxu0 0.0
      %1314 = vmatprep.subr.mxu0 0.0
      %1315 = vmatpush1.msra.mxu0 0.0
      %1316 = vmatprep.subr.mxu0 0.0
      %1317 = vmatpush1.msra.mxu0 0.0
      %1318 = vmatprep.subr.mxu0 0.0
      %1319 = vmatpush1.msra.mxu0 0.0
      %1320 = vmatprep.subr.mxu0 0.0
      %1321 = vmatpush1.msra.mxu0 0.0
      %1322 = vmatprep.subr.mxu0 0.0
      %1323 = vmatpush1.msra.mxu0 0.0
      %1324 = vmatprep.subr.mxu0 0.0
      %1325 = vmatpush1.msra.mxu0 0.0
      %1326 = vmatprep.subr.mxu0 0.0
      %1327 = vmatpush1.msra.mxu0 %v1309
      %1328 = vmatprep.subr.mxu0 0.0
      %1329 = vmatpush1.msra.mxu0 %v1308
      %1330 = vmatprep.subr.mxu0 0.0
      %1331 = vmatpush1.msra.mxu0 %v1307
      %1332 = vmatprep.subr.mxu0 0.0
      %1333 = vmatpush1.msra.mxu0 %v1306
      %1334 = vmatprep.subr.mxu0 0.0
      %1335 = vmatpush1.msra.mxu0 %v1305
      %1336 = vmatprep.subr.mxu0 0.0
      %1337 = vmatpush1.msra.mxu0 %v1304
      %1338 = vmatprep.subr.mxu0 0.0
      %1339 = vmatpush1.msra.mxu0 %v1303
      %1340 = vmatprep.subr.mxu0 0.0
      %1341 = vmatpush1.msra.mxu0 %v1302
      %1342 = vmatprep.subr.mxu0 0.0
      %1343 = vmatpush2.msra.mxu0 0.0
      %1344 = vmatprep.subr.mxu0 0.0
      %1345 = vmatpush2.msra.mxu0 0.0
      %1346 = vmatprep.subr.mxu0 0.0
      %1347 = vmatpush2.msra.mxu0 0.0
      %1348 = vmatprep.subr.mxu0 0.0
      %1349 = vmatpush2.msra.mxu0 0.0
      %1350 = vmatprep.subr.mxu0 0.0
      %1351 = vmatpush2.msra.mxu0 0.0
      %1352 = vmatprep.subr.mxu0 0.0
      %1353 = vmatpush2.msra.mxu0 0.0
      %1354 = vmatprep.subr.mxu0 0.0
      %1355 = vmatpush2.msra.mxu0 0.0
      %1356 = vmatprep.subr.mxu0 0.0
      %1357 = vmatpush2.msra.mxu0 0.0
      %1358 = vmatprep.subr.mxu0 0.0
      %1359 = vmatpush2.msra.mxu0 0.0
      %1360 = vmatprep.subr.mxu0 0.0
      %1361 = vmatpush2.msra.mxu0 0.0
      %1362 = vmatprep.subr.mxu0 0.0
      %1363 = vmatpush2.msra.mxu0 0.0
      %1364 = vmatprep.subr.mxu0 0.0
      %1365 = vmatpush2.msra.mxu0 0.0
      %1366 = vmatprep.subr.mxu0 0.0
      %1367 = vmatpush2.msra.mxu0 0.0
      %1368 = vmatprep.subr.mxu0 0.0
      %1369 = vmatpush2.msra.mxu0 0.0
      %1370 = vmatprep.subr.mxu0 0.0
      %1371 = vmatpush2.msra.mxu0 0.0
      %1372 = vmatprep.subr.mxu0 0.0
      %1373 = vmatpush2.msra.mxu0 0.0
      %1374 = vmatprep.mubr.f32.mxu0 0.0
      %1375 = vmatmul.mubr.f32.gmra.mxu0 %v858
      %v1376 = vpop.f32.mrf.mxu0
      %v1377 = vadd.f32 0.0, %v1376
      %v1378 = vpop.f32.mrf.mxu0
      %1379 = vmatprep.mubr.f32.mxu0 0.0
      %1380 = vmatmul.mubr.f32.gmra.mxu0 %v860
      %v1381 = vpop.f32.mrf.mxu0
      %v1382 = vadd.f32 0.0, %v1381
      %v1383 = vpop.f32.mrf.mxu0
      %1384 = vmatprep.mubr.f32.mxu0 0.0
      %1385 = vmatmul.mubr.f32.gmra.mxu0 %v862
      %v1386 = vpop.f32.mrf.mxu0
      %v1387 = vadd.f32 0.0, %v1386
      %v1388 = vpop.f32.mrf.mxu0
      %1389 = vmatprep.mubr.f32.mxu0 0.0
      %1390 = vmatmul.mubr.f32.gmra.mxu0 %v864
      %v1391 = vpop.f32.mrf.mxu0
      %v1392 = vadd.f32 0.0, %v1391
      %v1393 = vpop.f32.mrf.mxu0
      %1394 = vmatprep.mubr.f32.mxu0 0.0
      %1395 = vmatmul.mubr.f32.gmra.mxu0 %v866
      %v1396 = vpop.f32.mrf.mxu0
      %v1397 = vadd.f32 0.0, %v1396
      %v1398 = vpop.f32.mrf.mxu0
      %1399 = vmatprep.mubr.f32.mxu0 0.0
      %1400 = vmatmul.mubr.f32.gmra.mxu0 %v868
      %v1401 = vpop.f32.mrf.mxu0
      %v1402 = vadd.f32 0.0, %v1401
      %v1403 = vpop.f32.mrf.mxu0
      %1404 = vmatprep.mubr.f32.mxu0 0.0
      %1405 = vmatmul.mubr.f32.gmra.mxu0 %v624
      %v1406 = vpop.f32.mrf.mxu0
      %v1407 = vadd.f32 0.0, %v1406
      %v1408 = vpop.f32.mrf.mxu0
      %1409 = vdwg.mxu0
      %v1410 = vadd.f32 %v1268, %v1377
      %v1411 = vadd.f32 %v1273, %v1382
      %v1412 = vadd.f32 %v1278, %v1387
      %v1413 = vadd.f32 %v1283, %v1392
      %v1414 = vadd.f32 %v1288, %v1397
      %v1415 = vadd.f32 %v1293, %v1402
      %v1416 = vadd.f32 %v1298, %v1407
      %s1417 = scalar_lea.vmem %s1, 512
      %v1418 = vld [vmem:[%s1417] sm:$0xff]
      %v1419 = vld [vmem:[%s1417 + $0x8] sm:$0xff]
      %v1420 = vld [vmem:[%s1417 + $0x10] sm:$0xff]
      %v1421 = vld [vmem:[%s1417 + $0x18] sm:$0xff]
      %v1422 = vld [vmem:[%s1417 + $0x20] sm:$0xff]
      %v1423 = vld [vmem:[%s1417 + $0x28] sm:$0xff]
      %v1424 = vld [vmem:[%s1417 + $0x30] sm:$0xff]
      %v1425 = vld [vmem:[%s1417 + $0x38] sm:$0xff]
      %v1427 = vsel %vm466, %v444, 0
      %v1430 = vsel %vm466, %v445, 0
      %v1433 = vsel %vm466, %v446, 0
      %v1436 = vsel %vm466, %v447, 0
      %v1439 = vsel %vm466, %v448, 0
      %v1442 = vsel %vm466, %v449, 0
      %1444 = vmatprep.subr.mxu0 0.0
      %1445 = vmatpush1.msra.mxu0 0.0
      %1446 = vmatprep.subr.mxu0 0.0
      %1447 = vmatpush1.msra.mxu0 0.0
      %1448 = vmatprep.subr.mxu0 0.0
      %1449 = vmatpush1.msra.mxu0 0.0
      %1450 = vmatprep.subr.mxu0 0.0
      %1451 = vmatpush1.msra.mxu0 0.0
      %1452 = vmatprep.subr.mxu0 0.0
      %1453 = vmatpush1.msra.mxu0 0.0
      %1454 = vmatprep.subr.mxu0 0.0
      %1455 = vmatpush1.msra.mxu0 0.0
      %1456 = vmatprep.subr.mxu0 0.0
      %1457 = vmatpush1.msra.mxu0 0.0
      %1458 = vmatprep.subr.mxu0 0.0
      %1459 = vmatpush1.msra.mxu0 0.0
      %1460 = vmatprep.subr.mxu0 0.0
      %1461 = vmatpush1.msra.mxu0 %v1425
      %1462 = vmatprep.subr.mxu0 0.0
      %1463 = vmatpush1.msra.mxu0 %v1424
      %1464 = vmatprep.subr.mxu0 0.0
      %1465 = vmatpush1.msra.mxu0 %v1423
      %1466 = vmatprep.subr.mxu0 0.0
      %1467 = vmatpush1.msra.mxu0 %v1422
      %1468 = vmatprep.subr.mxu0 0.0
      %1469 = vmatpush1.msra.mxu0 %v1421
      %1470 = vmatprep.subr.mxu0 0.0
      %1471 = vmatpush1.msra.mxu0 %v1420
      %1472 = vmatprep.subr.mxu0 0.0
      %1473 = vmatpush1.msra.mxu0 %v1419
      %1474 = vmatprep.subr.mxu0 0.0
      %1475 = vmatpush1.msra.mxu0 %v1418
      %1476 = vmatprep.subr.mxu0 0.0
      %1477 = vmatpush2.msra.mxu0 0.0
      %1478 = vmatprep.subr.mxu0 0.0
      %1479 = vmatpush2.msra.mxu0 0.0
      %1480 = vmatprep.subr.mxu0 0.0
      %1481 = vmatpush2.msra.mxu0 0.0
      %1482 = vmatprep.subr.mxu0 0.0
      %1483 = vmatpush2.msra.mxu0 0.0
      %1484 = vmatprep.subr.mxu0 0.0
      %1485 = vmatpush2.msra.mxu0 0.0
      %1486 = vmatprep.subr.mxu0 0.0
      %1487 = vmatpush2.msra.mxu0 0.0
      %1488 = vmatprep.subr.mxu0 0.0
      %1489 = vmatpush2.msra.mxu0 0.0
      %1490 = vmatprep.subr.mxu0 0.0
      %1491 = vmatpush2.msra.mxu0 0.0
      %1492 = vmatprep.subr.mxu0 0.0
      %1493 = vmatpush2.msra.mxu0 0.0
      %1494 = vmatprep.subr.mxu0 0.0
      %1495 = vmatpush2.msra.mxu0 0.0
      %1496 = vmatprep.subr.mxu0 0.0
      %1497 = vmatpush2.msra.mxu0 0.0
      %1498 = vmatprep.subr.mxu0 0.0
      %1499 = vmatpush2.msra.mxu0 0.0
      %1500 = vmatprep.subr.mxu0 0.0
      %1501 = vmatpush2.msra.mxu0 0.0
      %1502 = vmatprep.subr.mxu0 0.0
      %1503 = vmatpush2.msra.mxu0 0.0
      %1504 = vmatprep.subr.mxu0 0.0
      %1505 = vmatpush2.msra.mxu0 0.0
      %1506 = vmatprep.subr.mxu0 0.0
      %1507 = vmatpush2.msra.mxu0 0.0
      %1508 = vmatprep.mubr.f32.mxu0 0.0
      %1509 = vmatmul.mubr.f32.gmra.mxu0 %v1427
      %v1510 = vpop.f32.mrf.mxu0
      %v1511 = vadd.f32 0.0, %v1510
      %v1512 = vpop.f32.mrf.mxu0
      %1513 = vmatprep.mubr.f32.mxu0 0.0
      %1514 = vmatmul.mubr.f32.gmra.mxu0 %v1430
      %v1515 = vpop.f32.mrf.mxu0
      %v1516 = vadd.f32 0.0, %v1515
      %v1517 = vpop.f32.mrf.mxu0
      %1518 = vmatprep.mubr.f32.mxu0 0.0
      %1519 = vmatmul.mubr.f32.gmra.mxu0 %v1433
      %v1520 = vpop.f32.mrf.mxu0
      %v1521 = vadd.f32 0.0, %v1520
      %v1522 = vpop.f32.mrf.mxu0
      %1523 = vmatprep.mubr.f32.mxu0 0.0
      %1524 = vmatmul.mubr.f32.gmra.mxu0 %v1436
      %v1525 = vpop.f32.mrf.mxu0
      %v1526 = vadd.f32 0.0, %v1525
      %v1527 = vpop.f32.mrf.mxu0
      %1528 = vmatprep.mubr.f32.mxu0 0.0
      %1529 = vmatmul.mubr.f32.gmra.mxu0 %v1439
      %v1530 = vpop.f32.mrf.mxu0
      %v1531 = vadd.f32 0.0, %v1530
      %v1532 = vpop.f32.mrf.mxu0
      %1533 = vmatprep.mubr.f32.mxu0 0.0
      %1534 = vmatmul.mubr.f32.gmra.mxu0 %v1442
      %v1535 = vpop.f32.mrf.mxu0
      %v1536 = vadd.f32 0.0, %v1535
      %v1537 = vpop.f32.mrf.mxu0
      %1538 = vmatprep.mubr.f32.mxu0 0.0
      %1539 = vmatmul.mubr.f32.gmra.mxu0 %v624
      %v1540 = vpop.f32.mrf.mxu0
      %v1541 = vadd.f32 0.0, %v1540
      %v1542 = vpop.f32.mrf.mxu0
      %1543 = vdwg.mxu0
      %v1544 = vadd.f32 %v1410, %v1511
      %v1545 = vadd.f32 %v1411, %v1516
      %v1546 = vadd.f32 %v1412, %v1521
      %v1547 = vadd.f32 %v1413, %v1526
      %v1548 = vadd.f32 %v1414, %v1531
      %v1549 = vadd.f32 %v1415, %v1536
      %v1550 = vadd.f32 %v1416, %v1541
      %v1551 = vadd.f32 %v1544, %v464
      %v1552 = vadd.f32 %v1545, %v464
      %v1553 = vadd.f32 %v1546, %v464
      %v1554 = vadd.f32 %v1547, %v464
      %v1555 = vadd.f32 %v1548, %v464
      %v1556 = vadd.f32 %v1549, %v464
      %v1557 = vadd.f32 %v1550, %v464
      %v1558 = vmax.f32 %v1551, 0.0
      %v1559 = vmax.f32 %v1552, 0.0
      %v1560 = vmax.f32 %v1553, 0.0
      %v1561 = vmax.f32 %v1554, 0.0
      %v1562 = vmax.f32 %v1555, 0.0
      %v1563 = vmax.f32 %v1556, 0.0
      %v1564 = vmax.f32 %v1557, 0.0
      %v1572 = vrot.slane %v581, 1
      %v1573 = vrot.slane %v582, 1
      %v1574 = vsel %vm248, %v1572, %v1573
      %v1575 = vrot.slane %v583, 1
      %v1576 = vsel %vm248, %v1573, %v1575
      %v1577 = vrot.slane %v584, 1
      %v1578 = vsel %vm248, %v1575, %v1577
      %v1579 = vrot.slane %v585, 1
      %v1580 = vsel %vm248, %v1577, %v1579
      %v1581 = vrot.slane %v586, 1
      %v1582 = vsel %vm248, %v1579, %v1581
      %v1583 = vrot.slane %v587, 1
      %v1584 = vsel %vm248, %v1581, %v1583
      %v1591 = vsel %vm394, %v1574, 0.0
      %v1592 = vsel %vm395, %v1576, 0.0
      %v1593 = vsel %vm396, %v1578, 0.0
      %v1594 = vsel %vm397, %v1580, 0.0
      %v1595 = vsel %vm398, %v1582, 0.0
      %v1596 = vsel %vm399, %v1584, 0.0
      %v1597 = vrot.slane %v581, 7
      %v1598 = vrot.slane %v582, 7
      %v1599 = vsel %vm406, %v1597, %v1598
      %v1600 = vrot.slane %v583, 7
      %v1601 = vsel %vm406, %v1598, %v1600
      %v1602 = vrot.slane %v584, 7
      %v1603 = vsel %vm406, %v1600, %v1602
      %v1604 = vrot.slane %v585, 7
      %v1605 = vsel %vm406, %v1602, %v1604
      %v1606 = vrot.slane %v586, 7
      %v1607 = vsel %vm406, %v1604, %v1606
      %v1608 = vrot.slane %v587, 7
      %v1609 = vsel %vm406, %v1606, %v1608
      %v1616 = vsel %vm421, %v1609, 0.0
      %v1618 = vrot.slane %v1599, 1
      %v1619 = vrot.slane %v1601, 1
      %v1620 = vsel %vm248, %v1618, %v1619
      %v1621 = vrot.slane %v1603, 1
      %v1622 = vsel %vm248, %v1619, %v1621
      %v1623 = vrot.slane %v1605, 1
      %v1624 = vsel %vm248, %v1621, %v1623
      %v1625 = vrot.slane %v1607, 1
      %v1626 = vsel %vm248, %v1623, %v1625
      %v1627 = vrot.slane %v1616, 1
      %v1628 = vsel %vm248, %v1625, %v1627
      %v1629 = vsel %vm248, %v1627, %v436
      %v1636 = vsel %vm394, %v1620, 0.0
      %v1637 = vsel %vm395, %v1622, 0.0
      %v1638 = vsel %vm396, %v1624, 0.0
      %v1639 = vsel %vm397, %v1626, 0.0
      %v1640 = vsel %vm398, %v1628, 0.0
      %v1641 = vsel %vm399, %v1629, 0.0
      %v1649 = vrot.slane %v833, 7
      %v1650 = vrot.slane %v834, 7
      %v1651 = vsel %vm406, %v1649, %v1650
      %v1652 = vrot.slane %v835, 7
      %v1653 = vsel %vm406, %v1650, %v1652
      %v1654 = vrot.slane %v836, 7
      %v1655 = vsel %vm406, %v1652, %v1654
      %v1656 = vrot.slane %v837, 7
      %v1657 = vsel %vm406, %v1654, %v1656
      %v1658 = vrot.slane %v838, 7
      %v1659 = vsel %vm406, %v1656, %v1658
      %v1660 = vrot.slane %v839, 7
      %v1661 = vsel %vm406, %v1658, %v1660
      %v1668 = vsel %vm421, %v1661, 0.0
      %v1676 = vrot.slane %v1077, 1
      %v1677 = vrot.slane %v1078, 1
      %v1678 = vsel %vm248, %v1676, %v1677
      %v1679 = vrot.slane %v1079, 1
      %v1680 = vsel %vm248, %v1677, %v1679
      %v1681 = vrot.slane %v1080, 1
      %v1682 = vsel %vm248, %v1679, %v1681
      %v1683 = vrot.slane %v1081, 1
      %v1684 = vsel %vm248, %v1681, %v1683
      %v1685 = vrot.slane %v1082, 1
      %v1686 = vsel %vm248, %v1683, %v1685
      %v1687 = vrot.slane %v1083, 1
      %v1688 = vsel %vm248, %v1685, %v1687
      %v1695 = vsel %vm394, %v1678, 0.0
      %v1696 = vsel %vm395, %v1680, 0.0
      %v1697 = vsel %vm396, %v1682, 0.0
      %v1698 = vsel %vm397, %v1684, 0.0
      %v1699 = vsel %vm398, %v1686, 0.0
      %v1700 = vsel %vm399, %v1688, 0.0
      %s1701 = scalar_lea.vmem %s3, 4
      %v1702 = vld [vmem:[%s1701] sm:$0x1]
      %v1704 = vlaneseq
      %v1705 = vshrl.u32 %v1704, 7
      %v1706 = vsub.s32 0, %v1705
      %v1707 = vrot.slane %v1702, %v1706
      %v1709 = vmul.f32 %v581, %v1707
      %v1710 = vmul.f32 %v582, %v1707
      %v1711 = vmul.f32 %v583, %v1707
      %v1712 = vmul.f32 %v584, %v1707
      %v1713 = vmul.f32 %v585, %v1707
      %v1714 = vmul.f32 %v586, %v1707
      %v1715 = vmul.f32 %v587, %v1707
      %v1716 = vadd.f32 %v1709, 0.0
      %v1717 = vadd.f32 %v1710, 0.0
      %v1718 = vadd.f32 %v1711, 0.0
      %v1719 = vadd.f32 %v1712, 0.0
      %v1720 = vadd.f32 %v1713, 0.0
      %v1721 = vadd.f32 %v1714, 0.0
      %v1722 = vadd.f32 %v1715, 0.0
      %vm1723 = vcmask 261120
      %v1724 = vsel %vm1723, %v1716, 0.0
      %1725 = vadd.xlane.f32.xlu0 %v1724
      %v1726 = vpop.xlane.xlu0 %1725
      %v1727 = vsel %vm1723, %v1717, 0.0
      %1728 = vadd.xlane.f32.xlu0 %v1727
      %v1729 = vpop.xlane.xlu0 %1728
      %v1730 = vsel %vm1723, %v1718, 0.0
      %1731 = vadd.xlane.f32.xlu0 %v1730
      %v1732 = vpop.xlane.xlu0 %1731
      %v1733 = vsel %vm1723, %v1719, 0.0
      %1734 = vadd.xlane.f32.xlu0 %v1733
      %v1735 = vpop.xlane.xlu0 %1734
      %v1736 = vsel %vm1723, %v1720, 0.0
      %1737 = vadd.xlane.f32.xlu0 %v1736
      %v1738 = vpop.xlane.xlu0 %1737
      %v1739 = vsel %vm1723, %v1721, 0.0
      %1740 = vadd.xlane.f32.xlu0 %v1739
      %v1741 = vpop.xlane.xlu0 %1740
      %vm1742 = vcmask 253952
      %v1743 = vsel %vm1742, %v1722, 0.0
      %1744 = vadd.xlane.f32.xlu0 %v1743
      %v1745 = vpop.xlane.xlu0 %1744
      %v1746 = vld [vmem:[#allocation2] sm:$0x1]
      %v1748 = vlaneseq
      %v1749 = vshrl.u32 %v1748, 7
      %v1750 = vsub.s32 0, %v1749
      %v1751 = vrot.slane %v1746, %v1750
      %v1753 = vadd.f32 %v1726, %v1751
      %v1754 = vadd.f32 %v1729, %v1751
      %v1755 = vadd.f32 %v1732, %v1751
      %v1756 = vadd.f32 %v1735, %v1751
      %v1757 = vadd.f32 %v1738, %v1751
      %v1758 = vadd.f32 %v1741, %v1751
      %v1759 = vadd.f32 %v1745, %v1751
      %v1760 = vsub.f32 0.0, %v1753
      %v1761 = vsub.f32 0.0, %v1754
      %v1762 = vsub.f32 0.0, %v1755
      %v1763 = vsub.f32 0.0, %v1756
      %v1764 = vsub.f32 0.0, %v1757
      %v1765 = vsub.f32 0.0, %v1758
      %v1766 = vsub.f32 0.0, %v1759
      %v1767 = vmul.f32 %v1760, 1.442695
      %v1768 = vpow.pop %v1767
      %v1769 = vmul.f32 %v1761, 1.442695
      %v1770 = vpow.pop %v1769
      %v1771 = vmul.f32 %v1762, 1.442695
      %v1772 = vpow.pop %v1771
      %v1773 = vmul.f32 %v1763, 1.442695
      %v1774 = vpow.pop %v1773
      %v1775 = vmul.f32 %v1764, 1.442695
      %v1776 = vpow.pop %v1775
      %v1777 = vmul.f32 %v1765, 1.442695
      %v1778 = vpow.pop %v1777
      %v1779 = vmul.f32 %v1766, 1.442695
      %v1780 = vpow.pop %v1779
      %v1781 = vadd.f32 %v1768, 1.0
      %v1782 = vadd.f32 %v1770, 1.0
      %v1783 = vadd.f32 %v1772, 1.0
      %v1784 = vadd.f32 %v1774, 1.0
      %v1785 = vadd.f32 %v1776, 1.0
      %v1786 = vadd.f32 %v1778, 1.0
      %v1787 = vadd.f32 %v1780, 1.0
      %v1788 = vrcp.pop %v1781
      %v1789 = vmul.f32 1.0, %v1788
      %v1790 = vrcp.pop %v1782
      %v1791 = vmul.f32 1.0, %v1790
      %v1792 = vrcp.pop %v1783
      %v1793 = vmul.f32 1.0, %v1792
      %v1794 = vrcp.pop %v1784
      %v1795 = vmul.f32 1.0, %v1794
      %v1796 = vrcp.pop %v1785
      %v1797 = vmul.f32 1.0, %v1796
      %v1798 = vrcp.pop %v1786
      %v1799 = vmul.f32 1.0, %v1798
      %v1800 = vrcp.pop %v1787
      %v1801 = vmul.f32 1.0, %v1800
      %vm1802 = vcmask 7168
      %1803 = vst.msk [vmem:[%s226] sm:$0xff] %vm1802, %v1789
      %1804 = vst.msk [vmem:[%s226 + $0x8] sm:$0xff] %vm1802, %v1791
      %1805 = vst.msk [vmem:[%s226 + $0x10] sm:$0xff] %vm1802, %v1793
      %1806 = vst.msk [vmem:[%s226 + $0x18] sm:$0xff] %vm1802, %v1795
      %1807 = vst.msk [vmem:[%s226 + $0x20] sm:$0xff] %vm1802, %v1797
      %1808 = vst.msk [vmem:[%s226 + $0x28] sm:$0xff] %vm1802, %v1799
      %vm1809 = vcmask 0
      %1810 = vst.msk [vmem:[%s226 + $0x30] sm:$0x1] %vm1809, %v1801
      %s1811 = scalar_lea.vmem %s3, 3
      %v1812 = vld [vmem:[%s1811] sm:$0x1]
      %v1814 = vlaneseq
      %v1815 = vshrl.u32 %v1814, 7
      %v1816 = vsub.s32 0, %v1815
      %v1817 = vrot.slane %v1812, %v1816
      %v1819 = vmul.f32 %v581, %v1817
      %v1820 = vmul.f32 %v582, %v1817
      %v1821 = vmul.f32 %v583, %v1817
      %v1822 = vmul.f32 %v584, %v1817
      %v1823 = vmul.f32 %v585, %v1817
      %v1824 = vmul.f32 %v586, %v1817
      %v1825 = vmul.f32 %v587, %v1817
      %v1826 = vadd.f32 %v1819, 0.0
      %v1827 = vadd.f32 %v1820, 0.0
      %v1828 = vadd.f32 %v1821, 0.0
      %v1829 = vadd.f32 %v1822, 0.0
      %v1830 = vadd.f32 %v1823, 0.0
      %v1831 = vadd.f32 %v1824, 0.0
      %v1832 = vadd.f32 %v1825, 0.0
      %s1833 = scalar_lea.vmem %s3, 5
      %v1834 = vld [vmem:[%s1833] sm:$0x1]
      %v1836 = vlaneseq
      %v1837 = vshrl.u32 %v1836, 7
      %v1838 = vsub.s32 0, %v1837
      %v1839 = vrot.slane %v1834, %v1838
      %v1841 = vmul.f32 %v833, %v1839
      %v1842 = vmul.f32 %v834, %v1839
      %v1843 = vmul.f32 %v835, %v1839
      %v1844 = vmul.f32 %v836, %v1839
      %v1845 = vmul.f32 %v837, %v1839
      %v1846 = vmul.f32 %v838, %v1839
      %v1847 = vmul.f32 %v839, %v1839
      %v1848 = vadd.f32 %v1826, %v1841
      %v1849 = vadd.f32 %v1827, %v1842
      %v1850 = vadd.f32 %v1828, %v1843
      %v1851 = vadd.f32 %v1829, %v1844
      %v1852 = vadd.f32 %v1830, %v1845
      %v1853 = vadd.f32 %v1831, %v1846
      %v1854 = vadd.f32 %v1832, %v1847
      %v1855 = vsel %vm1723, %v1848, 0.0
      %1856 = vadd.xlane.f32.xlu0 %v1855
      %v1857 = vpop.xlane.xlu0 %1856
      %v1858 = vsel %vm1723, %v1849, 0.0
      %1859 = vadd.xlane.f32.xlu0 %v1858
      %v1860 = vpop.xlane.xlu0 %1859
      %v1861 = vsel %vm1723, %v1850, 0.0
      %1862 = vadd.xlane.f32.xlu0 %v1861
      %v1863 = vpop.xlane.xlu0 %1862
      %v1864 = vsel %vm1723, %v1851, 0.0
      %1865 = vadd.xlane.f32.xlu0 %v1864
      %v1866 = vpop.xlane.xlu0 %1865
      %v1867 = vsel %vm1723, %v1852, 0.0
      %1868 = vadd.xlane.f32.xlu0 %v1867
      %v1869 = vpop.xlane.xlu0 %1868
      %v1870 = vsel %vm1723, %v1853, 0.0
      %1871 = vadd.xlane.f32.xlu0 %v1870
      %v1872 = vpop.xlane.xlu0 %1871
      %v1873 = vsel %vm1742, %v1854, 0.0
      %1874 = vadd.xlane.f32.xlu0 %v1873
      %v1875 = vpop.xlane.xlu0 %1874
      %v1876 = vld [vmem:[#allocation2] sm:$0x1]
      %v1878 = vlaneseq
      %v1879 = vshrl.u32 %v1878, 7
      %v1880 = vsub.s32 0, %v1879
      %v1881 = vrot.slane %v1876, %v1880
      %v1883 = vadd.f32 %v1857, %v1881
      %v1884 = vadd.f32 %v1860, %v1881
      %v1885 = vadd.f32 %v1863, %v1881
      %v1886 = vadd.f32 %v1866, %v1881
      %v1887 = vadd.f32 %v1869, %v1881
      %v1888 = vadd.f32 %v1872, %v1881
      %v1889 = vadd.f32 %v1875, %v1881
      %v1890 = vsub.f32 0.0, %v1883
      %v1891 = vsub.f32 0.0, %v1884
      %v1892 = vsub.f32 0.0, %v1885
      %v1893 = vsub.f32 0.0, %v1886
      %v1894 = vsub.f32 0.0, %v1887
      %v1895 = vsub.f32 0.0, %v1888
      %v1896 = vsub.f32 0.0, %v1889
      %v1897 = vmul.f32 %v1890, 1.442695
      %v1898 = vpow.pop %v1897
      %v1899 = vmul.f32 %v1891, 1.442695
      %v1900 = vpow.pop %v1899
      %v1901 = vmul.f32 %v1892, 1.442695
      %v1902 = vpow.pop %v1901
      %v1903 = vmul.f32 %v1893, 1.442695
      %v1904 = vpow.pop %v1903
      %v1905 = vmul.f32 %v1894, 1.442695
      %v1906 = vpow.pop %v1905
      %v1907 = vmul.f32 %v1895, 1.442695
      %v1908 = vpow.pop %v1907
      %v1909 = vmul.f32 %v1896, 1.442695
      %v1910 = vpow.pop %v1909
      %v1911 = vadd.f32 %v1898, 1.0
      %v1912 = vadd.f32 %v1900, 1.0
      %v1913 = vadd.f32 %v1902, 1.0
      %v1914 = vadd.f32 %v1904, 1.0
      %v1915 = vadd.f32 %v1906, 1.0
      %v1916 = vadd.f32 %v1908, 1.0
      %v1917 = vadd.f32 %v1910, 1.0
      %v1918 = vrcp.pop %v1911
      %v1919 = vmul.f32 1.0, %v1918
      %v1920 = vrcp.pop %v1912
      %v1921 = vmul.f32 1.0, %v1920
      %v1922 = vrcp.pop %v1913
      %v1923 = vmul.f32 1.0, %v1922
      %v1924 = vrcp.pop %v1914
      %v1925 = vmul.f32 1.0, %v1924
      %v1926 = vrcp.pop %v1915
      %v1927 = vmul.f32 1.0, %v1926
      %v1928 = vrcp.pop %v1916
      %v1929 = vmul.f32 1.0, %v1928
      %v1930 = vrcp.pop %v1917
      %v1931 = vmul.f32 1.0, %v1930
      %s1932 = scalar_lea.vmem %s226, 56
      %1933 = vst.msk [vmem:[%s1932] sm:$0xff] %vm1802, %v1919
      %1934 = vst.msk [vmem:[%s1932 + $0x8] sm:$0xff] %vm1802, %v1921
      %1935 = vst.msk [vmem:[%s1932 + $0x10] sm:$0xff] %vm1802, %v1923
      %1936 = vst.msk [vmem:[%s1932 + $0x18] sm:$0xff] %vm1802, %v1925
      %1937 = vst.msk [vmem:[%s1932 + $0x20] sm:$0xff] %vm1802, %v1927
      %1938 = vst.msk [vmem:[%s1932 + $0x28] sm:$0xff] %vm1802, %v1929
      %1939 = vst.msk [vmem:[%s1932 + $0x30] sm:$0x1] %vm1809, %v1931
      %v1940 = vld [vmem:[%s1701] sm:$0x1]
      %v1942 = vlaneseq
      %v1943 = vshrl.u32 %v1942, 7
      %v1944 = vsub.s32 0, %v1943
      %v1945 = vrot.slane %v1940, %v1944
      %v1947 = vmul.f32 %v833, %v1945
      %v1948 = vmul.f32 %v834, %v1945
      %v1949 = vmul.f32 %v835, %v1945
      %v1950 = vmul.f32 %v836, %v1945
      %v1951 = vmul.f32 %v837, %v1945
      %v1952 = vmul.f32 %v838, %v1945
      %v1953 = vmul.f32 %v839, %v1945
      %v1954 = vadd.f32 %v1947, 0.0
      %v1955 = vadd.f32 %v1948, 0.0
      %v1956 = vadd.f32 %v1949, 0.0
      %v1957 = vadd.f32 %v1950, 0.0
      %v1958 = vadd.f32 %v1951, 0.0
      %v1959 = vadd.f32 %v1952, 0.0
      %v1960 = vadd.f32 %v1953, 0.0
      %v1961 = vsel %vm1723, %v1954, 0.0
      %1962 = vadd.xlane.f32.xlu0 %v1961
      %v1963 = vpop.xlane.xlu0 %1962
      %v1964 = vsel %vm1723, %v1955, 0.0
      %1965 = vadd.xlane.f32.xlu0 %v1964
      %v1966 = vpop.xlane.xlu0 %1965
      %v1967 = vsel %vm1723, %v1956, 0.0
      %1968 = vadd.xlane.f32.xlu0 %v1967
      %v1969 = vpop.xlane.xlu0 %1968
      %v1970 = vsel %vm1723, %v1957, 0.0
      %1971 = vadd.xlane.f32.xlu0 %v1970
      %v1972 = vpop.xlane.xlu0 %1971
      %v1973 = vsel %vm1723, %v1958, 0.0
      %1974 = vadd.xlane.f32.xlu0 %v1973
      %v1975 = vpop.xlane.xlu0 %1974
      %v1976 = vsel %vm1723, %v1959, 0.0
      %1977 = vadd.xlane.f32.xlu0 %v1976
      %v1978 = vpop.xlane.xlu0 %1977
      %v1979 = vsel %vm1742, %v1960, 0.0
      %1980 = vadd.xlane.f32.xlu0 %v1979
      %v1981 = vpop.xlane.xlu0 %1980
      %v1982 = vld [vmem:[#allocation2] sm:$0x1]
      %v1984 = vlaneseq
      %v1985 = vshrl.u32 %v1984, 7
      %v1986 = vsub.s32 0, %v1985
      %v1987 = vrot.slane %v1982, %v1986
      %v1989 = vadd.f32 %v1963, %v1987
      %v1990 = vadd.f32 %v1966, %v1987
      %v1991 = vadd.f32 %v1969, %v1987
      %v1992 = vadd.f32 %v1972, %v1987
      %v1993 = vadd.f32 %v1975, %v1987
      %v1994 = vadd.f32 %v1978, %v1987
      %v1995 = vadd.f32 %v1981, %v1987
      %v1996 = vsub.f32 0.0, %v1989
      %v1997 = vsub.f32 0.0, %v1990
      %v1998 = vsub.f32 0.0, %v1991
      %v1999 = vsub.f32 0.0, %v1992
      %v2000 = vsub.f32 0.0, %v1993
      %v2001 = vsub.f32 0.0, %v1994
      %v2002 = vsub.f32 0.0, %v1995
      %v2003 = vmul.f32 %v1996, 1.442695
      %v2004 = vpow.pop %v2003
      %v2005 = vmul.f32 %v1997, 1.442695
      %v2006 = vpow.pop %v2005
      %v2007 = vmul.f32 %v1998, 1.442695
      %v2008 = vpow.pop %v2007
      %v2009 = vmul.f32 %v1999, 1.442695
      %v2010 = vpow.pop %v2009
      %v2011 = vmul.f32 %v2000, 1.442695
      %v2012 = vpow.pop %v2011
      %v2013 = vmul.f32 %v2001, 1.442695
      %v2014 = vpow.pop %v2013
      %v2015 = vmul.f32 %v2002, 1.442695
      %v2016 = vpow.pop %v2015
      %v2017 = vadd.f32 %v2004, 1.0
      %v2018 = vadd.f32 %v2006, 1.0
      %v2019 = vadd.f32 %v2008, 1.0
      %v2020 = vadd.f32 %v2010, 1.0
      %v2021 = vadd.f32 %v2012, 1.0
      %v2022 = vadd.f32 %v2014, 1.0
      %v2023 = vadd.f32 %v2016, 1.0
      %v2024 = vrcp.pop %v2017
      %v2025 = vmul.f32 1.0, %v2024
      %v2026 = vrcp.pop %v2018
      %v2027 = vmul.f32 1.0, %v2026
      %v2028 = vrcp.pop %v2019
      %v2029 = vmul.f32 1.0, %v2028
      %v2030 = vrcp.pop %v2020
      %v2031 = vmul.f32 1.0, %v2030
      %v2032 = vrcp.pop %v2021
      %v2033 = vmul.f32 1.0, %v2032
      %v2034 = vrcp.pop %v2022
      %v2035 = vmul.f32 1.0, %v2034
      %v2036 = vrcp.pop %v2023
      %v2037 = vmul.f32 1.0, %v2036
      %s2038 = scalar_lea.vmem %s226, 112
      %2039 = vst.msk [vmem:[%s2038] sm:$0xff] %vm1802, %v2025
      %2040 = vst.msk [vmem:[%s2038 + $0x8] sm:$0xff] %vm1802, %v2027
      %2041 = vst.msk [vmem:[%s2038 + $0x10] sm:$0xff] %vm1802, %v2029
      %2042 = vst.msk [vmem:[%s2038 + $0x18] sm:$0xff] %vm1802, %v2031
      %2043 = vst.msk [vmem:[%s2038 + $0x20] sm:$0xff] %vm1802, %v2033
      %2044 = vst.msk [vmem:[%s2038 + $0x28] sm:$0xff] %vm1802, %v2035
      %2045 = vst.msk [vmem:[%s2038 + $0x30] sm:$0x1] %vm1809, %v2037
      %v2046 = vld [vmem:[%s1811] sm:$0x1]
      %v2048 = vlaneseq
      %v2049 = vshrl.u32 %v2048, 7
      %v2050 = vsub.s32 0, %v2049
      %v2051 = vrot.slane %v2046, %v2050
      %v2053 = vmul.f32 %v833, %v2051
      %v2054 = vmul.f32 %v834, %v2051
      %v2055 = vmul.f32 %v835, %v2051
      %v2056 = vmul.f32 %v836, %v2051
      %v2057 = vmul.f32 %v837, %v2051
      %v2058 = vmul.f32 %v838, %v2051
      %v2059 = vmul.f32 %v839, %v2051
      %v2060 = vadd.f32 %v2053, 0.0
      %v2061 = vadd.f32 %v2054, 0.0
      %v2062 = vadd.f32 %v2055, 0.0
      %v2063 = vadd.f32 %v2056, 0.0
      %v2064 = vadd.f32 %v2057, 0.0
      %v2065 = vadd.f32 %v2058, 0.0
      %v2066 = vadd.f32 %v2059, 0.0
      %v2067 = vld [vmem:[%s1833] sm:$0x1]
      %v2069 = vlaneseq
      %v2070 = vshrl.u32 %v2069, 7
      %v2071 = vsub.s32 0, %v2070
      %v2072 = vrot.slane %v2067, %v2071
      %v2074 = vmul.f32 %v1591, %v2072
      %v2075 = vmul.f32 %v1592, %v2072
      %v2076 = vmul.f32 %v1593, %v2072
      %v2077 = vmul.f32 %v1594, %v2072
      %v2078 = vmul.f32 %v1595, %v2072
      %v2079 = vmul.f32 %v1596, %v2072
      %v2080 = vmul.f32 %v2072, 0.0
      %v2081 = vadd.f32 %v2060, %v2074
      %v2082 = vadd.f32 %v2061, %v2075
      %v2083 = vadd.f32 %v2062, %v2076
      %v2084 = vadd.f32 %v2063, %v2077
      %v2085 = vadd.f32 %v2064, %v2078
      %v2086 = vadd.f32 %v2065, %v2079
      %v2087 = vadd.f32 %v2066, %v2080
      %v2088 = vsel %vm1723, %v2081, 0.0
      %2089 = vadd.xlane.f32.xlu0 %v2088
      %v2090 = vpop.xlane.xlu0 %2089
      %v2091 = vsel %vm1723, %v2082, 0.0
      %2092 = vadd.xlane.f32.xlu0 %v2091
      %v2093 = vpop.xlane.xlu0 %2092
      %v2094 = vsel %vm1723, %v2083, 0.0
      %2095 = vadd.xlane.f32.xlu0 %v2094
      %v2096 = vpop.xlane.xlu0 %2095
      %v2097 = vsel %vm1723, %v2084, 0.0
      %2098 = vadd.xlane.f32.xlu0 %v2097
      %v2099 = vpop.xlane.xlu0 %2098
      %v2100 = vsel %vm1723, %v2085, 0.0
      %2101 = vadd.xlane.f32.xlu0 %v2100
      %v2102 = vpop.xlane.xlu0 %2101
      %v2103 = vsel %vm1723, %v2086, 0.0
      %2104 = vadd.xlane.f32.xlu0 %v2103
      %v2105 = vpop.xlane.xlu0 %2104
      %v2106 = vsel %vm1742, %v2087, 0.0
      %2107 = vadd.xlane.f32.xlu0 %v2106
      %v2108 = vpop.xlane.xlu0 %2107
      %v2109 = vld [vmem:[#allocation2] sm:$0x1]
      %v2111 = vlaneseq
      %v2112 = vshrl.u32 %v2111, 7
      %v2113 = vsub.s32 0, %v2112
      %v2114 = vrot.slane %v2109, %v2113
      %v2116 = vadd.f32 %v2090, %v2114
      %v2117 = vadd.f32 %v2093, %v2114
      %v2118 = vadd.f32 %v2096, %v2114
      %v2119 = vadd.f32 %v2099, %v2114
      %v2120 = vadd.f32 %v2102, %v2114
      %v2121 = vadd.f32 %v2105, %v2114
      %v2122 = vadd.f32 %v2108, %v2114
      %v2123 = vsub.f32 0.0, %v2116
      %v2124 = vsub.f32 0.0, %v2117
      %v2125 = vsub.f32 0.0, %v2118
      %v2126 = vsub.f32 0.0, %v2119
      %v2127 = vsub.f32 0.0, %v2120
      %v2128 = vsub.f32 0.0, %v2121
      %v2129 = vsub.f32 0.0, %v2122
      %v2130 = vmul.f32 %v2123, 1.442695
      %v2131 = vpow.pop %v2130
      %v2132 = vmul.f32 %v2124, 1.442695
      %v2133 = vpow.pop %v2132
      %v2134 = vmul.f32 %v2125, 1.442695
      %v2135 = vpow.pop %v2134
      %v2136 = vmul.f32 %v2126, 1.442695
      %v2137 = vpow.pop %v2136
      %v2138 = vmul.f32 %v2127, 1.442695
      %v2139 = vpow.pop %v2138
      %v2140 = vmul.f32 %v2128, 1.442695
      %v2141 = vpow.pop %v2140
      %v2142 = vmul.f32 %v2129, 1.442695
      %v2143 = vpow.pop %v2142
      %v2144 = vadd.f32 %v2131, 1.0
      %v2145 = vadd.f32 %v2133, 1.0
      %v2146 = vadd.f32 %v2135, 1.0
      %v2147 = vadd.f32 %v2137, 1.0
      %v2148 = vadd.f32 %v2139, 1.0
      %v2149 = vadd.f32 %v2141, 1.0
      %v2150 = vadd.f32 %v2143, 1.0
      %v2151 = vrcp.pop %v2144
      %v2152 = vmul.f32 1.0, %v2151
      %v2153 = vrcp.pop %v2145
      %v2154 = vmul.f32 1.0, %v2153
      %v2155 = vrcp.pop %v2146
      %v2156 = vmul.f32 1.0, %v2155
      %v2157 = vrcp.pop %v2147
      %v2158 = vmul.f32 1.0, %v2157
      %v2159 = vrcp.pop %v2148
      %v2160 = vmul.f32 1.0, %v2159
      %v2161 = vrcp.pop %v2149
      %v2162 = vmul.f32 1.0, %v2161
      %v2163 = vrcp.pop %v2150
      %v2164 = vmul.f32 1.0, %v2163
      %s2165 = scalar_lea.vmem %s226, 168
      %2166 = vst.msk [vmem:[%s2165] sm:$0xff] %vm1802, %v2152
      %2167 = vst.msk [vmem:[%s2165 + $0x8] sm:$0xff] %vm1802, %v2154
      %2168 = vst.msk [vmem:[%s2165 + $0x10] sm:$0xff] %vm1802, %v2156
      %2169 = vst.msk [vmem:[%s2165 + $0x18] sm:$0xff] %vm1802, %v2158
      %2170 = vst.msk [vmem:[%s2165 + $0x20] sm:$0xff] %vm1802, %v2160
      %2171 = vst.msk [vmem:[%s2165 + $0x28] sm:$0xff] %vm1802, %v2162
      %2172 = vst.msk [vmem:[%s2165 + $0x30] sm:$0x1] %vm1809, %v2164
      %s2173 = scalar_lea.vmem %s3, 1
      %v2174 = vld [vmem:[%s2173] sm:$0x1]
      %v2176 = vlaneseq
      %v2177 = vshrl.u32 %v2176, 7
      %v2178 = vsub.s32 0, %v2177
      %v2179 = vrot.slane %v2174, %v2178
      %v2181 = vmul.f32 %v581, %v2179
      %v2182 = vmul.f32 %v582, %v2179
      %v2183 = vmul.f32 %v583, %v2179
      %v2184 = vmul.f32 %v584, %v2179
      %v2185 = vmul.f32 %v585, %v2179
      %v2186 = vmul.f32 %v586, %v2179
      %v2187 = vmul.f32 %v587, %v2179
      %v2188 = vadd.f32 %v2181, 0.0
      %v2189 = vadd.f32 %v2182, 0.0
      %v2190 = vadd.f32 %v2183, 0.0
      %v2191 = vadd.f32 %v2184, 0.0
      %v2192 = vadd.f32 %v2185, 0.0
      %v2193 = vadd.f32 %v2186, 0.0
      %v2194 = vadd.f32 %v2187, 0.0
      %s2195 = scalar_lea.vmem %s3, 7
      %v2196 = vld [vmem:[%s2195] sm:$0x1]
      %v2198 = vlaneseq
      %v2199 = vshrl.u32 %v2198, 7
      %v2200 = vsub.s32 0, %v2199
      %v2201 = vrot.slane %v2196, %v2200
      %v2203 = vmul.f32 %v1077, %v2201
      %v2204 = vmul.f32 %v1078, %v2201
      %v2205 = vmul.f32 %v1079, %v2201
      %v2206 = vmul.f32 %v1080, %v2201
      %v2207 = vmul.f32 %v1081, %v2201
      %v2208 = vmul.f32 %v1082, %v2201
      %v2209 = vmul.f32 %v1083, %v2201
      %v2210 = vadd.f32 %v2188, %v2203
      %v2211 = vadd.f32 %v2189, %v2204
      %v2212 = vadd.f32 %v2190, %v2205
      %v2213 = vadd.f32 %v2191, %v2206
      %v2214 = vadd.f32 %v2192, %v2207
      %v2215 = vadd.f32 %v2193, %v2208
      %v2216 = vadd.f32 %v2194, %v2209
      %v2217 = vsel %vm1723, %v2210, 0.0
      %2218 = vadd.xlane.f32.xlu0 %v2217
      %v2219 = vpop.xlane.xlu0 %2218
      %v2220 = vsel %vm1723, %v2211, 0.0
      %2221 = vadd.xlane.f32.xlu0 %v2220
      %v2222 = vpop.xlane.xlu0 %2221
      %v2223 = vsel %vm1723, %v2212, 0.0
      %2224 = vadd.xlane.f32.xlu0 %v2223
      %v2225 = vpop.xlane.xlu0 %2224
      %v2226 = vsel %vm1723, %v2213, 0.0
      %2227 = vadd.xlane.f32.xlu0 %v2226
      %v2228 = vpop.xlane.xlu0 %2227
      %v2229 = vsel %vm1723, %v2214, 0.0
      %2230 = vadd.xlane.f32.xlu0 %v2229
      %v2231 = vpop.xlane.xlu0 %2230
      %v2232 = vsel %vm1723, %v2215, 0.0
      %2233 = vadd.xlane.f32.xlu0 %v2232
      %v2234 = vpop.xlane.xlu0 %2233
      %v2235 = vsel %vm1742, %v2216, 0.0
      %2236 = vadd.xlane.f32.xlu0 %v2235
      %v2237 = vpop.xlane.xlu0 %2236
      %v2238 = vld [vmem:[#allocation2] sm:$0x1]
      %v2240 = vlaneseq
      %v2241 = vshrl.u32 %v2240, 7
      %v2242 = vsub.s32 0, %v2241
      %v2243 = vrot.slane %v2238, %v2242
      %v2245 = vadd.f32 %v2219, %v2243
      %v2246 = vadd.f32 %v2222, %v2243
      %v2247 = vadd.f32 %v2225, %v2243
      %v2248 = vadd.f32 %v2228, %v2243
      %v2249 = vadd.f32 %v2231, %v2243
      %v2250 = vadd.f32 %v2234, %v2243
      %v2251 = vadd.f32 %v2237, %v2243
      %v2252 = vsub.f32 0.0, %v2245
      %v2253 = vsub.f32 0.0, %v2246
      %v2254 = vsub.f32 0.0, %v2247
      %v2255 = vsub.f32 0.0, %v2248
      %v2256 = vsub.f32 0.0, %v2249
      %v2257 = vsub.f32 0.0, %v2250
      %v2258 = vsub.f32 0.0, %v2251
      %v2259 = vmul.f32 %v2252, 1.442695
      %v2260 = vpow.pop %v2259
      %v2261 = vmul.f32 %v2253, 1.442695
      %v2262 = vpow.pop %v2261
      %v2263 = vmul.f32 %v2254, 1.442695
      %v2264 = vpow.pop %v2263
      %v2265 = vmul.f32 %v2255, 1.442695
      %v2266 = vpow.pop %v2265
      %v2267 = vmul.f32 %v2256, 1.442695
      %v2268 = vpow.pop %v2267
      %v2269 = vmul.f32 %v2257, 1.442695
      %v2270 = vpow.pop %v2269
      %v2271 = vmul.f32 %v2258, 1.442695
      %v2272 = vpow.pop %v2271
      %v2273 = vadd.f32 %v2260, 1.0
      %v2274 = vadd.f32 %v2262, 1.0
      %v2275 = vadd.f32 %v2264, 1.0
      %v2276 = vadd.f32 %v2266, 1.0
      %v2277 = vadd.f32 %v2268, 1.0
      %v2278 = vadd.f32 %v2270, 1.0
      %v2279 = vadd.f32 %v2272, 1.0
      %v2280 = vrcp.pop %v2273
      %v2281 = vmul.f32 1.0, %v2280
      %v2282 = vrcp.pop %v2274
      %v2283 = vmul.f32 1.0, %v2282
      %v2284 = vrcp.pop %v2275
      %v2285 = vmul.f32 1.0, %v2284
      %v2286 = vrcp.pop %v2276
      %v2287 = vmul.f32 1.0, %v2286
      %v2288 = vrcp.pop %v2277
      %v2289 = vmul.f32 1.0, %v2288
      %v2290 = vrcp.pop %v2278
      %v2291 = vmul.f32 1.0, %v2290
      %v2292 = vrcp.pop %v2279
      %v2293 = vmul.f32 1.0, %v2292
      %s2294 = scalar_lea.vmem %s226, 224
      %2295 = vst.msk [vmem:[%s2294] sm:$0xff] %vm1802, %v2281
      %2296 = vst.msk [vmem:[%s2294 + $0x8] sm:$0xff] %vm1802, %v2283
      %2297 = vst.msk [vmem:[%s2294 + $0x10] sm:$0xff] %vm1802, %v2285
      %2298 = vst.msk [vmem:[%s2294 + $0x18] sm:$0xff] %vm1802, %v2287
      %2299 = vst.msk [vmem:[%s2294 + $0x20] sm:$0xff] %vm1802, %v2289
      %2300 = vst.msk [vmem:[%s2294 + $0x28] sm:$0xff] %vm1802, %v2291
      %2301 = vst.msk [vmem:[%s2294 + $0x30] sm:$0x1] %vm1809, %v2293
      %v2302 = vld [vmem:[%s3] sm:$0x1]
      %v2304 = vlaneseq
      %v2305 = vshrl.u32 %v2304, 7
      %v2306 = vsub.s32 0, %v2305
      %v2307 = vrot.slane %v2302, %v2306
      %v2309 = vmul.f32 %v581, %v2307
      %v2310 = vmul.f32 %v582, %v2307
      %v2311 = vmul.f32 %v583, %v2307
      %v2312 = vmul.f32 %v584, %v2307
      %v2313 = vmul.f32 %v585, %v2307
      %v2314 = vmul.f32 %v586, %v2307
      %v2315 = vmul.f32 %v587, %v2307
      %v2316 = vadd.f32 %v2309, 0.0
      %v2317 = vadd.f32 %v2310, 0.0
      %v2318 = vadd.f32 %v2311, 0.0
      %v2319 = vadd.f32 %v2312, 0.0
      %v2320 = vadd.f32 %v2313, 0.0
      %v2321 = vadd.f32 %v2314, 0.0
      %v2322 = vadd.f32 %v2315, 0.0
      %s2323 = scalar_lea.vmem %s3, 2
      %v2324 = vld [vmem:[%s2323] sm:$0x1]
      %v2326 = vlaneseq
      %v2327 = vshrl.u32 %v2326, 7
      %v2328 = vsub.s32 0, %v2327
      %v2329 = vrot.slane %v2324, %v2328
      %v2331 = vmul.f32 %v833, %v2329
      %v2332 = vmul.f32 %v834, %v2329
      %v2333 = vmul.f32 %v835, %v2329
      %v2334 = vmul.f32 %v836, %v2329
      %v2335 = vmul.f32 %v837, %v2329
      %v2336 = vmul.f32 %v838, %v2329
      %v2337 = vmul.f32 %v839, %v2329
      %v2338 = vadd.f32 %v2316, %v2331
      %v2339 = vadd.f32 %v2317, %v2332
      %v2340 = vadd.f32 %v2318, %v2333
      %v2341 = vadd.f32 %v2319, %v2334
      %v2342 = vadd.f32 %v2320, %v2335
      %v2343 = vadd.f32 %v2321, %v2336
      %v2344 = vadd.f32 %v2322, %v2337
      %s2345 = scalar_lea.vmem %s3, 6
      %v2346 = vld [vmem:[%s2345] sm:$0x1]
      %v2348 = vlaneseq
      %v2349 = vshrl.u32 %v2348, 7
      %v2350 = vsub.s32 0, %v2349
      %v2351 = vrot.slane %v2346, %v2350
      %v2353 = vmul.f32 %v1077, %v2351
      %v2354 = vmul.f32 %v1078, %v2351
      %v2355 = vmul.f32 %v1079, %v2351
      %v2356 = vmul.f32 %v1080, %v2351
      %v2357 = vmul.f32 %v1081, %v2351
      %v2358 = vmul.f32 %v1082, %v2351
      %v2359 = vmul.f32 %v1083, %v2351
      %v2360 = vadd.f32 %v2338, %v2353
      %v2361 = vadd.f32 %v2339, %v2354
      %v2362 = vadd.f32 %v2340, %v2355
      %v2363 = vadd.f32 %v2341, %v2356
      %v2364 = vadd.f32 %v2342, %v2357
      %v2365 = vadd.f32 %v2343, %v2358
      %v2366 = vadd.f32 %v2344, %v2359
      %s2367 = scalar_lea.vmem %s3, 8
      %v2368 = vld [vmem:[%s2367] sm:$0x1]
      %v2370 = vlaneseq
      %v2371 = vshrl.u32 %v2370, 7
      %v2372 = vsub.s32 0, %v2371
      %v2373 = vrot.slane %v2368, %v2372
      %v2375 = vmul.f32 %v1558, %v2373
      %v2376 = vmul.f32 %v1559, %v2373
      %v2377 = vmul.f32 %v1560, %v2373
      %v2378 = vmul.f32 %v1561, %v2373
      %v2379 = vmul.f32 %v1562, %v2373
      %v2380 = vmul.f32 %v1563, %v2373
      %v2381 = vmul.f32 %v1564, %v2373
      %v2382 = vadd.f32 %v2360, %v2375
      %v2383 = vadd.f32 %v2361, %v2376
      %v2384 = vadd.f32 %v2362, %v2377
      %v2385 = vadd.f32 %v2363, %v2378
      %v2386 = vadd.f32 %v2364, %v2379
      %v2387 = vadd.f32 %v2365, %v2380
      %v2388 = vadd.f32 %v2366, %v2381
      %v2389 = vsel %vm1723, %v2382, 0.0
      %2390 = vadd.xlane.f32.xlu0 %v2389
      %v2391 = vpop.xlane.xlu0 %2390
      %v2392 = vsel %vm1723, %v2383, 0.0
      %2393 = vadd.xlane.f32.xlu0 %v2392
      %v2394 = vpop.xlane.xlu0 %2393
      %v2395 = vsel %vm1723, %v2384, 0.0
      %2396 = vadd.xlane.f32.xlu0 %v2395
      %v2397 = vpop.xlane.xlu0 %2396
      %v2398 = vsel %vm1723, %v2385, 0.0
      %2399 = vadd.xlane.f32.xlu0 %v2398
      %v2400 = vpop.xlane.xlu0 %2399
      %v2401 = vsel %vm1723, %v2386, 0.0
      %2402 = vadd.xlane.f32.xlu0 %v2401
      %v2403 = vpop.xlane.xlu0 %2402
      %v2404 = vsel %vm1723, %v2387, 0.0
      %2405 = vadd.xlane.f32.xlu0 %v2404
      %v2406 = vpop.xlane.xlu0 %2405
      %v2407 = vsel %vm1742, %v2388, 0.0
      %2408 = vadd.xlane.f32.xlu0 %v2407
      %v2409 = vpop.xlane.xlu0 %2408
      %v2410 = vld [vmem:[#allocation2] sm:$0x1]
      %v2412 = vlaneseq
      %v2413 = vshrl.u32 %v2412, 7
      %v2414 = vsub.s32 0, %v2413
      %v2415 = vrot.slane %v2410, %v2414
      %v2417 = vadd.f32 %v2391, %v2415
      %v2418 = vadd.f32 %v2394, %v2415
      %v2419 = vadd.f32 %v2397, %v2415
      %v2420 = vadd.f32 %v2400, %v2415
      %v2421 = vadd.f32 %v2403, %v2415
      %v2422 = vadd.f32 %v2406, %v2415
      %v2423 = vadd.f32 %v2409, %v2415
      %v2424 = vsub.f32 0.0, %v2417
      %v2425 = vsub.f32 0.0, %v2418
      %v2426 = vsub.f32 0.0, %v2419
      %v2427 = vsub.f32 0.0, %v2420
      %v2428 = vsub.f32 0.0, %v2421
      %v2429 = vsub.f32 0.0, %v2422
      %v2430 = vsub.f32 0.0, %v2423
      %v2431 = vmul.f32 %v2424, 1.442695
      %v2432 = vpow.pop %v2431
      %v2433 = vmul.f32 %v2425, 1.442695
      %v2434 = vpow.pop %v2433
      %v2435 = vmul.f32 %v2426, 1.442695
      %v2436 = vpow.pop %v2435
      %v2437 = vmul.f32 %v2427, 1.442695
      %v2438 = vpow.pop %v2437
      %v2439 = vmul.f32 %v2428, 1.442695
      %v2440 = vpow.pop %v2439
      %v2441 = vmul.f32 %v2429, 1.442695
      %v2442 = vpow.pop %v2441
      %v2443 = vmul.f32 %v2430, 1.442695
      %v2444 = vpow.pop %v2443
      %v2445 = vadd.f32 %v2432, 1.0
      %v2446 = vadd.f32 %v2434, 1.0
      %v2447 = vadd.f32 %v2436, 1.0
      %v2448 = vadd.f32 %v2438, 1.0
      %v2449 = vadd.f32 %v2440, 1.0
      %v2450 = vadd.f32 %v2442, 1.0
      %v2451 = vadd.f32 %v2444, 1.0
      %v2452 = vrcp.pop %v2445
      %v2453 = vmul.f32 1.0, %v2452
      %v2454 = vrcp.pop %v2446
      %v2455 = vmul.f32 1.0, %v2454
      %v2456 = vrcp.pop %v2447
      %v2457 = vmul.f32 1.0, %v2456
      %v2458 = vrcp.pop %v2448
      %v2459 = vmul.f32 1.0, %v2458
      %v2460 = vrcp.pop %v2449
      %v2461 = vmul.f32 1.0, %v2460
      %v2462 = vrcp.pop %v2450
      %v2463 = vmul.f32 1.0, %v2462
      %v2464 = vrcp.pop %v2451
      %v2465 = vmul.f32 1.0, %v2464
      %s2466 = scalar_lea.vmem %s226, 280
      %2467 = vst.msk [vmem:[%s2466] sm:$0xff] %vm1802, %v2453
      %2468 = vst.msk [vmem:[%s2466 + $0x8] sm:$0xff] %vm1802, %v2455
      %2469 = vst.msk [vmem:[%s2466 + $0x10] sm:$0xff] %vm1802, %v2457
      %2470 = vst.msk [vmem:[%s2466 + $0x18] sm:$0xff] %vm1802, %v2459
      %2471 = vst.msk [vmem:[%s2466 + $0x20] sm:$0xff] %vm1802, %v2461
      %2472 = vst.msk [vmem:[%s2466 + $0x28] sm:$0xff] %vm1802, %v2463
      %2473 = vst.msk [vmem:[%s2466 + $0x30] sm:$0x1] %vm1809, %v2465
      %v2474 = vld [vmem:[%s2173] sm:$0x1]
      %v2476 = vlaneseq
      %v2477 = vshrl.u32 %v2476, 7
      %v2478 = vsub.s32 0, %v2477
      %v2479 = vrot.slane %v2474, %v2478
      %v2481 = vmul.f32 %v833, %v2479
      %v2482 = vmul.f32 %v834, %v2479
      %v2483 = vmul.f32 %v835, %v2479
      %v2484 = vmul.f32 %v836, %v2479
      %v2485 = vmul.f32 %v837, %v2479
      %v2486 = vmul.f32 %v838, %v2479
      %v2487 = vmul.f32 %v839, %v2479
      %v2488 = vadd.f32 %v2481, 0.0
      %v2489 = vadd.f32 %v2482, 0.0
      %v2490 = vadd.f32 %v2483, 0.0
      %v2491 = vadd.f32 %v2484, 0.0
      %v2492 = vadd.f32 %v2485, 0.0
      %v2493 = vadd.f32 %v2486, 0.0
      %v2494 = vadd.f32 %v2487, 0.0
      %v2495 = vld [vmem:[%s2195] sm:$0x1]
      %v2497 = vlaneseq
      %v2498 = vshrl.u32 %v2497, 7
      %v2499 = vsub.s32 0, %v2498
      %v2500 = vrot.slane %v2495, %v2499
      %v2502 = vmul.f32 %v1558, %v2500
      %v2503 = vmul.f32 %v1559, %v2500
      %v2504 = vmul.f32 %v1560, %v2500
      %v2505 = vmul.f32 %v1561, %v2500
      %v2506 = vmul.f32 %v1562, %v2500
      %v2507 = vmul.f32 %v1563, %v2500
      %v2508 = vmul.f32 %v1564, %v2500
      %v2509 = vadd.f32 %v2488, %v2502
      %v2510 = vadd.f32 %v2489, %v2503
      %v2511 = vadd.f32 %v2490, %v2504
      %v2512 = vadd.f32 %v2491, %v2505
      %v2513 = vadd.f32 %v2492, %v2506
      %v2514 = vadd.f32 %v2493, %v2507
      %v2515 = vadd.f32 %v2494, %v2508
      %v2516 = vsel %vm1723, %v2509, 0.0
      %2517 = vadd.xlane.f32.xlu0 %v2516
      %v2518 = vpop.xlane.xlu0 %2517
      %v2519 = vsel %vm1723, %v2510, 0.0
      %2520 = vadd.xlane.f32.xlu0 %v2519
      %v2521 = vpop.xlane.xlu0 %2520
      %v2522 = vsel %vm1723, %v2511, 0.0
      %2523 = vadd.xlane.f32.xlu0 %v2522
      %v2524 = vpop.xlane.xlu0 %2523
      %v2525 = vsel %vm1723, %v2512, 0.0
      %2526 = vadd.xlane.f32.xlu0 %v2525
      %v2527 = vpop.xlane.xlu0 %2526
      %v2528 = vsel %vm1723, %v2513, 0.0
      %2529 = vadd.xlane.f32.xlu0 %v2528
      %v2530 = vpop.xlane.xlu0 %2529
      %v2531 = vsel %vm1723, %v2514, 0.0
      %2532 = vadd.xlane.f32.xlu0 %v2531
      %v2533 = vpop.xlane.xlu0 %2532
      %v2534 = vsel %vm1742, %v2515, 0.0
      %2535 = vadd.xlane.f32.xlu0 %v2534
      %v2536 = vpop.xlane.xlu0 %2535
      %v2537 = vld [vmem:[#allocation2] sm:$0x1]
      %v2539 = vlaneseq
      %v2540 = vshrl.u32 %v2539, 7
      %v2541 = vsub.s32 0, %v2540
      %v2542 = vrot.slane %v2537, %v2541
      %v2544 = vadd.f32 %v2518, %v2542
      %v2545 = vadd.f32 %v2521, %v2542
      %v2546 = vadd.f32 %v2524, %v2542
      %v2547 = vadd.f32 %v2527, %v2542
      %v2548 = vadd.f32 %v2530, %v2542
      %v2549 = vadd.f32 %v2533, %v2542
      %v2550 = vadd.f32 %v2536, %v2542
      %v2551 = vsub.f32 0.0, %v2544
      %v2552 = vsub.f32 0.0, %v2545
      %v2553 = vsub.f32 0.0, %v2546
      %v2554 = vsub.f32 0.0, %v2547
      %v2555 = vsub.f32 0.0, %v2548
      %v2556 = vsub.f32 0.0, %v2549
      %v2557 = vsub.f32 0.0, %v2550
      %v2558 = vmul.f32 %v2551, 1.442695
      %v2559 = vpow.pop %v2558
      %v2560 = vmul.f32 %v2552, 1.442695
      %v2561 = vpow.pop %v2560
      %v2562 = vmul.f32 %v2553, 1.442695
      %v2563 = vpow.pop %v2562
      %v2564 = vmul.f32 %v2554, 1.442695
      %v2565 = vpow.pop %v2564
      %v2566 = vmul.f32 %v2555, 1.442695
      %v2567 = vpow.pop %v2566
      %v2568 = vmul.f32 %v2556, 1.442695
      %v2569 = vpow.pop %v2568
      %v2570 = vmul.f32 %v2557, 1.442695
      %v2571 = vpow.pop %v2570
      %v2572 = vadd.f32 %v2559, 1.0
      %v2573 = vadd.f32 %v2561, 1.0
      %v2574 = vadd.f32 %v2563, 1.0
      %v2575 = vadd.f32 %v2565, 1.0
      %v2576 = vadd.f32 %v2567, 1.0
      %v2577 = vadd.f32 %v2569, 1.0
      %v2578 = vadd.f32 %v2571, 1.0
      %v2579 = vrcp.pop %v2572
      %v2580 = vmul.f32 1.0, %v2579
      %v2581 = vrcp.pop %v2573
      %v2582 = vmul.f32 1.0, %v2581
      %v2583 = vrcp.pop %v2574
      %v2584 = vmul.f32 1.0, %v2583
      %v2585 = vrcp.pop %v2575
      %v2586 = vmul.f32 1.0, %v2585
      %v2587 = vrcp.pop %v2576
      %v2588 = vmul.f32 1.0, %v2587
      %v2589 = vrcp.pop %v2577
      %v2590 = vmul.f32 1.0, %v2589
      %v2591 = vrcp.pop %v2578
      %v2592 = vmul.f32 1.0, %v2591
      %s2593 = scalar_lea.vmem %s226, 336
      %2594 = vst.msk [vmem:[%s2593] sm:$0xff] %vm1802, %v2580
      %2595 = vst.msk [vmem:[%s2593 + $0x8] sm:$0xff] %vm1802, %v2582
      %2596 = vst.msk [vmem:[%s2593 + $0x10] sm:$0xff] %vm1802, %v2584
      %2597 = vst.msk [vmem:[%s2593 + $0x18] sm:$0xff] %vm1802, %v2586
      %2598 = vst.msk [vmem:[%s2593 + $0x20] sm:$0xff] %vm1802, %v2588
      %2599 = vst.msk [vmem:[%s2593 + $0x28] sm:$0xff] %vm1802, %v2590
      %2600 = vst.msk [vmem:[%s2593 + $0x30] sm:$0x1] %vm1809, %v2592
      %v2601 = vld [vmem:[%s3] sm:$0x1]
      %v2603 = vlaneseq
      %v2604 = vshrl.u32 %v2603, 7
      %v2605 = vsub.s32 0, %v2604
      %v2606 = vrot.slane %v2601, %v2605
      %v2608 = vmul.f32 %v833, %v2606
      %v2609 = vmul.f32 %v834, %v2606
      %v2610 = vmul.f32 %v835, %v2606
      %v2611 = vmul.f32 %v836, %v2606
      %v2612 = vmul.f32 %v837, %v2606
      %v2613 = vmul.f32 %v838, %v2606
      %v2614 = vmul.f32 %v839, %v2606
      %v2615 = vadd.f32 %v2608, 0.0
      %v2616 = vadd.f32 %v2609, 0.0
      %v2617 = vadd.f32 %v2610, 0.0
      %v2618 = vadd.f32 %v2611, 0.0
      %v2619 = vadd.f32 %v2612, 0.0
      %v2620 = vadd.f32 %v2613, 0.0
      %v2621 = vadd.f32 %v2614, 0.0
      %v2622 = vld [vmem:[%s2323] sm:$0x1]
      %v2624 = vlaneseq
      %v2625 = vshrl.u32 %v2624, 7
      %v2626 = vsub.s32 0, %v2625
      %v2627 = vrot.slane %v2622, %v2626
      %v2629 = vmul.f32 %v1591, %v2627
      %v2630 = vmul.f32 %v1592, %v2627
      %v2631 = vmul.f32 %v1593, %v2627
      %v2632 = vmul.f32 %v1594, %v2627
      %v2633 = vmul.f32 %v1595, %v2627
      %v2634 = vmul.f32 %v1596, %v2627
      %v2635 = vmul.f32 %v2627, 0.0
      %v2636 = vadd.f32 %v2615, %v2629
      %v2637 = vadd.f32 %v2616, %v2630
      %v2638 = vadd.f32 %v2617, %v2631
      %v2639 = vadd.f32 %v2618, %v2632
      %v2640 = vadd.f32 %v2619, %v2633
      %v2641 = vadd.f32 %v2620, %v2634
      %v2642 = vadd.f32 %v2621, %v2635
      %v2643 = vld [vmem:[%s2345] sm:$0x1]
      %v2645 = vlaneseq
      %v2646 = vshrl.u32 %v2645, 7
      %v2647 = vsub.s32 0, %v2646
      %v2648 = vrot.slane %v2643, %v2647
      %v2650 = vmul.f32 %v1558, %v2648
      %v2651 = vmul.f32 %v1559, %v2648
      %v2652 = vmul.f32 %v1560, %v2648
      %v2653 = vmul.f32 %v1561, %v2648
      %v2654 = vmul.f32 %v1562, %v2648
      %v2655 = vmul.f32 %v1563, %v2648
      %v2656 = vmul.f32 %v1564, %v2648
      %v2657 = vadd.f32 %v2636, %v2650
      %v2658 = vadd.f32 %v2637, %v2651
      %v2659 = vadd.f32 %v2638, %v2652
      %v2660 = vadd.f32 %v2639, %v2653
      %v2661 = vadd.f32 %v2640, %v2654
      %v2662 = vadd.f32 %v2641, %v2655
      %v2663 = vadd.f32 %v2642, %v2656
      %v2664 = vld [vmem:[%s2367] sm:$0x1]
      %v2666 = vlaneseq
      %v2667 = vshrl.u32 %v2666, 7
      %v2668 = vsub.s32 0, %v2667
      %v2669 = vrot.slane %v2664, %v2668
      %v2671 = vmul.f32 %v1695, %v2669
      %v2672 = vmul.f32 %v1696, %v2669
      %v2673 = vmul.f32 %v1697, %v2669
      %v2674 = vmul.f32 %v1698, %v2669
      %v2675 = vmul.f32 %v1699, %v2669
      %v2676 = vmul.f32 %v1700, %v2669
      %v2677 = vmul.f32 %v2669, 0.0
      %v2678 = vadd.f32 %v2657, %v2671
      %v2679 = vadd.f32 %v2658, %v2672
      %v2680 = vadd.f32 %v2659, %v2673
      %v2681 = vadd.f32 %v2660, %v2674
      %v2682 = vadd.f32 %v2661, %v2675
      %v2683 = vadd.f32 %v2662, %v2676
      %v2684 = vadd.f32 %v2663, %v2677
      %v2685 = vsel %vm1723, %v2678, 0.0
      %2686 = vadd.xlane.f32.xlu0 %v2685
      %v2687 = vpop.xlane.xlu0 %2686
      %v2688 = vsel %vm1723, %v2679, 0.0
      %2689 = vadd.xlane.f32.xlu0 %v2688
      %v2690 = vpop.xlane.xlu0 %2689
      %v2691 = vsel %vm1723, %v2680, 0.0
      %2692 = vadd.xlane.f32.xlu0 %v2691
      %v2693 = vpop.xlane.xlu0 %2692
      %v2694 = vsel %vm1723, %v2681, 0.0
      %2695 = vadd.xlane.f32.xlu0 %v2694
      %v2696 = vpop.xlane.xlu0 %2695
      %v2697 = vsel %vm1723, %v2682, 0.0
      %2698 = vadd.xlane.f32.xlu0 %v2697
      %v2699 = vpop.xlane.xlu0 %2698
      %v2700 = vsel %vm1723, %v2683, 0.0
      %2701 = vadd.xlane.f32.xlu0 %v2700
      %v2702 = vpop.xlane.xlu0 %2701
      %v2703 = vsel %vm1742, %v2684, 0.0
      %2704 = vadd.xlane.f32.xlu0 %v2703
      %v2705 = vpop.xlane.xlu0 %2704
      %v2706 = vld [vmem:[#allocation2] sm:$0x1]
      %v2708 = vlaneseq
      %v2709 = vshrl.u32 %v2708, 7
      %v2710 = vsub.s32 0, %v2709
      %v2711 = vrot.slane %v2706, %v2710
      %v2713 = vadd.f32 %v2687, %v2711
      %v2714 = vadd.f32 %v2690, %v2711
      %v2715 = vadd.f32 %v2693, %v2711
      %v2716 = vadd.f32 %v2696, %v2711
      %v2717 = vadd.f32 %v2699, %v2711
      %v2718 = vadd.f32 %v2702, %v2711
      %v2719 = vadd.f32 %v2705, %v2711
      %v2720 = vsub.f32 0.0, %v2713
      %v2721 = vsub.f32 0.0, %v2714
      %v2722 = vsub.f32 0.0, %v2715
      %v2723 = vsub.f32 0.0, %v2716
      %v2724 = vsub.f32 0.0, %v2717
      %v2725 = vsub.f32 0.0, %v2718
      %v2726 = vsub.f32 0.0, %v2719
      %v2727 = vmul.f32 %v2720, 1.442695
      %v2728 = vpow.pop %v2727
      %v2729 = vmul.f32 %v2721, 1.442695
      %v2730 = vpow.pop %v2729
      %v2731 = vmul.f32 %v2722, 1.442695
      %v2732 = vpow.pop %v2731
      %v2733 = vmul.f32 %v2723, 1.442695
      %v2734 = vpow.pop %v2733
      %v2735 = vmul.f32 %v2724, 1.442695
      %v2736 = vpow.pop %v2735
      %v2737 = vmul.f32 %v2725, 1.442695
      %v2738 = vpow.pop %v2737
      %v2739 = vmul.f32 %v2726, 1.442695
      %v2740 = vpow.pop %v2739
      %v2741 = vadd.f32 %v2728, 1.0
      %v2742 = vadd.f32 %v2730, 1.0
      %v2743 = vadd.f32 %v2732, 1.0
      %v2744 = vadd.f32 %v2734, 1.0
      %v2745 = vadd.f32 %v2736, 1.0
      %v2746 = vadd.f32 %v2738, 1.0
      %v2747 = vadd.f32 %v2740, 1.0
      %v2748 = vrcp.pop %v2741
      %v2749 = vmul.f32 1.0, %v2748
      %v2750 = vrcp.pop %v2742
      %v2751 = vmul.f32 1.0, %v2750
      %v2752 = vrcp.pop %v2743
      %v2753 = vmul.f32 1.0, %v2752
      %v2754 = vrcp.pop %v2744
      %v2755 = vmul.f32 1.0, %v2754
      %v2756 = vrcp.pop %v2745
      %v2757 = vmul.f32 1.0, %v2756
      %v2758 = vrcp.pop %v2746
      %v2759 = vmul.f32 1.0, %v2758
      %v2760 = vrcp.pop %v2747
      %v2761 = vmul.f32 1.0, %v2760
      %s2762 = scalar_lea.vmem %s226, 392
      %2763 = vst.msk [vmem:[%s2762] sm:$0xff] %vm1802, %v2749
      %2764 = vst.msk [vmem:[%s2762 + $0x8] sm:$0xff] %vm1802, %v2751
      %2765 = vst.msk [vmem:[%s2762 + $0x10] sm:$0xff] %vm1802, %v2753
      %2766 = vst.msk [vmem:[%s2762 + $0x18] sm:$0xff] %vm1802, %v2755
      %2767 = vst.msk [vmem:[%s2762 + $0x20] sm:$0xff] %vm1802, %v2757
      %2768 = vst.msk [vmem:[%s2762 + $0x28] sm:$0xff] %vm1802, %v2759
      %2769 = vst.msk [vmem:[%s2762 + $0x30] sm:$0x1] %vm1809, %v2761
      %v2770 = vld [vmem:[%s1701] sm:$0x1]
      %v2772 = vlaneseq
      %v2773 = vshrl.u32 %v2772, 7
      %v2774 = vsub.s32 0, %v2773
      %v2775 = vrot.slane %v2770, %v2774
      %v2777 = vmul.f32 %v1077, %v2775
      %v2778 = vmul.f32 %v1078, %v2775
      %v2779 = vmul.f32 %v1079, %v2775
      %v2780 = vmul.f32 %v1080, %v2775
      %v2781 = vmul.f32 %v1081, %v2775
      %v2782 = vmul.f32 %v1082, %v2775
      %v2783 = vmul.f32 %v1083, %v2775
      %v2784 = vadd.f32 %v2777, 0.0
      %v2785 = vadd.f32 %v2778, 0.0
      %v2786 = vadd.f32 %v2779, 0.0
      %v2787 = vadd.f32 %v2780, 0.0
      %v2788 = vadd.f32 %v2781, 0.0
      %v2789 = vadd.f32 %v2782, 0.0
      %v2790 = vadd.f32 %v2783, 0.0
      %v2791 = vsel %vm1723, %v2784, 0.0
      %2792 = vadd.xlane.f32.xlu0 %v2791
      %v2793 = vpop.xlane.xlu0 %2792
      %v2794 = vsel %vm1723, %v2785, 0.0
      %2795 = vadd.xlane.f32.xlu0 %v2794
      %v2796 = vpop.xlane.xlu0 %2795
      %v2797 = vsel %vm1723, %v2786, 0.0
      %2798 = vadd.xlane.f32.xlu0 %v2797
      %v2799 = vpop.xlane.xlu0 %2798
      %v2800 = vsel %vm1723, %v2787, 0.0
      %2801 = vadd.xlane.f32.xlu0 %v2800
      %v2802 = vpop.xlane.xlu0 %2801
      %v2803 = vsel %vm1723, %v2788, 0.0
      %2804 = vadd.xlane.f32.xlu0 %v2803
      %v2805 = vpop.xlane.xlu0 %2804
      %v2806 = vsel %vm1723, %v2789, 0.0
      %2807 = vadd.xlane.f32.xlu0 %v2806
      %v2808 = vpop.xlane.xlu0 %2807
      %v2809 = vsel %vm1742, %v2790, 0.0
      %2810 = vadd.xlane.f32.xlu0 %v2809
      %v2811 = vpop.xlane.xlu0 %2810
      %v2812 = vld [vmem:[#allocation2] sm:$0x1]
      %v2814 = vlaneseq
      %v2815 = vshrl.u32 %v2814, 7
      %v2816 = vsub.s32 0, %v2815
      %v2817 = vrot.slane %v2812, %v2816
      %v2819 = vadd.f32 %v2793, %v2817
      %v2820 = vadd.f32 %v2796, %v2817
      %v2821 = vadd.f32 %v2799, %v2817
      %v2822 = vadd.f32 %v2802, %v2817
      %v2823 = vadd.f32 %v2805, %v2817
      %v2824 = vadd.f32 %v2808, %v2817
      %v2825 = vadd.f32 %v2811, %v2817
      %v2826 = vsub.f32 0.0, %v2819
      %v2827 = vsub.f32 0.0, %v2820
      %v2828 = vsub.f32 0.0, %v2821
      %v2829 = vsub.f32 0.0, %v2822
      %v2830 = vsub.f32 0.0, %v2823
      %v2831 = vsub.f32 0.0, %v2824
      %v2832 = vsub.f32 0.0, %v2825
      %v2833 = vmul.f32 %v2826, 1.442695
      %v2834 = vpow.pop %v2833
      %v2835 = vmul.f32 %v2827, 1.442695
      %v2836 = vpow.pop %v2835
      %v2837 = vmul.f32 %v2828, 1.442695
      %v2838 = vpow.pop %v2837
      %v2839 = vmul.f32 %v2829, 1.442695
      %v2840 = vpow.pop %v2839
      %v2841 = vmul.f32 %v2830, 1.442695
      %v2842 = vpow.pop %v2841
      %v2843 = vmul.f32 %v2831, 1.442695
      %v2844 = vpow.pop %v2843
      %v2845 = vmul.f32 %v2832, 1.442695
      %v2846 = vpow.pop %v2845
      %v2847 = vadd.f32 %v2834, 1.0
      %v2848 = vadd.f32 %v2836, 1.0
      %v2849 = vadd.f32 %v2838, 1.0
      %v2850 = vadd.f32 %v2840, 1.0
      %v2851 = vadd.f32 %v2842, 1.0
      %v2852 = vadd.f32 %v2844, 1.0
      %v2853 = vadd.f32 %v2846, 1.0
      %v2854 = vrcp.pop %v2847
      %v2855 = vmul.f32 1.0, %v2854
      %v2856 = vrcp.pop %v2848
      %v2857 = vmul.f32 1.0, %v2856
      %v2858 = vrcp.pop %v2849
      %v2859 = vmul.f32 1.0, %v2858
      %v2860 = vrcp.pop %v2850
      %v2861 = vmul.f32 1.0, %v2860
      %v2862 = vrcp.pop %v2851
      %v2863 = vmul.f32 1.0, %v2862
      %v2864 = vrcp.pop %v2852
      %v2865 = vmul.f32 1.0, %v2864
      %v2866 = vrcp.pop %v2853
      %v2867 = vmul.f32 1.0, %v2866
      %s2868 = scalar_lea.vmem %s226, 448
      %2869 = vst.msk [vmem:[%s2868] sm:$0xff] %vm1802, %v2855
      %2870 = vst.msk [vmem:[%s2868 + $0x8] sm:$0xff] %vm1802, %v2857
      %2871 = vst.msk [vmem:[%s2868 + $0x10] sm:$0xff] %vm1802, %v2859
      %2872 = vst.msk [vmem:[%s2868 + $0x18] sm:$0xff] %vm1802, %v2861
      %2873 = vst.msk [vmem:[%s2868 + $0x20] sm:$0xff] %vm1802, %v2863
      %2874 = vst.msk [vmem:[%s2868 + $0x28] sm:$0xff] %vm1802, %v2865
      %2875 = vst.msk [vmem:[%s2868 + $0x30] sm:$0x1] %vm1809, %v2867
      %v2876 = vld [vmem:[%s1811] sm:$0x1]
      %v2878 = vlaneseq
      %v2879 = vshrl.u32 %v2878, 7
      %v2880 = vsub.s32 0, %v2879
      %v2881 = vrot.slane %v2876, %v2880
      %v2883 = vmul.f32 %v1077, %v2881
      %v2884 = vmul.f32 %v1078, %v2881
      %v2885 = vmul.f32 %v1079, %v2881
      %v2886 = vmul.f32 %v1080, %v2881
      %v2887 = vmul.f32 %v1081, %v2881
      %v2888 = vmul.f32 %v1082, %v2881
      %v2889 = vmul.f32 %v1083, %v2881
      %v2890 = vadd.f32 %v2883, 0.0
      %v2891 = vadd.f32 %v2884, 0.0
      %v2892 = vadd.f32 %v2885, 0.0
      %v2893 = vadd.f32 %v2886, 0.0
      %v2894 = vadd.f32 %v2887, 0.0
      %v2895 = vadd.f32 %v2888, 0.0
      %v2896 = vadd.f32 %v2889, 0.0
      %v2897 = vld [vmem:[%s1833] sm:$0x1]
      %v2899 = vlaneseq
      %v2900 = vshrl.u32 %v2899, 7
      %v2901 = vsub.s32 0, %v2900
      %v2902 = vrot.slane %v2897, %v2901
      %v2904 = vmul.f32 %v1558, %v2902
      %v2905 = vmul.f32 %v1559, %v2902
      %v2906 = vmul.f32 %v1560, %v2902
      %v2907 = vmul.f32 %v1561, %v2902
      %v2908 = vmul.f32 %v1562, %v2902
      %v2909 = vmul.f32 %v1563, %v2902
      %v2910 = vmul.f32 %v1564, %v2902
      %v2911 = vadd.f32 %v2890, %v2904
      %v2912 = vadd.f32 %v2891, %v2905
      %v2913 = vadd.f32 %v2892, %v2906
      %v2914 = vadd.f32 %v2893, %v2907
      %v2915 = vadd.f32 %v2894, %v2908
      %v2916 = vadd.f32 %v2895, %v2909
      %v2917 = vadd.f32 %v2896, %v2910
      %v2918 = vsel %vm1723, %v2911, 0.0
      %2919 = vadd.xlane.f32.xlu0 %v2918
      %v2920 = vpop.xlane.xlu0 %2919
      %v2921 = vsel %vm1723, %v2912, 0.0
      %2922 = vadd.xlane.f32.xlu0 %v2921
      %v2923 = vpop.xlane.xlu0 %2922
      %v2924 = vsel %vm1723, %v2913, 0.0
      %2925 = vadd.xlane.f32.xlu0 %v2924
      %v2926 = vpop.xlane.xlu0 %2925
      %v2927 = vsel %vm1723, %v2914, 0.0
      %2928 = vadd.xlane.f32.xlu0 %v2927
      %v2929 = vpop.xlane.xlu0 %2928
      %v2930 = vsel %vm1723, %v2915, 0.0
      %2931 = vadd.xlane.f32.xlu0 %v2930
      %v2932 = vpop.xlane.xlu0 %2931
      %v2933 = vsel %vm1723, %v2916, 0.0
      %2934 = vadd.xlane.f32.xlu0 %v2933
      %v2935 = vpop.xlane.xlu0 %2934
      %v2936 = vsel %vm1742, %v2917, 0.0
      %2937 = vadd.xlane.f32.xlu0 %v2936
      %v2938 = vpop.xlane.xlu0 %2937
      %v2939 = vld [vmem:[#allocation2] sm:$0x1]
      %v2941 = vlaneseq
      %v2942 = vshrl.u32 %v2941, 7
      %v2943 = vsub.s32 0, %v2942
      %v2944 = vrot.slane %v2939, %v2943
      %v2946 = vadd.f32 %v2920, %v2944
      %v2947 = vadd.f32 %v2923, %v2944
      %v2948 = vadd.f32 %v2926, %v2944
      %v2949 = vadd.f32 %v2929, %v2944
      %v2950 = vadd.f32 %v2932, %v2944
      %v2951 = vadd.f32 %v2935, %v2944
      %v2952 = vadd.f32 %v2938, %v2944
      %v2953 = vsub.f32 0.0, %v2946
      %v2954 = vsub.f32 0.0, %v2947
      %v2955 = vsub.f32 0.0, %v2948
      %v2956 = vsub.f32 0.0, %v2949
      %v2957 = vsub.f32 0.0, %v2950
      %v2958 = vsub.f32 0.0, %v2951
      %v2959 = vsub.f32 0.0, %v2952
      %v2960 = vmul.f32 %v2953, 1.442695
      %v2961 = vpow.pop %v2960
      %v2962 = vmul.f32 %v2954, 1.442695
      %v2963 = vpow.pop %v2962
      %v2964 = vmul.f32 %v2955, 1.442695
      %v2965 = vpow.pop %v2964
      %v2966 = vmul.f32 %v2956, 1.442695
      %v2967 = vpow.pop %v2966
      %v2968 = vmul.f32 %v2957, 1.442695
      %v2969 = vpow.pop %v2968
      %v2970 = vmul.f32 %v2958, 1.442695
      %v2971 = vpow.pop %v2970
      %v2972 = vmul.f32 %v2959, 1.442695
      %v2973 = vpow.pop %v2972
      %v2974 = vadd.f32 %v2961, 1.0
      %v2975 = vadd.f32 %v2963, 1.0
      %v2976 = vadd.f32 %v2965, 1.0
      %v2977 = vadd.f32 %v2967, 1.0
      %v2978 = vadd.f32 %v2969, 1.0
      %v2979 = vadd.f32 %v2971, 1.0
      %v2980 = vadd.f32 %v2973, 1.0
      %v2981 = vrcp.pop %v2974
      %v2982 = vmul.f32 1.0, %v2981
      %v2983 = vrcp.pop %v2975
      %v2984 = vmul.f32 1.0, %v2983
      %v2985 = vrcp.pop %v2976
      %v2986 = vmul.f32 1.0, %v2985
      %v2987 = vrcp.pop %v2977
      %v2988 = vmul.f32 1.0, %v2987
      %v2989 = vrcp.pop %v2978
      %v2990 = vmul.f32 1.0, %v2989
      %v2991 = vrcp.pop %v2979
      %v2992 = vmul.f32 1.0, %v2991
      %v2993 = vrcp.pop %v2980
      %v2994 = vmul.f32 1.0, %v2993
      %s2995 = scalar_lea.vmem %s226, 504
      %2996 = vst.msk [vmem:[%s2995] sm:$0xff] %vm1802, %v2982
      %2997 = vst.msk [vmem:[%s2995 + $0x8] sm:$0xff] %vm1802, %v2984
      %2998 = vst.msk [vmem:[%s2995 + $0x10] sm:$0xff] %vm1802, %v2986
      %2999 = vst.msk [vmem:[%s2995 + $0x18] sm:$0xff] %vm1802, %v2988
      %3000 = vst.msk [vmem:[%s2995 + $0x20] sm:$0xff] %vm1802, %v2990
      %3001 = vst.msk [vmem:[%s2995 + $0x28] sm:$0xff] %vm1802, %v2992
      %3002 = vst.msk [vmem:[%s2995 + $0x30] sm:$0x1] %vm1809, %v2994
      %v3003 = vld [vmem:[%s1701] sm:$0x1]
      %v3005 = vlaneseq
      %v3006 = vshrl.u32 %v3005, 7
      %v3007 = vsub.s32 0, %v3006
      %v3008 = vrot.slane %v3003, %v3007
      %v3010 = vmul.f32 %v1558, %v3008
      %v3011 = vmul.f32 %v1559, %v3008
      %v3012 = vmul.f32 %v1560, %v3008
      %v3013 = vmul.f32 %v1561, %v3008
      %v3014 = vmul.f32 %v1562, %v3008
      %v3015 = vmul.f32 %v1563, %v3008
      %v3016 = vmul.f32 %v1564, %v3008
      %v3017 = vadd.f32 %v3010, 0.0
      %v3018 = vadd.f32 %v3011, 0.0
      %v3019 = vadd.f32 %v3012, 0.0
      %v3020 = vadd.f32 %v3013, 0.0
      %v3021 = vadd.f32 %v3014, 0.0
      %v3022 = vadd.f32 %v3015, 0.0
      %v3023 = vadd.f32 %v3016, 0.0
      %v3024 = vsel %vm1723, %v3017, 0.0
      %3025 = vadd.xlane.f32.xlu0 %v3024
      %v3026 = vpop.xlane.xlu0 %3025
      %v3027 = vsel %vm1723, %v3018, 0.0
      %3028 = vadd.xlane.f32.xlu0 %v3027
      %v3029 = vpop.xlane.xlu0 %3028
      %v3030 = vsel %vm1723, %v3019, 0.0
      %3031 = vadd.xlane.f32.xlu0 %v3030
      %v3032 = vpop.xlane.xlu0 %3031
      %v3033 = vsel %vm1723, %v3020, 0.0
      %3034 = vadd.xlane.f32.xlu0 %v3033
      %v3035 = vpop.xlane.xlu0 %3034
      %v3036 = vsel %vm1723, %v3021, 0.0
      %3037 = vadd.xlane.f32.xlu0 %v3036
      %v3038 = vpop.xlane.xlu0 %3037
      %v3039 = vsel %vm1723, %v3022, 0.0
      %3040 = vadd.xlane.f32.xlu0 %v3039
      %v3041 = vpop.xlane.xlu0 %3040
      %v3042 = vsel %vm1742, %v3023, 0.0
      %3043 = vadd.xlane.f32.xlu0 %v3042
      %v3044 = vpop.xlane.xlu0 %3043
      %v3045 = vld [vmem:[#allocation2] sm:$0x1]
      %v3047 = vlaneseq
      %v3048 = vshrl.u32 %v3047, 7
      %v3049 = vsub.s32 0, %v3048
      %v3050 = vrot.slane %v3045, %v3049
      %v3052 = vadd.f32 %v3026, %v3050
      %v3053 = vadd.f32 %v3029, %v3050
      %v3054 = vadd.f32 %v3032, %v3050
      %v3055 = vadd.f32 %v3035, %v3050
      %v3056 = vadd.f32 %v3038, %v3050
      %v3057 = vadd.f32 %v3041, %v3050
      %v3058 = vadd.f32 %v3044, %v3050
      %v3059 = vsub.f32 0.0, %v3052
      %v3060 = vsub.f32 0.0, %v3053
      %v3061 = vsub.f32 0.0, %v3054
      %v3062 = vsub.f32 0.0, %v3055
      %v3063 = vsub.f32 0.0, %v3056
      %v3064 = vsub.f32 0.0, %v3057
      %v3065 = vsub.f32 0.0, %v3058
      %v3066 = vmul.f32 %v3059, 1.442695
      %v3067 = vpow.pop %v3066
      %v3068 = vmul.f32 %v3060, 1.442695
      %v3069 = vpow.pop %v3068
      %v3070 = vmul.f32 %v3061, 1.442695
      %v3071 = vpow.pop %v3070
      %v3072 = vmul.f32 %v3062, 1.442695
      %v3073 = vpow.pop %v3072
      %v3074 = vmul.f32 %v3063, 1.442695
      %v3075 = vpow.pop %v3074
      %v3076 = vmul.f32 %v3064, 1.442695
      %v3077 = vpow.pop %v3076
      %v3078 = vmul.f32 %v3065, 1.442695
      %v3079 = vpow.pop %v3078
      %v3080 = vadd.f32 %v3067, 1.0
      %v3081 = vadd.f32 %v3069, 1.0
      %v3082 = vadd.f32 %v3071, 1.0
      %v3083 = vadd.f32 %v3073, 1.0
      %v3084 = vadd.f32 %v3075, 1.0
      %v3085 = vadd.f32 %v3077, 1.0
      %v3086 = vadd.f32 %v3079, 1.0
      %v3087 = vrcp.pop %v3080
      %v3088 = vmul.f32 1.0, %v3087
      %v3089 = vrcp.pop %v3081
      %v3090 = vmul.f32 1.0, %v3089
      %v3091 = vrcp.pop %v3082
      %v3092 = vmul.f32 1.0, %v3091
      %v3093 = vrcp.pop %v3083
      %v3094 = vmul.f32 1.0, %v3093
      %v3095 = vrcp.pop %v3084
      %v3096 = vmul.f32 1.0, %v3095
      %v3097 = vrcp.pop %v3085
      %v3098 = vmul.f32 1.0, %v3097
      %v3099 = vrcp.pop %v3086
      %v3100 = vmul.f32 1.0, %v3099
      %s3101 = scalar_lea.vmem %s226, 560
      %3102 = vst.msk [vmem:[%s3101] sm:$0xff] %vm1802, %v3088
      %3103 = vst.msk [vmem:[%s3101 + $0x8] sm:$0xff] %vm1802, %v3090
      %3104 = vst.msk [vmem:[%s3101 + $0x10] sm:$0xff] %vm1802, %v3092
      %3105 = vst.msk [vmem:[%s3101 + $0x18] sm:$0xff] %vm1802, %v3094
      %3106 = vst.msk [vmem:[%s3101 + $0x20] sm:$0xff] %vm1802, %v3096
      %3107 = vst.msk [vmem:[%s3101 + $0x28] sm:$0xff] %vm1802, %v3098
      %3108 = vst.msk [vmem:[%s3101 + $0x30] sm:$0x1] %vm1809, %v3100
      %v3109 = vld [vmem:[%s1811] sm:$0x1]
      %v3111 = vlaneseq
      %v3112 = vshrl.u32 %v3111, 7
      %v3113 = vsub.s32 0, %v3112
      %v3114 = vrot.slane %v3109, %v3113
      %v3116 = vmul.f32 %v1558, %v3114
      %v3117 = vmul.f32 %v1559, %v3114
      %v3118 = vmul.f32 %v1560, %v3114
      %v3119 = vmul.f32 %v1561, %v3114
      %v3120 = vmul.f32 %v1562, %v3114
      %v3121 = vmul.f32 %v1563, %v3114
      %v3122 = vmul.f32 %v1564, %v3114
      %v3123 = vadd.f32 %v3116, 0.0
      %v3124 = vadd.f32 %v3117, 0.0
      %v3125 = vadd.f32 %v3118, 0.0
      %v3126 = vadd.f32 %v3119, 0.0
      %v3127 = vadd.f32 %v3120, 0.0
      %v3128 = vadd.f32 %v3121, 0.0
      %v3129 = vadd.f32 %v3122, 0.0
      %v3130 = vld [vmem:[%s1833] sm:$0x1]
      %v3132 = vlaneseq
      %v3133 = vshrl.u32 %v3132, 7
      %v3134 = vsub.s32 0, %v3133
      %v3135 = vrot.slane %v3130, %v3134
      %v3137 = vmul.f32 %v1695, %v3135
      %v3138 = vmul.f32 %v1696, %v3135
      %v3139 = vmul.f32 %v1697, %v3135
      %v3140 = vmul.f32 %v1698, %v3135
      %v3141 = vmul.f32 %v1699, %v3135
      %v3142 = vmul.f32 %v1700, %v3135
      %v3143 = vmul.f32 %v3135, 0.0
      %v3144 = vadd.f32 %v3123, %v3137
      %v3145 = vadd.f32 %v3124, %v3138
      %v3146 = vadd.f32 %v3125, %v3139
      %v3147 = vadd.f32 %v3126, %v3140
      %v3148 = vadd.f32 %v3127, %v3141
      %v3149 = vadd.f32 %v3128, %v3142
      %v3150 = vadd.f32 %v3129, %v3143
      %v3151 = vsel %vm1723, %v3144, 0.0
      %3152 = vadd.xlane.f32.xlu0 %v3151
      %v3153 = vpop.xlane.xlu0 %3152
      %v3154 = vsel %vm1723, %v3145, 0.0
      %3155 = vadd.xlane.f32.xlu0 %v3154
      %v3156 = vpop.xlane.xlu0 %3155
      %v3157 = vsel %vm1723, %v3146, 0.0
      %3158 = vadd.xlane.f32.xlu0 %v3157
      %v3159 = vpop.xlane.xlu0 %3158
      %v3160 = vsel %vm1723, %v3147, 0.0
      %3161 = vadd.xlane.f32.xlu0 %v3160
      %v3162 = vpop.xlane.xlu0 %3161
      %v3163 = vsel %vm1723, %v3148, 0.0
      %3164 = vadd.xlane.f32.xlu0 %v3163
      %v3165 = vpop.xlane.xlu0 %3164
      %v3166 = vsel %vm1723, %v3149, 0.0
      %3167 = vadd.xlane.f32.xlu0 %v3166
      %v3168 = vpop.xlane.xlu0 %3167
      %v3169 = vsel %vm1742, %v3150, 0.0
      %3170 = vadd.xlane.f32.xlu0 %v3169
      %v3171 = vpop.xlane.xlu0 %3170
      %v3172 = vld [vmem:[#allocation2] sm:$0x1]
      %v3174 = vlaneseq
      %v3175 = vshrl.u32 %v3174, 7
      %v3176 = vsub.s32 0, %v3175
      %v3177 = vrot.slane %v3172, %v3176
      %v3179 = vadd.f32 %v3153, %v3177
      %v3180 = vadd.f32 %v3156, %v3177
      %v3181 = vadd.f32 %v3159, %v3177
      %v3182 = vadd.f32 %v3162, %v3177
      %v3183 = vadd.f32 %v3165, %v3177
      %v3184 = vadd.f32 %v3168, %v3177
      %v3185 = vadd.f32 %v3171, %v3177
      %v3186 = vsub.f32 0.0, %v3179
      %v3187 = vsub.f32 0.0, %v3180
      %v3188 = vsub.f32 0.0, %v3181
      %v3189 = vsub.f32 0.0, %v3182
      %v3190 = vsub.f32 0.0, %v3183
      %v3191 = vsub.f32 0.0, %v3184
      %v3192 = vsub.f32 0.0, %v3185
      %v3193 = vmul.f32 %v3186, 1.442695
      %v3194 = vpow.pop %v3193
      %v3195 = vmul.f32 %v3187, 1.442695
      %v3196 = vpow.pop %v3195
      %v3197 = vmul.f32 %v3188, 1.442695
      %v3198 = vpow.pop %v3197
      %v3199 = vmul.f32 %v3189, 1.442695
      %v3200 = vpow.pop %v3199
      %v3201 = vmul.f32 %v3190, 1.442695
      %v3202 = vpow.pop %v3201
      %v3203 = vmul.f32 %v3191, 1.442695
      %v3204 = vpow.pop %v3203
      %v3205 = vmul.f32 %v3192, 1.442695
      %v3206 = vpow.pop %v3205
      %v3207 = vadd.f32 %v3194, 1.0
      %v3208 = vadd.f32 %v3196, 1.0
      %v3209 = vadd.f32 %v3198, 1.0
      %v3210 = vadd.f32 %v3200, 1.0
      %v3211 = vadd.f32 %v3202, 1.0
      %v3212 = vadd.f32 %v3204, 1.0
      %v3213 = vadd.f32 %v3206, 1.0
      %v3214 = vrcp.pop %v3207
      %v3215 = vmul.f32 1.0, %v3214
      %v3216 = vrcp.pop %v3208
      %v3217 = vmul.f32 1.0, %v3216
      %v3218 = vrcp.pop %v3209
      %v3219 = vmul.f32 1.0, %v3218
      %v3220 = vrcp.pop %v3210
      %v3221 = vmul.f32 1.0, %v3220
      %v3222 = vrcp.pop %v3211
      %v3223 = vmul.f32 1.0, %v3222
      %v3224 = vrcp.pop %v3212
      %v3225 = vmul.f32 1.0, %v3224
      %v3226 = vrcp.pop %v3213
      %v3227 = vmul.f32 1.0, %v3226
      %s3228 = scalar_lea.vmem %s226, 616
      %3229 = vst.msk [vmem:[%s3228] sm:$0xff] %vm1802, %v3215
      %3230 = vst.msk [vmem:[%s3228 + $0x8] sm:$0xff] %vm1802, %v3217
      %3231 = vst.msk [vmem:[%s3228 + $0x10] sm:$0xff] %vm1802, %v3219
      %3232 = vst.msk [vmem:[%s3228 + $0x18] sm:$0xff] %vm1802, %v3221
      %3233 = vst.msk [vmem:[%s3228 + $0x20] sm:$0xff] %vm1802, %v3223
      %3234 = vst.msk [vmem:[%s3228 + $0x28] sm:$0xff] %vm1802, %v3225
      %3235 = vst.msk [vmem:[%s3228 + $0x30] sm:$0x1] %vm1809, %v3227
      %v3236 = vld [vmem:[%s2173] sm:$0x1]
      %v3238 = vlaneseq
      %v3239 = vshrl.u32 %v3238, 7
      %v3240 = vsub.s32 0, %v3239
      %v3241 = vrot.slane %v3236, %v3240
      %v3243 = vmul.f32 %v1077, %v3241
      %v3244 = vmul.f32 %v1078, %v3241
      %v3245 = vmul.f32 %v1079, %v3241
      %v3246 = vmul.f32 %v1080, %v3241
      %v3247 = vmul.f32 %v1081, %v3241
      %v3248 = vmul.f32 %v1082, %v3241
      %v3249 = vmul.f32 %v1083, %v3241
      %v3250 = vadd.f32 %v3243, 0.0
      %v3251 = vadd.f32 %v3244, 0.0
      %v3252 = vadd.f32 %v3245, 0.0
      %v3253 = vadd.f32 %v3246, 0.0
      %v3254 = vadd.f32 %v3247, 0.0
      %v3255 = vadd.f32 %v3248, 0.0
      %v3256 = vadd.f32 %v3249, 0.0
      %v3257 = vld [vmem:[%s2195] sm:$0x1]
      %v3259 = vlaneseq
      %v3260 = vshrl.u32 %v3259, 7
      %v3261 = vsub.s32 0, %v3260
      %v3262 = vrot.slane %v3257, %v3261
      %v3264 = vmul.f32 %v1599, %v3262
      %v3265 = vmul.f32 %v1601, %v3262
      %v3266 = vmul.f32 %v1603, %v3262
      %v3267 = vmul.f32 %v1605, %v3262
      %v3268 = vmul.f32 %v1607, %v3262
      %v3269 = vmul.f32 %v1616, %v3262
      %v3270 = vmul.f32 %v3262, 0.0
      %v3271 = vadd.f32 %v3250, %v3264
      %v3272 = vadd.f32 %v3251, %v3265
      %v3273 = vadd.f32 %v3252, %v3266
      %v3274 = vadd.f32 %v3253, %v3267
      %v3275 = vadd.f32 %v3254, %v3268
      %v3276 = vadd.f32 %v3255, %v3269
      %v3277 = vadd.f32 %v3256, %v3270
      %v3278 = vsel %vm1723, %v3271, 0.0
      %3279 = vadd.xlane.f32.xlu0 %v3278
      %v3280 = vpop.xlane.xlu0 %3279
      %v3281 = vsel %vm1723, %v3272, 0.0
      %3282 = vadd.xlane.f32.xlu0 %v3281
      %v3283 = vpop.xlane.xlu0 %3282
      %v3284 = vsel %vm1723, %v3273, 0.0
      %3285 = vadd.xlane.f32.xlu0 %v3284
      %v3286 = vpop.xlane.xlu0 %3285
      %v3287 = vsel %vm1723, %v3274, 0.0
      %3288 = vadd.xlane.f32.xlu0 %v3287
      %v3289 = vpop.xlane.xlu0 %3288
      %v3290 = vsel %vm1723, %v3275, 0.0
      %3291 = vadd.xlane.f32.xlu0 %v3290
      %v3292 = vpop.xlane.xlu0 %3291
      %v3293 = vsel %vm1723, %v3276, 0.0
      %3294 = vadd.xlane.f32.xlu0 %v3293
      %v3295 = vpop.xlane.xlu0 %3294
      %v3296 = vsel %vm1742, %v3277, 0.0
      %3297 = vadd.xlane.f32.xlu0 %v3296
      %v3298 = vpop.xlane.xlu0 %3297
      %v3299 = vld [vmem:[#allocation2] sm:$0x1]
      %v3301 = vlaneseq
      %v3302 = vshrl.u32 %v3301, 7
      %v3303 = vsub.s32 0, %v3302
      %v3304 = vrot.slane %v3299, %v3303
      %v3306 = vadd.f32 %v3280, %v3304
      %v3307 = vadd.f32 %v3283, %v3304
      %v3308 = vadd.f32 %v3286, %v3304
      %v3309 = vadd.f32 %v3289, %v3304
      %v3310 = vadd.f32 %v3292, %v3304
      %v3311 = vadd.f32 %v3295, %v3304
      %v3312 = vadd.f32 %v3298, %v3304
      %v3313 = vsub.f32 0.0, %v3306
      %v3314 = vsub.f32 0.0, %v3307
      %v3315 = vsub.f32 0.0, %v3308
      %v3316 = vsub.f32 0.0, %v3309
      %v3317 = vsub.f32 0.0, %v3310
      %v3318 = vsub.f32 0.0, %v3311
      %v3319 = vsub.f32 0.0, %v3312
      %v3320 = vmul.f32 %v3313, 1.442695
      %v3321 = vpow.pop %v3320
      %v3322 = vmul.f32 %v3314, 1.442695
      %v3323 = vpow.pop %v3322
      %v3324 = vmul.f32 %v3315, 1.442695
      %v3325 = vpow.pop %v3324
      %v3326 = vmul.f32 %v3316, 1.442695
      %v3327 = vpow.pop %v3326
      %v3328 = vmul.f32 %v3317, 1.442695
      %v3329 = vpow.pop %v3328
      %v3330 = vmul.f32 %v3318, 1.442695
      %v3331 = vpow.pop %v3330
      %v3332 = vmul.f32 %v3319, 1.442695
      %v3333 = vpow.pop %v3332
      %v3334 = vadd.f32 %v3321, 1.0
      %v3335 = vadd.f32 %v3323, 1.0
      %v3336 = vadd.f32 %v3325, 1.0
      %v3337 = vadd.f32 %v3327, 1.0
      %v3338 = vadd.f32 %v3329, 1.0
      %v3339 = vadd.f32 %v3331, 1.0
      %v3340 = vadd.f32 %v3333, 1.0
      %v3341 = vrcp.pop %v3334
      %v3342 = vmul.f32 1.0, %v3341
      %v3343 = vrcp.pop %v3335
      %v3344 = vmul.f32 1.0, %v3343
      %v3345 = vrcp.pop %v3336
      %v3346 = vmul.f32 1.0, %v3345
      %v3347 = vrcp.pop %v3337
      %v3348 = vmul.f32 1.0, %v3347
      %v3349 = vrcp.pop %v3338
      %v3350 = vmul.f32 1.0, %v3349
      %v3351 = vrcp.pop %v3339
      %v3352 = vmul.f32 1.0, %v3351
      %v3353 = vrcp.pop %v3340
      %v3354 = vmul.f32 1.0, %v3353
      %s3355 = scalar_lea.vmem %s226, 672
      %3356 = vst.msk [vmem:[%s3355] sm:$0xff] %vm1802, %v3342
      %3357 = vst.msk [vmem:[%s3355 + $0x8] sm:$0xff] %vm1802, %v3344
      %3358 = vst.msk [vmem:[%s3355 + $0x10] sm:$0xff] %vm1802, %v3346
      %3359 = vst.msk [vmem:[%s3355 + $0x18] sm:$0xff] %vm1802, %v3348
      %3360 = vst.msk [vmem:[%s3355 + $0x20] sm:$0xff] %vm1802, %v3350
      %3361 = vst.msk [vmem:[%s3355 + $0x28] sm:$0xff] %vm1802, %v3352
      %3362 = vst.msk [vmem:[%s3355 + $0x30] sm:$0x1] %vm1809, %v3354
      %v3363 = vld [vmem:[%s3] sm:$0x1]
      %v3365 = vlaneseq
      %v3366 = vshrl.u32 %v3365, 7
      %v3367 = vsub.s32 0, %v3366
      %v3368 = vrot.slane %v3363, %v3367
      %v3370 = vmul.f32 %v1077, %v3368
      %v3371 = vmul.f32 %v1078, %v3368
      %v3372 = vmul.f32 %v1079, %v3368
      %v3373 = vmul.f32 %v1080, %v3368
      %v3374 = vmul.f32 %v1081, %v3368
      %v3375 = vmul.f32 %v1082, %v3368
      %v3376 = vmul.f32 %v1083, %v3368
      %v3377 = vadd.f32 %v3370, 0.0
      %v3378 = vadd.f32 %v3371, 0.0
      %v3379 = vadd.f32 %v3372, 0.0
      %v3380 = vadd.f32 %v3373, 0.0
      %v3381 = vadd.f32 %v3374, 0.0
      %v3382 = vadd.f32 %v3375, 0.0
      %v3383 = vadd.f32 %v3376, 0.0
      %v3384 = vld [vmem:[%s2323] sm:$0x1]
      %v3386 = vlaneseq
      %v3387 = vshrl.u32 %v3386, 7
      %v3388 = vsub.s32 0, %v3387
      %v3389 = vrot.slane %v3384, %v3388
      %v3391 = vmul.f32 %v1558, %v3389
      %v3392 = vmul.f32 %v1559, %v3389
      %v3393 = vmul.f32 %v1560, %v3389
      %v3394 = vmul.f32 %v1561, %v3389
      %v3395 = vmul.f32 %v1562, %v3389
      %v3396 = vmul.f32 %v1563, %v3389
      %v3397 = vmul.f32 %v1564, %v3389
      %v3398 = vadd.f32 %v3377, %v3391
      %v3399 = vadd.f32 %v3378, %v3392
      %v3400 = vadd.f32 %v3379, %v3393
      %v3401 = vadd.f32 %v3380, %v3394
      %v3402 = vadd.f32 %v3381, %v3395
      %v3403 = vadd.f32 %v3382, %v3396
      %v3404 = vadd.f32 %v3383, %v3397
      %v3405 = vld [vmem:[%s2345] sm:$0x1]
      %v3407 = vlaneseq
      %v3408 = vshrl.u32 %v3407, 7
      %v3409 = vsub.s32 0, %v3408
      %v3410 = vrot.slane %v3405, %v3409
      %v3412 = vmul.f32 %v1599, %v3410
      %v3413 = vmul.f32 %v1601, %v3410
      %v3414 = vmul.f32 %v1603, %v3410
      %v3415 = vmul.f32 %v1605, %v3410
      %v3416 = vmul.f32 %v1607, %v3410
      %v3417 = vmul.f32 %v1616, %v3410
      %v3418 = vmul.f32 %v3410, 0.0
      %v3419 = vadd.f32 %v3398, %v3412
      %v3420 = vadd.f32 %v3399, %v3413
      %v3421 = vadd.f32 %v3400, %v3414
      %v3422 = vadd.f32 %v3401, %v3415
      %v3423 = vadd.f32 %v3402, %v3416
      %v3424 = vadd.f32 %v3403, %v3417
      %v3425 = vadd.f32 %v3404, %v3418
      %v3426 = vld [vmem:[%s2367] sm:$0x1]
      %v3428 = vlaneseq
      %v3429 = vshrl.u32 %v3428, 7
      %v3430 = vsub.s32 0, %v3429
      %v3431 = vrot.slane %v3426, %v3430
      %v3433 = vmul.f32 %v1651, %v3431
      %v3434 = vmul.f32 %v1653, %v3431
      %v3435 = vmul.f32 %v1655, %v3431
      %v3436 = vmul.f32 %v1657, %v3431
      %v3437 = vmul.f32 %v1659, %v3431
      %v3438 = vmul.f32 %v1668, %v3431
      %v3439 = vmul.f32 %v3431, 0.0
      %v3440 = vadd.f32 %v3419, %v3433
      %v3441 = vadd.f32 %v3420, %v3434
      %v3442 = vadd.f32 %v3421, %v3435
      %v3443 = vadd.f32 %v3422, %v3436
      %v3444 = vadd.f32 %v3423, %v3437
      %v3445 = vadd.f32 %v3424, %v3438
      %v3446 = vadd.f32 %v3425, %v3439
      %v3447 = vsel %vm1723, %v3440, 0.0
      %3448 = vadd.xlane.f32.xlu0 %v3447
      %v3449 = vpop.xlane.xlu0 %3448
      %v3450 = vsel %vm1723, %v3441, 0.0
      %3451 = vadd.xlane.f32.xlu0 %v3450
      %v3452 = vpop.xlane.xlu0 %3451
      %v3453 = vsel %vm1723, %v3442, 0.0
      %3454 = vadd.xlane.f32.xlu0 %v3453
      %v3455 = vpop.xlane.xlu0 %3454
      %v3456 = vsel %vm1723, %v3443, 0.0
      %3457 = vadd.xlane.f32.xlu0 %v3456
      %v3458 = vpop.xlane.xlu0 %3457
      %v3459 = vsel %vm1723, %v3444, 0.0
      %3460 = vadd.xlane.f32.xlu0 %v3459
      %v3461 = vpop.xlane.xlu0 %3460
      %v3462 = vsel %vm1723, %v3445, 0.0
      %3463 = vadd.xlane.f32.xlu0 %v3462
      %v3464 = vpop.xlane.xlu0 %3463
      %v3465 = vsel %vm1742, %v3446, 0.0
      %3466 = vadd.xlane.f32.xlu0 %v3465
      %v3467 = vpop.xlane.xlu0 %3466
      %v3468 = vld [vmem:[#allocation2] sm:$0x1]
      %v3470 = vlaneseq
      %v3471 = vshrl.u32 %v3470, 7
      %v3472 = vsub.s32 0, %v3471
      %v3473 = vrot.slane %v3468, %v3472
      %v3475 = vadd.f32 %v3449, %v3473
      %v3476 = vadd.f32 %v3452, %v3473
      %v3477 = vadd.f32 %v3455, %v3473
      %v3478 = vadd.f32 %v3458, %v3473
      %v3479 = vadd.f32 %v3461, %v3473
      %v3480 = vadd.f32 %v3464, %v3473
      %v3481 = vadd.f32 %v3467, %v3473
      %v3482 = vsub.f32 0.0, %v3475
      %v3483 = vsub.f32 0.0, %v3476
      %v3484 = vsub.f32 0.0, %v3477
      %v3485 = vsub.f32 0.0, %v3478
      %v3486 = vsub.f32 0.0, %v3479
      %v3487 = vsub.f32 0.0, %v3480
      %v3488 = vsub.f32 0.0, %v3481
      %v3489 = vmul.f32 %v3482, 1.442695
      %v3490 = vpow.pop %v3489
      %v3491 = vmul.f32 %v3483, 1.442695
      %v3492 = vpow.pop %v3491
      %v3493 = vmul.f32 %v3484, 1.442695
      %v3494 = vpow.pop %v3493
      %v3495 = vmul.f32 %v3485, 1.442695
      %v3496 = vpow.pop %v3495
      %v3497 = vmul.f32 %v3486, 1.442695
      %v3498 = vpow.pop %v3497
      %v3499 = vmul.f32 %v3487, 1.442695
      %v3500 = vpow.pop %v3499
      %v3501 = vmul.f32 %v3488, 1.442695
      %v3502 = vpow.pop %v3501
      %v3503 = vadd.f32 %v3490, 1.0
      %v3504 = vadd.f32 %v3492, 1.0
      %v3505 = vadd.f32 %v3494, 1.0
      %v3506 = vadd.f32 %v3496, 1.0
      %v3507 = vadd.f32 %v3498, 1.0
      %v3508 = vadd.f32 %v3500, 1.0
      %v3509 = vadd.f32 %v3502, 1.0
      %v3510 = vrcp.pop %v3503
      %v3511 = vmul.f32 1.0, %v3510
      %v3512 = vrcp.pop %v3504
      %v3513 = vmul.f32 1.0, %v3512
      %v3514 = vrcp.pop %v3505
      %v3515 = vmul.f32 1.0, %v3514
      %v3516 = vrcp.pop %v3506
      %v3517 = vmul.f32 1.0, %v3516
      %v3518 = vrcp.pop %v3507
      %v3519 = vmul.f32 1.0, %v3518
      %v3520 = vrcp.pop %v3508
      %v3521 = vmul.f32 1.0, %v3520
      %v3522 = vrcp.pop %v3509
      %v3523 = vmul.f32 1.0, %v3522
      %s3524 = scalar_lea.vmem %s226, 728
      %3525 = vst.msk [vmem:[%s3524] sm:$0xff] %vm1802, %v3511
      %3526 = vst.msk [vmem:[%s3524 + $0x8] sm:$0xff] %vm1802, %v3513
      %3527 = vst.msk [vmem:[%s3524 + $0x10] sm:$0xff] %vm1802, %v3515
      %3528 = vst.msk [vmem:[%s3524 + $0x18] sm:$0xff] %vm1802, %v3517
      %3529 = vst.msk [vmem:[%s3524 + $0x20] sm:$0xff] %vm1802, %v3519
      %3530 = vst.msk [vmem:[%s3524 + $0x28] sm:$0xff] %vm1802, %v3521
      %3531 = vst.msk [vmem:[%s3524 + $0x30] sm:$0x1] %vm1809, %v3523
      %v3532 = vld [vmem:[%s2173] sm:$0x1]
      %v3534 = vlaneseq
      %v3535 = vshrl.u32 %v3534, 7
      %v3536 = vsub.s32 0, %v3535
      %v3537 = vrot.slane %v3532, %v3536
      %v3539 = vmul.f32 %v1558, %v3537
      %v3540 = vmul.f32 %v1559, %v3537
      %v3541 = vmul.f32 %v1560, %v3537
      %v3542 = vmul.f32 %v1561, %v3537
      %v3543 = vmul.f32 %v1562, %v3537
      %v3544 = vmul.f32 %v1563, %v3537
      %v3545 = vmul.f32 %v1564, %v3537
      %v3546 = vadd.f32 %v3539, 0.0
      %v3547 = vadd.f32 %v3540, 0.0
      %v3548 = vadd.f32 %v3541, 0.0
      %v3549 = vadd.f32 %v3542, 0.0
      %v3550 = vadd.f32 %v3543, 0.0
      %v3551 = vadd.f32 %v3544, 0.0
      %v3552 = vadd.f32 %v3545, 0.0
      %v3553 = vld [vmem:[%s2195] sm:$0x1]
      %v3555 = vlaneseq
      %v3556 = vshrl.u32 %v3555, 7
      %v3557 = vsub.s32 0, %v3556
      %v3558 = vrot.slane %v3553, %v3557
      %v3560 = vmul.f32 %v1651, %v3558
      %v3561 = vmul.f32 %v1653, %v3558
      %v3562 = vmul.f32 %v1655, %v3558
      %v3563 = vmul.f32 %v1657, %v3558
      %v3564 = vmul.f32 %v1659, %v3558
      %v3565 = vmul.f32 %v1668, %v3558
      %v3566 = vmul.f32 %v3558, 0.0
      %v3567 = vadd.f32 %v3546, %v3560
      %v3568 = vadd.f32 %v3547, %v3561
      %v3569 = vadd.f32 %v3548, %v3562
      %v3570 = vadd.f32 %v3549, %v3563
      %v3571 = vadd.f32 %v3550, %v3564
      %v3572 = vadd.f32 %v3551, %v3565
      %v3573 = vadd.f32 %v3552, %v3566
      %v3574 = vsel %vm1723, %v3567, 0.0
      %3575 = vadd.xlane.f32.xlu0 %v3574
      %v3576 = vpop.xlane.xlu0 %3575
      %v3577 = vsel %vm1723, %v3568, 0.0
      %3578 = vadd.xlane.f32.xlu0 %v3577
      %v3579 = vpop.xlane.xlu0 %3578
      %v3580 = vsel %vm1723, %v3569, 0.0
      %3581 = vadd.xlane.f32.xlu0 %v3580
      %v3582 = vpop.xlane.xlu0 %3581
      %v3583 = vsel %vm1723, %v3570, 0.0
      %3584 = vadd.xlane.f32.xlu0 %v3583
      %v3585 = vpop.xlane.xlu0 %3584
      %v3586 = vsel %vm1723, %v3571, 0.0
      %3587 = vadd.xlane.f32.xlu0 %v3586
      %v3588 = vpop.xlane.xlu0 %3587
      %v3589 = vsel %vm1723, %v3572, 0.0
      %3590 = vadd.xlane.f32.xlu0 %v3589
      %v3591 = vpop.xlane.xlu0 %3590
      %v3592 = vsel %vm1742, %v3573, 0.0
      %3593 = vadd.xlane.f32.xlu0 %v3592
      %v3594 = vpop.xlane.xlu0 %3593
      %v3595 = vld [vmem:[#allocation2] sm:$0x1]
      %v3597 = vlaneseq
      %v3598 = vshrl.u32 %v3597, 7
      %v3599 = vsub.s32 0, %v3598
      %v3600 = vrot.slane %v3595, %v3599
      %v3602 = vadd.f32 %v3576, %v3600
      %v3603 = vadd.f32 %v3579, %v3600
      %v3604 = vadd.f32 %v3582, %v3600
      %v3605 = vadd.f32 %v3585, %v3600
      %v3606 = vadd.f32 %v3588, %v3600
      %v3607 = vadd.f32 %v3591, %v3600
      %v3608 = vadd.f32 %v3594, %v3600
      %v3609 = vsub.f32 0.0, %v3602
      %v3610 = vsub.f32 0.0, %v3603
      %v3611 = vsub.f32 0.0, %v3604
      %v3612 = vsub.f32 0.0, %v3605
      %v3613 = vsub.f32 0.0, %v3606
      %v3614 = vsub.f32 0.0, %v3607
      %v3615 = vsub.f32 0.0, %v3608
      %v3616 = vmul.f32 %v3609, 1.442695
      %v3617 = vpow.pop %v3616
      %v3618 = vmul.f32 %v3610, 1.442695
      %v3619 = vpow.pop %v3618
      %v3620 = vmul.f32 %v3611, 1.442695
      %v3621 = vpow.pop %v3620
      %v3622 = vmul.f32 %v3612, 1.442695
      %v3623 = vpow.pop %v3622
      %v3624 = vmul.f32 %v3613, 1.442695
      %v3625 = vpow.pop %v3624
      %v3626 = vmul.f32 %v3614, 1.442695
      %v3627 = vpow.pop %v3626
      %v3628 = vmul.f32 %v3615, 1.442695
      %v3629 = vpow.pop %v3628
      %v3630 = vadd.f32 %v3617, 1.0
      %v3631 = vadd.f32 %v3619, 1.0
      %v3632 = vadd.f32 %v3621, 1.0
      %v3633 = vadd.f32 %v3623, 1.0
      %v3634 = vadd.f32 %v3625, 1.0
      %v3635 = vadd.f32 %v3627, 1.0
      %v3636 = vadd.f32 %v3629, 1.0
      %v3637 = vrcp.pop %v3630
      %v3638 = vmul.f32 1.0, %v3637
      %v3639 = vrcp.pop %v3631
      %v3640 = vmul.f32 1.0, %v3639
      %v3641 = vrcp.pop %v3632
      %v3642 = vmul.f32 1.0, %v3641
      %v3643 = vrcp.pop %v3633
      %v3644 = vmul.f32 1.0, %v3643
      %v3645 = vrcp.pop %v3634
      %v3646 = vmul.f32 1.0, %v3645
      %v3647 = vrcp.pop %v3635
      %v3648 = vmul.f32 1.0, %v3647
      %v3649 = vrcp.pop %v3636
      %v3650 = vmul.f32 1.0, %v3649
      %s3651 = scalar_lea.vmem %s226, 784
      %3652 = vst.msk [vmem:[%s3651] sm:$0xff] %vm1802, %v3638
      %3653 = vst.msk [vmem:[%s3651 + $0x8] sm:$0xff] %vm1802, %v3640
      %3654 = vst.msk [vmem:[%s3651 + $0x10] sm:$0xff] %vm1802, %v3642
      %3655 = vst.msk [vmem:[%s3651 + $0x18] sm:$0xff] %vm1802, %v3644
      %3656 = vst.msk [vmem:[%s3651 + $0x20] sm:$0xff] %vm1802, %v3646
      %3657 = vst.msk [vmem:[%s3651 + $0x28] sm:$0xff] %vm1802, %v3648
      %3658 = vst.msk [vmem:[%s3651 + $0x30] sm:$0x1] %vm1809, %v3650
      %v3659 = vld [vmem:[%s3] sm:$0x1]
      %v3661 = vlaneseq
      %v3662 = vshrl.u32 %v3661, 7
      %v3663 = vsub.s32 0, %v3662
      %v3664 = vrot.slane %v3659, %v3663
      %v3666 = vmul.f32 %v1558, %v3664
      %v3667 = vmul.f32 %v1559, %v3664
      %v3668 = vmul.f32 %v1560, %v3664
      %v3669 = vmul.f32 %v1561, %v3664
      %v3670 = vmul.f32 %v1562, %v3664
      %v3671 = vmul.f32 %v1563, %v3664
      %v3672 = vmul.f32 %v1564, %v3664
      %v3673 = vadd.f32 %v3666, 0.0
      %v3674 = vadd.f32 %v3667, 0.0
      %v3675 = vadd.f32 %v3668, 0.0
      %v3676 = vadd.f32 %v3669, 0.0
      %v3677 = vadd.f32 %v3670, 0.0
      %v3678 = vadd.f32 %v3671, 0.0
      %v3679 = vadd.f32 %v3672, 0.0
      %v3680 = vld [vmem:[%s2323] sm:$0x1]
      %v3682 = vlaneseq
      %v3683 = vshrl.u32 %v3682, 7
      %v3684 = vsub.s32 0, %v3683
      %v3685 = vrot.slane %v3680, %v3684
      %v3687 = vmul.f32 %v1695, %v3685
      %v3688 = vmul.f32 %v1696, %v3685
      %v3689 = vmul.f32 %v1697, %v3685
      %v3690 = vmul.f32 %v1698, %v3685
      %v3691 = vmul.f32 %v1699, %v3685
      %v3692 = vmul.f32 %v1700, %v3685
      %v3693 = vmul.f32 %v3685, 0.0
      %v3694 = vadd.f32 %v3673, %v3687
      %v3695 = vadd.f32 %v3674, %v3688
      %v3696 = vadd.f32 %v3675, %v3689
      %v3697 = vadd.f32 %v3676, %v3690
      %v3698 = vadd.f32 %v3677, %v3691
      %v3699 = vadd.f32 %v3678, %v3692
      %v3700 = vadd.f32 %v3679, %v3693
      %v3701 = vld [vmem:[%s2345] sm:$0x1]
      %v3703 = vlaneseq
      %v3704 = vshrl.u32 %v3703, 7
      %v3705 = vsub.s32 0, %v3704
      %v3706 = vrot.slane %v3701, %v3705
      %v3708 = vmul.f32 %v1651, %v3706
      %v3709 = vmul.f32 %v1653, %v3706
      %v3710 = vmul.f32 %v1655, %v3706
      %v3711 = vmul.f32 %v1657, %v3706
      %v3712 = vmul.f32 %v1659, %v3706
      %v3713 = vmul.f32 %v1668, %v3706
      %v3714 = vmul.f32 %v3706, 0.0
      %v3715 = vadd.f32 %v3694, %v3708
      %v3716 = vadd.f32 %v3695, %v3709
      %v3717 = vadd.f32 %v3696, %v3710
      %v3718 = vadd.f32 %v3697, %v3711
      %v3719 = vadd.f32 %v3698, %v3712
      %v3720 = vadd.f32 %v3699, %v3713
      %v3721 = vadd.f32 %v3700, %v3714
      %v3722 = vld [vmem:[%s2367] sm:$0x1]
      %v3724 = vlaneseq
      %v3725 = vshrl.u32 %v3724, 7
      %v3726 = vsub.s32 0, %v3725
      %v3727 = vrot.slane %v3722, %v3726
      %v3729 = vmul.f32 %v1636, %v3727
      %v3730 = vmul.f32 %v1637, %v3727
      %v3731 = vmul.f32 %v1638, %v3727
      %v3732 = vmul.f32 %v1639, %v3727
      %v3733 = vmul.f32 %v1640, %v3727
      %v3734 = vmul.f32 %v1641, %v3727
      %v3735 = vmul.f32 %v3727, 0.0
      %v3736 = vadd.f32 %v3715, %v3729
      %v3737 = vadd.f32 %v3716, %v3730
      %v3738 = vadd.f32 %v3717, %v3731
      %v3739 = vadd.f32 %v3718, %v3732
      %v3740 = vadd.f32 %v3719, %v3733
      %v3741 = vadd.f32 %v3720, %v3734
      %v3742 = vadd.f32 %v3721, %v3735
      %v3743 = vsel %vm1723, %v3736, 0.0
      %3744 = vadd.xlane.f32.xlu0 %v3743
      %v3745 = vpop.xlane.xlu0 %3744
      %v3746 = vsel %vm1723, %v3737, 0.0
      %3747 = vadd.xlane.f32.xlu0 %v3746
      %v3748 = vpop.xlane.xlu0 %3747
      %v3749 = vsel %vm1723, %v3738, 0.0
      %3750 = vadd.xlane.f32.xlu0 %v3749
      %v3751 = vpop.xlane.xlu0 %3750
      %v3752 = vsel %vm1723, %v3739, 0.0
      %3753 = vadd.xlane.f32.xlu0 %v3752
      %v3754 = vpop.xlane.xlu0 %3753
      %v3755 = vsel %vm1723, %v3740, 0.0
      %3756 = vadd.xlane.f32.xlu0 %v3755
      %v3757 = vpop.xlane.xlu0 %3756
      %v3758 = vsel %vm1723, %v3741, 0.0
      %3759 = vadd.xlane.f32.xlu0 %v3758
      %v3760 = vpop.xlane.xlu0 %3759
      %v3761 = vsel %vm1742, %v3742, 0.0
      %3762 = vadd.xlane.f32.xlu0 %v3761
      %v3763 = vpop.xlane.xlu0 %3762
      %v3764 = vld [vmem:[#allocation2] sm:$0x1]
      %v3766 = vlaneseq
      %v3767 = vshrl.u32 %v3766, 7
      %v3768 = vsub.s32 0, %v3767
      %v3769 = vrot.slane %v3764, %v3768
      %v3771 = vadd.f32 %v3745, %v3769
      %v3772 = vadd.f32 %v3748, %v3769
      %v3773 = vadd.f32 %v3751, %v3769
      %v3774 = vadd.f32 %v3754, %v3769
      %v3775 = vadd.f32 %v3757, %v3769
      %v3776 = vadd.f32 %v3760, %v3769
      %v3777 = vadd.f32 %v3763, %v3769
      %v3778 = vsub.f32 0.0, %v3771
      %v3779 = vsub.f32 0.0, %v3772
      %v3780 = vsub.f32 0.0, %v3773
      %v3781 = vsub.f32 0.0, %v3774
      %v3782 = vsub.f32 0.0, %v3775
      %v3783 = vsub.f32 0.0, %v3776
      %v3784 = vsub.f32 0.0, %v3777
      %v3785 = vmul.f32 %v3778, 1.442695
      %v3786 = vpow.pop %v3785
      %v3787 = vmul.f32 %v3779, 1.442695
      %v3788 = vpow.pop %v3787
      %v3789 = vmul.f32 %v3780, 1.442695
      %v3790 = vpow.pop %v3789
      %v3791 = vmul.f32 %v3781, 1.442695
      %v3792 = vpow.pop %v3791
      %v3793 = vmul.f32 %v3782, 1.442695
      %v3794 = vpow.pop %v3793
      %v3795 = vmul.f32 %v3783, 1.442695
      %v3796 = vpow.pop %v3795
      %v3797 = vmul.f32 %v3784, 1.442695
      %v3798 = vpow.pop %v3797
      %v3799 = vadd.f32 %v3786, 1.0
      %v3800 = vadd.f32 %v3788, 1.0
      %v3801 = vadd.f32 %v3790, 1.0
      %v3802 = vadd.f32 %v3792, 1.0
      %v3803 = vadd.f32 %v3794, 1.0
      %v3804 = vadd.f32 %v3796, 1.0
      %v3805 = vadd.f32 %v3798, 1.0
      %v3806 = vrcp.pop %v3799
      %v3807 = vmul.f32 1.0, %v3806
      %v3808 = vrcp.pop %v3800
      %v3809 = vmul.f32 1.0, %v3808
      %v3810 = vrcp.pop %v3801
      %v3811 = vmul.f32 1.0, %v3810
      %v3812 = vrcp.pop %v3802
      %v3813 = vmul.f32 1.0, %v3812
      %v3814 = vrcp.pop %v3803
      %v3815 = vmul.f32 1.0, %v3814
      %v3816 = vrcp.pop %v3804
      %v3817 = vmul.f32 1.0, %v3816
      %v3818 = vrcp.pop %v3805
      %v3819 = vmul.f32 1.0, %v3818
      %s3820 = scalar_lea.vmem %s226, 840
      %3821 = vst.msk [vmem:[%s3820] sm:$0xff] %vm1802, %v3807
      %3822 = vst.msk [vmem:[%s3820 + $0x8] sm:$0xff] %vm1802, %v3809
      %3823 = vst.msk [vmem:[%s3820 + $0x10] sm:$0xff] %vm1802, %v3811
      %3824 = vst.msk [vmem:[%s3820 + $0x18] sm:$0xff] %vm1802, %v3813
      %3825 = vst.msk [vmem:[%s3820 + $0x20] sm:$0xff] %vm1802, %v3815
      %3826 = vst.msk [vmem:[%s3820 + $0x28] sm:$0xff] %vm1802, %v3817
      %3827 = vst.msk [vmem:[%s3820 + $0x30] sm:$0x1] %vm1809, %v3819
      %p3828 = scmp.lt.s32.totalorder %s18, 1
      %s3829 = scalar_select %p3828, %s18, 1
      %s3830 = smul.addr %s3829, 112
      %s3831 = smul.addr %s3830, 8
      %s3832 = scalar_lea.vmem %s5, %s3831
      // Predicated region
      $region41: #{vae_forward.5} parent=39 // pred_check
        %p3833 = pneg %p146
      $region42: #{vae_forward.5} parent=39 // pred_check_branch
        %3835 = sbr.rel (%p3833) target = $region44
      $region43: #{vae_forward.5} parent=39 // pred_region
        _
      $region44: #{vae_forward.5} parent=39 // pred_fallthru
        _
    $region40: #{vae_forward.5} parent=5 // pred_fallthru
      _
    %p3836 = scmp.le.s32.totalorder 2, %s13
    // Predicated region
    $region45: #{vae_forward.5} parent=5 // pred_check
      %p3837 = pneg %p3836
    $region46: #{vae_forward.5} parent=5 // pred_check_branch
      %3839 = sbr.rel (%p3837) target = $region48
    $region47: #{vae_forward.5} parent=5 // pred_region
      %s3840 = ssub.s32 %s13, 2
      // Predicated region
      $region49: #{vae_forward.5} parent=47 // pred_check
        %p3841 = pneg %p152
      $region50: #{vae_forward.5} parent=47 // pred_check_branch
        %3843 = sbr.rel (%p3841) target = $region52
      $region51: #{vae_forward.5} parent=47 // pred_region
        %p3844 = scmp.lt.s32.totalorder %s19, 1
        %s3845 = scalar_select %p3844, %s19, 1
        %s3846 = smul.addr %s3845, 112
        %s3847 = smul.addr %s3846, 8
        %s3848 = scalar_lea.vmem %s5, %s3847
      $region52: #{vae_forward.5} parent=47 // pred_fallthru
        _
    $region48: #{vae_forward.5} parent=5 // pred_fallthru
      _
  $region6: #{vae_forward.5} parent=0 // loop_footer
    %s17 = sadd.s32 1, %s13
  $region7: #{vae_forward.5} parent=0 // loop_footer_branch
    %12 = sbr.rel target = $region3
  $region8: #{vae_forward.5} parent=0 // loop_exit
    _

</llo_original>
